<compile_context>
chip_gen: v7x
topology: tpu7x:2x2x1
jax: 0.10.0
libtpu: 0.0.40
codegen_flags: <defaults>
</compile_context>

<pallas_src>
import jax
import jax.numpy as jnp
from jax.experimental import pallas as pl
from jax.experimental.pallas import tpu as pltpu


# ----------------------------------------------------------------------------- #
# Fused Pallas kernel (3 LSTM layers + FC head)
# ----------------------------------------------------------------------------- #
def _make_fused_lstm_fc_kernel(num_layers, hidden_pad, seq_len, batch, d_in):
    HP, T, B, D = hidden_pad, seq_len, batch, d_in

    def kernel(*refs):
        # refs = x, (wih, whh, b) * num_layers, wfc, bfc, out, seq_scratch
        x_ref = refs[0]
        layer_refs = [refs[1 + 3 * l: 4 + 3 * l] for l in range(num_layers)]
        wfc_ref = refs[1 + 3 * num_layers]      # (1, HP)
        bfc_ref = refs[2 + 3 * num_layers]      # (1, 1)
        out_ref = refs[3 + 3 * num_layers]      # (B, 1)
        seq_scr = refs[4 + 3 * num_layers]      # (T*B, HP) VMEM scratch

        # batch_first -> time-major layer input, zero-padded to HP lanes (VMEM only).
        seq_scr[...] = jnp.zeros_like(seq_scr)
        for t in range(T):                                       # T static & tiny
            seq_scr[t * B:(t + 1) * B, 0:D] = x_ref[:, t, :]

        h = jnp.zeros((B, HP), jnp.float32)
        for li in range(num_layers):
            wih_ref, whh_ref, b_ref = layer_refs[li]
            whh = whh_ref[...]                                   # (HP, 4HP)

            # Hoisted input projection + bias (no recurrent dependence):
            # one matmul + one broadcast per layer.
            gx = jnp.dot(seq_scr[...], wih_ref[...],
                         preferred_element_type=jnp.float32) + b_ref[...]   # (T*B, 4HP)

            h = jnp.zeros((B, HP), jnp.float32)
            c = jnp.zeros((B, HP), jnp.float32)
            for t in range(T):                                   # fully unrolled
                gates = gx[t * B:(t + 1) * B, :] + jnp.dot(
                    h, whh, preferred_element_type=jnp.float32)  # (B, 4HP)
                # lane-aligned 128-wide gate strips (PyTorch order i, f, g, o)
                i_g = jax.nn.sigmoid(gates[:, 0 * HP:1 * HP])
                f_g = jax.nn.sigmoid(gates[:, 1 * HP:2 * HP])
                g_g = jnp.tanh(gates[:, 2 * HP:3 * HP])
                o_g = jax.nn.sigmoid(gates[:, 3 * HP:4 * HP])
                c = f_g * c + i_g * g_g
                h = o_g * jnp.tanh(c)
                if li + 1 < num_layers:
                    # Feed next layer; stays in VMEM (never leaves the kernel).
                    seq_scr[t * B:(t + 1) * B, :] = h

        # FC head as a lane reduction (padded lanes of h and wfc are exactly zero).
        out_ref[...] = (jnp.sum(h * wfc_ref[...], axis=-1, keepdims=True)
                        + bfc_ref[...])

    return kernel


# ----------------------------------------------------------------------------- #
# Wrapper
# ----------------------------------------------------------------------------- #
_VMEM_SPEC = pl.BlockSpec(memory_space=pltpu.MemorySpace.VMEM)


@jax.jit
def lstm_model_forward(x_btd, params):
    """x_btd: (B, T, input_size), batch_first like the PyTorch module."""
    B, T, D = x_btd.shape
    layers = params["lstm"]
    num_layers = len(layers)
    HP = layers[0]["whh"].shape[0]           # padded hidden size (128)

    flat_inputs = [x_btd.astype(jnp.float32)]
    for p in layers:
        flat_inputs += [p["wih"], p["whh"], p["b"]]
    flat_inputs += [params["fc"]["w"], params["fc"]["b"]]

    kernel = _make_fused_lstm_fc_kernel(num_layers, HP, T, B, D)
    return pl.pallas_call(
        kernel,
        out_shape=jax.ShapeDtypeStruct((B, 1), jnp.float32),
        in_specs=[_VMEM_SPEC] * len(flat_inputs),
        out_specs=_VMEM_SPEC,
        scratch_shapes=[pltpu.VMEM((T * B, HP), jnp.float32)],
    )(*flat_inputs)


# ----------------------------------------------------------------------------- #
# Parameter init (PyTorch-style U(-1/sqrt(H), 1/sqrt(H))) + lane-aligned padding
# ----------------------------------------------------------------------------- #
def init_params(key, input_size=4, hidden_size=100, num_layers=3, hidden_pad=128):
    H, HP = hidden_size, hidden_pad
    bound = 1.0 / (H ** 0.5)

    def pad_gate_cols(w_t):
        # (rows, 4H) -> (rows, 4HP): each gate in its own lane-aligned 128-wide strip.
        parts = [jnp.pad(w_t[:, g * H:(g + 1) * H], ((0, 0), (0, HP - H)))
                 for g in range(4)]
        return jnp.concatenate(parts, axis=1)

    padded = {"lstm": [], "fc": {}}
    raw = {"lstm": [], "fc": {}}
    for l in range(num_layers):
        d_in = input_size if l == 0 else H
        key, k1, k2, k3, k4 = jax.random.split(key, 5)
        w_ih = jax.random.uniform(k1, (4 * H, d_in), jnp.float32, -bound, bound)
        w_hh = jax.random.uniform(k2, (4 * H, H), jnp.float32, -bound, bound)
        b_ih = jax.random.uniform(k3, (4 * H,), jnp.float32, -bound, bound)
        b_hh = jax.random.uniform(k4, (4 * H,), jnp.float32, -bound, bound)
        raw["lstm"].append({"w_ih": w_ih, "w_hh": w_hh, "b_ih": b_ih, "b_hh": b_hh})

        wih_p = pad_gate_cols(w_ih.T)                              # (d_in, 4HP)
        wih_p = jnp.pad(wih_p, ((0, HP - wih_p.shape[0]), (0, 0)))  # -> (HP, 4HP)
        whh_p = pad_gate_cols(w_hh.T)                              # (H, 4HP)
        whh_p = jnp.pad(whh_p, ((0, HP - H), (0, 0)))              # -> (HP, 4HP)
        b_p = pad_gate_cols((b_ih + b_hh).reshape(1, 4 * H))       # (1, 4HP)
        padded["lstm"].append({"wih": wih_p, "whh": whh_p, "b": b_p})

    key, k5, k6 = jax.random.split(key, 3)
    w_fc = jax.random.uniform(k5, (1, H), jnp.float32, -bound, bound)
    b_fc = jax.random.uniform(k6, (1,), jnp.float32, -bound, bound)
    raw["fc"] = {"w": w_fc, "b": b_fc}
    padded["fc"]["w"] = jnp.pad(w_fc, ((0, 0), (0, HP - H)))       # (1, HP)
    padded["fc"]["b"] = b_fc.reshape(1, 1)                         # (1, 1)
    return padded, raw


# ----------------------------------------------------------------------------- #
# Pure-JAX reference (unpadded), for a correctness sanity check
# ----------------------------------------------------------------------------- #
def reference_forward(x_btd, raw, num_layers, hidden_size):
    B, T, _ = x_btd.shape
    H = hidden_size
    hi = jax.lax.Precision.HIGHEST
    seq = x_btd.astype(jnp.float32)
    for l in range(num_layers):
        p = raw["lstm"][l]
        w_ih_t, w_hh_t = p["w_ih"].T, p["w_hh"].T
        b = p["b_ih"] + p["b_hh"]
        h = jnp.zeros((B, H), jnp.float32)
        c = jnp.zeros((B, H), jnp.float32)
        outs = []
        for t in range(T):
            gates = (jnp.dot(seq[:, t, :], w_ih_t, precision=hi)
                     + jnp.dot(h, w_hh_t, precision=hi) + b)
            i_g = jax.nn.sigmoid(gates[:, 0 * H:1 * H])
            f_g = jax.nn.sigmoid(gates[:, 1 * H:2 * H])
            g_g = jnp.tanh(gates[:, 2 * H:3 * H])
            o_g = jax.nn.sigmoid(gates[:, 3 * H:4 * H])
            c = f_g * c + i_g * g_g
            h = o_g * jnp.tanh(c)
            outs.append(h)
        seq = jnp.stack(outs, axis=1)                              # (B, T, H)
    return jnp.dot(seq[:, -1, :], raw["fc"]["w"].T, precision=hi) + raw["fc"]["b"]


# ----------------------------------------------------------------------------- #
# Main
# ----------------------------------------------------------------------------- #
if __name__ == "__main__":
    INPUT_SIZE, HIDDEN_SIZE, NUM_LAYERS = 4, 100, 3
    BATCH, SEQ = 2, 8

    key = jax.random.PRNGKey(0)
    key, xk = jax.random.split(key)
    x = jax.random.normal(xk, (BATCH, SEQ, INPUT_SIZE), dtype=jnp.float32)

    params, raw = init_params(key, INPUT_SIZE, HIDDEN_SIZE, NUM_LAYERS)

    out = lstm_model_forward(x, params)
    out = jax.block_until_ready(out)

    ref = reference_forward(x, raw, NUM_LAYERS, HIDDEN_SIZE)

    assert out.shape == (BATCH, 1), out.shape
    assert bool(jnp.all(jnp.isfinite(out)))
    # Loose tolerance to allow MXU-vs-XLA f32 matmul precision differences; any
    # structural bug (gate order, padding leak, time ordering) would blow past this.
    assert bool(jnp.allclose(out, ref, atol=3e-2, rtol=3e-2)), (out, ref)
    print("KERNEL_OK")
</pallas_src>

<mosaic_0001>
module attributes {stable_mosaic.version = 11 : i64} {
  func.func @kernel(%arg0: memref<2x8x4xf32, #tpu.memory_space<vmem>>, %arg1: memref<128x512xf32, #tpu.memory_space<vmem>>, %arg2: memref<128x512xf32, #tpu.memory_space<vmem>>, %arg3: memref<1x512xf32, #tpu.memory_space<vmem>>, %arg4: memref<128x512xf32, #tpu.memory_space<vmem>>, %arg5: memref<128x512xf32, #tpu.memory_space<vmem>>, %arg6: memref<1x512xf32, #tpu.memory_space<vmem>>, %arg7: memref<128x512xf32, #tpu.memory_space<vmem>>, %arg8: memref<128x512xf32, #tpu.memory_space<vmem>>, %arg9: memref<1x512xf32, #tpu.memory_space<vmem>>, %arg10: memref<1x128xf32, #tpu.memory_space<vmem>>, %arg11: memref<1x1xf32, #tpu.memory_space<vmem>>, %arg12: memref<2x1xf32, #tpu.memory_space<vmem>>, %arg13: memref<16x128xf32, #tpu.memory_space<vmem>>) attributes {dimension_semantics = [], scalar_prefetch = 0 : i64, scratch_operands = 1 : i64, tpu.core_type = #tpu.core_type<tc>} {
    %cst = arith.constant 0.000000e+00 : f32
    %0 = vector.broadcast %cst : f32 to vector<16x128xf32>
    %c0 = arith.constant 0 : index
    %c0_0 = arith.constant 0 : index
    %1 = vector.load %arg13[%c0, %c0_0] : memref<16x128xf32, #tpu.memory_space<vmem>>, vector<16x128xf32>
    tpu.vector_store %arg13[%c0, %c0_0], %0 {strides = array<i32>} : memref<16x128xf32, #tpu.memory_space<vmem>>, vector<16x128xf32>,
    %c0_1 = arith.constant 0 : index
    %c0_2 = arith.constant 0 : index
    %c0_3 = arith.constant 0 : index
    %2 = vector.load %arg0[%c0_1, %c0_2, %c0_3] : memref<2x8x4xf32, #tpu.memory_space<vmem>>, vector<2x1x4xf32>
    %3 = vector.shape_cast %2 : vector<2x1x4xf32> to vector<2x4xf32>
    %c0_4 = arith.constant 0 : index
    %c0_5 = arith.constant 0 : index
    %4 = vector.load %arg13[%c0_4, %c0_5] : memref<16x128xf32, #tpu.memory_space<vmem>>, vector<2x4xf32>
    tpu.vector_store %arg13[%c0_4, %c0_5], %3 {strides = array<i32>} : memref<16x128xf32, #tpu.memory_space<vmem>>, vector<2x4xf32>,
    %c0_6 = arith.constant 0 : index
    %c1 = arith.constant 1 : index
    %c0_7 = arith.constant 0 : index
    %5 = vector.load %arg0[%c0_6, %c1, %c0_7] : memref<2x8x4xf32, #tpu.memory_space<vmem>>, vector<2x1x4xf32>
    %6 = vector.shape_cast %5 : vector<2x1x4xf32> to vector<2x4xf32>
    %c2 = arith.constant 2 : index
    %c0_8 = arith.constant 0 : index
    %7 = vector.load %arg13[%c2, %c0_8] : memref<16x128xf32, #tpu.memory_space<vmem>>, vector<2x4xf32>
    tpu.vector_store %arg13[%c2, %c0_8], %6 {strides = array<i32>} : memref<16x128xf32, #tpu.memory_space<vmem>>, vector<2x4xf32>,
    %c0_9 = arith.constant 0 : index
    %c2_10 = arith.constant 2 : index
    %c0_11 = arith.constant 0 : index
    %8 = vector.load %arg0[%c0_9, %c2_10, %c0_11] : memref<2x8x4xf32, #tpu.memory_space<vmem>>, vector<2x1x4xf32>
    %9 = vector.shape_cast %8 : vector<2x1x4xf32> to vector<2x4xf32>
    %c4 = arith.constant 4 : index
    %c0_12 = arith.constant 0 : index
    %10 = vector.load %arg13[%c4, %c0_12] : memref<16x128xf32, #tpu.memory_space<vmem>>, vector<2x4xf32>
    tpu.vector_store %arg13[%c4, %c0_12], %9 {strides = array<i32>} : memref<16x128xf32, #tpu.memory_space<vmem>>, vector<2x4xf32>,
    %c0_13 = arith.constant 0 : index
    %c3 = arith.constant 3 : index
    %c0_14 = arith.constant 0 : index
    %11 = vector.load %arg0[%c0_13, %c3, %c0_14] : memref<2x8x4xf32, #tpu.memory_space<vmem>>, vector<2x1x4xf32>
    %12 = vector.shape_cast %11 : vector<2x1x4xf32> to vector<2x4xf32>
    %c6 = arith.constant 6 : index
    %c0_15 = arith.constant 0 : index
    %13 = vector.load %arg13[%c6, %c0_15] : memref<16x128xf32, #tpu.memory_space<vmem>>, vector<2x4xf32>
    tpu.vector_store %arg13[%c6, %c0_15], %12 {strides = array<i32>} : memref<16x128xf32, #tpu.memory_space<vmem>>, vector<2x4xf32>,
    %c0_16 = arith.constant 0 : index
    %c4_17 = arith.constant 4 : index
    %c0_18 = arith.constant 0 : index
    %14 = vector.load %arg0[%c0_16, %c4_17, %c0_18] : memref<2x8x4xf32, #tpu.memory_space<vmem>>, vector<2x1x4xf32>
    %15 = vector.shape_cast %14 : vector<2x1x4xf32> to vector<2x4xf32>
    %c8 = arith.constant 8 : index
    %c0_19 = arith.constant 0 : index
    %16 = vector.load %arg13[%c8, %c0_19] : memref<16x128xf32, #tpu.memory_space<vmem>>, vector<2x4xf32>
    tpu.vector_store %arg13[%c8, %c0_19], %15 {strides = array<i32>} : memref<16x128xf32, #tpu.memory_space<vmem>>, vector<2x4xf32>,
    %c0_20 = arith.constant 0 : index
    %c5 = arith.constant 5 : index
    %c0_21 = arith.constant 0 : index
    %17 = vector.load %arg0[%c0_20, %c5, %c0_21] : memref<2x8x4xf32, #tpu.memory_space<vmem>>, vector<2x1x4xf32>
    %18 = vector.shape_cast %17 : vector<2x1x4xf32> to vector<2x4xf32>
    %c10 = arith.constant 10 : index
    %c0_22 = arith.constant 0 : index
    %19 = vector.load %arg13[%c10, %c0_22] : memref<16x128xf32, #tpu.memory_space<vmem>>, vector<2x4xf32>
    tpu.vector_store %arg13[%c10, %c0_22], %18 {strides = array<i32>} : memref<16x128xf32, #tpu.memory_space<vmem>>, vector<2x4xf32>,
    %c0_23 = arith.constant 0 : index
    %c6_24 = arith.constant 6 : index
    %c0_25 = arith.constant 0 : index
    %20 = vector.load %arg0[%c0_23, %c6_24, %c0_25] : memref<2x8x4xf32, #tpu.memory_space<vmem>>, vector<2x1x4xf32>
    %21 = vector.shape_cast %20 : vector<2x1x4xf32> to vector<2x4xf32>
    %c12 = arith.constant 12 : index
    %c0_26 = arith.constant 0 : index
    %22 = vector.load %arg13[%c12, %c0_26] : memref<16x128xf32, #tpu.memory_space<vmem>>, vector<2x4xf32>
    tpu.vector_store %arg13[%c12, %c0_26], %21 {strides = array<i32>} : memref<16x128xf32, #tpu.memory_space<vmem>>, vector<2x4xf32>,
    %c0_27 = arith.constant 0 : index
    %c7 = arith.constant 7 : index
    %c0_28 = arith.constant 0 : index
    %23 = vector.load %arg0[%c0_27, %c7, %c0_28] : memref<2x8x4xf32, #tpu.memory_space<vmem>>, vector<2x1x4xf32>
    %24 = vector.shape_cast %23 : vector<2x1x4xf32> to vector<2x4xf32>
    %c14 = arith.constant 14 : index
    %c0_29 = arith.constant 0 : index
    %25 = vector.load %arg13[%c14, %c0_29] : memref<16x128xf32, #tpu.memory_space<vmem>>, vector<2x4xf32>
    tpu.vector_store %arg13[%c14, %c0_29], %24 {strides = array<i32>} : memref<16x128xf32, #tpu.memory_space<vmem>>, vector<2x4xf32>,
    %c0_30 = arith.constant 0 : index
    %c0_31 = arith.constant 0 : index
    %26 = vector.load %arg2[%c0_30, %c0_31] : memref<128x512xf32, #tpu.memory_space<vmem>>, vector<128x512xf32>
    %c0_32 = arith.constant 0 : index
    %c0_33 = arith.constant 0 : index
    %27 = vector.load %arg13[%c0_32, %c0_33] : memref<16x128xf32, #tpu.memory_space<vmem>>, vector<16x128xf32>
    %c0_34 = arith.constant 0 : index
    %c0_35 = arith.constant 0 : index
    %28 = vector.load %arg1[%c0_34, %c0_35] : memref<128x512xf32, #tpu.memory_space<vmem>>, vector<128x512xf32>
    %cst_36 = arith.constant dense<0.000000e+00> : vector<16x512xf32>
    %29 = tpu.matmul %27, %28, %cst_36 {dimension_numbers = #tpu.dot_dimension_numbers<[1], [0], [0], [1], [0, 0, 1, 1], [], []>} : vector<16x128xf32>, vector<128x512xf32>, vector<16x512xf32> -> vector<16x512xf32>
    %c0_37 = arith.constant 0 : index
    %c0_38 = arith.constant 0 : index
    %30 = vector.load %arg3[%c0_37, %c0_38] : memref<1x512xf32, #tpu.memory_space<vmem>>, vector<1x512xf32>
    %31 = vector.broadcast %30 : vector<1x512xf32> to vector<16x512xf32>
    %32 = arith.addf %29, %31 : vector<16x512xf32>
    %cst_39 = arith.constant 0.000000e+00 : f32
    %33 = vector.broadcast %cst_39 : f32 to vector<2x128xf32>
    %cst_40 = arith.constant 0.000000e+00 : f32
    %34 = vector.broadcast %cst_40 : f32 to vector<2x128xf32>
    %35 = vector.extract_strided_slice %32 {offsets = [0, 0], sizes = [2, 512], strides = [1, 1]} : vector<16x512xf32> to vector<2x512xf32>
    %cst_41 = arith.constant dense<0.000000e+00> : vector<2x512xf32>
    %36 = tpu.matmul %33, %26, %cst_41 {dimension_numbers = #tpu.dot_dimension_numbers<[1], [0], [0], [1], [0, 0, 1, 1], [], []>} : vector<2x128xf32>, vector<128x512xf32>, vector<2x512xf32> -> vector<2x512xf32>
    %37 = arith.addf %35, %36 : vector<2x512xf32>
    %38 = vector.extract_strided_slice %37 {offsets = [0, 0], sizes = [2, 128], strides = [1, 1]} : vector<2x512xf32> to vector<2x128xf32>
    %39 = arith.negf %38 : vector<2x128xf32>
    %40 = math.exp %39 : vector<2x128xf32>
    %cst_42 = arith.constant 1.000000e+00 : f32
    %41 = vector.broadcast %cst_42 : f32 to vector<2x128xf32>
    %42 = arith.addf %41, %40 : vector<2x128xf32>
    %43 = arith.divf %41, %42 : vector<2x128xf32>
    %44 = vector.extract_strided_slice %37 {offsets = [0, 128], sizes = [2, 128], strides = [1, 1]} : vector<2x512xf32> to vector<2x128xf32>
    %45 = arith.negf %44 : vector<2x128xf32>
    %46 = math.exp %45 : vector<2x128xf32>
    %cst_43 = arith.constant 1.000000e+00 : f32
    %47 = vector.broadcast %cst_43 : f32 to vector<2x128xf32>
    %48 = arith.addf %47, %46 : vector<2x128xf32>
    %49 = arith.divf %47, %48 : vector<2x128xf32>
    %50 = vector.extract_strided_slice %37 {offsets = [0, 256], sizes = [2, 128], strides = [1, 1]} : vector<2x512xf32> to vector<2x128xf32>
    %51 = math.tanh %50 : vector<2x128xf32>
    %52 = vector.extract_strided_slice %37 {offsets = [0, 384], sizes = [2, 128], strides = [1, 1]} : vector<2x512xf32> to vector<2x128xf32>
    %53 = arith.negf %52 : vector<2x128xf32>
    %54 = math.exp %53 : vector<2x128xf32>
    %cst_44 = arith.constant 1.000000e+00 : f32
    %55 = vector.broadcast %cst_44 : f32 to vector<2x128xf32>
    %56 = arith.addf %55, %54 : vector<2x128xf32>
    %57 = arith.divf %55, %56 : vector<2x128xf32>
    %58 = arith.mulf %49, %34 : vector<2x128xf32>
    %59 = arith.mulf %43, %51 : vector<2x128xf32>
    %60 = arith.addf %58, %59 : vector<2x128xf32>
    %61 = math.tanh %60 : vector<2x128xf32>
    %62 = arith.mulf %57, %61 : vector<2x128xf32>
    %c0_45 = arith.constant 0 : index
    %c0_46 = arith.constant 0 : index
    %63 = vector.load %arg13[%c0_45, %c0_46] : memref<16x128xf32, #tpu.memory_space<vmem>>, vector<2x128xf32>
    tpu.vector_store %arg13[%c0_45, %c0_46], %62 {strides = array<i32>} : memref<16x128xf32, #tpu.memory_space<vmem>>, vector<2x128xf32>,
    %64 = vector.extract_strided_slice %32 {offsets = [2, 0], sizes = [2, 512], strides = [1, 1]} : vector<16x512xf32> to vector<2x512xf32>
    %cst_47 = arith.constant dense<0.000000e+00> : vector<2x512xf32>
    %65 = tpu.matmul %62, %26, %cst_47 {dimension_numbers = #tpu.dot_dimension_numbers<[1], [0], [0], [1], [0, 0, 1, 1], [], []>} : vector<2x128xf32>, vector<128x512xf32>, vector<2x512xf32> -> vector<2x512xf32>
    %66 = arith.addf %64, %65 : vector<2x512xf32>
    %67 = vector.extract_strided_slice %66 {offsets = [0, 0], sizes = [2, 128], strides = [1, 1]} : vector<2x512xf32> to vector<2x128xf32>
    %68 = arith.negf %67 : vector<2x128xf32>
    %69 = math.exp %68 : vector<2x128xf32>
    %cst_48 = arith.constant 1.000000e+00 : f32
    %70 = vector.broadcast %cst_48 : f32 to vector<2x128xf32>
    %71 = arith.addf %70, %69 : vector<2x128xf32>
    %72 = arith.divf %70, %71 : vector<2x128xf32>
    %73 = vector.extract_strided_slice %66 {offsets = [0, 128], sizes = [2, 128], strides = [1, 1]} : vector<2x512xf32> to vector<2x128xf32>
    %74 = arith.negf %73 : vector<2x128xf32>
    %75 = math.exp %74 : vector<2x128xf32>
    %cst_49 = arith.constant 1.000000e+00 : f32
    %76 = vector.broadcast %cst_49 : f32 to vector<2x128xf32>
    %77 = arith.addf %76, %75 : vector<2x128xf32>
    %78 = arith.divf %76, %77 : vector<2x128xf32>
    %79 = vector.extract_strided_slice %66 {offsets = [0, 256], sizes = [2, 128], strides = [1, 1]} : vector<2x512xf32> to vector<2x128xf32>
    %80 = math.tanh %79 : vector<2x128xf32>
    %81 = vector.extract_strided_slice %66 {offsets = [0, 384], sizes = [2, 128], strides = [1, 1]} : vector<2x512xf32> to vector<2x128xf32>
    %82 = arith.negf %81 : vector<2x128xf32>
    %83 = math.exp %82 : vector<2x128xf32>
    %cst_50 = arith.constant 1.000000e+00 : f32
    %84 = vector.broadcast %cst_50 : f32 to vector<2x128xf32>
    %85 = arith.addf %84, %83 : vector<2x128xf32>
    %86 = arith.divf %84, %85 : vector<2x128xf32>
    %87 = arith.mulf %78, %60 : vector<2x128xf32>
    %88 = arith.mulf %72, %80 : vector<2x128xf32>
    %89 = arith.addf %87, %88 : vector<2x128xf32>
    %90 = math.tanh %89 : vector<2x128xf32>
    %91 = arith.mulf %86, %90 : vector<2x128xf32>
    %c2_51 = arith.constant 2 : index
    %c0_52 = arith.constant 0 : index
    %92 = vector.load %arg13[%c2_51, %c0_52] : memref<16x128xf32, #tpu.memory_space<vmem>>, vector<2x128xf32>
    tpu.vector_store %arg13[%c2_51, %c0_52], %91 {strides = array<i32>} : memref<16x128xf32, #tpu.memory_space<vmem>>, vector<2x128xf32>,
    %93 = vector.extract_strided_slice %32 {offsets = [4, 0], sizes = [2, 512], strides = [1, 1]} : vector<16x512xf32> to vector<2x512xf32>
    %cst_53 = arith.constant dense<0.000000e+00> : vector<2x512xf32>
    %94 = tpu.matmul %91, %26, %cst_53 {dimension_numbers = #tpu.dot_dimension_numbers<[1], [0], [0], [1], [0, 0, 1, 1], [], []>} : vector<2x128xf32>, vector<128x512xf32>, vector<2x512xf32> -> vector<2x512xf32>
    %95 = arith.addf %93, %94 : vector<2x512xf32>
    %96 = vector.extract_strided_slice %95 {offsets = [0, 0], sizes = [2, 128], strides = [1, 1]} : vector<2x512xf32> to vector<2x128xf32>
    %97 = arith.negf %96 : vector<2x128xf32>
    %98 = math.exp %97 : vector<2x128xf32>
    %cst_54 = arith.constant 1.000000e+00 : f32
    %99 = vector.broadcast %cst_54 : f32 to vector<2x128xf32>
    %100 = arith.addf %99, %98 : vector<2x128xf32>
    %101 = arith.divf %99, %100 : vector<2x128xf32>
    %102 = vector.extract_strided_slice %95 {offsets = [0, 128], sizes = [2, 128], strides = [1, 1]} : vector<2x512xf32> to vector<2x128xf32>
    %103 = arith.negf %102 : vector<2x128xf32>
    %104 = math.exp %103 : vector<2x128xf32>
    %cst_55 = arith.constant 1.000000e+00 : f32
    %105 = vector.broadcast %cst_55 : f32 to vector<2x128xf32>
    %106 = arith.addf %105, %104 : vector<2x128xf32>
    %107 = arith.divf %105, %106 : vector<2x128xf32>
    %108 = vector.extract_strided_slice %95 {offsets = [0, 256], sizes = [2, 128], strides = [1, 1]} : vector<2x512xf32> to vector<2x128xf32>
    %109 = math.tanh %108 : vector<2x128xf32>
    %110 = vector.extract_strided_slice %95 {offsets = [0, 384], sizes = [2, 128], strides = [1, 1]} : vector<2x512xf32> to vector<2x128xf32>
    %111 = arith.negf %110 : vector<2x128xf32>
    %112 = math.exp %111 : vector<2x128xf32>
    %cst_56 = arith.constant 1.000000e+00 : f32
    %113 = vector.broadcast %cst_56 : f32 to vector<2x128xf32>
    %114 = arith.addf %113, %112 : vector<2x128xf32>
    %115 = arith.divf %113, %114 : vector<2x128xf32>
    %116 = arith.mulf %107, %89 : vector<2x128xf32>
    %117 = arith.mulf %101, %109 : vector<2x128xf32>
    %118 = arith.addf %116, %117 : vector<2x128xf32>
    %119 = math.tanh %118 : vector<2x128xf32>
    %120 = arith.mulf %115, %119 : vector<2x128xf32>
    %c4_57 = arith.constant 4 : index
    %c0_58 = arith.constant 0 : index
    %121 = vector.load %arg13[%c4_57, %c0_58] : memref<16x128xf32, #tpu.memory_space<vmem>>, vector<2x128xf32>
    tpu.vector_store %arg13[%c4_57, %c0_58], %120 {strides = array<i32>} : memref<16x128xf32, #tpu.memory_space<vmem>>, vector<2x128xf32>,
    %122 = vector.extract_strided_slice %32 {offsets = [6, 0], sizes = [2, 512], strides = [1, 1]} : vector<16x512xf32> to vector<2x512xf32>
    %cst_59 = arith.constant dense<0.000000e+00> : vector<2x512xf32>
    %123 = tpu.matmul %120, %26, %cst_59 {dimension_numbers = #tpu.dot_dimension_numbers<[1], [0], [0], [1], [0, 0, 1, 1], [], []>} : vector<2x128xf32>, vector<128x512xf32>, vector<2x512xf32> -> vector<2x512xf32>
    %124 = arith.addf %122, %123 : vector<2x512xf32>
    %125 = vector.extract_strided_slice %124 {offsets = [0, 0], sizes = [2, 128], strides = [1, 1]} : vector<2x512xf32> to vector<2x128xf32>
    %126 = arith.negf %125 : vector<2x128xf32>
    %127 = math.exp %126 : vector<2x128xf32>
    %cst_60 = arith.constant 1.000000e+00 : f32
    %128 = vector.broadcast %cst_60 : f32 to vector<2x128xf32>
    %129 = arith.addf %128, %127 : vector<2x128xf32>
    %130 = arith.divf %128, %129 : vector<2x128xf32>
    %131 = vector.extract_strided_slice %124 {offsets = [0, 128], sizes = [2, 128], strides = [1, 1]} : vector<2x512xf32> to vector<2x128xf32>
    %132 = arith.negf %131 : vector<2x128xf32>
    %133 = math.exp %132 : vector<2x128xf32>
    %cst_61 = arith.constant 1.000000e+00 : f32
    %134 = vector.broadcast %cst_61 : f32 to vector<2x128xf32>
    %135 = arith.addf %134, %133 : vector<2x128xf32>
    %136 = arith.divf %134, %135 : vector<2x128xf32>
    %137 = vector.extract_strided_slice %124 {offsets = [0, 256], sizes = [2, 128], strides = [1, 1]} : vector<2x512xf32> to vector<2x128xf32>
    %138 = math.tanh %137 : vector<2x128xf32>
    %139 = vector.extract_strided_slice %124 {offsets = [0, 384], sizes = [2, 128], strides = [1, 1]} : vector<2x512xf32> to vector<2x128xf32>
    %140 = arith.negf %139 : vector<2x128xf32>
    %141 = math.exp %140 : vector<2x128xf32>
    %cst_62 = arith.constant 1.000000e+00 : f32
    %142 = vector.broadcast %cst_62 : f32 to vector<2x128xf32>
    %143 = arith.addf %142, %141 : vector<2x128xf32>
    %144 = arith.divf %142, %143 : vector<2x128xf32>
    %145 = arith.mulf %136, %118 : vector<2x128xf32>
    %146 = arith.mulf %130, %138 : vector<2x128xf32>
    %147 = arith.addf %145, %146 : vector<2x128xf32>
    %148 = math.tanh %147 : vector<2x128xf32>
    %149 = arith.mulf %144, %148 : vector<2x128xf32>
    %c6_63 = arith.constant 6 : index
    %c0_64 = arith.constant 0 : index
    %150 = vector.load %arg13[%c6_63, %c0_64] : memref<16x128xf32, #tpu.memory_space<vmem>>, vector<2x128xf32>
    tpu.vector_store %arg13[%c6_63, %c0_64], %149 {strides = array<i32>} : memref<16x128xf32, #tpu.memory_space<vmem>>, vector<2x128xf32>,
    %151 = vector.extract_strided_slice %32 {offsets = [8, 0], sizes = [2, 512], strides = [1, 1]} : vector<16x512xf32> to vector<2x512xf32>
    %cst_65 = arith.constant dense<0.000000e+00> : vector<2x512xf32>
    %152 = tpu.matmul %149, %26, %cst_65 {dimension_numbers = #tpu.dot_dimension_numbers<[1], [0], [0], [1], [0, 0, 1, 1], [], []>} : vector<2x128xf32>, vector<128x512xf32>, vector<2x512xf32> -> vector<2x512xf32>
    %153 = arith.addf %151, %152 : vector<2x512xf32>
    %154 = vector.extract_strided_slice %153 {offsets = [0, 0], sizes = [2, 128], strides = [1, 1]} : vector<2x512xf32> to vector<2x128xf32>
    %155 = arith.negf %154 : vector<2x128xf32>
    %156 = math.exp %155 : vector<2x128xf32>
    %cst_66 = arith.constant 1.000000e+00 : f32
    %157 = vector.broadcast %cst_66 : f32 to vector<2x128xf32>
    %158 = arith.addf %157, %156 : vector<2x128xf32>
    %159 = arith.divf %157, %158 : vector<2x128xf32>
    %160 = vector.extract_strided_slice %153 {offsets = [0, 128], sizes = [2, 128], strides = [1, 1]} : vector<2x512xf32> to vector<2x128xf32>
    %161 = arith.negf %160 : vector<2x128xf32>
    %162 = math.exp %161 : vector<2x128xf32>
    %cst_67 = arith.constant 1.000000e+00 : f32
    %163 = vector.broadcast %cst_67 : f32 to vector<2x128xf32>
    %164 = arith.addf %163, %162 : vector<2x128xf32>
    %165 = arith.divf %163, %164 : vector<2x128xf32>
    %166 = vector.extract_strided_slice %153 {offsets = [0, 256], sizes = [2, 128], strides = [1, 1]} : vector<2x512xf32> to vector<2x128xf32>
    %167 = math.tanh %166 : vector<2x128xf32>
    %168 = vector.extract_strided_slice %153 {offsets = [0, 384], sizes = [2, 128], strides = [1, 1]} : vector<2x512xf32> to vector<2x128xf32>
    %169 = arith.negf %168 : vector<2x128xf32>
    %170 = math.exp %169 : vector<2x128xf32>
    %cst_68 = arith.constant 1.000000e+00 : f32
    %171 = vector.broadcast %cst_68 : f32 to vector<2x128xf32>
    %172 = arith.addf %171, %170 : vector<2x128xf32>
    %173 = arith.divf %171, %172 : vector<2x128xf32>
    %174 = arith.mulf %165, %147 : vector<2x128xf32>
    %175 = arith.mulf %159, %167 : vector<2x128xf32>
    %176 = arith.addf %174, %175 : vector<2x128xf32>
    %177 = math.tanh %176 : vector<2x128xf32>
    %178 = arith.mulf %173, %177 : vector<2x128xf32>
    %c8_69 = arith.constant 8 : index
    %c0_70 = arith.constant 0 : index
    %179 = vector.load %arg13[%c8_69, %c0_70] : memref<16x128xf32, #tpu.memory_space<vmem>>, vector<2x128xf32>
    tpu.vector_store %arg13[%c8_69, %c0_70], %178 {strides = array<i32>} : memref<16x128xf32, #tpu.memory_space<vmem>>, vector<2x128xf32>,
    %180 = vector.extract_strided_slice %32 {offsets = [10, 0], sizes = [2, 512], strides = [1, 1]} : vector<16x512xf32> to vector<2x512xf32>
    %cst_71 = arith.constant dense<0.000000e+00> : vector<2x512xf32>
    %181 = tpu.matmul %178, %26, %cst_71 {dimension_numbers = #tpu.dot_dimension_numbers<[1], [0], [0], [1], [0, 0, 1, 1], [], []>} : vector<2x128xf32>, vector<128x512xf32>, vector<2x512xf32> -> vector<2x512xf32>
    %182 = arith.addf %180, %181 : vector<2x512xf32>
    %183 = vector.extract_strided_slice %182 {offsets = [0, 0], sizes = [2, 128], strides = [1, 1]} : vector<2x512xf32> to vector<2x128xf32>
    %184 = arith.negf %183 : vector<2x128xf32>
    %185 = math.exp %184 : vector<2x128xf32>
    %cst_72 = arith.constant 1.000000e+00 : f32
    %186 = vector.broadcast %cst_72 : f32 to vector<2x128xf32>
    %187 = arith.addf %186, %185 : vector<2x128xf32>
    %188 = arith.divf %186, %187 : vector<2x128xf32>
    %189 = vector.extract_strided_slice %182 {offsets = [0, 128], sizes = [2, 128], strides = [1, 1]} : vector<2x512xf32> to vector<2x128xf32>
    %190 = arith.negf %189 : vector<2x128xf32>
    %191 = math.exp %190 : vector<2x128xf32>
    %cst_73 = arith.constant 1.000000e+00 : f32
    %192 = vector.broadcast %cst_73 : f32 to vector<2x128xf32>
    %193 = arith.addf %192, %191 : vector<2x128xf32>
    %194 = arith.divf %192, %193 : vector<2x128xf32>
    %195 = vector.extract_strided_slice %182 {offsets = [0, 256], sizes = [2, 128], strides = [1, 1]} : vector<2x512xf32> to vector<2x128xf32>
    %196 = math.tanh %195 : vector<2x128xf32>
    %197 = vector.extract_strided_slice %182 {offsets = [0, 384], sizes = [2, 128], strides = [1, 1]} : vector<2x512xf32> to vector<2x128xf32>
    %198 = arith.negf %197 : vector<2x128xf32>
    %199 = math.exp %198 : vector<2x128xf32>
    %cst_74 = arith.constant 1.000000e+00 : f32
    %200 = vector.broadcast %cst_74 : f32 to vector<2x128xf32>
    %201 = arith.addf %200, %199 : vector<2x128xf32>
    %202 = arith.divf %200, %201 : vector<2x128xf32>
    %203 = arith.mulf %194, %176 : vector<2x128xf32>
    %204 = arith.mulf %188, %196 : vector<2x128xf32>
    %205 = arith.addf %203, %204 : vector<2x128xf32>
    %206 = math.tanh %205 : vector<2x128xf32>
    %207 = arith.mulf %202, %206 : vector<2x128xf32>
    %c10_75 = arith.constant 10 : index
    %c0_76 = arith.constant 0 : index
    %208 = vector.load %arg13[%c10_75, %c0_76] : memref<16x128xf32, #tpu.memory_space<vmem>>, vector<2x128xf32>
    tpu.vector_store %arg13[%c10_75, %c0_76], %207 {strides = array<i32>} : memref<16x128xf32, #tpu.memory_space<vmem>>, vector<2x128xf32>,
    %209 = vector.extract_strided_slice %32 {offsets = [12, 0], sizes = [2, 512], strides = [1, 1]} : vector<16x512xf32> to vector<2x512xf32>
    %cst_77 = arith.constant dense<0.000000e+00> : vector<2x512xf32>
    %210 = tpu.matmul %207, %26, %cst_77 {dimension_numbers = #tpu.dot_dimension_numbers<[1], [0], [0], [1], [0, 0, 1, 1], [], []>} : vector<2x128xf32>, vector<128x512xf32>, vector<2x512xf32> -> vector<2x512xf32>
    %211 = arith.addf %209, %210 : vector<2x512xf32>
    %212 = vector.extract_strided_slice %211 {offsets = [0, 0], sizes = [2, 128], strides = [1, 1]} : vector<2x512xf32> to vector<2x128xf32>
    %213 = arith.negf %212 : vector<2x128xf32>
    %214 = math.exp %213 : vector<2x128xf32>
    %cst_78 = arith.constant 1.000000e+00 : f32
    %215 = vector.broadcast %cst_78 : f32 to vector<2x128xf32>
    %216 = arith.addf %215, %214 : vector<2x128xf32>
    %217 = arith.divf %215, %216 : vector<2x128xf32>
    %218 = vector.extract_strided_slice %211 {offsets = [0, 128], sizes = [2, 128], strides = [1, 1]} : vector<2x512xf32> to vector<2x128xf32>
    %219 = arith.negf %218 : vector<2x128xf32>
    %220 = math.exp %219 : vector<2x128xf32>
    %cst_79 = arith.constant 1.000000e+00 : f32
    %221 = vector.broadcast %cst_79 : f32 to vector<2x128xf32>
    %222 = arith.addf %221, %220 : vector<2x128xf32>
    %223 = arith.divf %221, %222 : vector<2x128xf32>
    %224 = vector.extract_strided_slice %211 {offsets = [0, 256], sizes = [2, 128], strides = [1, 1]} : vector<2x512xf32> to vector<2x128xf32>
    %225 = math.tanh %224 : vector<2x128xf32>
    %226 = vector.extract_strided_slice %211 {offsets = [0, 384], sizes = [2, 128], strides = [1, 1]} : vector<2x512xf32> to vector<2x128xf32>
    %227 = arith.negf %226 : vector<2x128xf32>
    %228 = math.exp %227 : vector<2x128xf32>
    %cst_80 = arith.constant 1.000000e+00 : f32
    %229 = vector.broadcast %cst_80 : f32 to vector<2x128xf32>
    %230 = arith.addf %229, %228 : vector<2x128xf32>
    %231 = arith.divf %229, %230 : vector<2x128xf32>
    %232 = arith.mulf %223, %205 : vector<2x128xf32>
    %233 = arith.mulf %217, %225 : vector<2x128xf32>
    %234 = arith.addf %232, %233 : vector<2x128xf32>
    %235 = math.tanh %234 : vector<2x128xf32>
    %236 = arith.mulf %231, %235 : vector<2x128xf32>
    %c12_81 = arith.constant 12 : index
    %c0_82 = arith.constant 0 : index
    %237 = vector.load %arg13[%c12_81, %c0_82] : memref<16x128xf32, #tpu.memory_space<vmem>>, vector<2x128xf32>
    tpu.vector_store %arg13[%c12_81, %c0_82], %236 {strides = array<i32>} : memref<16x128xf32, #tpu.memory_space<vmem>>, vector<2x128xf32>,
    %238 = vector.extract_strided_slice %32 {offsets = [14, 0], sizes = [2, 512], strides = [1, 1]} : vector<16x512xf32> to vector<2x512xf32>
    %cst_83 = arith.constant dense<0.000000e+00> : vector<2x512xf32>
    %239 = tpu.matmul %236, %26, %cst_83 {dimension_numbers = #tpu.dot_dimension_numbers<[1], [0], [0], [1], [0, 0, 1, 1], [], []>} : vector<2x128xf32>, vector<128x512xf32>, vector<2x512xf32> -> vector<2x512xf32>
    %240 = arith.addf %238, %239 : vector<2x512xf32>
    %241 = vector.extract_strided_slice %240 {offsets = [0, 0], sizes = [2, 128], strides = [1, 1]} : vector<2x512xf32> to vector<2x128xf32>
    %242 = arith.negf %241 : vector<2x128xf32>
    %243 = math.exp %242 : vector<2x128xf32>
    %cst_84 = arith.constant 1.000000e+00 : f32
    %244 = vector.broadcast %cst_84 : f32 to vector<2x128xf32>
    %245 = arith.addf %244, %243 : vector<2x128xf32>
    %246 = arith.divf %244, %245 : vector<2x128xf32>
    %247 = vector.extract_strided_slice %240 {offsets = [0, 128], sizes = [2, 128], strides = [1, 1]} : vector<2x512xf32> to vector<2x128xf32>
    %248 = arith.negf %247 : vector<2x128xf32>
    %249 = math.exp %248 : vector<2x128xf32>
    %cst_85 = arith.constant 1.000000e+00 : f32
    %250 = vector.broadcast %cst_85 : f32 to vector<2x128xf32>
    %251 = arith.addf %250, %249 : vector<2x128xf32>
    %252 = arith.divf %250, %251 : vector<2x128xf32>
    %253 = vector.extract_strided_slice %240 {offsets = [0, 256], sizes = [2, 128], strides = [1, 1]} : vector<2x512xf32> to vector<2x128xf32>
    %254 = math.tanh %253 : vector<2x128xf32>
    %255 = vector.extract_strided_slice %240 {offsets = [0, 384], sizes = [2, 128], strides = [1, 1]} : vector<2x512xf32> to vector<2x128xf32>
    %256 = arith.negf %255 : vector<2x128xf32>
    %257 = math.exp %256 : vector<2x128xf32>
    %cst_86 = arith.constant 1.000000e+00 : f32
    %258 = vector.broadcast %cst_86 : f32 to vector<2x128xf32>
    %259 = arith.addf %258, %257 : vector<2x128xf32>
    %260 = arith.divf %258, %259 : vector<2x128xf32>
    %261 = arith.mulf %252, %234 : vector<2x128xf32>
    %262 = arith.mulf %246, %254 : vector<2x128xf32>
    %263 = arith.addf %261, %262 : vector<2x128xf32>
    %264 = math.tanh %263 : vector<2x128xf32>
    %265 = arith.mulf %260, %264 : vector<2x128xf32>
    %c14_87 = arith.constant 14 : index
    %c0_88 = arith.constant 0 : index
    %266 = vector.load %arg13[%c14_87, %c0_88] : memref<16x128xf32, #tpu.memory_space<vmem>>, vector<2x128xf32>
    tpu.vector_store %arg13[%c14_87, %c0_88], %265 {strides = array<i32>} : memref<16x128xf32, #tpu.memory_space<vmem>>, vector<2x128xf32>,
    %c0_89 = arith.constant 0 : index
    %c0_90 = arith.constant 0 : index
    %267 = vector.load %arg5[%c0_89, %c0_90] : memref<128x512xf32, #tpu.memory_space<vmem>>, vector<128x512xf32>
    %c0_91 = arith.constant 0 : index
    %c0_92 = arith.constant 0 : index
    %268 = vector.load %arg13[%c0_91, %c0_92] : memref<16x128xf32, #tpu.memory_space<vmem>>, vector<16x128xf32>
    %c0_93 = arith.constant 0 : index
    %c0_94 = arith.constant 0 : index
    %269 = vector.load %arg4[%c0_93, %c0_94] : memref<128x512xf32, #tpu.memory_space<vmem>>, vector<128x512xf32>
    %cst_95 = arith.constant dense<0.000000e+00> : vector<16x512xf32>
    %270 = tpu.matmul %268, %269, %cst_95 {dimension_numbers = #tpu.dot_dimension_numbers<[1], [0], [0], [1], [0, 0, 1, 1], [], []>} : vector<16x128xf32>, vector<128x512xf32>, vector<16x512xf32> -> vector<16x512xf32>
    %c0_96 = arith.constant 0 : index
    %c0_97 = arith.constant 0 : index
    %271 = vector.load %arg6[%c0_96, %c0_97] : memref<1x512xf32, #tpu.memory_space<vmem>>, vector<1x512xf32>
    %272 = vector.broadcast %271 : vector<1x512xf32> to vector<16x512xf32>
    %273 = arith.addf %270, %272 : vector<16x512xf32>
    %cst_98 = arith.constant 0.000000e+00 : f32
    %274 = vector.broadcast %cst_98 : f32 to vector<2x128xf32>
    %cst_99 = arith.constant 0.000000e+00 : f32
    %275 = vector.broadcast %cst_99 : f32 to vector<2x128xf32>
    %276 = vector.extract_strided_slice %273 {offsets = [0, 0], sizes = [2, 512], strides = [1, 1]} : vector<16x512xf32> to vector<2x512xf32>
    %cst_100 = arith.constant dense<0.000000e+00> : vector<2x512xf32>
    %277 = tpu.matmul %274, %267, %cst_100 {dimension_numbers = #tpu.dot_dimension_numbers<[1], [0], [0], [1], [0, 0, 1, 1], [], []>} : vector<2x128xf32>, vector<128x512xf32>, vector<2x512xf32> -> vector<2x512xf32>
    %278 = arith.addf %276, %277 : vector<2x512xf32>
    %279 = vector.extract_strided_slice %278 {offsets = [0, 0], sizes = [2, 128], strides = [1, 1]} : vector<2x512xf32> to vector<2x128xf32>
    %280 = arith.negf %279 : vector<2x128xf32>
    %281 = math.exp %280 : vector<2x128xf32>
    %cst_101 = arith.constant 1.000000e+00 : f32
    %282 = vector.broadcast %cst_101 : f32 to vector<2x128xf32>
    %283 = arith.addf %282, %281 : vector<2x128xf32>
    %284 = arith.divf %282, %283 : vector<2x128xf32>
    %285 = vector.extract_strided_slice %278 {offsets = [0, 128], sizes = [2, 128], strides = [1, 1]} : vector<2x512xf32> to vector<2x128xf32>
    %286 = arith.negf %285 : vector<2x128xf32>
    %287 = math.exp %286 : vector<2x128xf32>
    %cst_102 = arith.constant 1.000000e+00 : f32
    %288 = vector.broadcast %cst_102 : f32 to vector<2x128xf32>
    %289 = arith.addf %288, %287 : vector<2x128xf32>
    %290 = arith.divf %288, %289 : vector<2x128xf32>
    %291 = vector.extract_strided_slice %278 {offsets = [0, 256], sizes = [2, 128], strides = [1, 1]} : vector<2x512xf32> to vector<2x128xf32>
    %292 = math.tanh %291 : vector<2x128xf32>
    %293 = vector.extract_strided_slice %278 {offsets = [0, 384], sizes = [2, 128], strides = [1, 1]} : vector<2x512xf32> to vector<2x128xf32>
    %294 = arith.negf %293 : vector<2x128xf32>
    %295 = math.exp %294 : vector<2x128xf32>
    %cst_103 = arith.constant 1.000000e+00 : f32
    %296 = vector.broadcast %cst_103 : f32 to vector<2x128xf32>
    %297 = arith.addf %296, %295 : vector<2x128xf32>
    %298 = arith.divf %296, %297 : vector<2x128xf32>
    %299 = arith.mulf %290, %275 : vector<2x128xf32>
    %300 = arith.mulf %284, %292 : vector<2x128xf32>
    %301 = arith.addf %299, %300 : vector<2x128xf32>
    %302 = math.tanh %301 : vector<2x128xf32>
    %303 = arith.mulf %298, %302 : vector<2x128xf32>
    %c0_104 = arith.constant 0 : index
    %c0_105 = arith.constant 0 : index
    %304 = vector.load %arg13[%c0_104, %c0_105] : memref<16x128xf32, #tpu.memory_space<vmem>>, vector<2x128xf32>
    tpu.vector_store %arg13[%c0_104, %c0_105], %303 {strides = array<i32>} : memref<16x128xf32, #tpu.memory_space<vmem>>, vector<2x128xf32>,
    %305 = vector.extract_strided_slice %273 {offsets = [2, 0], sizes = [2, 512], strides = [1, 1]} : vector<16x512xf32> to vector<2x512xf32>
    %cst_106 = arith.constant dense<0.000000e+00> : vector<2x512xf32>
    %306 = tpu.matmul %303, %267, %cst_106 {dimension_numbers = #tpu.dot_dimension_numbers<[1], [0], [0], [1], [0, 0, 1, 1], [], []>} : vector<2x128xf32>, vector<128x512xf32>, vector<2x512xf32> -> vector<2x512xf32>
    %307 = arith.addf %305, %306 : vector<2x512xf32>
    %308 = vector.extract_strided_slice %307 {offsets = [0, 0], sizes = [2, 128], strides = [1, 1]} : vector<2x512xf32> to vector<2x128xf32>
    %309 = arith.negf %308 : vector<2x128xf32>
    %310 = math.exp %309 : vector<2x128xf32>
    %cst_107 = arith.constant 1.000000e+00 : f32
    %311 = vector.broadcast %cst_107 : f32 to vector<2x128xf32>
    %312 = arith.addf %311, %310 : vector<2x128xf32>
    %313 = arith.divf %311, %312 : vector<2x128xf32>
    %314 = vector.extract_strided_slice %307 {offsets = [0, 128], sizes = [2, 128], strides = [1, 1]} : vector<2x512xf32> to vector<2x128xf32>
    %315 = arith.negf %314 : vector<2x128xf32>
    %316 = math.exp %315 : vector<2x128xf32>
    %cst_108 = arith.constant 1.000000e+00 : f32
    %317 = vector.broadcast %cst_108 : f32 to vector<2x128xf32>
    %318 = arith.addf %317, %316 : vector<2x128xf32>
    %319 = arith.divf %317, %318 : vector<2x128xf32>
    %320 = vector.extract_strided_slice %307 {offsets = [0, 256], sizes = [2, 128], strides = [1, 1]} : vector<2x512xf32> to vector<2x128xf32>
    %321 = math.tanh %320 : vector<2x128xf32>
    %322 = vector.extract_strided_slice %307 {offsets = [0, 384], sizes = [2, 128], strides = [1, 1]} : vector<2x512xf32> to vector<2x128xf32>
    %323 = arith.negf %322 : vector<2x128xf32>
    %324 = math.exp %323 : vector<2x128xf32>
    %cst_109 = arith.constant 1.000000e+00 : f32
    %325 = vector.broadcast %cst_109 : f32 to vector<2x128xf32>
    %326 = arith.addf %325, %324 : vector<2x128xf32>
    %327 = arith.divf %325, %326 : vector<2x128xf32>
    %328 = arith.mulf %319, %301 : vector<2x128xf32>
    %329 = arith.mulf %313, %321 : vector<2x128xf32>
    %330 = arith.addf %328, %329 : vector<2x128xf32>
    %331 = math.tanh %330 : vector<2x128xf32>
    %332 = arith.mulf %327, %331 : vector<2x128xf32>
    %c2_110 = arith.constant 2 : index
    %c0_111 = arith.constant 0 : index
    %333 = vector.load %arg13[%c2_110, %c0_111] : memref<16x128xf32, #tpu.memory_space<vmem>>, vector<2x128xf32>
    tpu.vector_store %arg13[%c2_110, %c0_111], %332 {strides = array<i32>} : memref<16x128xf32, #tpu.memory_space<vmem>>, vector<2x128xf32>,
    %334 = vector.extract_strided_slice %273 {offsets = [4, 0], sizes = [2, 512], strides = [1, 1]} : vector<16x512xf32> to vector<2x512xf32>
    %cst_112 = arith.constant dense<0.000000e+00> : vector<2x512xf32>
    %335 = tpu.matmul %332, %267, %cst_112 {dimension_numbers = #tpu.dot_dimension_numbers<[1], [0], [0], [1], [0, 0, 1, 1], [], []>} : vector<2x128xf32>, vector<128x512xf32>, vector<2x512xf32> -> vector<2x512xf32>
    %336 = arith.addf %334, %335 : vector<2x512xf32>
    %337 = vector.extract_strided_slice %336 {offsets = [0, 0], sizes = [2, 128], strides = [1, 1]} : vector<2x512xf32> to vector<2x128xf32>
    %338 = arith.negf %337 : vector<2x128xf32>
    %339 = math.exp %338 : vector<2x128xf32>
    %cst_113 = arith.constant 1.000000e+00 : f32
    %340 = vector.broadcast %cst_113 : f32 to vector<2x128xf32>
    %341 = arith.addf %340, %339 : vector<2x128xf32>
    %342 = arith.divf %340, %341 : vector<2x128xf32>
    %343 = vector.extract_strided_slice %336 {offsets = [0, 128], sizes = [2, 128], strides = [1, 1]} : vector<2x512xf32> to vector<2x128xf32>
    %344 = arith.negf %343 : vector<2x128xf32>
    %345 = math.exp %344 : vector<2x128xf32>
    %cst_114 = arith.constant 1.000000e+00 : f32
    %346 = vector.broadcast %cst_114 : f32 to vector<2x128xf32>
    %347 = arith.addf %346, %345 : vector<2x128xf32>
    %348 = arith.divf %346, %347 : vector<2x128xf32>
    %349 = vector.extract_strided_slice %336 {offsets = [0, 256], sizes = [2, 128], strides = [1, 1]} : vector<2x512xf32> to vector<2x128xf32>
    %350 = math.tanh %349 : vector<2x128xf32>
    %351 = vector.extract_strided_slice %336 {offsets = [0, 384], sizes = [2, 128], strides = [1, 1]} : vector<2x512xf32> to vector<2x128xf32>
    %352 = arith.negf %351 : vector<2x128xf32>
    %353 = math.exp %352 : vector<2x128xf32>
    %cst_115 = arith.constant 1.000000e+00 : f32
    %354 = vector.broadcast %cst_115 : f32 to vector<2x128xf32>
    %355 = arith.addf %354, %353 : vector<2x128xf32>
    %356 = arith.divf %354, %355 : vector<2x128xf32>
    %357 = arith.mulf %348, %330 : vector<2x128xf32>
    %358 = arith.mulf %342, %350 : vector<2x128xf32>
    %359 = arith.addf %357, %358 : vector<2x128xf32>
    %360 = math.tanh %359 : vector<2x128xf32>
    %361 = arith.mulf %356, %360 : vector<2x128xf32>
    %c4_116 = arith.constant 4 : index
    %c0_117 = arith.constant 0 : index
    %362 = vector.load %arg13[%c4_116, %c0_117] : memref<16x128xf32, #tpu.memory_space<vmem>>, vector<2x128xf32>
    tpu.vector_store %arg13[%c4_116, %c0_117], %361 {strides = array<i32>} : memref<16x128xf32, #tpu.memory_space<vmem>>, vector<2x128xf32>,
    %363 = vector.extract_strided_slice %273 {offsets = [6, 0], sizes = [2, 512], strides = [1, 1]} : vector<16x512xf32> to vector<2x512xf32>
    %cst_118 = arith.constant dense<0.000000e+00> : vector<2x512xf32>
    %364 = tpu.matmul %361, %267, %cst_118 {dimension_numbers = #tpu.dot_dimension_numbers<[1], [0], [0], [1], [0, 0, 1, 1], [], []>} : vector<2x128xf32>, vector<128x512xf32>, vector<2x512xf32> -> vector<2x512xf32>
    %365 = arith.addf %363, %364 : vector<2x512xf32>
    %366 = vector.extract_strided_slice %365 {offsets = [0, 0], sizes = [2, 128], strides = [1, 1]} : vector<2x512xf32> to vector<2x128xf32>
    %367 = arith.negf %366 : vector<2x128xf32>
    %368 = math.exp %367 : vector<2x128xf32>
    %cst_119 = arith.constant 1.000000e+00 : f32
    %369 = vector.broadcast %cst_119 : f32 to vector<2x128xf32>
    %370 = arith.addf %369, %368 : vector<2x128xf32>
    %371 = arith.divf %369, %370 : vector<2x128xf32>
    %372 = vector.extract_strided_slice %365 {offsets = [0, 128], sizes = [2, 128], strides = [1, 1]} : vector<2x512xf32> to vector<2x128xf32>
    %373 = arith.negf %372 : vector<2x128xf32>
    %374 = math.exp %373 : vector<2x128xf32>
    %cst_120 = arith.constant 1.000000e+00 : f32
    %375 = vector.broadcast %cst_120 : f32 to vector<2x128xf32>
    %376 = arith.addf %375, %374 : vector<2x128xf32>
    %377 = arith.divf %375, %376 : vector<2x128xf32>
    %378 = vector.extract_strided_slice %365 {offsets = [0, 256], sizes = [2, 128], strides = [1, 1]} : vector<2x512xf32> to vector<2x128xf32>
    %379 = math.tanh %378 : vector<2x128xf32>
    %380 = vector.extract_strided_slice %365 {offsets = [0, 384], sizes = [2, 128], strides = [1, 1]} : vector<2x512xf32> to vector<2x128xf32>
    %381 = arith.negf %380 : vector<2x128xf32>
    %382 = math.exp %381 : vector<2x128xf32>
    %cst_121 = arith.constant 1.000000e+00 : f32
    %383 = vector.broadcast %cst_121 : f32 to vector<2x128xf32>
    %384 = arith.addf %383, %382 : vector<2x128xf32>
    %385 = arith.divf %383, %384 : vector<2x128xf32>
    %386 = arith.mulf %377, %359 : vector<2x128xf32>
    %387 = arith.mulf %371, %379 : vector<2x128xf32>
    %388 = arith.addf %386, %387 : vector<2x128xf32>
    %389 = math.tanh %388 : vector<2x128xf32>
    %390 = arith.mulf %385, %389 : vector<2x128xf32>
    %c6_122 = arith.constant 6 : index
    %c0_123 = arith.constant 0 : index
    %391 = vector.load %arg13[%c6_122, %c0_123] : memref<16x128xf32, #tpu.memory_space<vmem>>, vector<2x128xf32>
    tpu.vector_store %arg13[%c6_122, %c0_123], %390 {strides = array<i32>} : memref<16x128xf32, #tpu.memory_space<vmem>>, vector<2x128xf32>,
    %392 = vector.extract_strided_slice %273 {offsets = [8, 0], sizes = [2, 512], strides = [1, 1]} : vector<16x512xf32> to vector<2x512xf32>
    %cst_124 = arith.constant dense<0.000000e+00> : vector<2x512xf32>
    %393 = tpu.matmul %390, %267, %cst_124 {dimension_numbers = #tpu.dot_dimension_numbers<[1], [0], [0], [1], [0, 0, 1, 1], [], []>} : vector<2x128xf32>, vector<128x512xf32>, vector<2x512xf32> -> vector<2x512xf32>
    %394 = arith.addf %392, %393 : vector<2x512xf32>
    %395 = vector.extract_strided_slice %394 {offsets = [0, 0], sizes = [2, 128], strides = [1, 1]} : vector<2x512xf32> to vector<2x128xf32>
    %396 = arith.negf %395 : vector<2x128xf32>
    %397 = math.exp %396 : vector<2x128xf32>
    %cst_125 = arith.constant 1.000000e+00 : f32
    %398 = vector.broadcast %cst_125 : f32 to vector<2x128xf32>
    %399 = arith.addf %398, %397 : vector<2x128xf32>
    %400 = arith.divf %398, %399 : vector<2x128xf32>
    %401 = vector.extract_strided_slice %394 {offsets = [0, 128], sizes = [2, 128], strides = [1, 1]} : vector<2x512xf32> to vector<2x128xf32>
    %402 = arith.negf %401 : vector<2x128xf32>
    %403 = math.exp %402 : vector<2x128xf32>
    %cst_126 = arith.constant 1.000000e+00 : f32
    %404 = vector.broadcast %cst_126 : f32 to vector<2x128xf32>
    %405 = arith.addf %404, %403 : vector<2x128xf32>
    %406 = arith.divf %404, %405 : vector<2x128xf32>
    %407 = vector.extract_strided_slice %394 {offsets = [0, 256], sizes = [2, 128], strides = [1, 1]} : vector<2x512xf32> to vector<2x128xf32>
    %408 = math.tanh %407 : vector<2x128xf32>
    %409 = vector.extract_strided_slice %394 {offsets = [0, 384], sizes = [2, 128], strides = [1, 1]} : vector<2x512xf32> to vector<2x128xf32>
    %410 = arith.negf %409 : vector<2x128xf32>
    %411 = math.exp %410 : vector<2x128xf32>
    %cst_127 = arith.constant 1.000000e+00 : f32
    %412 = vector.broadcast %cst_127 : f32 to vector<2x128xf32>
    %413 = arith.addf %412, %411 : vector<2x128xf32>
    %414 = arith.divf %412, %413 : vector<2x128xf32>
    %415 = arith.mulf %406, %388 : vector<2x128xf32>
    %416 = arith.mulf %400, %408 : vector<2x128xf32>
    %417 = arith.addf %415, %416 : vector<2x128xf32>
    %418 = math.tanh %417 : vector<2x128xf32>
    %419 = arith.mulf %414, %418 : vector<2x128xf32>
    %c8_128 = arith.constant 8 : index
    %c0_129 = arith.constant 0 : index
    %420 = vector.load %arg13[%c8_128, %c0_129] : memref<16x128xf32, #tpu.memory_space<vmem>>, vector<2x128xf32>
    tpu.vector_store %arg13[%c8_128, %c0_129], %419 {strides = array<i32>} : memref<16x128xf32, #tpu.memory_space<vmem>>, vector<2x128xf32>,
    %421 = vector.extract_strided_slice %273 {offsets = [10, 0], sizes = [2, 512], strides = [1, 1]} : vector<16x512xf32> to vector<2x512xf32>
    %cst_130 = arith.constant dense<0.000000e+00> : vector<2x512xf32>
    %422 = tpu.matmul %419, %267, %cst_130 {dimension_numbers = #tpu.dot_dimension_numbers<[1], [0], [0], [1], [0, 0, 1, 1], [], []>} : vector<2x128xf32>, vector<128x512xf32>, vector<2x512xf32> -> vector<2x512xf32>
    %423 = arith.addf %421, %422 : vector<2x512xf32>
    %424 = vector.extract_strided_slice %423 {offsets = [0, 0], sizes = [2, 128], strides = [1, 1]} : vector<2x512xf32> to vector<2x128xf32>
    %425 = arith.negf %424 : vector<2x128xf32>
    %426 = math.exp %425 : vector<2x128xf32>
    %cst_131 = arith.constant 1.000000e+00 : f32
    %427 = vector.broadcast %cst_131 : f32 to vector<2x128xf32>
    %428 = arith.addf %427, %426 : vector<2x128xf32>
    %429 = arith.divf %427, %428 : vector<2x128xf32>
    %430 = vector.extract_strided_slice %423 {offsets = [0, 128], sizes = [2, 128], strides = [1, 1]} : vector<2x512xf32> to vector<2x128xf32>
    %431 = arith.negf %430 : vector<2x128xf32>
    %432 = math.exp %431 : vector<2x128xf32>
    %cst_132 = arith.constant 1.000000e+00 : f32
    %433 = vector.broadcast %cst_132 : f32 to vector<2x128xf32>
    %434 = arith.addf %433, %432 : vector<2x128xf32>
    %435 = arith.divf %433, %434 : vector<2x128xf32>
    %436 = vector.extract_strided_slice %423 {offsets = [0, 256], sizes = [2, 128], strides = [1, 1]} : vector<2x512xf32> to vector<2x128xf32>
    %437 = math.tanh %436 : vector<2x128xf32>
    %438 = vector.extract_strided_slice %423 {offsets = [0, 384], sizes = [2, 128], strides = [1, 1]} : vector<2x512xf32> to vector<2x128xf32>
    %439 = arith.negf %438 : vector<2x128xf32>
    %440 = math.exp %439 : vector<2x128xf32>
    %cst_133 = arith.constant 1.000000e+00 : f32
    %441 = vector.broadcast %cst_133 : f32 to vector<2x128xf32>
    %442 = arith.addf %441, %440 : vector<2x128xf32>
    %443 = arith.divf %441, %442 : vector<2x128xf32>
    %444 = arith.mulf %435, %417 : vector<2x128xf32>
    %445 = arith.mulf %429, %437 : vector<2x128xf32>
    %446 = arith.addf %444, %445 : vector<2x128xf32>
    %447 = math.tanh %446 : vector<2x128xf32>
    %448 = arith.mulf %443, %447 : vector<2x128xf32>
    %c10_134 = arith.constant 10 : index
    %c0_135 = arith.constant 0 : index
    %449 = vector.load %arg13[%c10_134, %c0_135] : memref<16x128xf32, #tpu.memory_space<vmem>>, vector<2x128xf32>
    tpu.vector_store %arg13[%c10_134, %c0_135], %448 {strides = array<i32>} : memref<16x128xf32, #tpu.memory_space<vmem>>, vector<2x128xf32>,
    %450 = vector.extract_strided_slice %273 {offsets = [12, 0], sizes = [2, 512], strides = [1, 1]} : vector<16x512xf32> to vector<2x512xf32>
    %cst_136 = arith.constant dense<0.000000e+00> : vector<2x512xf32>
    %451 = tpu.matmul %448, %267, %cst_136 {dimension_numbers = #tpu.dot_dimension_numbers<[1], [0], [0], [1], [0, 0, 1, 1], [], []>} : vector<2x128xf32>, vector<128x512xf32>, vector<2x512xf32> -> vector<2x512xf32>
    %452 = arith.addf %450, %451 : vector<2x512xf32>
    %453 = vector.extract_strided_slice %452 {offsets = [0, 0], sizes = [2, 128], strides = [1, 1]} : vector<2x512xf32> to vector<2x128xf32>
    %454 = arith.negf %453 : vector<2x128xf32>
    %455 = math.exp %454 : vector<2x128xf32>
    %cst_137 = arith.constant 1.000000e+00 : f32
    %456 = vector.broadcast %cst_137 : f32 to vector<2x128xf32>
    %457 = arith.addf %456, %455 : vector<2x128xf32>
    %458 = arith.divf %456, %457 : vector<2x128xf32>
    %459 = vector.extract_strided_slice %452 {offsets = [0, 128], sizes = [2, 128], strides = [1, 1]} : vector<2x512xf32> to vector<2x128xf32>
    %460 = arith.negf %459 : vector<2x128xf32>
    %461 = math.exp %460 : vector<2x128xf32>
    %cst_138 = arith.constant 1.000000e+00 : f32
    %462 = vector.broadcast %cst_138 : f32 to vector<2x128xf32>
    %463 = arith.addf %462, %461 : vector<2x128xf32>
    %464 = arith.divf %462, %463 : vector<2x128xf32>
    %465 = vector.extract_strided_slice %452 {offsets = [0, 256], sizes = [2, 128], strides = [1, 1]} : vector<2x512xf32> to vector<2x128xf32>
    %466 = math.tanh %465 : vector<2x128xf32>
    %467 = vector.extract_strided_slice %452 {offsets = [0, 384], sizes = [2, 128], strides = [1, 1]} : vector<2x512xf32> to vector<2x128xf32>
    %468 = arith.negf %467 : vector<2x128xf32>
    %469 = math.exp %468 : vector<2x128xf32>
    %cst_139 = arith.constant 1.000000e+00 : f32
    %470 = vector.broadcast %cst_139 : f32 to vector<2x128xf32>
    %471 = arith.addf %470, %469 : vector<2x128xf32>
    %472 = arith.divf %470, %471 : vector<2x128xf32>
    %473 = arith.mulf %464, %446 : vector<2x128xf32>
    %474 = arith.mulf %458, %466 : vector<2x128xf32>
    %475 = arith.addf %473, %474 : vector<2x128xf32>
    %476 = math.tanh %475 : vector<2x128xf32>
    %477 = arith.mulf %472, %476 : vector<2x128xf32>
    %c12_140 = arith.constant 12 : index
    %c0_141 = arith.constant 0 : index
    %478 = vector.load %arg13[%c12_140, %c0_141] : memref<16x128xf32, #tpu.memory_space<vmem>>, vector<2x128xf32>
    tpu.vector_store %arg13[%c12_140, %c0_141], %477 {strides = array<i32>} : memref<16x128xf32, #tpu.memory_space<vmem>>, vector<2x128xf32>,
    %479 = vector.extract_strided_slice %273 {offsets = [14, 0], sizes = [2, 512], strides = [1, 1]} : vector<16x512xf32> to vector<2x512xf32>
    %cst_142 = arith.constant dense<0.000000e+00> : vector<2x512xf32>
    %480 = tpu.matmul %477, %267, %cst_142 {dimension_numbers = #tpu.dot_dimension_numbers<[1], [0], [0], [1], [0, 0, 1, 1], [], []>} : vector<2x128xf32>, vector<128x512xf32>, vector<2x512xf32> -> vector<2x512xf32>
    %481 = arith.addf %479, %480 : vector<2x512xf32>
    %482 = vector.extract_strided_slice %481 {offsets = [0, 0], sizes = [2, 128], strides = [1, 1]} : vector<2x512xf32> to vector<2x128xf32>
    %483 = arith.negf %482 : vector<2x128xf32>
    %484 = math.exp %483 : vector<2x128xf32>
    %cst_143 = arith.constant 1.000000e+00 : f32
    %485 = vector.broadcast %cst_143 : f32 to vector<2x128xf32>
    %486 = arith.addf %485, %484 : vector<2x128xf32>
    %487 = arith.divf %485, %486 : vector<2x128xf32>
    %488 = vector.extract_strided_slice %481 {offsets = [0, 128], sizes = [2, 128], strides = [1, 1]} : vector<2x512xf32> to vector<2x128xf32>
    %489 = arith.negf %488 : vector<2x128xf32>
    %490 = math.exp %489 : vector<2x128xf32>
    %cst_144 = arith.constant 1.000000e+00 : f32
    %491 = vector.broadcast %cst_144 : f32 to vector<2x128xf32>
    %492 = arith.addf %491, %490 : vector<2x128xf32>
    %493 = arith.divf %491, %492 : vector<2x128xf32>
    %494 = vector.extract_strided_slice %481 {offsets = [0, 256], sizes = [2, 128], strides = [1, 1]} : vector<2x512xf32> to vector<2x128xf32>
    %495 = math.tanh %494 : vector<2x128xf32>
    %496 = vector.extract_strided_slice %481 {offsets = [0, 384], sizes = [2, 128], strides = [1, 1]} : vector<2x512xf32> to vector<2x128xf32>
    %497 = arith.negf %496 : vector<2x128xf32>
    %498 = math.exp %497 : vector<2x128xf32>
    %cst_145 = arith.constant 1.000000e+00 : f32
    %499 = vector.broadcast %cst_145 : f32 to vector<2x128xf32>
    %500 = arith.addf %499, %498 : vector<2x128xf32>
    %501 = arith.divf %499, %500 : vector<2x128xf32>
    %502 = arith.mulf %493, %475 : vector<2x128xf32>
    %503 = arith.mulf %487, %495 : vector<2x128xf32>
    %504 = arith.addf %502, %503 : vector<2x128xf32>
    %505 = math.tanh %504 : vector<2x128xf32>
    %506 = arith.mulf %501, %505 : vector<2x128xf32>
    %c14_146 = arith.constant 14 : index
    %c0_147 = arith.constant 0 : index
    %507 = vector.load %arg13[%c14_146, %c0_147] : memref<16x128xf32, #tpu.memory_space<vmem>>, vector<2x128xf32>
    tpu.vector_store %arg13[%c14_146, %c0_147], %506 {strides = array<i32>} : memref<16x128xf32, #tpu.memory_space<vmem>>, vector<2x128xf32>,
    %c0_148 = arith.constant 0 : index
    %c0_149 = arith.constant 0 : index
    %508 = vector.load %arg8[%c0_148, %c0_149] : memref<128x512xf32, #tpu.memory_space<vmem>>, vector<128x512xf32>
    %c0_150 = arith.constant 0 : index
    %c0_151 = arith.constant 0 : index
    %509 = vector.load %arg13[%c0_150, %c0_151] : memref<16x128xf32, #tpu.memory_space<vmem>>, vector<16x128xf32>
    %c0_152 = arith.constant 0 : index
    %c0_153 = arith.constant 0 : index
    %510 = vector.load %arg7[%c0_152, %c0_153] : memref<128x512xf32, #tpu.memory_space<vmem>>, vector<128x512xf32>
    %cst_154 = arith.constant dense<0.000000e+00> : vector<16x512xf32>
    %511 = tpu.matmul %509, %510, %cst_154 {dimension_numbers = #tpu.dot_dimension_numbers<[1], [0], [0], [1], [0, 0, 1, 1], [], []>} : vector<16x128xf32>, vector<128x512xf32>, vector<16x512xf32> -> vector<16x512xf32>
    %c0_155 = arith.constant 0 : index
    %c0_156 = arith.constant 0 : index
    %512 = vector.load %arg9[%c0_155, %c0_156] : memref<1x512xf32, #tpu.memory_space<vmem>>, vector<1x512xf32>
    %513 = vector.broadcast %512 : vector<1x512xf32> to vector<16x512xf32>
    %514 = arith.addf %511, %513 : vector<16x512xf32>
    %cst_157 = arith.constant 0.000000e+00 : f32
    %515 = vector.broadcast %cst_157 : f32 to vector<2x128xf32>
    %cst_158 = arith.constant 0.000000e+00 : f32
    %516 = vector.broadcast %cst_158 : f32 to vector<2x128xf32>
    %517 = vector.extract_strided_slice %514 {offsets = [0, 0], sizes = [2, 512], strides = [1, 1]} : vector<16x512xf32> to vector<2x512xf32>
    %cst_159 = arith.constant dense<0.000000e+00> : vector<2x512xf32>
    %518 = tpu.matmul %515, %508, %cst_159 {dimension_numbers = #tpu.dot_dimension_numbers<[1], [0], [0], [1], [0, 0, 1, 1], [], []>} : vector<2x128xf32>, vector<128x512xf32>, vector<2x512xf32> -> vector<2x512xf32>
    %519 = arith.addf %517, %518 : vector<2x512xf32>
    %520 = vector.extract_strided_slice %519 {offsets = [0, 0], sizes = [2, 128], strides = [1, 1]} : vector<2x512xf32> to vector<2x128xf32>
    %521 = arith.negf %520 : vector<2x128xf32>
    %522 = math.exp %521 : vector<2x128xf32>
    %cst_160 = arith.constant 1.000000e+00 : f32
    %523 = vector.broadcast %cst_160 : f32 to vector<2x128xf32>
    %524 = arith.addf %523, %522 : vector<2x128xf32>
    %525 = arith.divf %523, %524 : vector<2x128xf32>
    %526 = vector.extract_strided_slice %519 {offsets = [0, 128], sizes = [2, 128], strides = [1, 1]} : vector<2x512xf32> to vector<2x128xf32>
    %527 = arith.negf %526 : vector<2x128xf32>
    %528 = math.exp %527 : vector<2x128xf32>
    %cst_161 = arith.constant 1.000000e+00 : f32
    %529 = vector.broadcast %cst_161 : f32 to vector<2x128xf32>
    %530 = arith.addf %529, %528 : vector<2x128xf32>
    %531 = arith.divf %529, %530 : vector<2x128xf32>
    %532 = vector.extract_strided_slice %519 {offsets = [0, 256], sizes = [2, 128], strides = [1, 1]} : vector<2x512xf32> to vector<2x128xf32>
    %533 = math.tanh %532 : vector<2x128xf32>
    %534 = vector.extract_strided_slice %519 {offsets = [0, 384], sizes = [2, 128], strides = [1, 1]} : vector<2x512xf32> to vector<2x128xf32>
    %535 = arith.negf %534 : vector<2x128xf32>
    %536 = math.exp %535 : vector<2x128xf32>
    %cst_162 = arith.constant 1.000000e+00 : f32
    %537 = vector.broadcast %cst_162 : f32 to vector<2x128xf32>
    %538 = arith.addf %537, %536 : vector<2x128xf32>
    %539 = arith.divf %537, %538 : vector<2x128xf32>
    %540 = arith.mulf %531, %516 : vector<2x128xf32>
    %541 = arith.mulf %525, %533 : vector<2x128xf32>
    %542 = arith.addf %540, %541 : vector<2x128xf32>
    %543 = math.tanh %542 : vector<2x128xf32>
    %544 = arith.mulf %539, %543 : vector<2x128xf32>
    %545 = vector.extract_strided_slice %514 {offsets = [2, 0], sizes = [2, 512], strides = [1, 1]} : vector<16x512xf32> to vector<2x512xf32>
    %cst_163 = arith.constant dense<0.000000e+00> : vector<2x512xf32>
    %546 = tpu.matmul %544, %508, %cst_163 {dimension_numbers = #tpu.dot_dimension_numbers<[1], [0], [0], [1], [0, 0, 1, 1], [], []>} : vector<2x128xf32>, vector<128x512xf32>, vector<2x512xf32> -> vector<2x512xf32>
    %547 = arith.addf %545, %546 : vector<2x512xf32>
    %548 = vector.extract_strided_slice %547 {offsets = [0, 0], sizes = [2, 128], strides = [1, 1]} : vector<2x512xf32> to vector<2x128xf32>
    %549 = arith.negf %548 : vector<2x128xf32>
    %550 = math.exp %549 : vector<2x128xf32>
    %cst_164 = arith.constant 1.000000e+00 : f32
    %551 = vector.broadcast %cst_164 : f32 to vector<2x128xf32>
    %552 = arith.addf %551, %550 : vector<2x128xf32>
    %553 = arith.divf %551, %552 : vector<2x128xf32>
    %554 = vector.extract_strided_slice %547 {offsets = [0, 128], sizes = [2, 128], strides = [1, 1]} : vector<2x512xf32> to vector<2x128xf32>
    %555 = arith.negf %554 : vector<2x128xf32>
    %556 = math.exp %555 : vector<2x128xf32>
    %cst_165 = arith.constant 1.000000e+00 : f32
    %557 = vector.broadcast %cst_165 : f32 to vector<2x128xf32>
    %558 = arith.addf %557, %556 : vector<2x128xf32>
    %559 = arith.divf %557, %558 : vector<2x128xf32>
    %560 = vector.extract_strided_slice %547 {offsets = [0, 256], sizes = [2, 128], strides = [1, 1]} : vector<2x512xf32> to vector<2x128xf32>
    %561 = math.tanh %560 : vector<2x128xf32>
    %562 = vector.extract_strided_slice %547 {offsets = [0, 384], sizes = [2, 128], strides = [1, 1]} : vector<2x512xf32> to vector<2x128xf32>
    %563 = arith.negf %562 : vector<2x128xf32>
    %564 = math.exp %563 : vector<2x128xf32>
    %cst_166 = arith.constant 1.000000e+00 : f32
    %565 = vector.broadcast %cst_166 : f32 to vector<2x128xf32>
    %566 = arith.addf %565, %564 : vector<2x128xf32>
    %567 = arith.divf %565, %566 : vector<2x128xf32>
    %568 = arith.mulf %559, %542 : vector<2x128xf32>
    %569 = arith.mulf %553, %561 : vector<2x128xf32>
    %570 = arith.addf %568, %569 : vector<2x128xf32>
    %571 = math.tanh %570 : vector<2x128xf32>
    %572 = arith.mulf %567, %571 : vector<2x128xf32>
    %573 = vector.extract_strided_slice %514 {offsets = [4, 0], sizes = [2, 512], strides = [1, 1]} : vector<16x512xf32> to vector<2x512xf32>
    %cst_167 = arith.constant dense<0.000000e+00> : vector<2x512xf32>
    %574 = tpu.matmul %572, %508, %cst_167 {dimension_numbers = #tpu.dot_dimension_numbers<[1], [0], [0], [1], [0, 0, 1, 1], [], []>} : vector<2x128xf32>, vector<128x512xf32>, vector<2x512xf32> -> vector<2x512xf32>
    %575 = arith.addf %573, %574 : vector<2x512xf32>
    %576 = vector.extract_strided_slice %575 {offsets = [0, 0], sizes = [2, 128], strides = [1, 1]} : vector<2x512xf32> to vector<2x128xf32>
    %577 = arith.negf %576 : vector<2x128xf32>
    %578 = math.exp %577 : vector<2x128xf32>
    %cst_168 = arith.constant 1.000000e+00 : f32
    %579 = vector.broadcast %cst_168 : f32 to vector<2x128xf32>
    %580 = arith.addf %579, %578 : vector<2x128xf32>
    %581 = arith.divf %579, %580 : vector<2x128xf32>
    %582 = vector.extract_strided_slice %575 {offsets = [0, 128], sizes = [2, 128], strides = [1, 1]} : vector<2x512xf32> to vector<2x128xf32>
    %583 = arith.negf %582 : vector<2x128xf32>
    %584 = math.exp %583 : vector<2x128xf32>
    %cst_169 = arith.constant 1.000000e+00 : f32
    %585 = vector.broadcast %cst_169 : f32 to vector<2x128xf32>
    %586 = arith.addf %585, %584 : vector<2x128xf32>
    %587 = arith.divf %585, %586 : vector<2x128xf32>
    %588 = vector.extract_strided_slice %575 {offsets = [0, 256], sizes = [2, 128], strides = [1, 1]} : vector<2x512xf32> to vector<2x128xf32>
    %589 = math.tanh %588 : vector<2x128xf32>
    %590 = vector.extract_strided_slice %575 {offsets = [0, 384], sizes = [2, 128], strides = [1, 1]} : vector<2x512xf32> to vector<2x128xf32>
    %591 = arith.negf %590 : vector<2x128xf32>
    %592 = math.exp %591 : vector<2x128xf32>
    %cst_170 = arith.constant 1.000000e+00 : f32
    %593 = vector.broadcast %cst_170 : f32 to vector<2x128xf32>
    %594 = arith.addf %593, %592 : vector<2x128xf32>
    %595 = arith.divf %593, %594 : vector<2x128xf32>
    %596 = arith.mulf %587, %570 : vector<2x128xf32>
    %597 = arith.mulf %581, %589 : vector<2x128xf32>
    %598 = arith.addf %596, %597 : vector<2x128xf32>
    %599 = math.tanh %598 : vector<2x128xf32>
    %600 = arith.mulf %595, %599 : vector<2x128xf32>
    %601 = vector.extract_strided_slice %514 {offsets = [6, 0], sizes = [2, 512], strides = [1, 1]} : vector<16x512xf32> to vector<2x512xf32>
    %cst_171 = arith.constant dense<0.000000e+00> : vector<2x512xf32>
    %602 = tpu.matmul %600, %508, %cst_171 {dimension_numbers = #tpu.dot_dimension_numbers<[1], [0], [0], [1], [0, 0, 1, 1], [], []>} : vector<2x128xf32>, vector<128x512xf32>, vector<2x512xf32> -> vector<2x512xf32>
    %603 = arith.addf %601, %602 : vector<2x512xf32>
    %604 = vector.extract_strided_slice %603 {offsets = [0, 0], sizes = [2, 128], strides = [1, 1]} : vector<2x512xf32> to vector<2x128xf32>
    %605 = arith.negf %604 : vector<2x128xf32>
    %606 = math.exp %605 : vector<2x128xf32>
    %cst_172 = arith.constant 1.000000e+00 : f32
    %607 = vector.broadcast %cst_172 : f32 to vector<2x128xf32>
    %608 = arith.addf %607, %606 : vector<2x128xf32>
    %609 = arith.divf %607, %608 : vector<2x128xf32>
    %610 = vector.extract_strided_slice %603 {offsets = [0, 128], sizes = [2, 128], strides = [1, 1]} : vector<2x512xf32> to vector<2x128xf32>
    %611 = arith.negf %610 : vector<2x128xf32>
    %612 = math.exp %611 : vector<2x128xf32>
    %cst_173 = arith.constant 1.000000e+00 : f32
    %613 = vector.broadcast %cst_173 : f32 to vector<2x128xf32>
    %614 = arith.addf %613, %612 : vector<2x128xf32>
    %615 = arith.divf %613, %614 : vector<2x128xf32>
    %616 = vector.extract_strided_slice %603 {offsets = [0, 256], sizes = [2, 128], strides = [1, 1]} : vector<2x512xf32> to vector<2x128xf32>
    %617 = math.tanh %616 : vector<2x128xf32>
    %618 = vector.extract_strided_slice %603 {offsets = [0, 384], sizes = [2, 128], strides = [1, 1]} : vector<2x512xf32> to vector<2x128xf32>
    %619 = arith.negf %618 : vector<2x128xf32>
    %620 = math.exp %619 : vector<2x128xf32>
    %cst_174 = arith.constant 1.000000e+00 : f32
    %621 = vector.broadcast %cst_174 : f32 to vector<2x128xf32>
    %622 = arith.addf %621, %620 : vector<2x128xf32>
    %623 = arith.divf %621, %622 : vector<2x128xf32>
    %624 = arith.mulf %615, %598 : vector<2x128xf32>
    %625 = arith.mulf %609, %617 : vector<2x128xf32>
    %626 = arith.addf %624, %625 : vector<2x128xf32>
    %627 = math.tanh %626 : vector<2x128xf32>
    %628 = arith.mulf %623, %627 : vector<2x128xf32>
    %629 = vector.extract_strided_slice %514 {offsets = [8, 0], sizes = [2, 512], strides = [1, 1]} : vector<16x512xf32> to vector<2x512xf32>
    %cst_175 = arith.constant dense<0.000000e+00> : vector<2x512xf32>
    %630 = tpu.matmul %628, %508, %cst_175 {dimension_numbers = #tpu.dot_dimension_numbers<[1], [0], [0], [1], [0, 0, 1, 1], [], []>} : vector<2x128xf32>, vector<128x512xf32>, vector<2x512xf32> -> vector<2x512xf32>
    %631 = arith.addf %629, %630 : vector<2x512xf32>
    %632 = vector.extract_strided_slice %631 {offsets = [0, 0], sizes = [2, 128], strides = [1, 1]} : vector<2x512xf32> to vector<2x128xf32>
    %633 = arith.negf %632 : vector<2x128xf32>
    %634 = math.exp %633 : vector<2x128xf32>
    %cst_176 = arith.constant 1.000000e+00 : f32
    %635 = vector.broadcast %cst_176 : f32 to vector<2x128xf32>
    %636 = arith.addf %635, %634 : vector<2x128xf32>
    %637 = arith.divf %635, %636 : vector<2x128xf32>
    %638 = vector.extract_strided_slice %631 {offsets = [0, 128], sizes = [2, 128], strides = [1, 1]} : vector<2x512xf32> to vector<2x128xf32>
    %639 = arith.negf %638 : vector<2x128xf32>
    %640 = math.exp %639 : vector<2x128xf32>
    %cst_177 = arith.constant 1.000000e+00 : f32
    %641 = vector.broadcast %cst_177 : f32 to vector<2x128xf32>
    %642 = arith.addf %641, %640 : vector<2x128xf32>
    %643 = arith.divf %641, %642 : vector<2x128xf32>
    %644 = vector.extract_strided_slice %631 {offsets = [0, 256], sizes = [2, 128], strides = [1, 1]} : vector<2x512xf32> to vector<2x128xf32>
    %645 = math.tanh %644 : vector<2x128xf32>
    %646 = vector.extract_strided_slice %631 {offsets = [0, 384], sizes = [2, 128], strides = [1, 1]} : vector<2x512xf32> to vector<2x128xf32>
    %647 = arith.negf %646 : vector<2x128xf32>
    %648 = math.exp %647 : vector<2x128xf32>
    %cst_178 = arith.constant 1.000000e+00 : f32
    %649 = vector.broadcast %cst_178 : f32 to vector<2x128xf32>
    %650 = arith.addf %649, %648 : vector<2x128xf32>
    %651 = arith.divf %649, %650 : vector<2x128xf32>
    %652 = arith.mulf %643, %626 : vector<2x128xf32>
    %653 = arith.mulf %637, %645 : vector<2x128xf32>
    %654 = arith.addf %652, %653 : vector<2x128xf32>
    %655 = math.tanh %654 : vector<2x128xf32>
    %656 = arith.mulf %651, %655 : vector<2x128xf32>
    %657 = vector.extract_strided_slice %514 {offsets = [10, 0], sizes = [2, 512], strides = [1, 1]} : vector<16x512xf32> to vector<2x512xf32>
    %cst_179 = arith.constant dense<0.000000e+00> : vector<2x512xf32>
    %658 = tpu.matmul %656, %508, %cst_179 {dimension_numbers = #tpu.dot_dimension_numbers<[1], [0], [0], [1], [0, 0, 1, 1], [], []>} : vector<2x128xf32>, vector<128x512xf32>, vector<2x512xf32> -> vector<2x512xf32>
    %659 = arith.addf %657, %658 : vector<2x512xf32>
    %660 = vector.extract_strided_slice %659 {offsets = [0, 0], sizes = [2, 128], strides = [1, 1]} : vector<2x512xf32> to vector<2x128xf32>
    %661 = arith.negf %660 : vector<2x128xf32>
    %662 = math.exp %661 : vector<2x128xf32>
    %cst_180 = arith.constant 1.000000e+00 : f32
    %663 = vector.broadcast %cst_180 : f32 to vector<2x128xf32>
    %664 = arith.addf %663, %662 : vector<2x128xf32>
    %665 = arith.divf %663, %664 : vector<2x128xf32>
    %666 = vector.extract_strided_slice %659 {offsets = [0, 128], sizes = [2, 128], strides = [1, 1]} : vector<2x512xf32> to vector<2x128xf32>
    %667 = arith.negf %666 : vector<2x128xf32>
    %668 = math.exp %667 : vector<2x128xf32>
    %cst_181 = arith.constant 1.000000e+00 : f32
    %669 = vector.broadcast %cst_181 : f32 to vector<2x128xf32>
    %670 = arith.addf %669, %668 : vector<2x128xf32>
    %671 = arith.divf %669, %670 : vector<2x128xf32>
    %672 = vector.extract_strided_slice %659 {offsets = [0, 256], sizes = [2, 128], strides = [1, 1]} : vector<2x512xf32> to vector<2x128xf32>
    %673 = math.tanh %672 : vector<2x128xf32>
    %674 = vector.extract_strided_slice %659 {offsets = [0, 384], sizes = [2, 128], strides = [1, 1]} : vector<2x512xf32> to vector<2x128xf32>
    %675 = arith.negf %674 : vector<2x128xf32>
    %676 = math.exp %675 : vector<2x128xf32>
    %cst_182 = arith.constant 1.000000e+00 : f32
    %677 = vector.broadcast %cst_182 : f32 to vector<2x128xf32>
    %678 = arith.addf %677, %676 : vector<2x128xf32>
    %679 = arith.divf %677, %678 : vector<2x128xf32>
    %680 = arith.mulf %671, %654 : vector<2x128xf32>
    %681 = arith.mulf %665, %673 : vector<2x128xf32>
    %682 = arith.addf %680, %681 : vector<2x128xf32>
    %683 = math.tanh %682 : vector<2x128xf32>
    %684 = arith.mulf %679, %683 : vector<2x128xf32>
    %685 = vector.extract_strided_slice %514 {offsets = [12, 0], sizes = [2, 512], strides = [1, 1]} : vector<16x512xf32> to vector<2x512xf32>
    %cst_183 = arith.constant dense<0.000000e+00> : vector<2x512xf32>
    %686 = tpu.matmul %684, %508, %cst_183 {dimension_numbers = #tpu.dot_dimension_numbers<[1], [0], [0], [1], [0, 0, 1, 1], [], []>} : vector<2x128xf32>, vector<128x512xf32>, vector<2x512xf32> -> vector<2x512xf32>
    %687 = arith.addf %685, %686 : vector<2x512xf32>
    %688 = vector.extract_strided_slice %687 {offsets = [0, 0], sizes = [2, 128], strides = [1, 1]} : vector<2x512xf32> to vector<2x128xf32>
    %689 = arith.negf %688 : vector<2x128xf32>
    %690 = math.exp %689 : vector<2x128xf32>
    %cst_184 = arith.constant 1.000000e+00 : f32
    %691 = vector.broadcast %cst_184 : f32 to vector<2x128xf32>
    %692 = arith.addf %691, %690 : vector<2x128xf32>
    %693 = arith.divf %691, %692 : vector<2x128xf32>
    %694 = vector.extract_strided_slice %687 {offsets = [0, 128], sizes = [2, 128], strides = [1, 1]} : vector<2x512xf32> to vector<2x128xf32>
    %695 = arith.negf %694 : vector<2x128xf32>
    %696 = math.exp %695 : vector<2x128xf32>
    %cst_185 = arith.constant 1.000000e+00 : f32
    %697 = vector.broadcast %cst_185 : f32 to vector<2x128xf32>
    %698 = arith.addf %697, %696 : vector<2x128xf32>
    %699 = arith.divf %697, %698 : vector<2x128xf32>
    %700 = vector.extract_strided_slice %687 {offsets = [0, 256], sizes = [2, 128], strides = [1, 1]} : vector<2x512xf32> to vector<2x128xf32>
    %701 = math.tanh %700 : vector<2x128xf32>
    %702 = vector.extract_strided_slice %687 {offsets = [0, 384], sizes = [2, 128], strides = [1, 1]} : vector<2x512xf32> to vector<2x128xf32>
    %703 = arith.negf %702 : vector<2x128xf32>
    %704 = math.exp %703 : vector<2x128xf32>
    %cst_186 = arith.constant 1.000000e+00 : f32
    %705 = vector.broadcast %cst_186 : f32 to vector<2x128xf32>
    %706 = arith.addf %705, %704 : vector<2x128xf32>
    %707 = arith.divf %705, %706 : vector<2x128xf32>
    %708 = arith.mulf %699, %682 : vector<2x128xf32>
    %709 = arith.mulf %693, %701 : vector<2x128xf32>
    %710 = arith.addf %708, %709 : vector<2x128xf32>
    %711 = math.tanh %710 : vector<2x128xf32>
    %712 = arith.mulf %707, %711 : vector<2x128xf32>
    %713 = vector.extract_strided_slice %514 {offsets = [14, 0], sizes = [2, 512], strides = [1, 1]} : vector<16x512xf32> to vector<2x512xf32>
    %cst_187 = arith.constant dense<0.000000e+00> : vector<2x512xf32>
    %714 = tpu.matmul %712, %508, %cst_187 {dimension_numbers = #tpu.dot_dimension_numbers<[1], [0], [0], [1], [0, 0, 1, 1], [], []>} : vector<2x128xf32>, vector<128x512xf32>, vector<2x512xf32> -> vector<2x512xf32>
    %715 = arith.addf %713, %714 : vector<2x512xf32>
    %716 = vector.extract_strided_slice %715 {offsets = [0, 0], sizes = [2, 128], strides = [1, 1]} : vector<2x512xf32> to vector<2x128xf32>
    %717 = arith.negf %716 : vector<2x128xf32>
    %718 = math.exp %717 : vector<2x128xf32>
    %cst_188 = arith.constant 1.000000e+00 : f32
    %719 = vector.broadcast %cst_188 : f32 to vector<2x128xf32>
    %720 = arith.addf %719, %718 : vector<2x128xf32>
    %721 = arith.divf %719, %720 : vector<2x128xf32>
    %722 = vector.extract_strided_slice %715 {offsets = [0, 128], sizes = [2, 128], strides = [1, 1]} : vector<2x512xf32> to vector<2x128xf32>
    %723 = arith.negf %722 : vector<2x128xf32>
    %724 = math.exp %723 : vector<2x128xf32>
    %cst_189 = arith.constant 1.000000e+00 : f32
    %725 = vector.broadcast %cst_189 : f32 to vector<2x128xf32>
    %726 = arith.addf %725, %724 : vector<2x128xf32>
    %727 = arith.divf %725, %726 : vector<2x128xf32>
    %728 = vector.extract_strided_slice %715 {offsets = [0, 256], sizes = [2, 128], strides = [1, 1]} : vector<2x512xf32> to vector<2x128xf32>
    %729 = math.tanh %728 : vector<2x128xf32>
    %730 = vector.extract_strided_slice %715 {offsets = [0, 384], sizes = [2, 128], strides = [1, 1]} : vector<2x512xf32> to vector<2x128xf32>
    %731 = arith.negf %730 : vector<2x128xf32>
    %732 = math.exp %731 : vector<2x128xf32>
    %cst_190 = arith.constant 1.000000e+00 : f32
    %733 = vector.broadcast %cst_190 : f32 to vector<2x128xf32>
    %734 = arith.addf %733, %732 : vector<2x128xf32>
    %735 = arith.divf %733, %734 : vector<2x128xf32>
    %736 = arith.mulf %727, %710 : vector<2x128xf32>
    %737 = arith.mulf %721, %729 : vector<2x128xf32>
    %738 = arith.addf %736, %737 : vector<2x128xf32>
    %739 = math.tanh %738 : vector<2x128xf32>
    %740 = arith.mulf %735, %739 : vector<2x128xf32>
    %c0_191 = arith.constant 0 : index
    %c0_192 = arith.constant 0 : index
    %741 = vector.load %arg10[%c0_191, %c0_192] : memref<1x128xf32, #tpu.memory_space<vmem>>, vector<1x128xf32>
    %742 = vector.broadcast %741 : vector<1x128xf32> to vector<2x128xf32>
    %743 = arith.mulf %740, %742 : vector<2x128xf32>
    %cst_193 = arith.constant dense<0.000000e+00> : vector<2xf32>
    %744 = vector.multi_reduction <add>, %743, %cst_193 [1] : vector<2x128xf32> to vector<2xf32>
    %745 = vector.shape_cast %744 : vector<2xf32> to vector<2x1xf32>
    %c0_194 = arith.constant 0 : index
    %c0_195 = arith.constant 0 : index
    %746 = vector.load %arg11[%c0_194, %c0_195] : memref<1x1xf32, #tpu.memory_space<vmem>>, vector<1x1xf32>
    %747 = vector.broadcast %746 : vector<1x1xf32> to vector<2x1xf32>
    %748 = arith.addf %745, %747 : vector<2x1xf32>
    %c0_196 = arith.constant 0 : index
    %c0_197 = arith.constant 0 : index
    %749 = vector.load %arg12[%c0_196, %c0_197] : memref<2x1xf32, #tpu.memory_space<vmem>>, vector<2x1xf32>
    tpu.vector_store %arg12[%c0_196, %c0_197], %748 {strides = array<i32>} : memref<2x1xf32, #tpu.memory_space<vmem>>, vector<2x1xf32>,
    return
  }
}

</mosaic_0001>

<llo_original>
// kernel: lstm_model_forward.1
$region0: #{lstm_model_forward.1}
  #allocation0 [shape = 'u32[]', space=smem, size = 0x4, offset = 0x4, fixed_abs, tag = 'smem constant byte address 0x4 - core index']
  #allocation1 [shape = 'u32[144,128]{1,0:T(1,128)}', space=vmem, size = 0x12000, scoped, tag = 'internal scratch']
  #allocation2 [shape = 'f32[16,128]{1,0:T(8,128)}', space=vmem, size = 0x2000, scoped, tag = 'scratch operand']
  #allocation3 [shape = 'f32[1,1]{1,0:T(1,128)S(1)}', space=vmem, size = 0x200, scoped, tag = 'scoped memory for lstm_model_forward.1']
  %s0 = inlined_call_operand.vmem [shape: f32[2,8,4], index: 0, kind: input, shape index: {}]
  %s1 = inlined_call_operand.hbm [shape: f32[128,512], index: 1, kind: input, shape index: {}]
  %s2 = inlined_call_operand.hbm [shape: f32[128,512], index: 2, kind: input, shape index: {}]
  %s3 = inlined_call_operand.vmem [shape: f32[1,512], index: 3, kind: input, shape index: {}]
  %s4 = inlined_call_operand.hbm [shape: f32[128,512], index: 4, kind: input, shape index: {}]
  %s5 = inlined_call_operand.hbm [shape: f32[128,512], index: 5, kind: input, shape index: {}]
  %s6 = inlined_call_operand.vmem [shape: f32[1,512], index: 6, kind: input, shape index: {}]
  %s7 = inlined_call_operand.hbm [shape: f32[128,512], index: 7, kind: input, shape index: {}]
  %s8 = inlined_call_operand.hbm [shape: f32[128,512], index: 8, kind: input, shape index: {}]
  %s9 = inlined_call_operand.vmem [shape: f32[1,512], index: 9, kind: input, shape index: {}]
  %s10 = inlined_call_operand.vmem [shape: f32[1,128], index: 10, kind: input, shape index: {}]
  %s11 = inlined_call_operand.<no memory space> [shape: f32[1,1], index: 11, kind: input, shape index: {}]
  %s12 = inlined_call_operand.vmem [shape: f32[2,1], index: 12, kind: output, shape index: {}]
  %s13 = sld [smem:[#allocation0]]
  $region82: #{lstm_model_forward.1} parent=0
    _
  %s15 = ssub.s32 1, %s13
  %s16 = scalar_select 0, %s15, %s13
  %v17 = vstv %s11
  %18 = vst [vmem:[#allocation3] sm:$0x1] %v17
  $region1: #{lstm_model_forward.1} parent=0
    #allocation4 [shape = 'u8[262144]{0}', space=vmem, size = 0x40000, scoped, tag = 'input window, operand 1, single buffered']
    #allocation5 [shape = 's32[1]{0}', space=sflag, size = 0x4, scoped, tag = 'scoped memory for lstm_model_forward.1']
    #allocation6 [shape = 'u8[262144]{0}', space=vmem, size = 0x40000, scoped, tag = 'input window, operand 2, single buffered']
    #allocation7 [shape = 's32[1]{0}', space=sflag, size = 0x4, scoped, tag = 'scoped memory for lstm_model_forward.1']
    #allocation8 [shape = 'u8[262144]{0}', space=vmem, size = 0x40000, scoped, tag = 'input window, operand 4, single buffered']
    #allocation9 [shape = 'u8[262144]{0}', space=vmem, size = 0x40000, scoped, tag = 'input window, operand 5, single buffered']
    #allocation10 [shape = 's32[1]{0}', space=sflag, size = 0x4, scoped, tag = 'scoped memory for lstm_model_forward.1']
    #allocation11 [shape = 'u8[262144]{0}', space=vmem, size = 0x40000, scoped, tag = 'input window, operand 7, single buffered']
    #allocation12 [shape = 'u8[262144]{0}', space=vmem, size = 0x40000, scoped, tag = 'input window, operand 8, single buffered']
    #allocation13 [shape = 's32[1]{0}', space=sflag, size = 0x4, scoped, tag = 'scoped memory for lstm_model_forward.1']
    %19 = vsyncpa [#allocation5], 0
    %20 = vsyncpa [#allocation7], 0
    %21 = vsyncpa [#allocation10], 0
    %22 = vsyncpa [#allocation13], 0
    // Predicated region
    $region2: #{lstm_model_forward.1} parent=1 // pred_check
      _
    $region3: #{lstm_model_forward.1} parent=1 // pred_check_branch
      %24 = sbr.rel (0) target = $region5
    $region4: #{lstm_model_forward.1} parent=1 // pred_region
      _
    $region5: #{lstm_model_forward.1} parent=1 // pred_fallthru
      _
    // Predicated region
    $region6: #{lstm_model_forward.1} parent=1 // pred_check
      _
    $region7: #{lstm_model_forward.1} parent=1 // pred_check_branch
      %26 = sbr.rel (0) target = $region9
    $region8: #{lstm_model_forward.1} parent=1 // pred_region
      %s28 = ssub.s32 8192, 8192
      %29 = vsyncadd [#allocation5], %s28
      %s30 = sshll.u32 [#allocation4], 4
      %s31 = int_to_ptr.vmem [resolvable:$true] %s30
      %36 = dma.hbm_to_vmem [thread:$0]  %s1, 8192, %s31, [#allocation5], 512, 512, 32
    $region9: #{lstm_model_forward.1} parent=1 // pred_fallthru
      _
    // Predicated region
    $region10: #{lstm_model_forward.1} parent=1 // pred_check
      _
    $region11: #{lstm_model_forward.1} parent=1 // pred_check_branch
      %38 = sbr.rel (0) target = $region13
    $region12: #{lstm_model_forward.1} parent=1 // pred_region
      %s40 = ssub.s32 8192, 8192
      %41 = vsyncadd [#allocation7], %s40
      %s42 = sshll.u32 [#allocation6], 4
      %s43 = int_to_ptr.vmem [resolvable:$true] %s42
      %48 = dma.hbm_to_vmem [thread:$0]  %s2, 8192, %s43, [#allocation7], 512, 512, 32
    $region13: #{lstm_model_forward.1} parent=1 // pred_fallthru
      _
    // Predicated region
    $region14: #{lstm_model_forward.1} parent=1 // pred_check
      _
    $region15: #{lstm_model_forward.1} parent=1 // pred_check_branch
      %50 = sbr.rel (0) target = $region17
    $region16: #{lstm_model_forward.1} parent=1 // pred_region
      _
    $region17: #{lstm_model_forward.1} parent=1 // pred_fallthru
      _
    // Predicated region
    $region18: #{lstm_model_forward.1} parent=1 // pred_check
      _
    $region19: #{lstm_model_forward.1} parent=1 // pred_check_branch
      %52 = sbr.rel (0) target = $region21
    $region20: #{lstm_model_forward.1} parent=1 // pred_region
      %s54 = ssub.s32 8192, 8192
      %55 = vsyncadd [#allocation7], %s54
      %s56 = sshll.u32 [#allocation8], 4
      %s57 = int_to_ptr.vmem [resolvable:$true] %s56
      %62 = dma.hbm_to_vmem [thread:$0]  %s4, 8192, %s57, [#allocation7], 512, 512, 32
    $region21: #{lstm_model_forward.1} parent=1 // pred_fallthru
      _
    // Predicated region
    $region22: #{lstm_model_forward.1} parent=1 // pred_check
      _
    $region23: #{lstm_model_forward.1} parent=1 // pred_check_branch
      %64 = sbr.rel (0) target = $region25
    $region24: #{lstm_model_forward.1} parent=1 // pred_region
      %s66 = ssub.s32 8192, 8192
      %67 = vsyncadd [#allocation10], %s66
      %s68 = sshll.u32 [#allocation9], 4
      %s69 = int_to_ptr.vmem [resolvable:$true] %s68
      %74 = dma.hbm_to_vmem [thread:$0]  %s5, 8192, %s69, [#allocation10], 512, 512, 32
    $region25: #{lstm_model_forward.1} parent=1 // pred_fallthru
      _
    // Predicated region
    $region26: #{lstm_model_forward.1} parent=1 // pred_check
      _
    $region27: #{lstm_model_forward.1} parent=1 // pred_check_branch
      %76 = sbr.rel (0) target = $region29
    $region28: #{lstm_model_forward.1} parent=1 // pred_region
      _
    $region29: #{lstm_model_forward.1} parent=1 // pred_fallthru
      _
    // Predicated region
    $region30: #{lstm_model_forward.1} parent=1 // pred_check
      _
    $region31: #{lstm_model_forward.1} parent=1 // pred_check_branch
      %78 = sbr.rel (0) target = $region33
    $region32: #{lstm_model_forward.1} parent=1 // pred_region
      %s80 = ssub.s32 8192, 8192
      %81 = vsyncadd [#allocation10], %s80
      %s82 = sshll.u32 [#allocation11], 4
      %s83 = int_to_ptr.vmem [resolvable:$true] %s82
      %88 = dma.hbm_to_vmem [thread:$0]  %s7, 8192, %s83, [#allocation10], 512, 512, 32
    $region33: #{lstm_model_forward.1} parent=1 // pred_fallthru
      _
    // Predicated region
    $region34: #{lstm_model_forward.1} parent=1 // pred_check
      _
    $region35: #{lstm_model_forward.1} parent=1 // pred_check_branch
      %90 = sbr.rel (0) target = $region37
    $region36: #{lstm_model_forward.1} parent=1 // pred_region
      %s92 = ssub.s32 8192, 8192
      %93 = vsyncadd [#allocation13], %s92
      %s94 = sshll.u32 [#allocation12], 4
      %s95 = int_to_ptr.vmem [resolvable:$true] %s94
      %100 = dma.hbm_to_vmem [thread:$0]  %s8, 8192, %s95, [#allocation13], 512, 512, 32
    $region37: #{lstm_model_forward.1} parent=1 // pred_fallthru
      _
    // Predicated region
    $region38: #{lstm_model_forward.1} parent=1 // pred_check
      _
    $region39: #{lstm_model_forward.1} parent=1 // pred_check_branch
      %102 = sbr.rel (0) target = $region41
    $region40: #{lstm_model_forward.1} parent=1 // pred_region
      _
    $region41: #{lstm_model_forward.1} parent=1 // pred_fallthru
      _
    // Predicated region
    $region42: #{lstm_model_forward.1} parent=1 // pred_check
      _
    $region43: #{lstm_model_forward.1} parent=1 // pred_check_branch
      %104 = sbr.rel (0) target = $region45
    $region44: #{lstm_model_forward.1} parent=1 // pred_region
      _
    $region45: #{lstm_model_forward.1} parent=1 // pred_fallthru
      _
    // Predicated region
    $region46: #{lstm_model_forward.1} parent=1 // pred_check
      _
    $region47: #{lstm_model_forward.1} parent=1 // pred_check_branch
      %106 = sbr.rel (0) target = $region49
    $region48: #{lstm_model_forward.1} parent=1 // pred_region
      _
    $region49: #{lstm_model_forward.1} parent=1 // pred_fallthru
      _
    // Predicated region
    $region50: #{lstm_model_forward.1} parent=1 // pred_check
      _
    $region51: #{lstm_model_forward.1} parent=1 // pred_check_branch
      %108 = sbr.rel (0) target = $region53
    $region52: #{lstm_model_forward.1} parent=1 // pred_region
      %109 = dma.done [#allocation5], 8192
    $region53: #{lstm_model_forward.1} parent=1 // pred_fallthru
      _
    // Predicated region
    $region54: #{lstm_model_forward.1} parent=1 // pred_check
      _
    $region55: #{lstm_model_forward.1} parent=1 // pred_check_branch
      %111 = sbr.rel (0) target = $region57
    $region56: #{lstm_model_forward.1} parent=1 // pred_region
      %112 = dma.done [#allocation7], 8192
    $region57: #{lstm_model_forward.1} parent=1 // pred_fallthru
      _
    // Predicated region
    $region58: #{lstm_model_forward.1} parent=1 // pred_check
      _
    $region59: #{lstm_model_forward.1} parent=1 // pred_check_branch
      %114 = sbr.rel (0) target = $region61
    $region60: #{lstm_model_forward.1} parent=1 // pred_region
      %115 = dma.done [#allocation7], 8192
    $region61: #{lstm_model_forward.1} parent=1 // pred_fallthru
      _
    // Predicated region
    $region62: #{lstm_model_forward.1} parent=1 // pred_check
      _
    $region63: #{lstm_model_forward.1} parent=1 // pred_check_branch
      %117 = sbr.rel (0) target = $region65
    $region64: #{lstm_model_forward.1} parent=1 // pred_region
      %118 = dma.done [#allocation10], 8192
    $region65: #{lstm_model_forward.1} parent=1 // pred_fallthru
      _
    // Predicated region
    $region66: #{lstm_model_forward.1} parent=1 // pred_check
      _
    $region67: #{lstm_model_forward.1} parent=1 // pred_check_branch
      %120 = sbr.rel (0) target = $region69
    $region68: #{lstm_model_forward.1} parent=1 // pred_region
      %121 = dma.done [#allocation10], 8192
    $region69: #{lstm_model_forward.1} parent=1 // pred_fallthru
      _
    // Predicated region
    $region70: #{lstm_model_forward.1} parent=1 // pred_check
      _
    $region71: #{lstm_model_forward.1} parent=1 // pred_check_branch
      %123 = sbr.rel (0) target = $region73
    $region72: #{lstm_model_forward.1} parent=1 // pred_region
      %124 = dma.done [#allocation13], 8192
    $region73: #{lstm_model_forward.1} parent=1 // pred_fallthru
      _
    %125 = vst [vmem:[#allocation2] sm:$0xff] 0.0
    %126 = vst [vmem:[#allocation2 + $0x8] sm:$0xff] 0.0
    %v127 = vld [vmem:[%s0] sm:$0x1]
    %v128 = vld [vmem:[%s0 + $0x8] sm:$0x1]
    %v131 = vrot.slane %v128, 7
    %vm132 = vcmask 1041409
    %v133 = vsel %vm132, %v131, %v127
    %vm135 = vcmask 25600
    %136 = vst.msk [vmem:[#allocation2] sm:$0x3] %vm135, %v133
    %v137 = vld [vmem:[%s0 + $0x1] sm:$0x1]
    %v138 = vld [vmem:[%s0 + $0x9] sm:$0x1]
    %v141 = vrot.slane %v138, 7
    %v142 = vsel %vm132, %v141, %v137
    %144 = vst.msk [vmem:[#allocation2 + $0x2] sm:$0x3] %vm135, %v142
    %v145 = vld [vmem:[%s0 + $0x2] sm:$0x1]
    %v146 = vld [vmem:[%s0 + $0xa] sm:$0x1]
    %v149 = vrot.slane %v146, 7
    %v150 = vsel %vm132, %v149, %v145
    %152 = vst.msk [vmem:[#allocation2 + $0x4] sm:$0x3] %vm135, %v150
    %v153 = vld [vmem:[%s0 + $0x3] sm:$0x1]
    %v154 = vld [vmem:[%s0 + $0xb] sm:$0x1]
    %v157 = vrot.slane %v154, 7
    %v158 = vsel %vm132, %v157, %v153
    %160 = vst.msk [vmem:[#allocation2 + $0x6] sm:$0x3] %vm135, %v158
    %v161 = vld [vmem:[%s0 + $0x4] sm:$0x1]
    %v162 = vld [vmem:[%s0 + $0xc] sm:$0x1]
    %v165 = vrot.slane %v162, 7
    %v166 = vsel %vm132, %v165, %v161
    %168 = vst.msk [vmem:[#allocation2 + $0x8] sm:$0x3] %vm135, %v166
    %v169 = vld [vmem:[%s0 + $0x5] sm:$0x1]
    %v170 = vld [vmem:[%s0 + $0xd] sm:$0x1]
    %v173 = vrot.slane %v170, 7
    %v174 = vsel %vm132, %v173, %v169
    %176 = vst.msk [vmem:[#allocation2 + $0xa] sm:$0x3] %vm135, %v174
    %v177 = vld [vmem:[%s0 + $0x6] sm:$0x1]
    %v178 = vld [vmem:[%s0 + $0xe] sm:$0x1]
    %v181 = vrot.slane %v178, 7
    %v182 = vsel %vm132, %v181, %v177
    %184 = vst.msk [vmem:[#allocation2 + $0xc] sm:$0x3] %vm135, %v182
    %v185 = vld [vmem:[%s0 + $0x7] sm:$0x1]
    %v186 = vld [vmem:[%s0 + $0xf] sm:$0x1]
    %v189 = vrot.slane %v186, 7
    %v190 = vsel %vm132, %v189, %v185
    %192 = vst.msk [vmem:[#allocation2 + $0xe] sm:$0x3] %vm135, %v190
    %v193 = vld [vmem:[#allocation6] sm:$0xff]
    %v194 = vld [vmem:[#allocation6 + $0x8] sm:$0xff]
    %v195 = vld [vmem:[#allocation6 + $0x10] sm:$0xff]
    %v196 = vld [vmem:[#allocation6 + $0x18] sm:$0xff]
    %v197 = vld [vmem:[#allocation6 + $0x20] sm:$0xff]
    %v198 = vld [vmem:[#allocation6 + $0x28] sm:$0xff]
    %v199 = vld [vmem:[#allocation6 + $0x30] sm:$0xff]
    %v200 = vld [vmem:[#allocation6 + $0x38] sm:$0xff]
    %v201 = vld [vmem:[#allocation6 + $0x40] sm:$0xff]
    %v202 = vld [vmem:[#allocation6 + $0x48] sm:$0xff]
    %v203 = vld [vmem:[#allocation6 + $0x50] sm:$0xff]
    %v204 = vld [vmem:[#allocation6 + $0x58] sm:$0xff]
    %v205 = vld [vmem:[#allocation6 + $0x60] sm:$0xff]
    %v206 = vld [vmem:[#allocation6 + $0x68] sm:$0xff]
    %v207 = vld [vmem:[#allocation6 + $0x70] sm:$0xff]
    %v208 = vld [vmem:[#allocation6 + $0x78] sm:$0xff]
    %v209 = vld [vmem:[#allocation6 + $0x80] sm:$0xff]
    %v210 = vld [vmem:[#allocation6 + $0x88] sm:$0xff]
    %v211 = vld [vmem:[#allocation6 + $0x90] sm:$0xff]
    %v212 = vld [vmem:[#allocation6 + $0x98] sm:$0xff]
    %v213 = vld [vmem:[#allocation6 + $0xa0] sm:$0xff]
    %v214 = vld [vmem:[#allocation6 + $0xa8] sm:$0xff]
    %v215 = vld [vmem:[#allocation6 + $0xb0] sm:$0xff]
    %v216 = vld [vmem:[#allocation6 + $0xb8] sm:$0xff]
    %v217 = vld [vmem:[#allocation6 + $0xc0] sm:$0xff]
    %v218 = vld [vmem:[#allocation6 + $0xc8] sm:$0xff]
    %v219 = vld [vmem:[#allocation6 + $0xd0] sm:$0xff]
    %v220 = vld [vmem:[#allocation6 + $0xd8] sm:$0xff]
    %v221 = vld [vmem:[#allocation6 + $0xe0] sm:$0xff]
    %v222 = vld [vmem:[#allocation6 + $0xe8] sm:$0xff]
    %v223 = vld [vmem:[#allocation6 + $0xf0] sm:$0xff]
    %v224 = vld [vmem:[#allocation6 + $0xf8] sm:$0xff]
    %v225 = vld [vmem:[#allocation6 + $0x100] sm:$0xff]
    %v226 = vld [vmem:[#allocation6 + $0x108] sm:$0xff]
    %v227 = vld [vmem:[#allocation6 + $0x110] sm:$0xff]
    %v228 = vld [vmem:[#allocation6 + $0x118] sm:$0xff]
    %v229 = vld [vmem:[#allocation6 + $0x120] sm:$0xff]
    %v230 = vld [vmem:[#allocation6 + $0x128] sm:$0xff]
    %v231 = vld [vmem:[#allocation6 + $0x130] sm:$0xff]
    %v232 = vld [vmem:[#allocation6 + $0x138] sm:$0xff]
    %v233 = vld [vmem:[#allocation6 + $0x140] sm:$0xff]
    %v234 = vld [vmem:[#allocation6 + $0x148] sm:$0xff]
    %v235 = vld [vmem:[#allocation6 + $0x150] sm:$0xff]
    %v236 = vld [vmem:[#allocation6 + $0x158] sm:$0xff]
    %v237 = vld [vmem:[#allocation6 + $0x160] sm:$0xff]
    %v238 = vld [vmem:[#allocation6 + $0x168] sm:$0xff]
    %v239 = vld [vmem:[#allocation6 + $0x170] sm:$0xff]
    %v240 = vld [vmem:[#allocation6 + $0x178] sm:$0xff]
    %v241 = vld [vmem:[#allocation6 + $0x180] sm:$0xff]
    %v242 = vld [vmem:[#allocation6 + $0x188] sm:$0xff]
    %v243 = vld [vmem:[#allocation6 + $0x190] sm:$0xff]
    %v244 = vld [vmem:[#allocation6 + $0x198] sm:$0xff]
    %v245 = vld [vmem:[#allocation6 + $0x1a0] sm:$0xff]
    %v246 = vld [vmem:[#allocation6 + $0x1a8] sm:$0xff]
    %v247 = vld [vmem:[#allocation6 + $0x1b0] sm:$0xff]
    %v248 = vld [vmem:[#allocation6 + $0x1b8] sm:$0xff]
    %v249 = vld [vmem:[#allocation6 + $0x1c0] sm:$0xff]
    %v250 = vld [vmem:[#allocation6 + $0x1c8] sm:$0xff]
    %v251 = vld [vmem:[#allocation6 + $0x1d0] sm:$0xff]
    %v252 = vld [vmem:[#allocation6 + $0x1d8] sm:$0xff]
    %v253 = vld [vmem:[#allocation6 + $0x1e0] sm:$0xff]
    %v254 = vld [vmem:[#allocation6 + $0x1e8] sm:$0xff]
    %v255 = vld [vmem:[#allocation6 + $0x1f0] sm:$0xff]
    %v256 = vld [vmem:[#allocation6 + $0x1f8] sm:$0xff]
    %v257 = vld [vmem:[#allocation2] sm:$0xff]
    %v258 = vld [vmem:[#allocation2 + $0x8] sm:$0xff]
    %v259 = vld [vmem:[#allocation4] sm:$0xff]
    %v260 = vld [vmem:[#allocation4 + $0x8] sm:$0xff]
    %v261 = vld [vmem:[#allocation4 + $0x10] sm:$0xff]
    %v262 = vld [vmem:[#allocation4 + $0x18] sm:$0xff]
    %v263 = vld [vmem:[#allocation4 + $0x20] sm:$0xff]
    %v264 = vld [vmem:[#allocation4 + $0x28] sm:$0xff]
    %v265 = vld [vmem:[#allocation4 + $0x30] sm:$0xff]
    %v266 = vld [vmem:[#allocation4 + $0x38] sm:$0xff]
    %v267 = vld [vmem:[#allocation4 + $0x40] sm:$0xff]
    %v268 = vld [vmem:[#allocation4 + $0x48] sm:$0xff]
    %v269 = vld [vmem:[#allocation4 + $0x50] sm:$0xff]
    %v270 = vld [vmem:[#allocation4 + $0x58] sm:$0xff]
    %v271 = vld [vmem:[#allocation4 + $0x60] sm:$0xff]
    %v272 = vld [vmem:[#allocation4 + $0x68] sm:$0xff]
    %v273 = vld [vmem:[#allocation4 + $0x70] sm:$0xff]
    %v274 = vld [vmem:[#allocation4 + $0x78] sm:$0xff]
    %v275 = vld [vmem:[#allocation4 + $0x80] sm:$0xff]
    %v276 = vld [vmem:[#allocation4 + $0x88] sm:$0xff]
    %v277 = vld [vmem:[#allocation4 + $0x90] sm:$0xff]
    %v278 = vld [vmem:[#allocation4 + $0x98] sm:$0xff]
    %v279 = vld [vmem:[#allocation4 + $0xa0] sm:$0xff]
    %v280 = vld [vmem:[#allocation4 + $0xa8] sm:$0xff]
    %v281 = vld [vmem:[#allocation4 + $0xb0] sm:$0xff]
    %v282 = vld [vmem:[#allocation4 + $0xb8] sm:$0xff]
    %v283 = vld [vmem:[#allocation4 + $0xc0] sm:$0xff]
    %v284 = vld [vmem:[#allocation4 + $0xc8] sm:$0xff]
    %v285 = vld [vmem:[#allocation4 + $0xd0] sm:$0xff]
    %v286 = vld [vmem:[#allocation4 + $0xd8] sm:$0xff]
    %v287 = vld [vmem:[#allocation4 + $0xe0] sm:$0xff]
    %v288 = vld [vmem:[#allocation4 + $0xe8] sm:$0xff]
    %v289 = vld [vmem:[#allocation4 + $0xf0] sm:$0xff]
    %v290 = vld [vmem:[#allocation4 + $0xf8] sm:$0xff]
    %v291 = vld [vmem:[#allocation4 + $0x100] sm:$0xff]
    %v292 = vld [vmem:[#allocation4 + $0x108] sm:$0xff]
    %v293 = vld [vmem:[#allocation4 + $0x110] sm:$0xff]
    %v294 = vld [vmem:[#allocation4 + $0x118] sm:$0xff]
    %v295 = vld [vmem:[#allocation4 + $0x120] sm:$0xff]
    %v296 = vld [vmem:[#allocation4 + $0x128] sm:$0xff]
    %v297 = vld [vmem:[#allocation4 + $0x130] sm:$0xff]
    %v298 = vld [vmem:[#allocation4 + $0x138] sm:$0xff]
    %v299 = vld [vmem:[#allocation4 + $0x140] sm:$0xff]
    %v300 = vld [vmem:[#allocation4 + $0x148] sm:$0xff]
    %v301 = vld [vmem:[#allocation4 + $0x150] sm:$0xff]
    %v302 = vld [vmem:[#allocation4 + $0x158] sm:$0xff]
    %v303 = vld [vmem:[#allocation4 + $0x160] sm:$0xff]
    %v304 = vld [vmem:[#allocation4 + $0x168] sm:$0xff]
    %v305 = vld [vmem:[#allocation4 + $0x170] sm:$0xff]
    %v306 = vld [vmem:[#allocation4 + $0x178] sm:$0xff]
    %v307 = vld [vmem:[#allocation4 + $0x180] sm:$0xff]
    %v308 = vld [vmem:[#allocation4 + $0x188] sm:$0xff]
    %v309 = vld [vmem:[#allocation4 + $0x190] sm:$0xff]
    %v310 = vld [vmem:[#allocation4 + $0x198] sm:$0xff]
    %v311 = vld [vmem:[#allocation4 + $0x1a0] sm:$0xff]
    %v312 = vld [vmem:[#allocation4 + $0x1a8] sm:$0xff]
    %v313 = vld [vmem:[#allocation4 + $0x1b0] sm:$0xff]
    %v314 = vld [vmem:[#allocation4 + $0x1b8] sm:$0xff]
    %v315 = vld [vmem:[#allocation4 + $0x1c0] sm:$0xff]
    %v316 = vld [vmem:[#allocation4 + $0x1c8] sm:$0xff]
    %v317 = vld [vmem:[#allocation4 + $0x1d0] sm:$0xff]
    %v318 = vld [vmem:[#allocation4 + $0x1d8] sm:$0xff]
    %v319 = vld [vmem:[#allocation4 + $0x1e0] sm:$0xff]
    %v320 = vld [vmem:[#allocation4 + $0x1e8] sm:$0xff]
    %v321 = vld [vmem:[#allocation4 + $0x1f0] sm:$0xff]
    %v322 = vld [vmem:[#allocation4 + $0x1f8] sm:$0xff]
    %v323 = vld [vmem:[%s3] sm:$0xf]
    %v325 = vlaneseq
    %v326 = vshrl.u32 %v325, 7
    %v327 = vsub.s32 0, %v326
    %v328 = vrot.slane %v323, %v327
    %v329 = vlaneseq
    %v330 = vshrl.u32 %v329, 7
    %v331 = vsub.s32 1, %v330
    %v332 = vrot.slane %v323, %v331
    %v333 = vlaneseq
    %v334 = vshrl.u32 %v333, 7
    %v335 = vsub.s32 2, %v334
    %v336 = vrot.slane %v323, %v335
    %v337 = vlaneseq
    %v338 = vshrl.u32 %v337, 7
    %v339 = vsub.s32 3, %v338
    %v340 = vrot.slane %v323, %v339
    %345 = vmatprep.subr.mxu0 %v260
    %346 = vmatpush1.msra.mxu0 %v259
    %347 = vmatprep.subr.mxu0 %v264
    %348 = vmatpush1.msra.mxu0 %v263
    %349 = vmatprep.subr.mxu0 %v268
    %350 = vmatpush1.msra.mxu0 %v267
    %351 = vmatprep.subr.mxu0 %v272
    %352 = vmatpush1.msra.mxu0 %v271
    %353 = vmatprep.subr.mxu0 %v276
    %354 = vmatpush1.msra.mxu0 %v275
    %355 = vmatprep.subr.mxu0 %v280
    %356 = vmatpush1.msra.mxu0 %v279
    %357 = vmatprep.subr.mxu0 %v284
    %358 = vmatpush1.msra.mxu0 %v283
    %359 = vmatprep.subr.mxu0 %v288
    %360 = vmatpush1.msra.mxu0 %v287
    %361 = vmatprep.subr.mxu0 %v292
    %362 = vmatpush1.msra.mxu0 %v291
    %363 = vmatprep.subr.mxu0 %v296
    %364 = vmatpush1.msra.mxu0 %v295
    %365 = vmatprep.subr.mxu0 %v300
    %366 = vmatpush1.msra.mxu0 %v299
    %367 = vmatprep.subr.mxu0 %v304
    %368 = vmatpush1.msra.mxu0 %v303
    %369 = vmatprep.subr.mxu0 %v308
    %370 = vmatpush1.msra.mxu0 %v307
    %371 = vmatprep.subr.mxu0 %v312
    %372 = vmatpush1.msra.mxu0 %v311
    %373 = vmatprep.subr.mxu0 %v316
    %374 = vmatpush1.msra.mxu0 %v315
    %375 = vmatprep.subr.mxu0 %v320
    %376 = vmatpush1.msra.mxu0 %v319
    %377 = vmatprep.subr.mxu0 0.0
    %378 = vmatpush1.msra.mxu0 0.0
    %379 = vmatprep.subr.mxu0 0.0
    %380 = vmatpush1.msra.mxu0 0.0
    %381 = vmatprep.subr.mxu0 0.0
    %382 = vmatpush1.msra.mxu0 0.0
    %383 = vmatprep.subr.mxu0 0.0
    %384 = vmatpush1.msra.mxu0 0.0
    %385 = vmatprep.subr.mxu0 0.0
    %386 = vmatpush1.msra.mxu0 0.0
    %387 = vmatprep.subr.mxu0 0.0
    %388 = vmatpush1.msra.mxu0 0.0
    %389 = vmatprep.subr.mxu0 0.0
    %390 = vmatpush1.msra.mxu0 0.0
    %391 = vmatprep.subr.mxu0 0.0
    %392 = vmatpush1.msra.mxu0 0.0
    %393 = vmatprep.subr.mxu0 0.0
    %394 = vmatpush1.msra.mxu0 0.0
    %395 = vmatprep.subr.mxu0 0.0
    %396 = vmatpush1.msra.mxu0 0.0
    %397 = vmatprep.subr.mxu0 0.0
    %398 = vmatpush1.msra.mxu0 0.0
    %399 = vmatprep.subr.mxu0 0.0
    %400 = vmatpush1.msra.mxu0 0.0
    %401 = vmatprep.subr.mxu0 0.0
    %402 = vmatpush1.msra.mxu0 0.0
    %403 = vmatprep.subr.mxu0 0.0
    %404 = vmatpush1.msra.mxu0 0.0
    %405 = vmatprep.subr.mxu0 0.0
    %406 = vmatpush1.msra.mxu0 0.0
    %407 = vmatprep.subr.mxu0 0.0
    %408 = vmatpush1.msra.mxu0 0.0
    %409 = vmatprep.mubr.f32.mxu0 0.0
    %410 = vmatmul.mubr.f32.gmra.mrb[0].mxu0 %v257
    %v411 = vpop.f32.mrb[0].mxu0
    %v412 = vadd.f32 %v328, %v411
    %v413 = vpop.f32.mrb[0].mxu0
    %v414 = vadd.f32 %v332, %v413
    %415 = vmatprep.mubr.f32.mxu0 0.0
    %416 = vmatmul.mubr.f32.gmra.mrb[0].mxu0 %v258
    %v417 = vpop.f32.mrb[0].mxu0
    %v418 = vadd.f32 %v328, %v417
    %v419 = vpop.f32.mrb[0].mxu0
    %v420 = vadd.f32 %v332, %v419
    %421 = vdwg.mxu0
    %422 = vmatprep.subr.mxu0 %v262
    %423 = vmatpush1.msra.mxu0 %v261
    %424 = vmatprep.subr.mxu0 %v266
    %425 = vmatpush1.msra.mxu0 %v265
    %426 = vmatprep.subr.mxu0 %v270
    %427 = vmatpush1.msra.mxu0 %v269
    %428 = vmatprep.subr.mxu0 %v274
    %429 = vmatpush1.msra.mxu0 %v273
    %430 = vmatprep.subr.mxu0 %v278
    %431 = vmatpush1.msra.mxu0 %v277
    %432 = vmatprep.subr.mxu0 %v282
    %433 = vmatpush1.msra.mxu0 %v281
    %434 = vmatprep.subr.mxu0 %v286
    %435 = vmatpush1.msra.mxu0 %v285
    %436 = vmatprep.subr.mxu0 %v290
    %437 = vmatpush1.msra.mxu0 %v289
    %438 = vmatprep.subr.mxu0 %v294
    %439 = vmatpush1.msra.mxu0 %v293
    %440 = vmatprep.subr.mxu0 %v298
    %441 = vmatpush1.msra.mxu0 %v297
    %442 = vmatprep.subr.mxu0 %v302
    %443 = vmatpush1.msra.mxu0 %v301
    %444 = vmatprep.subr.mxu0 %v306
    %445 = vmatpush1.msra.mxu0 %v305
    %446 = vmatprep.subr.mxu0 %v310
    %447 = vmatpush1.msra.mxu0 %v309
    %448 = vmatprep.subr.mxu0 %v314
    %449 = vmatpush1.msra.mxu0 %v313
    %450 = vmatprep.subr.mxu0 %v318
    %451 = vmatpush1.msra.mxu0 %v317
    %452 = vmatprep.subr.mxu0 %v322
    %453 = vmatpush1.msra.mxu0 %v321
    %454 = vmatprep.subr.mxu0 0.0
    %455 = vmatpush1.msra.mxu0 0.0
    %456 = vmatprep.subr.mxu0 0.0
    %457 = vmatpush1.msra.mxu0 0.0
    %458 = vmatprep.subr.mxu0 0.0
    %459 = vmatpush1.msra.mxu0 0.0
    %460 = vmatprep.subr.mxu0 0.0
    %461 = vmatpush1.msra.mxu0 0.0
    %462 = vmatprep.subr.mxu0 0.0
    %463 = vmatpush1.msra.mxu0 0.0
    %464 = vmatprep.subr.mxu0 0.0
    %465 = vmatpush1.msra.mxu0 0.0
    %466 = vmatprep.subr.mxu0 0.0
    %467 = vmatpush1.msra.mxu0 0.0
    %468 = vmatprep.subr.mxu0 0.0
    %469 = vmatpush1.msra.mxu0 0.0
    %470 = vmatprep.subr.mxu0 0.0
    %471 = vmatpush1.msra.mxu0 0.0
    %472 = vmatprep.subr.mxu0 0.0
    %473 = vmatpush1.msra.mxu0 0.0
    %474 = vmatprep.subr.mxu0 0.0
    %475 = vmatpush1.msra.mxu0 0.0
    %476 = vmatprep.subr.mxu0 0.0
    %477 = vmatpush1.msra.mxu0 0.0
    %478 = vmatprep.subr.mxu0 0.0
    %479 = vmatpush1.msra.mxu0 0.0
    %480 = vmatprep.subr.mxu0 0.0
    %481 = vmatpush1.msra.mxu0 0.0
    %482 = vmatprep.subr.mxu0 0.0
    %483 = vmatpush1.msra.mxu0 0.0
    %484 = vmatprep.subr.mxu0 0.0
    %485 = vmatpush1.msra.mxu0 0.0
    %486 = vmatprep.mubr.f32.mxu0 0.0
    %487 = vmatmul.mubr.f32.gmra.mrb[0].mxu0 %v257
    %v488 = vpop.f32.mrb[0].mxu0
    %v489 = vadd.f32 %v336, %v488
    %v490 = vpop.f32.mrb[0].mxu0
    %v491 = vadd.f32 %v340, %v490
    %492 = vmatprep.mubr.f32.mxu0 0.0
    %493 = vmatmul.mubr.f32.gmra.mrb[0].mxu0 %v258
    %v494 = vpop.f32.mrb[0].mxu0
    %v495 = vadd.f32 %v336, %v494
    %v496 = vpop.f32.mrb[0].mxu0
    %v497 = vadd.f32 %v340, %v496
    %498 = vdwg.mxu0
    %499 = vmatprep.subr.mxu0 %v194
    %500 = vmatpush1.msra.mxu0 %v193
    %501 = vmatprep.subr.mxu0 %v198
    %502 = vmatpush1.msra.mxu0 %v197
    %503 = vmatprep.subr.mxu0 %v202
    %504 = vmatpush1.msra.mxu0 %v201
    %505 = vmatprep.subr.mxu0 %v206
    %506 = vmatpush1.msra.mxu0 %v205
    %507 = vmatprep.subr.mxu0 %v210
    %508 = vmatpush1.msra.mxu0 %v209
    %509 = vmatprep.subr.mxu0 %v214
    %510 = vmatpush1.msra.mxu0 %v213
    %511 = vmatprep.subr.mxu0 %v218
    %512 = vmatpush1.msra.mxu0 %v217
    %513 = vmatprep.subr.mxu0 %v222
    %514 = vmatpush1.msra.mxu0 %v221
    %515 = vmatprep.subr.mxu0 %v226
    %516 = vmatpush1.msra.mxu0 %v225
    %517 = vmatprep.subr.mxu0 %v230
    %518 = vmatpush1.msra.mxu0 %v229
    %519 = vmatprep.subr.mxu0 %v234
    %520 = vmatpush1.msra.mxu0 %v233
    %521 = vmatprep.subr.mxu0 %v238
    %522 = vmatpush1.msra.mxu0 %v237
    %523 = vmatprep.subr.mxu0 %v242
    %524 = vmatpush1.msra.mxu0 %v241
    %525 = vmatprep.subr.mxu0 %v246
    %526 = vmatpush1.msra.mxu0 %v245
    %527 = vmatprep.subr.mxu0 %v250
    %528 = vmatpush1.msra.mxu0 %v249
    %529 = vmatprep.subr.mxu0 %v254
    %530 = vmatpush1.msra.mxu0 %v253
    %531 = vmatprep.subr.mxu0 0.0
    %532 = vmatpush1.msra.mxu0 0.0
    %533 = vmatprep.subr.mxu0 0.0
    %534 = vmatpush1.msra.mxu0 0.0
    %535 = vmatprep.subr.mxu0 0.0
    %536 = vmatpush1.msra.mxu0 0.0
    %537 = vmatprep.subr.mxu0 0.0
    %538 = vmatpush1.msra.mxu0 0.0
    %539 = vmatprep.subr.mxu0 0.0
    %540 = vmatpush1.msra.mxu0 0.0
    %541 = vmatprep.subr.mxu0 0.0
    %542 = vmatpush1.msra.mxu0 0.0
    %543 = vmatprep.subr.mxu0 0.0
    %544 = vmatpush1.msra.mxu0 0.0
    %545 = vmatprep.subr.mxu0 0.0
    %546 = vmatpush1.msra.mxu0 0.0
    %547 = vmatprep.subr.mxu0 0.0
    %548 = vmatpush1.msra.mxu0 0.0
    %549 = vmatprep.subr.mxu0 0.0
    %550 = vmatpush1.msra.mxu0 0.0
    %551 = vmatprep.subr.mxu0 0.0
    %552 = vmatpush1.msra.mxu0 0.0
    %553 = vmatprep.subr.mxu0 0.0
    %554 = vmatpush1.msra.mxu0 0.0
    %555 = vmatprep.subr.mxu0 0.0
    %556 = vmatpush1.msra.mxu0 0.0
    %557 = vmatprep.subr.mxu0 0.0
    %558 = vmatpush1.msra.mxu0 0.0
    %559 = vmatprep.subr.mxu0 0.0
    %560 = vmatpush1.msra.mxu0 0.0
    %561 = vmatprep.subr.mxu0 0.0
    %562 = vmatpush1.msra.mxu0 0.0
    %563 = vmatprep.mubr.f32.mxu0 0.0
    %564 = vmatmul.mubr.f32.gmra.mrb[0].mxu0 0.0
    %v565 = vpop.f32.mrb[0].mxu0
    %v566 = vadd.f32 0.0, %v565
    %v567 = vpop.f32.mrb[0].mxu0
    %v568 = vadd.f32 0.0, %v567
    %569 = vdwg.mxu0
    %570 = vmatprep.subr.mxu0 %v196
    %571 = vmatpush1.msra.mxu0 %v195
    %572 = vmatprep.subr.mxu0 %v200
    %573 = vmatpush1.msra.mxu0 %v199
    %574 = vmatprep.subr.mxu0 %v204
    %575 = vmatpush1.msra.mxu0 %v203
    %576 = vmatprep.subr.mxu0 %v208
    %577 = vmatpush1.msra.mxu0 %v207
    %578 = vmatprep.subr.mxu0 %v212
    %579 = vmatpush1.msra.mxu0 %v211
    %580 = vmatprep.subr.mxu0 %v216
    %581 = vmatpush1.msra.mxu0 %v215
    %582 = vmatprep.subr.mxu0 %v220
    %583 = vmatpush1.msra.mxu0 %v219
    %584 = vmatprep.subr.mxu0 %v224
    %585 = vmatpush1.msra.mxu0 %v223
    %586 = vmatprep.subr.mxu0 %v228
    %587 = vmatpush1.msra.mxu0 %v227
    %588 = vmatprep.subr.mxu0 %v232
    %589 = vmatpush1.msra.mxu0 %v231
    %590 = vmatprep.subr.mxu0 %v236
    %591 = vmatpush1.msra.mxu0 %v235
    %592 = vmatprep.subr.mxu0 %v240
    %593 = vmatpush1.msra.mxu0 %v239
    %594 = vmatprep.subr.mxu0 %v244
    %595 = vmatpush1.msra.mxu0 %v243
    %596 = vmatprep.subr.mxu0 %v248
    %597 = vmatpush1.msra.mxu0 %v247
    %598 = vmatprep.subr.mxu0 %v252
    %599 = vmatpush1.msra.mxu0 %v251
    %600 = vmatprep.subr.mxu0 %v256
    %601 = vmatpush1.msra.mxu0 %v255
    %602 = vmatprep.subr.mxu0 0.0
    %603 = vmatpush1.msra.mxu0 0.0
    %604 = vmatprep.subr.mxu0 0.0
    %605 = vmatpush1.msra.mxu0 0.0
    %606 = vmatprep.subr.mxu0 0.0
    %607 = vmatpush1.msra.mxu0 0.0
    %608 = vmatprep.subr.mxu0 0.0
    %609 = vmatpush1.msra.mxu0 0.0
    %610 = vmatprep.subr.mxu0 0.0
    %611 = vmatpush1.msra.mxu0 0.0
    %612 = vmatprep.subr.mxu0 0.0
    %613 = vmatpush1.msra.mxu0 0.0
    %614 = vmatprep.subr.mxu0 0.0
    %615 = vmatpush1.msra.mxu0 0.0
    %616 = vmatprep.subr.mxu0 0.0
    %617 = vmatpush1.msra.mxu0 0.0
    %618 = vmatprep.subr.mxu0 0.0
    %619 = vmatpush1.msra.mxu0 0.0
    %620 = vmatprep.subr.mxu0 0.0
    %621 = vmatpush1.msra.mxu0 0.0
    %622 = vmatprep.subr.mxu0 0.0
    %623 = vmatpush1.msra.mxu0 0.0
    %624 = vmatprep.subr.mxu0 0.0
    %625 = vmatpush1.msra.mxu0 0.0
    %626 = vmatprep.subr.mxu0 0.0
    %627 = vmatpush1.msra.mxu0 0.0
    %628 = vmatprep.subr.mxu0 0.0
    %629 = vmatpush1.msra.mxu0 0.0
    %630 = vmatprep.subr.mxu0 0.0
    %631 = vmatpush1.msra.mxu0 0.0
    %632 = vmatprep.subr.mxu0 0.0
    %633 = vmatpush1.msra.mxu0 0.0
    %634 = vmatprep.mubr.f32.mxu0 0.0
    %635 = vmatmul.mubr.f32.gmra.mrb[0].mxu0 0.0
    %v636 = vpop.f32.mrb[0].mxu0
    %v637 = vadd.f32 0.0, %v636
    %v638 = vpop.f32.mrb[0].mxu0
    %v639 = vadd.f32 0.0, %v638
    %640 = vdwg.mxu0
    %v641 = vadd.f32 %v412, %v566
    %v642 = vadd.f32 %v414, %v568
    %v643 = vadd.f32 %v489, %v637
    %v644 = vadd.f32 %v491, %v639
    %v645 = vxor.u32 %v641, 2147483648
    %v646 = vmul.f32 %v645, 1.442695
    %v647 = vpow.pop %v646
    %v648 = vadd.f32 %v647, 1.0
    %v649 = vrcp.pop %v648
    %v650 = vmul.f32 1.0, %v649
    %v651 = vxor.u32 %v642, 2147483648
    %v652 = vmul.f32 %v651, 1.442695
    %v653 = vpow.pop %v652
    %v654 = vadd.f32 %v653, 1.0
    %v655 = vrcp.pop %v654
    %v656 = vmul.f32 1.0, %v655
    %v657 = vtanh.pop %v643
    %v658 = vxor.u32 %v644, 2147483648
    %v659 = vmul.f32 %v658, 1.442695
    %v660 = vpow.pop %v659
    %v661 = vadd.f32 %v660, 1.0
    %v662 = vrcp.pop %v661
    %v663 = vmul.f32 1.0, %v662
    %v664 = vmul.f32 %v656, 0.0
    %v665 = vmul.f32 %v650, %v657
    %v666 = vadd.f32 %v664, %v665
    %v667 = vtanh.pop %v666
    %v668 = vmul.f32 %v663, %v667
    %669 = vst [vmem:[#allocation2] sm:$0x3] %v668
    %670 = vmatprep.subr.mxu0 %v194
    %671 = vmatpush1.msra.mxu0 %v193
    %672 = vmatprep.subr.mxu0 %v198
    %673 = vmatpush1.msra.mxu0 %v197
    %674 = vmatprep.subr.mxu0 %v202
    %675 = vmatpush1.msra.mxu0 %v201
    %676 = vmatprep.subr.mxu0 %v206
    %677 = vmatpush1.msra.mxu0 %v205
    %678 = vmatprep.subr.mxu0 %v210
    %679 = vmatpush1.msra.mxu0 %v209
    %680 = vmatprep.subr.mxu0 %v214
    %681 = vmatpush1.msra.mxu0 %v213
    %682 = vmatprep.subr.mxu0 %v218
    %683 = vmatpush1.msra.mxu0 %v217
    %684 = vmatprep.subr.mxu0 %v222
    %685 = vmatpush1.msra.mxu0 %v221
    %686 = vmatprep.subr.mxu0 %v226
    %687 = vmatpush1.msra.mxu0 %v225
    %688 = vmatprep.subr.mxu0 %v230
    %689 = vmatpush1.msra.mxu0 %v229
    %690 = vmatprep.subr.mxu0 %v234
    %691 = vmatpush1.msra.mxu0 %v233
    %692 = vmatprep.subr.mxu0 %v238
    %693 = vmatpush1.msra.mxu0 %v237
    %694 = vmatprep.subr.mxu0 %v242
    %695 = vmatpush1.msra.mxu0 %v241
    %696 = vmatprep.subr.mxu0 %v246
    %697 = vmatpush1.msra.mxu0 %v245
    %698 = vmatprep.subr.mxu0 %v250
    %699 = vmatpush1.msra.mxu0 %v249
    %700 = vmatprep.subr.mxu0 %v254
    %701 = vmatpush1.msra.mxu0 %v253
    %702 = vmatprep.subr.mxu0 0.0
    %703 = vmatpush1.msra.mxu0 0.0
    %704 = vmatprep.subr.mxu0 0.0
    %705 = vmatpush1.msra.mxu0 0.0
    %706 = vmatprep.subr.mxu0 0.0
    %707 = vmatpush1.msra.mxu0 0.0
    %708 = vmatprep.subr.mxu0 0.0
    %709 = vmatpush1.msra.mxu0 0.0
    %710 = vmatprep.subr.mxu0 0.0
    %711 = vmatpush1.msra.mxu0 0.0
    %712 = vmatprep.subr.mxu0 0.0
    %713 = vmatpush1.msra.mxu0 0.0
    %714 = vmatprep.subr.mxu0 0.0
    %715 = vmatpush1.msra.mxu0 0.0
    %716 = vmatprep.subr.mxu0 0.0
    %717 = vmatpush1.msra.mxu0 0.0
    %718 = vmatprep.subr.mxu0 0.0
    %719 = vmatpush1.msra.mxu0 0.0
    %720 = vmatprep.subr.mxu0 0.0
    %721 = vmatpush1.msra.mxu0 0.0
    %722 = vmatprep.subr.mxu0 0.0
    %723 = vmatpush1.msra.mxu0 0.0
    %724 = vmatprep.subr.mxu0 0.0
    %725 = vmatpush1.msra.mxu0 0.0
    %726 = vmatprep.subr.mxu0 0.0
    %727 = vmatpush1.msra.mxu0 0.0
    %728 = vmatprep.subr.mxu0 0.0
    %729 = vmatpush1.msra.mxu0 0.0
    %730 = vmatprep.subr.mxu0 0.0
    %731 = vmatpush1.msra.mxu0 0.0
    %732 = vmatprep.subr.mxu0 0.0
    %733 = vmatpush1.msra.mxu0 0.0
    %734 = vmatprep.mubr.f32.mxu0 0.0
    %735 = vmatmul.mubr.f32.gmra.mrb[0].mxu0 %v668
    %v736 = vpop.f32.mrb[0].mxu0
    %v737 = vadd.f32 0.0, %v736
    %v738 = vpop.f32.mrb[0].mxu0
    %v739 = vadd.f32 0.0, %v738
    %740 = vdwg.mxu0
    %741 = vmatprep.subr.mxu0 %v196
    %742 = vmatpush1.msra.mxu0 %v195
    %743 = vmatprep.subr.mxu0 %v200
    %744 = vmatpush1.msra.mxu0 %v199
    %745 = vmatprep.subr.mxu0 %v204
    %746 = vmatpush1.msra.mxu0 %v203
    %747 = vmatprep.subr.mxu0 %v208
    %748 = vmatpush1.msra.mxu0 %v207
    %749 = vmatprep.subr.mxu0 %v212
    %750 = vmatpush1.msra.mxu0 %v211
    %751 = vmatprep.subr.mxu0 %v216
    %752 = vmatpush1.msra.mxu0 %v215
    %753 = vmatprep.subr.mxu0 %v220
    %754 = vmatpush1.msra.mxu0 %v219
    %755 = vmatprep.subr.mxu0 %v224
    %756 = vmatpush1.msra.mxu0 %v223
    %757 = vmatprep.subr.mxu0 %v228
    %758 = vmatpush1.msra.mxu0 %v227
    %759 = vmatprep.subr.mxu0 %v232
    %760 = vmatpush1.msra.mxu0 %v231
    %761 = vmatprep.subr.mxu0 %v236
    %762 = vmatpush1.msra.mxu0 %v235
    %763 = vmatprep.subr.mxu0 %v240
    %764 = vmatpush1.msra.mxu0 %v239
    %765 = vmatprep.subr.mxu0 %v244
    %766 = vmatpush1.msra.mxu0 %v243
    %767 = vmatprep.subr.mxu0 %v248
    %768 = vmatpush1.msra.mxu0 %v247
    %769 = vmatprep.subr.mxu0 %v252
    %770 = vmatpush1.msra.mxu0 %v251
    %771 = vmatprep.subr.mxu0 %v256
    %772 = vmatpush1.msra.mxu0 %v255
    %773 = vmatprep.subr.mxu0 0.0
    %774 = vmatpush1.msra.mxu0 0.0
    %775 = vmatprep.subr.mxu0 0.0
    %776 = vmatpush1.msra.mxu0 0.0
    %777 = vmatprep.subr.mxu0 0.0
    %778 = vmatpush1.msra.mxu0 0.0
    %779 = vmatprep.subr.mxu0 0.0
    %780 = vmatpush1.msra.mxu0 0.0
    %781 = vmatprep.subr.mxu0 0.0
    %782 = vmatpush1.msra.mxu0 0.0
    %783 = vmatprep.subr.mxu0 0.0
    %784 = vmatpush1.msra.mxu0 0.0
    %785 = vmatprep.subr.mxu0 0.0
    %786 = vmatpush1.msra.mxu0 0.0
    %787 = vmatprep.subr.mxu0 0.0
    %788 = vmatpush1.msra.mxu0 0.0
    %789 = vmatprep.subr.mxu0 0.0
    %790 = vmatpush1.msra.mxu0 0.0
    %791 = vmatprep.subr.mxu0 0.0
    %792 = vmatpush1.msra.mxu0 0.0
    %793 = vmatprep.subr.mxu0 0.0
    %794 = vmatpush1.msra.mxu0 0.0
    %795 = vmatprep.subr.mxu0 0.0
    %796 = vmatpush1.msra.mxu0 0.0
    %797 = vmatprep.subr.mxu0 0.0
    %798 = vmatpush1.msra.mxu0 0.0
    %799 = vmatprep.subr.mxu0 0.0
    %800 = vmatpush1.msra.mxu0 0.0
    %801 = vmatprep.subr.mxu0 0.0
    %802 = vmatpush1.msra.mxu0 0.0
    %803 = vmatprep.subr.mxu0 0.0
    %804 = vmatpush1.msra.mxu0 0.0
    %805 = vmatprep.mubr.f32.mxu0 0.0
    %806 = vmatmul.mubr.f32.gmra.mrb[0].mxu0 %v668
    %v807 = vpop.f32.mrb[0].mxu0
    %v808 = vadd.f32 0.0, %v807
    %v809 = vpop.f32.mrb[0].mxu0
    %v810 = vadd.f32 0.0, %v809
    %811 = vdwg.mxu0
    %v816 = vrot.slane %v737, 6
    %v817 = vrot.slane %v739, 6
    %v818 = vrot.slane %v808, 6
    %v819 = vrot.slane %v810, 6
    %v824 = vadd.f32 %v412, %v816
    %v825 = vadd.f32 %v414, %v817
    %v826 = vadd.f32 %v489, %v818
    %v827 = vadd.f32 %v491, %v819
    %v828 = vxor.u32 %v824, 2147483648
    %v829 = vmul.f32 %v828, 1.442695
    %v830 = vpow.pop %v829
    %v831 = vadd.f32 %v830, 1.0
    %v832 = vrcp.pop %v831
    %v833 = vmul.f32 1.0, %v832
    %v834 = vxor.u32 %v825, 2147483648
    %v835 = vmul.f32 %v834, 1.442695
    %v836 = vpow.pop %v835
    %v837 = vadd.f32 %v836, 1.0
    %v838 = vrcp.pop %v837
    %v839 = vmul.f32 1.0, %v838
    %v840 = vtanh.pop %v826
    %v841 = vxor.u32 %v827, 2147483648
    %v842 = vmul.f32 %v841, 1.442695
    %v843 = vpow.pop %v842
    %v844 = vadd.f32 %v843, 1.0
    %v845 = vrcp.pop %v844
    %v846 = vmul.f32 1.0, %v845
    %v848 = vrot.slane %v666, 6
    %v850 = vmul.f32 %v839, %v848
    %v851 = vmul.f32 %v833, %v840
    %v852 = vadd.f32 %v850, %v851
    %v853 = vtanh.pop %v852
    %v854 = vmul.f32 %v846, %v853
    %855 = vst [vmem:[#allocation2] sm:$0xc] %v854
    %v857 = vrot.slane %v854, 2
    %859 = vmatprep.subr.mxu0 %v194
    %860 = vmatpush1.msra.mxu0 %v193
    %861 = vmatprep.subr.mxu0 %v198
    %862 = vmatpush1.msra.mxu0 %v197
    %863 = vmatprep.subr.mxu0 %v202
    %864 = vmatpush1.msra.mxu0 %v201
    %865 = vmatprep.subr.mxu0 %v206
    %866 = vmatpush1.msra.mxu0 %v205
    %867 = vmatprep.subr.mxu0 %v210
    %868 = vmatpush1.msra.mxu0 %v209
    %869 = vmatprep.subr.mxu0 %v214
    %870 = vmatpush1.msra.mxu0 %v213
    %871 = vmatprep.subr.mxu0 %v218
    %872 = vmatpush1.msra.mxu0 %v217
    %873 = vmatprep.subr.mxu0 %v222
    %874 = vmatpush1.msra.mxu0 %v221
    %875 = vmatprep.subr.mxu0 %v226
    %876 = vmatpush1.msra.mxu0 %v225
    %877 = vmatprep.subr.mxu0 %v230
    %878 = vmatpush1.msra.mxu0 %v229
    %879 = vmatprep.subr.mxu0 %v234
    %880 = vmatpush1.msra.mxu0 %v233
    %881 = vmatprep.subr.mxu0 %v238
    %882 = vmatpush1.msra.mxu0 %v237
    %883 = vmatprep.subr.mxu0 %v242
    %884 = vmatpush1.msra.mxu0 %v241
    %885 = vmatprep.subr.mxu0 %v246
    %886 = vmatpush1.msra.mxu0 %v245
    %887 = vmatprep.subr.mxu0 %v250
    %888 = vmatpush1.msra.mxu0 %v249
    %889 = vmatprep.subr.mxu0 %v254
    %890 = vmatpush1.msra.mxu0 %v253
    %891 = vmatprep.subr.mxu0 0.0
    %892 = vmatpush1.msra.mxu0 0.0
    %893 = vmatprep.subr.mxu0 0.0
    %894 = vmatpush1.msra.mxu0 0.0
    %895 = vmatprep.subr.mxu0 0.0
    %896 = vmatpush1.msra.mxu0 0.0
    %897 = vmatprep.subr.mxu0 0.0
    %898 = vmatpush1.msra.mxu0 0.0
    %899 = vmatprep.subr.mxu0 0.0
    %900 = vmatpush1.msra.mxu0 0.0
    %901 = vmatprep.subr.mxu0 0.0
    %902 = vmatpush1.msra.mxu0 0.0
    %903 = vmatprep.subr.mxu0 0.0
    %904 = vmatpush1.msra.mxu0 0.0
    %905 = vmatprep.subr.mxu0 0.0
    %906 = vmatpush1.msra.mxu0 0.0
    %907 = vmatprep.subr.mxu0 0.0
    %908 = vmatpush1.msra.mxu0 0.0
    %909 = vmatprep.subr.mxu0 0.0
    %910 = vmatpush1.msra.mxu0 0.0
    %911 = vmatprep.subr.mxu0 0.0
    %912 = vmatpush1.msra.mxu0 0.0
    %913 = vmatprep.subr.mxu0 0.0
    %914 = vmatpush1.msra.mxu0 0.0
    %915 = vmatprep.subr.mxu0 0.0
    %916 = vmatpush1.msra.mxu0 0.0
    %917 = vmatprep.subr.mxu0 0.0
    %918 = vmatpush1.msra.mxu0 0.0
    %919 = vmatprep.subr.mxu0 0.0
    %920 = vmatpush1.msra.mxu0 0.0
    %921 = vmatprep.subr.mxu0 0.0
    %922 = vmatpush1.msra.mxu0 0.0
    %923 = vmatprep.mubr.f32.mxu0 0.0
    %924 = vmatmul.mubr.f32.gmra.mrb[0].mxu0 %v857
    %v925 = vpop.f32.mrb[0].mxu0
    %v926 = vadd.f32 0.0, %v925
    %v927 = vpop.f32.mrb[0].mxu0
    %v928 = vadd.f32 0.0, %v927
    %929 = vdwg.mxu0
    %930 = vmatprep.subr.mxu0 %v196
    %931 = vmatpush1.msra.mxu0 %v195
    %932 = vmatprep.subr.mxu0 %v200
    %933 = vmatpush1.msra.mxu0 %v199
    %934 = vmatprep.subr.mxu0 %v204
    %935 = vmatpush1.msra.mxu0 %v203
    %936 = vmatprep.subr.mxu0 %v208
    %937 = vmatpush1.msra.mxu0 %v207
    %938 = vmatprep.subr.mxu0 %v212
    %939 = vmatpush1.msra.mxu0 %v211
    %940 = vmatprep.subr.mxu0 %v216
    %941 = vmatpush1.msra.mxu0 %v215
    %942 = vmatprep.subr.mxu0 %v220
    %943 = vmatpush1.msra.mxu0 %v219
    %944 = vmatprep.subr.mxu0 %v224
    %945 = vmatpush1.msra.mxu0 %v223
    %946 = vmatprep.subr.mxu0 %v228
    %947 = vmatpush1.msra.mxu0 %v227
    %948 = vmatprep.subr.mxu0 %v232
    %949 = vmatpush1.msra.mxu0 %v231
    %950 = vmatprep.subr.mxu0 %v236
    %951 = vmatpush1.msra.mxu0 %v235
    %952 = vmatprep.subr.mxu0 %v240
    %953 = vmatpush1.msra.mxu0 %v239
    %954 = vmatprep.subr.mxu0 %v244
    %955 = vmatpush1.msra.mxu0 %v243
    %956 = vmatprep.subr.mxu0 %v248
    %957 = vmatpush1.msra.mxu0 %v247
    %958 = vmatprep.subr.mxu0 %v252
    %959 = vmatpush1.msra.mxu0 %v251
    %960 = vmatprep.subr.mxu0 %v256
    %961 = vmatpush1.msra.mxu0 %v255
    %962 = vmatprep.subr.mxu0 0.0
    %963 = vmatpush1.msra.mxu0 0.0
    %964 = vmatprep.subr.mxu0 0.0
    %965 = vmatpush1.msra.mxu0 0.0
    %966 = vmatprep.subr.mxu0 0.0
    %967 = vmatpush1.msra.mxu0 0.0
    %968 = vmatprep.subr.mxu0 0.0
    %969 = vmatpush1.msra.mxu0 0.0
    %970 = vmatprep.subr.mxu0 0.0
    %971 = vmatpush1.msra.mxu0 0.0
    %972 = vmatprep.subr.mxu0 0.0
    %973 = vmatpush1.msra.mxu0 0.0
    %974 = vmatprep.subr.mxu0 0.0
    %975 = vmatpush1.msra.mxu0 0.0
    %976 = vmatprep.subr.mxu0 0.0
    %977 = vmatpush1.msra.mxu0 0.0
    %978 = vmatprep.subr.mxu0 0.0
    %979 = vmatpush1.msra.mxu0 0.0
    %980 = vmatprep.subr.mxu0 0.0
    %981 = vmatpush1.msra.mxu0 0.0
    %982 = vmatprep.subr.mxu0 0.0
    %983 = vmatpush1.msra.mxu0 0.0
    %984 = vmatprep.subr.mxu0 0.0
    %985 = vmatpush1.msra.mxu0 0.0
    %986 = vmatprep.subr.mxu0 0.0
    %987 = vmatpush1.msra.mxu0 0.0
    %988 = vmatprep.subr.mxu0 0.0
    %989 = vmatpush1.msra.mxu0 0.0
    %990 = vmatprep.subr.mxu0 0.0
    %991 = vmatpush1.msra.mxu0 0.0
    %992 = vmatprep.subr.mxu0 0.0
    %993 = vmatpush1.msra.mxu0 0.0
    %994 = vmatprep.mubr.f32.mxu0 0.0
    %995 = vmatmul.mubr.f32.gmra.mrb[0].mxu0 %v857
    %v996 = vpop.f32.mrb[0].mxu0
    %v997 = vadd.f32 0.0, %v996
    %v998 = vpop.f32.mrb[0].mxu0
    %v999 = vadd.f32 0.0, %v998
    %1000 = vdwg.mxu0
    %v1005 = vrot.slane %v926, 4
    %v1006 = vrot.slane %v928, 4
    %v1007 = vrot.slane %v997, 4
    %v1008 = vrot.slane %v999, 4
    %v1013 = vadd.f32 %v412, %v1005
    %v1014 = vadd.f32 %v414, %v1006
    %v1015 = vadd.f32 %v489, %v1007
    %v1016 = vadd.f32 %v491, %v1008
    %v1017 = vxor.u32 %v1013, 2147483648
    %v1018 = vmul.f32 %v1017, 1.442695
    %v1019 = vpow.pop %v1018
    %v1020 = vadd.f32 %v1019, 1.0
    %v1021 = vrcp.pop %v1020
    %v1022 = vmul.f32 1.0, %v1021
    %v1023 = vxor.u32 %v1014, 2147483648
    %v1024 = vmul.f32 %v1023, 1.442695
    %v1025 = vpow.pop %v1024
    %v1026 = vadd.f32 %v1025, 1.0
    %v1027 = vrcp.pop %v1026
    %v1028 = vmul.f32 1.0, %v1027
    %v1029 = vtanh.pop %v1015
    %v1030 = vxor.u32 %v1016, 2147483648
    %v1031 = vmul.f32 %v1030, 1.442695
    %v1032 = vpow.pop %v1031
    %v1033 = vadd.f32 %v1032, 1.0
    %v1034 = vrcp.pop %v1033
    %v1035 = vmul.f32 1.0, %v1034
    %v1037 = vrot.slane %v852, 6
    %v1039 = vmul.f32 %v1028, %v1037
    %v1040 = vmul.f32 %v1022, %v1029
    %v1041 = vadd.f32 %v1039, %v1040
    %v1042 = vtanh.pop %v1041
    %v1043 = vmul.f32 %v1035, %v1042
    %1044 = vst [vmem:[#allocation2] sm:$0x30] %v1043
    %v1046 = vrot.slane %v1043, 4
    %1048 = vmatprep.subr.mxu0 %v194
    %1049 = vmatpush1.msra.mxu0 %v193
    %1050 = vmatprep.subr.mxu0 %v198
    %1051 = vmatpush1.msra.mxu0 %v197
    %1052 = vmatprep.subr.mxu0 %v202
    %1053 = vmatpush1.msra.mxu0 %v201
    %1054 = vmatprep.subr.mxu0 %v206
    %1055 = vmatpush1.msra.mxu0 %v205
    %1056 = vmatprep.subr.mxu0 %v210
    %1057 = vmatpush1.msra.mxu0 %v209
    %1058 = vmatprep.subr.mxu0 %v214
    %1059 = vmatpush1.msra.mxu0 %v213
    %1060 = vmatprep.subr.mxu0 %v218
    %1061 = vmatpush1.msra.mxu0 %v217
    %1062 = vmatprep.subr.mxu0 %v222
    %1063 = vmatpush1.msra.mxu0 %v221
    %1064 = vmatprep.subr.mxu0 %v226
    %1065 = vmatpush1.msra.mxu0 %v225
    %1066 = vmatprep.subr.mxu0 %v230
    %1067 = vmatpush1.msra.mxu0 %v229
    %1068 = vmatprep.subr.mxu0 %v234
    %1069 = vmatpush1.msra.mxu0 %v233
    %1070 = vmatprep.subr.mxu0 %v238
    %1071 = vmatpush1.msra.mxu0 %v237
    %1072 = vmatprep.subr.mxu0 %v242
    %1073 = vmatpush1.msra.mxu0 %v241
    %1074 = vmatprep.subr.mxu0 %v246
    %1075 = vmatpush1.msra.mxu0 %v245
    %1076 = vmatprep.subr.mxu0 %v250
    %1077 = vmatpush1.msra.mxu0 %v249
    %1078 = vmatprep.subr.mxu0 %v254
    %1079 = vmatpush1.msra.mxu0 %v253
    %1080 = vmatprep.subr.mxu0 0.0
    %1081 = vmatpush1.msra.mxu0 0.0
    %1082 = vmatprep.subr.mxu0 0.0
    %1083 = vmatpush1.msra.mxu0 0.0
    %1084 = vmatprep.subr.mxu0 0.0
    %1085 = vmatpush1.msra.mxu0 0.0
    %1086 = vmatprep.subr.mxu0 0.0
    %1087 = vmatpush1.msra.mxu0 0.0
    %1088 = vmatprep.subr.mxu0 0.0
    %1089 = vmatpush1.msra.mxu0 0.0
    %1090 = vmatprep.subr.mxu0 0.0
    %1091 = vmatpush1.msra.mxu0 0.0
    %1092 = vmatprep.subr.mxu0 0.0
    %1093 = vmatpush1.msra.mxu0 0.0
    %1094 = vmatprep.subr.mxu0 0.0
    %1095 = vmatpush1.msra.mxu0 0.0
    %1096 = vmatprep.subr.mxu0 0.0
    %1097 = vmatpush1.msra.mxu0 0.0
    %1098 = vmatprep.subr.mxu0 0.0
    %1099 = vmatpush1.msra.mxu0 0.0
    %1100 = vmatprep.subr.mxu0 0.0
    %1101 = vmatpush1.msra.mxu0 0.0
    %1102 = vmatprep.subr.mxu0 0.0
    %1103 = vmatpush1.msra.mxu0 0.0
    %1104 = vmatprep.subr.mxu0 0.0
    %1105 = vmatpush1.msra.mxu0 0.0
    %1106 = vmatprep.subr.mxu0 0.0
    %1107 = vmatpush1.msra.mxu0 0.0
    %1108 = vmatprep.subr.mxu0 0.0
    %1109 = vmatpush1.msra.mxu0 0.0
    %1110 = vmatprep.subr.mxu0 0.0
    %1111 = vmatpush1.msra.mxu0 0.0
    %1112 = vmatprep.mubr.f32.mxu0 0.0
    %1113 = vmatmul.mubr.f32.gmra.mrb[0].mxu0 %v1046
    %v1114 = vpop.f32.mrb[0].mxu0
    %v1115 = vadd.f32 0.0, %v1114
    %v1116 = vpop.f32.mrb[0].mxu0
    %v1117 = vadd.f32 0.0, %v1116
    %1118 = vdwg.mxu0
    %1119 = vmatprep.subr.mxu0 %v196
    %1120 = vmatpush1.msra.mxu0 %v195
    %1121 = vmatprep.subr.mxu0 %v200
    %1122 = vmatpush1.msra.mxu0 %v199
    %1123 = vmatprep.subr.mxu0 %v204
    %1124 = vmatpush1.msra.mxu0 %v203
    %1125 = vmatprep.subr.mxu0 %v208
    %1126 = vmatpush1.msra.mxu0 %v207
    %1127 = vmatprep.subr.mxu0 %v212
    %1128 = vmatpush1.msra.mxu0 %v211
    %1129 = vmatprep.subr.mxu0 %v216
    %1130 = vmatpush1.msra.mxu0 %v215
    %1131 = vmatprep.subr.mxu0 %v220
    %1132 = vmatpush1.msra.mxu0 %v219
    %1133 = vmatprep.subr.mxu0 %v224
    %1134 = vmatpush1.msra.mxu0 %v223
    %1135 = vmatprep.subr.mxu0 %v228
    %1136 = vmatpush1.msra.mxu0 %v227
    %1137 = vmatprep.subr.mxu0 %v232
    %1138 = vmatpush1.msra.mxu0 %v231
    %1139 = vmatprep.subr.mxu0 %v236
    %1140 = vmatpush1.msra.mxu0 %v235
    %1141 = vmatprep.subr.mxu0 %v240
    %1142 = vmatpush1.msra.mxu0 %v239
    %1143 = vmatprep.subr.mxu0 %v244
    %1144 = vmatpush1.msra.mxu0 %v243
    %1145 = vmatprep.subr.mxu0 %v248
    %1146 = vmatpush1.msra.mxu0 %v247
    %1147 = vmatprep.subr.mxu0 %v252
    %1148 = vmatpush1.msra.mxu0 %v251
    %1149 = vmatprep.subr.mxu0 %v256
    %1150 = vmatpush1.msra.mxu0 %v255
    %1151 = vmatprep.subr.mxu0 0.0
    %1152 = vmatpush1.msra.mxu0 0.0
    %1153 = vmatprep.subr.mxu0 0.0
    %1154 = vmatpush1.msra.mxu0 0.0
    %1155 = vmatprep.subr.mxu0 0.0
    %1156 = vmatpush1.msra.mxu0 0.0
    %1157 = vmatprep.subr.mxu0 0.0
    %1158 = vmatpush1.msra.mxu0 0.0
    %1159 = vmatprep.subr.mxu0 0.0
    %1160 = vmatpush1.msra.mxu0 0.0
    %1161 = vmatprep.subr.mxu0 0.0
    %1162 = vmatpush1.msra.mxu0 0.0
    %1163 = vmatprep.subr.mxu0 0.0
    %1164 = vmatpush1.msra.mxu0 0.0
    %1165 = vmatprep.subr.mxu0 0.0
    %1166 = vmatpush1.msra.mxu0 0.0
    %1167 = vmatprep.subr.mxu0 0.0
    %1168 = vmatpush1.msra.mxu0 0.0
    %1169 = vmatprep.subr.mxu0 0.0
    %1170 = vmatpush1.msra.mxu0 0.0
    %1171 = vmatprep.subr.mxu0 0.0
    %1172 = vmatpush1.msra.mxu0 0.0
    %1173 = vmatprep.subr.mxu0 0.0
    %1174 = vmatpush1.msra.mxu0 0.0
    %1175 = vmatprep.subr.mxu0 0.0
    %1176 = vmatpush1.msra.mxu0 0.0
    %1177 = vmatprep.subr.mxu0 0.0
    %1178 = vmatpush1.msra.mxu0 0.0
    %1179 = vmatprep.subr.mxu0 0.0
    %1180 = vmatpush1.msra.mxu0 0.0
    %1181 = vmatprep.subr.mxu0 0.0
    %1182 = vmatpush1.msra.mxu0 0.0
    %1183 = vmatprep.mubr.f32.mxu0 0.0
    %1184 = vmatmul.mubr.f32.gmra.mrb[0].mxu0 %v1046
    %v1185 = vpop.f32.mrb[0].mxu0
    %v1186 = vadd.f32 0.0, %v1185
    %v1187 = vpop.f32.mrb[0].mxu0
    %v1188 = vadd.f32 0.0, %v1187
    %1189 = vdwg.mxu0
    %v1194 = vrot.slane %v1115, 2
    %v1195 = vrot.slane %v1117, 2
    %v1196 = vrot.slane %v1186, 2
    %v1197 = vrot.slane %v1188, 2
    %v1202 = vadd.f32 %v412, %v1194
    %v1203 = vadd.f32 %v414, %v1195
    %v1204 = vadd.f32 %v489, %v1196
    %v1205 = vadd.f32 %v491, %v1197
    %v1206 = vxor.u32 %v1202, 2147483648
    %v1207 = vmul.f32 %v1206, 1.442695
    %v1208 = vpow.pop %v1207
    %v1209 = vadd.f32 %v1208, 1.0
    %v1210 = vrcp.pop %v1209
    %v1211 = vmul.f32 1.0, %v1210
    %v1212 = vxor.u32 %v1203, 2147483648
    %v1213 = vmul.f32 %v1212, 1.442695
    %v1214 = vpow.pop %v1213
    %v1215 = vadd.f32 %v1214, 1.0
    %v1216 = vrcp.pop %v1215
    %v1217 = vmul.f32 1.0, %v1216
    %v1218 = vtanh.pop %v1204
    %v1219 = vxor.u32 %v1205, 2147483648
    %v1220 = vmul.f32 %v1219, 1.442695
    %v1221 = vpow.pop %v1220
    %v1222 = vadd.f32 %v1221, 1.0
    %v1223 = vrcp.pop %v1222
    %v1224 = vmul.f32 1.0, %v1223
    %v1226 = vrot.slane %v1041, 6
    %v1228 = vmul.f32 %v1217, %v1226
    %v1229 = vmul.f32 %v1211, %v1218
    %v1230 = vadd.f32 %v1228, %v1229
    %v1231 = vtanh.pop %v1230
    %v1232 = vmul.f32 %v1224, %v1231
    %1233 = vst [vmem:[#allocation2] sm:$0xc0] %v1232
    %v1235 = vrot.slane %v1232, 6
    %1237 = vmatprep.subr.mxu0 %v194
    %1238 = vmatpush1.msra.mxu0 %v193
    %1239 = vmatprep.subr.mxu0 %v198
    %1240 = vmatpush1.msra.mxu0 %v197
    %1241 = vmatprep.subr.mxu0 %v202
    %1242 = vmatpush1.msra.mxu0 %v201
    %1243 = vmatprep.subr.mxu0 %v206
    %1244 = vmatpush1.msra.mxu0 %v205
    %1245 = vmatprep.subr.mxu0 %v210
    %1246 = vmatpush1.msra.mxu0 %v209
    %1247 = vmatprep.subr.mxu0 %v214
    %1248 = vmatpush1.msra.mxu0 %v213
    %1249 = vmatprep.subr.mxu0 %v218
    %1250 = vmatpush1.msra.mxu0 %v217
    %1251 = vmatprep.subr.mxu0 %v222
    %1252 = vmatpush1.msra.mxu0 %v221
    %1253 = vmatprep.subr.mxu0 %v226
    %1254 = vmatpush1.msra.mxu0 %v225
    %1255 = vmatprep.subr.mxu0 %v230
    %1256 = vmatpush1.msra.mxu0 %v229
    %1257 = vmatprep.subr.mxu0 %v234
    %1258 = vmatpush1.msra.mxu0 %v233
    %1259 = vmatprep.subr.mxu0 %v238
    %1260 = vmatpush1.msra.mxu0 %v237
    %1261 = vmatprep.subr.mxu0 %v242
    %1262 = vmatpush1.msra.mxu0 %v241
    %1263 = vmatprep.subr.mxu0 %v246
    %1264 = vmatpush1.msra.mxu0 %v245
    %1265 = vmatprep.subr.mxu0 %v250
    %1266 = vmatpush1.msra.mxu0 %v249
    %1267 = vmatprep.subr.mxu0 %v254
    %1268 = vmatpush1.msra.mxu0 %v253
    %1269 = vmatprep.subr.mxu0 0.0
    %1270 = vmatpush1.msra.mxu0 0.0
    %1271 = vmatprep.subr.mxu0 0.0
    %1272 = vmatpush1.msra.mxu0 0.0
    %1273 = vmatprep.subr.mxu0 0.0
    %1274 = vmatpush1.msra.mxu0 0.0
    %1275 = vmatprep.subr.mxu0 0.0
    %1276 = vmatpush1.msra.mxu0 0.0
    %1277 = vmatprep.subr.mxu0 0.0
    %1278 = vmatpush1.msra.mxu0 0.0
    %1279 = vmatprep.subr.mxu0 0.0
    %1280 = vmatpush1.msra.mxu0 0.0
    %1281 = vmatprep.subr.mxu0 0.0
    %1282 = vmatpush1.msra.mxu0 0.0
    %1283 = vmatprep.subr.mxu0 0.0
    %1284 = vmatpush1.msra.mxu0 0.0
    %1285 = vmatprep.subr.mxu0 0.0
    %1286 = vmatpush1.msra.mxu0 0.0
    %1287 = vmatprep.subr.mxu0 0.0
    %1288 = vmatpush1.msra.mxu0 0.0
    %1289 = vmatprep.subr.mxu0 0.0
    %1290 = vmatpush1.msra.mxu0 0.0
    %1291 = vmatprep.subr.mxu0 0.0
    %1292 = vmatpush1.msra.mxu0 0.0
    %1293 = vmatprep.subr.mxu0 0.0
    %1294 = vmatpush1.msra.mxu0 0.0
    %1295 = vmatprep.subr.mxu0 0.0
    %1296 = vmatpush1.msra.mxu0 0.0
    %1297 = vmatprep.subr.mxu0 0.0
    %1298 = vmatpush1.msra.mxu0 0.0
    %1299 = vmatprep.subr.mxu0 0.0
    %1300 = vmatpush1.msra.mxu0 0.0
    %1301 = vmatprep.mubr.f32.mxu0 0.0
    %1302 = vmatmul.mubr.f32.gmra.mrb[0].mxu0 %v1235
    %v1303 = vpop.f32.mrb[0].mxu0
    %v1304 = vadd.f32 0.0, %v1303
    %v1305 = vpop.f32.mrb[0].mxu0
    %v1306 = vadd.f32 0.0, %v1305
    %1307 = vdwg.mxu0
    %1308 = vmatprep.subr.mxu0 %v196
    %1309 = vmatpush1.msra.mxu0 %v195
    %1310 = vmatprep.subr.mxu0 %v200
    %1311 = vmatpush1.msra.mxu0 %v199
    %1312 = vmatprep.subr.mxu0 %v204
    %1313 = vmatpush1.msra.mxu0 %v203
    %1314 = vmatprep.subr.mxu0 %v208
    %1315 = vmatpush1.msra.mxu0 %v207
    %1316 = vmatprep.subr.mxu0 %v212
    %1317 = vmatpush1.msra.mxu0 %v211
    %1318 = vmatprep.subr.mxu0 %v216
    %1319 = vmatpush1.msra.mxu0 %v215
    %1320 = vmatprep.subr.mxu0 %v220
    %1321 = vmatpush1.msra.mxu0 %v219
    %1322 = vmatprep.subr.mxu0 %v224
    %1323 = vmatpush1.msra.mxu0 %v223
    %1324 = vmatprep.subr.mxu0 %v228
    %1325 = vmatpush1.msra.mxu0 %v227
    %1326 = vmatprep.subr.mxu0 %v232
    %1327 = vmatpush1.msra.mxu0 %v231
    %1328 = vmatprep.subr.mxu0 %v236
    %1329 = vmatpush1.msra.mxu0 %v235
    %1330 = vmatprep.subr.mxu0 %v240
    %1331 = vmatpush1.msra.mxu0 %v239
    %1332 = vmatprep.subr.mxu0 %v244
    %1333 = vmatpush1.msra.mxu0 %v243
    %1334 = vmatprep.subr.mxu0 %v248
    %1335 = vmatpush1.msra.mxu0 %v247
    %1336 = vmatprep.subr.mxu0 %v252
    %1337 = vmatpush1.msra.mxu0 %v251
    %1338 = vmatprep.subr.mxu0 %v256
    %1339 = vmatpush1.msra.mxu0 %v255
    %1340 = vmatprep.subr.mxu0 0.0
    %1341 = vmatpush1.msra.mxu0 0.0
    %1342 = vmatprep.subr.mxu0 0.0
    %1343 = vmatpush1.msra.mxu0 0.0
    %1344 = vmatprep.subr.mxu0 0.0
    %1345 = vmatpush1.msra.mxu0 0.0
    %1346 = vmatprep.subr.mxu0 0.0
    %1347 = vmatpush1.msra.mxu0 0.0
    %1348 = vmatprep.subr.mxu0 0.0
    %1349 = vmatpush1.msra.mxu0 0.0
    %1350 = vmatprep.subr.mxu0 0.0
    %1351 = vmatpush1.msra.mxu0 0.0
    %1352 = vmatprep.subr.mxu0 0.0
    %1353 = vmatpush1.msra.mxu0 0.0
    %1354 = vmatprep.subr.mxu0 0.0
    %1355 = vmatpush1.msra.mxu0 0.0
    %1356 = vmatprep.subr.mxu0 0.0
    %1357 = vmatpush1.msra.mxu0 0.0
    %1358 = vmatprep.subr.mxu0 0.0
    %1359 = vmatpush1.msra.mxu0 0.0
    %1360 = vmatprep.subr.mxu0 0.0
    %1361 = vmatpush1.msra.mxu0 0.0
    %1362 = vmatprep.subr.mxu0 0.0
    %1363 = vmatpush1.msra.mxu0 0.0
    %1364 = vmatprep.subr.mxu0 0.0
    %1365 = vmatpush1.msra.mxu0 0.0
    %1366 = vmatprep.subr.mxu0 0.0
    %1367 = vmatpush1.msra.mxu0 0.0
    %1368 = vmatprep.subr.mxu0 0.0
    %1369 = vmatpush1.msra.mxu0 0.0
    %1370 = vmatprep.subr.mxu0 0.0
    %1371 = vmatpush1.msra.mxu0 0.0
    %1372 = vmatprep.mubr.f32.mxu0 0.0
    %1373 = vmatmul.mubr.f32.gmra.mrb[0].mxu0 %v1235
    %v1374 = vpop.f32.mrb[0].mxu0
    %v1375 = vadd.f32 0.0, %v1374
    %v1376 = vpop.f32.mrb[0].mxu0
    %v1377 = vadd.f32 0.0, %v1376
    %1378 = vdwg.mxu0
    %v1379 = vadd.f32 %v418, %v1304
    %v1380 = vadd.f32 %v420, %v1306
    %v1381 = vadd.f32 %v495, %v1375
    %v1382 = vadd.f32 %v497, %v1377
    %v1383 = vxor.u32 %v1379, 2147483648
    %v1384 = vmul.f32 %v1383, 1.442695
    %v1385 = vpow.pop %v1384
    %v1386 = vadd.f32 %v1385, 1.0
    %v1387 = vrcp.pop %v1386
    %v1388 = vmul.f32 1.0, %v1387
    %v1389 = vxor.u32 %v1380, 2147483648
    %v1390 = vmul.f32 %v1389, 1.442695
    %v1391 = vpow.pop %v1390
    %v1392 = vadd.f32 %v1391, 1.0
    %v1393 = vrcp.pop %v1392
    %v1394 = vmul.f32 1.0, %v1393
    %v1395 = vtanh.pop %v1381
    %v1396 = vxor.u32 %v1382, 2147483648
    %v1397 = vmul.f32 %v1396, 1.442695
    %v1398 = vpow.pop %v1397
    %v1399 = vadd.f32 %v1398, 1.0
    %v1400 = vrcp.pop %v1399
    %v1401 = vmul.f32 1.0, %v1400
    %v1403 = vrot.slane %v1230, 6
    %v1405 = vmul.f32 %v1394, %v1403
    %v1406 = vmul.f32 %v1388, %v1395
    %v1407 = vadd.f32 %v1405, %v1406
    %v1408 = vtanh.pop %v1407
    %v1409 = vmul.f32 %v1401, %v1408
    %1410 = vst [vmem:[#allocation2 + $0x8] sm:$0x3] %v1409
    %1411 = vmatprep.subr.mxu0 %v194
    %1412 = vmatpush1.msra.mxu0 %v193
    %1413 = vmatprep.subr.mxu0 %v198
    %1414 = vmatpush1.msra.mxu0 %v197
    %1415 = vmatprep.subr.mxu0 %v202
    %1416 = vmatpush1.msra.mxu0 %v201
    %1417 = vmatprep.subr.mxu0 %v206
    %1418 = vmatpush1.msra.mxu0 %v205
    %1419 = vmatprep.subr.mxu0 %v210
    %1420 = vmatpush1.msra.mxu0 %v209
    %1421 = vmatprep.subr.mxu0 %v214
    %1422 = vmatpush1.msra.mxu0 %v213
    %1423 = vmatprep.subr.mxu0 %v218
    %1424 = vmatpush1.msra.mxu0 %v217
    %1425 = vmatprep.subr.mxu0 %v222
    %1426 = vmatpush1.msra.mxu0 %v221
    %1427 = vmatprep.subr.mxu0 %v226
    %1428 = vmatpush1.msra.mxu0 %v225
    %1429 = vmatprep.subr.mxu0 %v230
    %1430 = vmatpush1.msra.mxu0 %v229
    %1431 = vmatprep.subr.mxu0 %v234
    %1432 = vmatpush1.msra.mxu0 %v233
    %1433 = vmatprep.subr.mxu0 %v238
    %1434 = vmatpush1.msra.mxu0 %v237
    %1435 = vmatprep.subr.mxu0 %v242
    %1436 = vmatpush1.msra.mxu0 %v241
    %1437 = vmatprep.subr.mxu0 %v246
    %1438 = vmatpush1.msra.mxu0 %v245
    %1439 = vmatprep.subr.mxu0 %v250
    %1440 = vmatpush1.msra.mxu0 %v249
    %1441 = vmatprep.subr.mxu0 %v254
    %1442 = vmatpush1.msra.mxu0 %v253
    %1443 = vmatprep.subr.mxu0 0.0
    %1444 = vmatpush1.msra.mxu0 0.0
    %1445 = vmatprep.subr.mxu0 0.0
    %1446 = vmatpush1.msra.mxu0 0.0
    %1447 = vmatprep.subr.mxu0 0.0
    %1448 = vmatpush1.msra.mxu0 0.0
    %1449 = vmatprep.subr.mxu0 0.0
    %1450 = vmatpush1.msra.mxu0 0.0
    %1451 = vmatprep.subr.mxu0 0.0
    %1452 = vmatpush1.msra.mxu0 0.0
    %1453 = vmatprep.subr.mxu0 0.0
    %1454 = vmatpush1.msra.mxu0 0.0
    %1455 = vmatprep.subr.mxu0 0.0
    %1456 = vmatpush1.msra.mxu0 0.0
    %1457 = vmatprep.subr.mxu0 0.0
    %1458 = vmatpush1.msra.mxu0 0.0
    %1459 = vmatprep.subr.mxu0 0.0
    %1460 = vmatpush1.msra.mxu0 0.0
    %1461 = vmatprep.subr.mxu0 0.0
    %1462 = vmatpush1.msra.mxu0 0.0
    %1463 = vmatprep.subr.mxu0 0.0
    %1464 = vmatpush1.msra.mxu0 0.0
    %1465 = vmatprep.subr.mxu0 0.0
    %1466 = vmatpush1.msra.mxu0 0.0
    %1467 = vmatprep.subr.mxu0 0.0
    %1468 = vmatpush1.msra.mxu0 0.0
    %1469 = vmatprep.subr.mxu0 0.0
    %1470 = vmatpush1.msra.mxu0 0.0
    %1471 = vmatprep.subr.mxu0 0.0
    %1472 = vmatpush1.msra.mxu0 0.0
    %1473 = vmatprep.subr.mxu0 0.0
    %1474 = vmatpush1.msra.mxu0 0.0
    %1475 = vmatprep.mubr.f32.mxu0 0.0
    %1476 = vmatmul.mubr.f32.gmra.mrb[0].mxu0 %v1409
    %v1477 = vpop.f32.mrb[0].mxu0
    %v1478 = vadd.f32 0.0, %v1477
    %v1479 = vpop.f32.mrb[0].mxu0
    %v1480 = vadd.f32 0.0, %v1479
    %1481 = vdwg.mxu0
    %1482 = vmatprep.subr.mxu0 %v196
    %1483 = vmatpush1.msra.mxu0 %v195
    %1484 = vmatprep.subr.mxu0 %v200
    %1485 = vmatpush1.msra.mxu0 %v199
    %1486 = vmatprep.subr.mxu0 %v204
    %1487 = vmatpush1.msra.mxu0 %v203
    %1488 = vmatprep.subr.mxu0 %v208
    %1489 = vmatpush1.msra.mxu0 %v207
    %1490 = vmatprep.subr.mxu0 %v212
    %1491 = vmatpush1.msra.mxu0 %v211
    %1492 = vmatprep.subr.mxu0 %v216
    %1493 = vmatpush1.msra.mxu0 %v215
    %1494 = vmatprep.subr.mxu0 %v220
    %1495 = vmatpush1.msra.mxu0 %v219
    %1496 = vmatprep.subr.mxu0 %v224
    %1497 = vmatpush1.msra.mxu0 %v223
    %1498 = vmatprep.subr.mxu0 %v228
    %1499 = vmatpush1.msra.mxu0 %v227
    %1500 = vmatprep.subr.mxu0 %v232
    %1501 = vmatpush1.msra.mxu0 %v231
    %1502 = vmatprep.subr.mxu0 %v236
    %1503 = vmatpush1.msra.mxu0 %v235
    %1504 = vmatprep.subr.mxu0 %v240
    %1505 = vmatpush1.msra.mxu0 %v239
    %1506 = vmatprep.subr.mxu0 %v244
    %1507 = vmatpush1.msra.mxu0 %v243
    %1508 = vmatprep.subr.mxu0 %v248
    %1509 = vmatpush1.msra.mxu0 %v247
    %1510 = vmatprep.subr.mxu0 %v252
    %1511 = vmatpush1.msra.mxu0 %v251
    %1512 = vmatprep.subr.mxu0 %v256
    %1513 = vmatpush1.msra.mxu0 %v255
    %1514 = vmatprep.subr.mxu0 0.0
    %1515 = vmatpush1.msra.mxu0 0.0
    %1516 = vmatprep.subr.mxu0 0.0
    %1517 = vmatpush1.msra.mxu0 0.0
    %1518 = vmatprep.subr.mxu0 0.0
    %1519 = vmatpush1.msra.mxu0 0.0
    %1520 = vmatprep.subr.mxu0 0.0
    %1521 = vmatpush1.msra.mxu0 0.0
    %1522 = vmatprep.subr.mxu0 0.0
    %1523 = vmatpush1.msra.mxu0 0.0
    %1524 = vmatprep.subr.mxu0 0.0
    %1525 = vmatpush1.msra.mxu0 0.0
    %1526 = vmatprep.subr.mxu0 0.0
    %1527 = vmatpush1.msra.mxu0 0.0
    %1528 = vmatprep.subr.mxu0 0.0
    %1529 = vmatpush1.msra.mxu0 0.0
    %1530 = vmatprep.subr.mxu0 0.0
    %1531 = vmatpush1.msra.mxu0 0.0
    %1532 = vmatprep.subr.mxu0 0.0
    %1533 = vmatpush1.msra.mxu0 0.0
    %1534 = vmatprep.subr.mxu0 0.0
    %1535 = vmatpush1.msra.mxu0 0.0
    %1536 = vmatprep.subr.mxu0 0.0
    %1537 = vmatpush1.msra.mxu0 0.0
    %1538 = vmatprep.subr.mxu0 0.0
    %1539 = vmatpush1.msra.mxu0 0.0
    %1540 = vmatprep.subr.mxu0 0.0
    %1541 = vmatpush1.msra.mxu0 0.0
    %1542 = vmatprep.subr.mxu0 0.0
    %1543 = vmatpush1.msra.mxu0 0.0
    %1544 = vmatprep.subr.mxu0 0.0
    %1545 = vmatpush1.msra.mxu0 0.0
    %1546 = vmatprep.mubr.f32.mxu0 0.0
    %1547 = vmatmul.mubr.f32.gmra.mrb[0].mxu0 %v1409
    %v1548 = vpop.f32.mrb[0].mxu0
    %v1549 = vadd.f32 0.0, %v1548
    %v1550 = vpop.f32.mrb[0].mxu0
    %v1551 = vadd.f32 0.0, %v1550
    %1552 = vdwg.mxu0
    %v1557 = vrot.slane %v1478, 6
    %v1558 = vrot.slane %v1480, 6
    %v1559 = vrot.slane %v1549, 6
    %v1560 = vrot.slane %v1551, 6
    %v1565 = vadd.f32 %v418, %v1557
    %v1566 = vadd.f32 %v420, %v1558
    %v1567 = vadd.f32 %v495, %v1559
    %v1568 = vadd.f32 %v497, %v1560
    %v1569 = vxor.u32 %v1565, 2147483648
    %v1570 = vmul.f32 %v1569, 1.442695
    %v1571 = vpow.pop %v1570
    %v1572 = vadd.f32 %v1571, 1.0
    %v1573 = vrcp.pop %v1572
    %v1574 = vmul.f32 1.0, %v1573
    %v1575 = vxor.u32 %v1566, 2147483648
    %v1576 = vmul.f32 %v1575, 1.442695
    %v1577 = vpow.pop %v1576
    %v1578 = vadd.f32 %v1577, 1.0
    %v1579 = vrcp.pop %v1578
    %v1580 = vmul.f32 1.0, %v1579
    %v1581 = vtanh.pop %v1567
    %v1582 = vxor.u32 %v1568, 2147483648
    %v1583 = vmul.f32 %v1582, 1.442695
    %v1584 = vpow.pop %v1583
    %v1585 = vadd.f32 %v1584, 1.0
    %v1586 = vrcp.pop %v1585
    %v1587 = vmul.f32 1.0, %v1586
    %v1589 = vrot.slane %v1407, 6
    %v1591 = vmul.f32 %v1580, %v1589
    %v1592 = vmul.f32 %v1574, %v1581
    %v1593 = vadd.f32 %v1591, %v1592
    %v1594 = vtanh.pop %v1593
    %v1595 = vmul.f32 %v1587, %v1594
    %1596 = vst [vmem:[#allocation2 + $0x8] sm:$0xc] %v1595
    %v1598 = vrot.slane %v1595, 2
    %1600 = vmatprep.subr.mxu0 %v194
    %1601 = vmatpush1.msra.mxu0 %v193
    %1602 = vmatprep.subr.mxu0 %v198
    %1603 = vmatpush1.msra.mxu0 %v197
    %1604 = vmatprep.subr.mxu0 %v202
    %1605 = vmatpush1.msra.mxu0 %v201
    %1606 = vmatprep.subr.mxu0 %v206
    %1607 = vmatpush1.msra.mxu0 %v205
    %1608 = vmatprep.subr.mxu0 %v210
    %1609 = vmatpush1.msra.mxu0 %v209
    %1610 = vmatprep.subr.mxu0 %v214
    %1611 = vmatpush1.msra.mxu0 %v213
    %1612 = vmatprep.subr.mxu0 %v218
    %1613 = vmatpush1.msra.mxu0 %v217
    %1614 = vmatprep.subr.mxu0 %v222
    %1615 = vmatpush1.msra.mxu0 %v221
    %1616 = vmatprep.subr.mxu0 %v226
    %1617 = vmatpush1.msra.mxu0 %v225
    %1618 = vmatprep.subr.mxu0 %v230
    %1619 = vmatpush1.msra.mxu0 %v229
    %1620 = vmatprep.subr.mxu0 %v234
    %1621 = vmatpush1.msra.mxu0 %v233
    %1622 = vmatprep.subr.mxu0 %v238
    %1623 = vmatpush1.msra.mxu0 %v237
    %1624 = vmatprep.subr.mxu0 %v242
    %1625 = vmatpush1.msra.mxu0 %v241
    %1626 = vmatprep.subr.mxu0 %v246
    %1627 = vmatpush1.msra.mxu0 %v245
    %1628 = vmatprep.subr.mxu0 %v250
    %1629 = vmatpush1.msra.mxu0 %v249
    %1630 = vmatprep.subr.mxu0 %v254
    %1631 = vmatpush1.msra.mxu0 %v253
    %1632 = vmatprep.subr.mxu0 0.0
    %1633 = vmatpush1.msra.mxu0 0.0
    %1634 = vmatprep.subr.mxu0 0.0
    %1635 = vmatpush1.msra.mxu0 0.0
    %1636 = vmatprep.subr.mxu0 0.0
    %1637 = vmatpush1.msra.mxu0 0.0
    %1638 = vmatprep.subr.mxu0 0.0
    %1639 = vmatpush1.msra.mxu0 0.0
    %1640 = vmatprep.subr.mxu0 0.0
    %1641 = vmatpush1.msra.mxu0 0.0
    %1642 = vmatprep.subr.mxu0 0.0
    %1643 = vmatpush1.msra.mxu0 0.0
    %1644 = vmatprep.subr.mxu0 0.0
    %1645 = vmatpush1.msra.mxu0 0.0
    %1646 = vmatprep.subr.mxu0 0.0
    %1647 = vmatpush1.msra.mxu0 0.0
    %1648 = vmatprep.subr.mxu0 0.0
    %1649 = vmatpush1.msra.mxu0 0.0
    %1650 = vmatprep.subr.mxu0 0.0
    %1651 = vmatpush1.msra.mxu0 0.0
    %1652 = vmatprep.subr.mxu0 0.0
    %1653 = vmatpush1.msra.mxu0 0.0
    %1654 = vmatprep.subr.mxu0 0.0
    %1655 = vmatpush1.msra.mxu0 0.0
    %1656 = vmatprep.subr.mxu0 0.0
    %1657 = vmatpush1.msra.mxu0 0.0
    %1658 = vmatprep.subr.mxu0 0.0
    %1659 = vmatpush1.msra.mxu0 0.0
    %1660 = vmatprep.subr.mxu0 0.0
    %1661 = vmatpush1.msra.mxu0 0.0
    %1662 = vmatprep.subr.mxu0 0.0
    %1663 = vmatpush1.msra.mxu0 0.0
    %1664 = vmatprep.mubr.f32.mxu0 0.0
    %1665 = vmatmul.mubr.f32.gmra.mrb[0].mxu0 %v1598
    %v1666 = vpop.f32.mrb[0].mxu0
    %v1667 = vadd.f32 0.0, %v1666
    %v1668 = vpop.f32.mrb[0].mxu0
    %v1669 = vadd.f32 0.0, %v1668
    %1670 = vdwg.mxu0
    %1671 = vmatprep.subr.mxu0 %v196
    %1672 = vmatpush1.msra.mxu0 %v195
    %1673 = vmatprep.subr.mxu0 %v200
    %1674 = vmatpush1.msra.mxu0 %v199
    %1675 = vmatprep.subr.mxu0 %v204
    %1676 = vmatpush1.msra.mxu0 %v203
    %1677 = vmatprep.subr.mxu0 %v208
    %1678 = vmatpush1.msra.mxu0 %v207
    %1679 = vmatprep.subr.mxu0 %v212
    %1680 = vmatpush1.msra.mxu0 %v211
    %1681 = vmatprep.subr.mxu0 %v216
    %1682 = vmatpush1.msra.mxu0 %v215
    %1683 = vmatprep.subr.mxu0 %v220
    %1684 = vmatpush1.msra.mxu0 %v219
    %1685 = vmatprep.subr.mxu0 %v224
    %1686 = vmatpush1.msra.mxu0 %v223
    %1687 = vmatprep.subr.mxu0 %v228
    %1688 = vmatpush1.msra.mxu0 %v227
    %1689 = vmatprep.subr.mxu0 %v232
    %1690 = vmatpush1.msra.mxu0 %v231
    %1691 = vmatprep.subr.mxu0 %v236
    %1692 = vmatpush1.msra.mxu0 %v235
    %1693 = vmatprep.subr.mxu0 %v240
    %1694 = vmatpush1.msra.mxu0 %v239
    %1695 = vmatprep.subr.mxu0 %v244
    %1696 = vmatpush1.msra.mxu0 %v243
    %1697 = vmatprep.subr.mxu0 %v248
    %1698 = vmatpush1.msra.mxu0 %v247
    %1699 = vmatprep.subr.mxu0 %v252
    %1700 = vmatpush1.msra.mxu0 %v251
    %1701 = vmatprep.subr.mxu0 %v256
    %1702 = vmatpush1.msra.mxu0 %v255
    %1703 = vmatprep.subr.mxu0 0.0
    %1704 = vmatpush1.msra.mxu0 0.0
    %1705 = vmatprep.subr.mxu0 0.0
    %1706 = vmatpush1.msra.mxu0 0.0
    %1707 = vmatprep.subr.mxu0 0.0
    %1708 = vmatpush1.msra.mxu0 0.0
    %1709 = vmatprep.subr.mxu0 0.0
    %1710 = vmatpush1.msra.mxu0 0.0
    %1711 = vmatprep.subr.mxu0 0.0
    %1712 = vmatpush1.msra.mxu0 0.0
    %1713 = vmatprep.subr.mxu0 0.0
    %1714 = vmatpush1.msra.mxu0 0.0
    %1715 = vmatprep.subr.mxu0 0.0
    %1716 = vmatpush1.msra.mxu0 0.0
    %1717 = vmatprep.subr.mxu0 0.0
    %1718 = vmatpush1.msra.mxu0 0.0
    %1719 = vmatprep.subr.mxu0 0.0
    %1720 = vmatpush1.msra.mxu0 0.0
    %1721 = vmatprep.subr.mxu0 0.0
    %1722 = vmatpush1.msra.mxu0 0.0
    %1723 = vmatprep.subr.mxu0 0.0
    %1724 = vmatpush1.msra.mxu0 0.0
    %1725 = vmatprep.subr.mxu0 0.0
    %1726 = vmatpush1.msra.mxu0 0.0
    %1727 = vmatprep.subr.mxu0 0.0
    %1728 = vmatpush1.msra.mxu0 0.0
    %1729 = vmatprep.subr.mxu0 0.0
    %1730 = vmatpush1.msra.mxu0 0.0
    %1731 = vmatprep.subr.mxu0 0.0
    %1732 = vmatpush1.msra.mxu0 0.0
    %1733 = vmatprep.subr.mxu0 0.0
    %1734 = vmatpush1.msra.mxu0 0.0
    %1735 = vmatprep.mubr.f32.mxu0 0.0
    %1736 = vmatmul.mubr.f32.gmra.mrb[0].mxu0 %v1598
    %v1737 = vpop.f32.mrb[0].mxu0
    %v1738 = vadd.f32 0.0, %v1737
    %v1739 = vpop.f32.mrb[0].mxu0
    %v1740 = vadd.f32 0.0, %v1739
    %1741 = vdwg.mxu0
    %v1746 = vrot.slane %v1667, 4
    %v1747 = vrot.slane %v1669, 4
    %v1748 = vrot.slane %v1738, 4
    %v1749 = vrot.slane %v1740, 4
    %v1754 = vadd.f32 %v418, %v1746
    %v1755 = vadd.f32 %v420, %v1747
    %v1756 = vadd.f32 %v495, %v1748
    %v1757 = vadd.f32 %v497, %v1749
    %v1758 = vxor.u32 %v1754, 2147483648
    %v1759 = vmul.f32 %v1758, 1.442695
    %v1760 = vpow.pop %v1759
    %v1761 = vadd.f32 %v1760, 1.0
    %v1762 = vrcp.pop %v1761
    %v1763 = vmul.f32 1.0, %v1762
    %v1764 = vxor.u32 %v1755, 2147483648
    %v1765 = vmul.f32 %v1764, 1.442695
    %v1766 = vpow.pop %v1765
    %v1767 = vadd.f32 %v1766, 1.0
    %v1768 = vrcp.pop %v1767
    %v1769 = vmul.f32 1.0, %v1768
    %v1770 = vtanh.pop %v1756
    %v1771 = vxor.u32 %v1757, 2147483648
    %v1772 = vmul.f32 %v1771, 1.442695
    %v1773 = vpow.pop %v1772
    %v1774 = vadd.f32 %v1773, 1.0
    %v1775 = vrcp.pop %v1774
    %v1776 = vmul.f32 1.0, %v1775
    %v1778 = vrot.slane %v1593, 6
    %v1780 = vmul.f32 %v1769, %v1778
    %v1781 = vmul.f32 %v1763, %v1770
    %v1782 = vadd.f32 %v1780, %v1781
    %v1783 = vtanh.pop %v1782
    %v1784 = vmul.f32 %v1776, %v1783
    %1785 = vst [vmem:[#allocation2 + $0x8] sm:$0x30] %v1784
    %v1787 = vrot.slane %v1784, 4
    %1789 = vmatprep.subr.mxu0 %v194
    %1790 = vmatpush1.msra.mxu0 %v193
    %1791 = vmatprep.subr.mxu0 %v198
    %1792 = vmatpush1.msra.mxu0 %v197
    %1793 = vmatprep.subr.mxu0 %v202
    %1794 = vmatpush1.msra.mxu0 %v201
    %1795 = vmatprep.subr.mxu0 %v206
    %1796 = vmatpush1.msra.mxu0 %v205
    %1797 = vmatprep.subr.mxu0 %v210
    %1798 = vmatpush1.msra.mxu0 %v209
    %1799 = vmatprep.subr.mxu0 %v214
    %1800 = vmatpush1.msra.mxu0 %v213
    %1801 = vmatprep.subr.mxu0 %v218
    %1802 = vmatpush1.msra.mxu0 %v217
    %1803 = vmatprep.subr.mxu0 %v222
    %1804 = vmatpush1.msra.mxu0 %v221
    %1805 = vmatprep.subr.mxu0 %v226
    %1806 = vmatpush1.msra.mxu0 %v225
    %1807 = vmatprep.subr.mxu0 %v230
    %1808 = vmatpush1.msra.mxu0 %v229
    %1809 = vmatprep.subr.mxu0 %v234
    %1810 = vmatpush1.msra.mxu0 %v233
    %1811 = vmatprep.subr.mxu0 %v238
    %1812 = vmatpush1.msra.mxu0 %v237
    %1813 = vmatprep.subr.mxu0 %v242
    %1814 = vmatpush1.msra.mxu0 %v241
    %1815 = vmatprep.subr.mxu0 %v246
    %1816 = vmatpush1.msra.mxu0 %v245
    %1817 = vmatprep.subr.mxu0 %v250
    %1818 = vmatpush1.msra.mxu0 %v249
    %1819 = vmatprep.subr.mxu0 %v254
    %1820 = vmatpush1.msra.mxu0 %v253
    %1821 = vmatprep.subr.mxu0 0.0
    %1822 = vmatpush1.msra.mxu0 0.0
    %1823 = vmatprep.subr.mxu0 0.0
    %1824 = vmatpush1.msra.mxu0 0.0
    %1825 = vmatprep.subr.mxu0 0.0
    %1826 = vmatpush1.msra.mxu0 0.0
    %1827 = vmatprep.subr.mxu0 0.0
    %1828 = vmatpush1.msra.mxu0 0.0
    %1829 = vmatprep.subr.mxu0 0.0
    %1830 = vmatpush1.msra.mxu0 0.0
    %1831 = vmatprep.subr.mxu0 0.0
    %1832 = vmatpush1.msra.mxu0 0.0
    %1833 = vmatprep.subr.mxu0 0.0
    %1834 = vmatpush1.msra.mxu0 0.0
    %1835 = vmatprep.subr.mxu0 0.0
    %1836 = vmatpush1.msra.mxu0 0.0
    %1837 = vmatprep.subr.mxu0 0.0
    %1838 = vmatpush1.msra.mxu0 0.0
    %1839 = vmatprep.subr.mxu0 0.0
    %1840 = vmatpush1.msra.mxu0 0.0
    %1841 = vmatprep.subr.mxu0 0.0
    %1842 = vmatpush1.msra.mxu0 0.0
    %1843 = vmatprep.subr.mxu0 0.0
    %1844 = vmatpush1.msra.mxu0 0.0
    %1845 = vmatprep.subr.mxu0 0.0
    %1846 = vmatpush1.msra.mxu0 0.0
    %1847 = vmatprep.subr.mxu0 0.0
    %1848 = vmatpush1.msra.mxu0 0.0
    %1849 = vmatprep.subr.mxu0 0.0
    %1850 = vmatpush1.msra.mxu0 0.0
    %1851 = vmatprep.subr.mxu0 0.0
    %1852 = vmatpush1.msra.mxu0 0.0
    %1853 = vmatprep.mubr.f32.mxu0 0.0
    %1854 = vmatmul.mubr.f32.gmra.mrb[0].mxu0 %v1787
    %v1855 = vpop.f32.mrb[0].mxu0
    %v1856 = vadd.f32 0.0, %v1855
    %v1857 = vpop.f32.mrb[0].mxu0
    %v1858 = vadd.f32 0.0, %v1857
    %1859 = vdwg.mxu0
    %1860 = vmatprep.subr.mxu0 %v196
    %1861 = vmatpush1.msra.mxu0 %v195
    %1862 = vmatprep.subr.mxu0 %v200
    %1863 = vmatpush1.msra.mxu0 %v199
    %1864 = vmatprep.subr.mxu0 %v204
    %1865 = vmatpush1.msra.mxu0 %v203
    %1866 = vmatprep.subr.mxu0 %v208
    %1867 = vmatpush1.msra.mxu0 %v207
    %1868 = vmatprep.subr.mxu0 %v212
    %1869 = vmatpush1.msra.mxu0 %v211
    %1870 = vmatprep.subr.mxu0 %v216
    %1871 = vmatpush1.msra.mxu0 %v215
    %1872 = vmatprep.subr.mxu0 %v220
    %1873 = vmatpush1.msra.mxu0 %v219
    %1874 = vmatprep.subr.mxu0 %v224
    %1875 = vmatpush1.msra.mxu0 %v223
    %1876 = vmatprep.subr.mxu0 %v228
    %1877 = vmatpush1.msra.mxu0 %v227
    %1878 = vmatprep.subr.mxu0 %v232
    %1879 = vmatpush1.msra.mxu0 %v231
    %1880 = vmatprep.subr.mxu0 %v236
    %1881 = vmatpush1.msra.mxu0 %v235
    %1882 = vmatprep.subr.mxu0 %v240
    %1883 = vmatpush1.msra.mxu0 %v239
    %1884 = vmatprep.subr.mxu0 %v244
    %1885 = vmatpush1.msra.mxu0 %v243
    %1886 = vmatprep.subr.mxu0 %v248
    %1887 = vmatpush1.msra.mxu0 %v247
    %1888 = vmatprep.subr.mxu0 %v252
    %1889 = vmatpush1.msra.mxu0 %v251
    %1890 = vmatprep.subr.mxu0 %v256
    %1891 = vmatpush1.msra.mxu0 %v255
    %1892 = vmatprep.subr.mxu0 0.0
    %1893 = vmatpush1.msra.mxu0 0.0
    %1894 = vmatprep.subr.mxu0 0.0
    %1895 = vmatpush1.msra.mxu0 0.0
    %1896 = vmatprep.subr.mxu0 0.0
    %1897 = vmatpush1.msra.mxu0 0.0
    %1898 = vmatprep.subr.mxu0 0.0
    %1899 = vmatpush1.msra.mxu0 0.0
    %1900 = vmatprep.subr.mxu0 0.0
    %1901 = vmatpush1.msra.mxu0 0.0
    %1902 = vmatprep.subr.mxu0 0.0
    %1903 = vmatpush1.msra.mxu0 0.0
    %1904 = vmatprep.subr.mxu0 0.0
    %1905 = vmatpush1.msra.mxu0 0.0
    %1906 = vmatprep.subr.mxu0 0.0
    %1907 = vmatpush1.msra.mxu0 0.0
    %1908 = vmatprep.subr.mxu0 0.0
    %1909 = vmatpush1.msra.mxu0 0.0
    %1910 = vmatprep.subr.mxu0 0.0
    %1911 = vmatpush1.msra.mxu0 0.0
    %1912 = vmatprep.subr.mxu0 0.0
    %1913 = vmatpush1.msra.mxu0 0.0
    %1914 = vmatprep.subr.mxu0 0.0
    %1915 = vmatpush1.msra.mxu0 0.0
    %1916 = vmatprep.subr.mxu0 0.0
    %1917 = vmatpush1.msra.mxu0 0.0
    %1918 = vmatprep.subr.mxu0 0.0
    %1919 = vmatpush1.msra.mxu0 0.0
    %1920 = vmatprep.subr.mxu0 0.0
    %1921 = vmatpush1.msra.mxu0 0.0
    %1922 = vmatprep.subr.mxu0 0.0
    %1923 = vmatpush1.msra.mxu0 0.0
    %1924 = vmatprep.mubr.f32.mxu0 0.0
    %1925 = vmatmul.mubr.f32.gmra.mrb[0].mxu0 %v1787
    %v1926 = vpop.f32.mrb[0].mxu0
    %v1927 = vadd.f32 0.0, %v1926
    %v1928 = vpop.f32.mrb[0].mxu0
    %v1929 = vadd.f32 0.0, %v1928
    %1930 = vdwg.mxu0
    %v1935 = vrot.slane %v1856, 2
    %v1936 = vrot.slane %v1858, 2
    %v1937 = vrot.slane %v1927, 2
    %v1938 = vrot.slane %v1929, 2
    %v1943 = vadd.f32 %v418, %v1935
    %v1944 = vadd.f32 %v420, %v1936
    %v1945 = vadd.f32 %v495, %v1937
    %v1946 = vadd.f32 %v497, %v1938
    %v1947 = vxor.u32 %v1943, 2147483648
    %v1948 = vmul.f32 %v1947, 1.442695
    %v1949 = vpow.pop %v1948
    %v1950 = vadd.f32 %v1949, 1.0
    %v1951 = vrcp.pop %v1950
    %v1952 = vmul.f32 1.0, %v1951
    %v1953 = vxor.u32 %v1944, 2147483648
    %v1954 = vmul.f32 %v1953, 1.442695
    %v1955 = vpow.pop %v1954
    %v1956 = vadd.f32 %v1955, 1.0
    %v1957 = vrcp.pop %v1956
    %v1958 = vmul.f32 1.0, %v1957
    %v1959 = vtanh.pop %v1945
    %v1960 = vxor.u32 %v1946, 2147483648
    %v1961 = vmul.f32 %v1960, 1.442695
    %v1962 = vpow.pop %v1961
    %v1963 = vadd.f32 %v1962, 1.0
    %v1964 = vrcp.pop %v1963
    %v1965 = vmul.f32 1.0, %v1964
    %v1967 = vrot.slane %v1782, 6
    %v1969 = vmul.f32 %v1958, %v1967
    %v1970 = vmul.f32 %v1952, %v1959
    %v1971 = vadd.f32 %v1969, %v1970
    %v1972 = vtanh.pop %v1971
    %v1973 = vmul.f32 %v1965, %v1972
    %1974 = vst [vmem:[#allocation2 + $0x8] sm:$0xc0] %v1973
    %v1975 = vld [vmem:[#allocation9] sm:$0xff]
    %v1976 = vld [vmem:[#allocation9 + $0x8] sm:$0xff]
    %v1977 = vld [vmem:[#allocation9 + $0x10] sm:$0xff]
    %v1978 = vld [vmem:[#allocation9 + $0x18] sm:$0xff]
    %v1979 = vld [vmem:[#allocation9 + $0x20] sm:$0xff]
    %v1980 = vld [vmem:[#allocation9 + $0x28] sm:$0xff]
    %v1981 = vld [vmem:[#allocation9 + $0x30] sm:$0xff]
    %v1982 = vld [vmem:[#allocation9 + $0x38] sm:$0xff]
    %v1983 = vld [vmem:[#allocation9 + $0x40] sm:$0xff]
    %v1984 = vld [vmem:[#allocation9 + $0x48] sm:$0xff]
    %v1985 = vld [vmem:[#allocation9 + $0x50] sm:$0xff]
    %v1986 = vld [vmem:[#allocation9 + $0x58] sm:$0xff]
    %v1987 = vld [vmem:[#allocation9 + $0x60] sm:$0xff]
    %v1988 = vld [vmem:[#allocation9 + $0x68] sm:$0xff]
    %v1989 = vld [vmem:[#allocation9 + $0x70] sm:$0xff]
    %v1990 = vld [vmem:[#allocation9 + $0x78] sm:$0xff]
    %v1991 = vld [vmem:[#allocation9 + $0x80] sm:$0xff]
    %v1992 = vld [vmem:[#allocation9 + $0x88] sm:$0xff]
    %v1993 = vld [vmem:[#allocation9 + $0x90] sm:$0xff]
    %v1994 = vld [vmem:[#allocation9 + $0x98] sm:$0xff]
    %v1995 = vld [vmem:[#allocation9 + $0xa0] sm:$0xff]
    %v1996 = vld [vmem:[#allocation9 + $0xa8] sm:$0xff]
    %v1997 = vld [vmem:[#allocation9 + $0xb0] sm:$0xff]
    %v1998 = vld [vmem:[#allocation9 + $0xb8] sm:$0xff]
    %v1999 = vld [vmem:[#allocation9 + $0xc0] sm:$0xff]
    %v2000 = vld [vmem:[#allocation9 + $0xc8] sm:$0xff]
    %v2001 = vld [vmem:[#allocation9 + $0xd0] sm:$0xff]
    %v2002 = vld [vmem:[#allocation9 + $0xd8] sm:$0xff]
    %v2003 = vld [vmem:[#allocation9 + $0xe0] sm:$0xff]
    %v2004 = vld [vmem:[#allocation9 + $0xe8] sm:$0xff]
    %v2005 = vld [vmem:[#allocation9 + $0xf0] sm:$0xff]
    %v2006 = vld [vmem:[#allocation9 + $0xf8] sm:$0xff]
    %v2007 = vld [vmem:[#allocation9 + $0x100] sm:$0xff]
    %v2008 = vld [vmem:[#allocation9 + $0x108] sm:$0xff]
    %v2009 = vld [vmem:[#allocation9 + $0x110] sm:$0xff]
    %v2010 = vld [vmem:[#allocation9 + $0x118] sm:$0xff]
    %v2011 = vld [vmem:[#allocation9 + $0x120] sm:$0xff]
    %v2012 = vld [vmem:[#allocation9 + $0x128] sm:$0xff]
    %v2013 = vld [vmem:[#allocation9 + $0x130] sm:$0xff]
    %v2014 = vld [vmem:[#allocation9 + $0x138] sm:$0xff]
    %v2015 = vld [vmem:[#allocation9 + $0x140] sm:$0xff]
    %v2016 = vld [vmem:[#allocation9 + $0x148] sm:$0xff]
    %v2017 = vld [vmem:[#allocation9 + $0x150] sm:$0xff]
    %v2018 = vld [vmem:[#allocation9 + $0x158] sm:$0xff]
    %v2019 = vld [vmem:[#allocation9 + $0x160] sm:$0xff]
    %v2020 = vld [vmem:[#allocation9 + $0x168] sm:$0xff]
    %v2021 = vld [vmem:[#allocation9 + $0x170] sm:$0xff]
    %v2022 = vld [vmem:[#allocation9 + $0x178] sm:$0xff]
    %v2023 = vld [vmem:[#allocation9 + $0x180] sm:$0xff]
    %v2024 = vld [vmem:[#allocation9 + $0x188] sm:$0xff]
    %v2025 = vld [vmem:[#allocation9 + $0x190] sm:$0xff]
    %v2026 = vld [vmem:[#allocation9 + $0x198] sm:$0xff]
    %v2027 = vld [vmem:[#allocation9 + $0x1a0] sm:$0xff]
    %v2028 = vld [vmem:[#allocation9 + $0x1a8] sm:$0xff]
    %v2029 = vld [vmem:[#allocation9 + $0x1b0] sm:$0xff]
    %v2030 = vld [vmem:[#allocation9 + $0x1b8] sm:$0xff]
    %v2031 = vld [vmem:[#allocation9 + $0x1c0] sm:$0xff]
    %v2032 = vld [vmem:[#allocation9 + $0x1c8] sm:$0xff]
    %v2033 = vld [vmem:[#allocation9 + $0x1d0] sm:$0xff]
    %v2034 = vld [vmem:[#allocation9 + $0x1d8] sm:$0xff]
    %v2035 = vld [vmem:[#allocation9 + $0x1e0] sm:$0xff]
    %v2036 = vld [vmem:[#allocation9 + $0x1e8] sm:$0xff]
    %v2037 = vld [vmem:[#allocation9 + $0x1f0] sm:$0xff]
    %v2038 = vld [vmem:[#allocation9 + $0x1f8] sm:$0xff]
    %v2039 = vld [vmem:[#allocation2] sm:$0xff]
    %v2040 = vld [vmem:[#allocation2 + $0x8] sm:$0xff]
    %v2041 = vld [vmem:[#allocation8] sm:$0xff]
    %v2042 = vld [vmem:[#allocation8 + $0x8] sm:$0xff]
    %v2043 = vld [vmem:[#allocation8 + $0x10] sm:$0xff]
    %v2044 = vld [vmem:[#allocation8 + $0x18] sm:$0xff]
    %v2045 = vld [vmem:[#allocation8 + $0x20] sm:$0xff]
    %v2046 = vld [vmem:[#allocation8 + $0x28] sm:$0xff]
    %v2047 = vld [vmem:[#allocation8 + $0x30] sm:$0xff]
    %v2048 = vld [vmem:[#allocation8 + $0x38] sm:$0xff]
    %v2049 = vld [vmem:[#allocation8 + $0x40] sm:$0xff]
    %v2050 = vld [vmem:[#allocation8 + $0x48] sm:$0xff]
    %v2051 = vld [vmem:[#allocation8 + $0x50] sm:$0xff]
    %v2052 = vld [vmem:[#allocation8 + $0x58] sm:$0xff]
    %v2053 = vld [vmem:[#allocation8 + $0x60] sm:$0xff]
    %v2054 = vld [vmem:[#allocation8 + $0x68] sm:$0xff]
    %v2055 = vld [vmem:[#allocation8 + $0x70] sm:$0xff]
    %v2056 = vld [vmem:[#allocation8 + $0x78] sm:$0xff]
    %v2057 = vld [vmem:[#allocation8 + $0x80] sm:$0xff]
    %v2058 = vld [vmem:[#allocation8 + $0x88] sm:$0xff]
    %v2059 = vld [vmem:[#allocation8 + $0x90] sm:$0xff]
    %v2060 = vld [vmem:[#allocation8 + $0x98] sm:$0xff]
    %v2061 = vld [vmem:[#allocation8 + $0xa0] sm:$0xff]
    %v2062 = vld [vmem:[#allocation8 + $0xa8] sm:$0xff]
    %v2063 = vld [vmem:[#allocation8 + $0xb0] sm:$0xff]
    %v2064 = vld [vmem:[#allocation8 + $0xb8] sm:$0xff]
    %v2065 = vld [vmem:[#allocation8 + $0xc0] sm:$0xff]
    %v2066 = vld [vmem:[#allocation8 + $0xc8] sm:$0xff]
    %v2067 = vld [vmem:[#allocation8 + $0xd0] sm:$0xff]
    %v2068 = vld [vmem:[#allocation8 + $0xd8] sm:$0xff]
    %v2069 = vld [vmem:[#allocation8 + $0xe0] sm:$0xff]
    %v2070 = vld [vmem:[#allocation8 + $0xe8] sm:$0xff]
    %v2071 = vld [vmem:[#allocation8 + $0xf0] sm:$0xff]
    %v2072 = vld [vmem:[#allocation8 + $0xf8] sm:$0xff]
    %v2073 = vld [vmem:[#allocation8 + $0x100] sm:$0xff]
    %v2074 = vld [vmem:[#allocation8 + $0x108] sm:$0xff]
    %v2075 = vld [vmem:[#allocation8 + $0x110] sm:$0xff]
    %v2076 = vld [vmem:[#allocation8 + $0x118] sm:$0xff]
    %v2077 = vld [vmem:[#allocation8 + $0x120] sm:$0xff]
    %v2078 = vld [vmem:[#allocation8 + $0x128] sm:$0xff]
    %v2079 = vld [vmem:[#allocation8 + $0x130] sm:$0xff]
    %v2080 = vld [vmem:[#allocation8 + $0x138] sm:$0xff]
    %v2081 = vld [vmem:[#allocation8 + $0x140] sm:$0xff]
    %v2082 = vld [vmem:[#allocation8 + $0x148] sm:$0xff]
    %v2083 = vld [vmem:[#allocation8 + $0x150] sm:$0xff]
    %v2084 = vld [vmem:[#allocation8 + $0x158] sm:$0xff]
    %v2085 = vld [vmem:[#allocation8 + $0x160] sm:$0xff]
    %v2086 = vld [vmem:[#allocation8 + $0x168] sm:$0xff]
    %v2087 = vld [vmem:[#allocation8 + $0x170] sm:$0xff]
    %v2088 = vld [vmem:[#allocation8 + $0x178] sm:$0xff]
    %v2089 = vld [vmem:[#allocation8 + $0x180] sm:$0xff]
    %v2090 = vld [vmem:[#allocation8 + $0x188] sm:$0xff]
    %v2091 = vld [vmem:[#allocation8 + $0x190] sm:$0xff]
    %v2092 = vld [vmem:[#allocation8 + $0x198] sm:$0xff]
    %v2093 = vld [vmem:[#allocation8 + $0x1a0] sm:$0xff]
    %v2094 = vld [vmem:[#allocation8 + $0x1a8] sm:$0xff]
    %v2095 = vld [vmem:[#allocation8 + $0x1b0] sm:$0xff]
    %v2096 = vld [vmem:[#allocation8 + $0x1b8] sm:$0xff]
    %v2097 = vld [vmem:[#allocation8 + $0x1c0] sm:$0xff]
    %v2098 = vld [vmem:[#allocation8 + $0x1c8] sm:$0xff]
    %v2099 = vld [vmem:[#allocation8 + $0x1d0] sm:$0xff]
    %v2100 = vld [vmem:[#allocation8 + $0x1d8] sm:$0xff]
    %v2101 = vld [vmem:[#allocation8 + $0x1e0] sm:$0xff]
    %v2102 = vld [vmem:[#allocation8 + $0x1e8] sm:$0xff]
    %v2103 = vld [vmem:[#allocation8 + $0x1f0] sm:$0xff]
    %v2104 = vld [vmem:[#allocation8 + $0x1f8] sm:$0xff]
    %v2105 = vld [vmem:[%s6] sm:$0xf]
    %v2107 = vlaneseq
    %v2108 = vshrl.u32 %v2107, 7
    %v2109 = vsub.s32 0, %v2108
    %v2110 = vrot.slane %v2105, %v2109
    %v2111 = vlaneseq
    %v2112 = vshrl.u32 %v2111, 7
    %v2113 = vsub.s32 1, %v2112
    %v2114 = vrot.slane %v2105, %v2113
    %v2115 = vlaneseq
    %v2116 = vshrl.u32 %v2115, 7
    %v2117 = vsub.s32 2, %v2116
    %v2118 = vrot.slane %v2105, %v2117
    %v2119 = vlaneseq
    %v2120 = vshrl.u32 %v2119, 7
    %v2121 = vsub.s32 3, %v2120
    %v2122 = vrot.slane %v2105, %v2121
    %2127 = vmatprep.subr.mxu0 %v2042
    %2128 = vmatpush1.msra.mxu0 %v2041
    %2129 = vmatprep.subr.mxu0 %v2046
    %2130 = vmatpush1.msra.mxu0 %v2045
    %2131 = vmatprep.subr.mxu0 %v2050
    %2132 = vmatpush1.msra.mxu0 %v2049
    %2133 = vmatprep.subr.mxu0 %v2054
    %2134 = vmatpush1.msra.mxu0 %v2053
    %2135 = vmatprep.subr.mxu0 %v2058
    %2136 = vmatpush1.msra.mxu0 %v2057
    %2137 = vmatprep.subr.mxu0 %v2062
    %2138 = vmatpush1.msra.mxu0 %v2061
    %2139 = vmatprep.subr.mxu0 %v2066
    %2140 = vmatpush1.msra.mxu0 %v2065
    %2141 = vmatprep.subr.mxu0 %v2070
    %2142 = vmatpush1.msra.mxu0 %v2069
    %2143 = vmatprep.subr.mxu0 %v2074
    %2144 = vmatpush1.msra.mxu0 %v2073
    %2145 = vmatprep.subr.mxu0 %v2078
    %2146 = vmatpush1.msra.mxu0 %v2077
    %2147 = vmatprep.subr.mxu0 %v2082
    %2148 = vmatpush1.msra.mxu0 %v2081
    %2149 = vmatprep.subr.mxu0 %v2086
    %2150 = vmatpush1.msra.mxu0 %v2085
    %2151 = vmatprep.subr.mxu0 %v2090
    %2152 = vmatpush1.msra.mxu0 %v2089
    %2153 = vmatprep.subr.mxu0 %v2094
    %2154 = vmatpush1.msra.mxu0 %v2093
    %2155 = vmatprep.subr.mxu0 %v2098
    %2156 = vmatpush1.msra.mxu0 %v2097
    %2157 = vmatprep.subr.mxu0 %v2102
    %2158 = vmatpush1.msra.mxu0 %v2101
    %2159 = vmatprep.subr.mxu0 0.0
    %2160 = vmatpush1.msra.mxu0 0.0
    %2161 = vmatprep.subr.mxu0 0.0
    %2162 = vmatpush1.msra.mxu0 0.0
    %2163 = vmatprep.subr.mxu0 0.0
    %2164 = vmatpush1.msra.mxu0 0.0
    %2165 = vmatprep.subr.mxu0 0.0
    %2166 = vmatpush1.msra.mxu0 0.0
    %2167 = vmatprep.subr.mxu0 0.0
    %2168 = vmatpush1.msra.mxu0 0.0
    %2169 = vmatprep.subr.mxu0 0.0
    %2170 = vmatpush1.msra.mxu0 0.0
    %2171 = vmatprep.subr.mxu0 0.0
    %2172 = vmatpush1.msra.mxu0 0.0
    %2173 = vmatprep.subr.mxu0 0.0
    %2174 = vmatpush1.msra.mxu0 0.0
    %2175 = vmatprep.subr.mxu0 0.0
    %2176 = vmatpush1.msra.mxu0 0.0
    %2177 = vmatprep.subr.mxu0 0.0
    %2178 = vmatpush1.msra.mxu0 0.0
    %2179 = vmatprep.subr.mxu0 0.0
    %2180 = vmatpush1.msra.mxu0 0.0
    %2181 = vmatprep.subr.mxu0 0.0
    %2182 = vmatpush1.msra.mxu0 0.0
    %2183 = vmatprep.subr.mxu0 0.0
    %2184 = vmatpush1.msra.mxu0 0.0
    %2185 = vmatprep.subr.mxu0 0.0
    %2186 = vmatpush1.msra.mxu0 0.0
    %2187 = vmatprep.subr.mxu0 0.0
    %2188 = vmatpush1.msra.mxu0 0.0
    %2189 = vmatprep.subr.mxu0 0.0
    %2190 = vmatpush1.msra.mxu0 0.0
    %2191 = vmatprep.mubr.f32.mxu0 0.0
    %2192 = vmatmul.mubr.f32.gmra.mrb[0].mxu0 %v2039
    %v2193 = vpop.f32.mrb[0].mxu0
    %v2194 = vadd.f32 %v2110, %v2193
    %v2195 = vpop.f32.mrb[0].mxu0
    %v2196 = vadd.f32 %v2114, %v2195
    %2197 = vmatprep.mubr.f32.mxu0 0.0
    %2198 = vmatmul.mubr.f32.gmra.mrb[0].mxu0 %v2040
    %v2199 = vpop.f32.mrb[0].mxu0
    %v2200 = vadd.f32 %v2110, %v2199
    %v2201 = vpop.f32.mrb[0].mxu0
    %v2202 = vadd.f32 %v2114, %v2201
    %2203 = vdwg.mxu0
    %2204 = vmatprep.subr.mxu0 %v2044
    %2205 = vmatpush1.msra.mxu0 %v2043
    %2206 = vmatprep.subr.mxu0 %v2048
    %2207 = vmatpush1.msra.mxu0 %v2047
    %2208 = vmatprep.subr.mxu0 %v2052
    %2209 = vmatpush1.msra.mxu0 %v2051
    %2210 = vmatprep.subr.mxu0 %v2056
    %2211 = vmatpush1.msra.mxu0 %v2055
    %2212 = vmatprep.subr.mxu0 %v2060
    %2213 = vmatpush1.msra.mxu0 %v2059
    %2214 = vmatprep.subr.mxu0 %v2064
    %2215 = vmatpush1.msra.mxu0 %v2063
    %2216 = vmatprep.subr.mxu0 %v2068
    %2217 = vmatpush1.msra.mxu0 %v2067
    %2218 = vmatprep.subr.mxu0 %v2072
    %2219 = vmatpush1.msra.mxu0 %v2071
    %2220 = vmatprep.subr.mxu0 %v2076
    %2221 = vmatpush1.msra.mxu0 %v2075
    %2222 = vmatprep.subr.mxu0 %v2080
    %2223 = vmatpush1.msra.mxu0 %v2079
    %2224 = vmatprep.subr.mxu0 %v2084
    %2225 = vmatpush1.msra.mxu0 %v2083
    %2226 = vmatprep.subr.mxu0 %v2088
    %2227 = vmatpush1.msra.mxu0 %v2087
    %2228 = vmatprep.subr.mxu0 %v2092
    %2229 = vmatpush1.msra.mxu0 %v2091
    %2230 = vmatprep.subr.mxu0 %v2096
    %2231 = vmatpush1.msra.mxu0 %v2095
    %2232 = vmatprep.subr.mxu0 %v2100
    %2233 = vmatpush1.msra.mxu0 %v2099
    %2234 = vmatprep.subr.mxu0 %v2104
    %2235 = vmatpush1.msra.mxu0 %v2103
    %2236 = vmatprep.subr.mxu0 0.0
    %2237 = vmatpush1.msra.mxu0 0.0
    %2238 = vmatprep.subr.mxu0 0.0
    %2239 = vmatpush1.msra.mxu0 0.0
    %2240 = vmatprep.subr.mxu0 0.0
    %2241 = vmatpush1.msra.mxu0 0.0
    %2242 = vmatprep.subr.mxu0 0.0
    %2243 = vmatpush1.msra.mxu0 0.0
    %2244 = vmatprep.subr.mxu0 0.0
    %2245 = vmatpush1.msra.mxu0 0.0
    %2246 = vmatprep.subr.mxu0 0.0
    %2247 = vmatpush1.msra.mxu0 0.0
    %2248 = vmatprep.subr.mxu0 0.0
    %2249 = vmatpush1.msra.mxu0 0.0
    %2250 = vmatprep.subr.mxu0 0.0
    %2251 = vmatpush1.msra.mxu0 0.0
    %2252 = vmatprep.subr.mxu0 0.0
    %2253 = vmatpush1.msra.mxu0 0.0
    %2254 = vmatprep.subr.mxu0 0.0
    %2255 = vmatpush1.msra.mxu0 0.0
    %2256 = vmatprep.subr.mxu0 0.0
    %2257 = vmatpush1.msra.mxu0 0.0
    %2258 = vmatprep.subr.mxu0 0.0
    %2259 = vmatpush1.msra.mxu0 0.0
    %2260 = vmatprep.subr.mxu0 0.0
    %2261 = vmatpush1.msra.mxu0 0.0
    %2262 = vmatprep.subr.mxu0 0.0
    %2263 = vmatpush1.msra.mxu0 0.0
    %2264 = vmatprep.subr.mxu0 0.0
    %2265 = vmatpush1.msra.mxu0 0.0
    %2266 = vmatprep.subr.mxu0 0.0
    %2267 = vmatpush1.msra.mxu0 0.0
    %2268 = vmatprep.mubr.f32.mxu0 0.0
    %2269 = vmatmul.mubr.f32.gmra.mrb[0].mxu0 %v2039
    %v2270 = vpop.f32.mrb[0].mxu0
    %v2271 = vadd.f32 %v2118, %v2270
    %v2272 = vpop.f32.mrb[0].mxu0
    %v2273 = vadd.f32 %v2122, %v2272
    %2274 = vmatprep.mubr.f32.mxu0 0.0
    %2275 = vmatmul.mubr.f32.gmra.mrb[0].mxu0 %v2040
    %v2276 = vpop.f32.mrb[0].mxu0
    %v2277 = vadd.f32 %v2118, %v2276
    %v2278 = vpop.f32.mrb[0].mxu0
    %v2279 = vadd.f32 %v2122, %v2278
    %2280 = vdwg.mxu0
    %2281 = vmatprep.subr.mxu0 %v1976
    %2282 = vmatpush1.msra.mxu0 %v1975
    %2283 = vmatprep.subr.mxu0 %v1980
    %2284 = vmatpush1.msra.mxu0 %v1979
    %2285 = vmatprep.subr.mxu0 %v1984
    %2286 = vmatpush1.msra.mxu0 %v1983
    %2287 = vmatprep.subr.mxu0 %v1988
    %2288 = vmatpush1.msra.mxu0 %v1987
    %2289 = vmatprep.subr.mxu0 %v1992
    %2290 = vmatpush1.msra.mxu0 %v1991
    %2291 = vmatprep.subr.mxu0 %v1996
    %2292 = vmatpush1.msra.mxu0 %v1995
    %2293 = vmatprep.subr.mxu0 %v2000
    %2294 = vmatpush1.msra.mxu0 %v1999
    %2295 = vmatprep.subr.mxu0 %v2004
    %2296 = vmatpush1.msra.mxu0 %v2003
    %2297 = vmatprep.subr.mxu0 %v2008
    %2298 = vmatpush1.msra.mxu0 %v2007
    %2299 = vmatprep.subr.mxu0 %v2012
    %2300 = vmatpush1.msra.mxu0 %v2011
    %2301 = vmatprep.subr.mxu0 %v2016
    %2302 = vmatpush1.msra.mxu0 %v2015
    %2303 = vmatprep.subr.mxu0 %v2020
    %2304 = vmatpush1.msra.mxu0 %v2019
    %2305 = vmatprep.subr.mxu0 %v2024
    %2306 = vmatpush1.msra.mxu0 %v2023
    %2307 = vmatprep.subr.mxu0 %v2028
    %2308 = vmatpush1.msra.mxu0 %v2027
    %2309 = vmatprep.subr.mxu0 %v2032
    %2310 = vmatpush1.msra.mxu0 %v2031
    %2311 = vmatprep.subr.mxu0 %v2036
    %2312 = vmatpush1.msra.mxu0 %v2035
    %2313 = vmatprep.subr.mxu0 0.0
    %2314 = vmatpush1.msra.mxu0 0.0
    %2315 = vmatprep.subr.mxu0 0.0
    %2316 = vmatpush1.msra.mxu0 0.0
    %2317 = vmatprep.subr.mxu0 0.0
    %2318 = vmatpush1.msra.mxu0 0.0
    %2319 = vmatprep.subr.mxu0 0.0
    %2320 = vmatpush1.msra.mxu0 0.0
    %2321 = vmatprep.subr.mxu0 0.0
    %2322 = vmatpush1.msra.mxu0 0.0
    %2323 = vmatprep.subr.mxu0 0.0
    %2324 = vmatpush1.msra.mxu0 0.0
    %2325 = vmatprep.subr.mxu0 0.0
    %2326 = vmatpush1.msra.mxu0 0.0
    %2327 = vmatprep.subr.mxu0 0.0
    %2328 = vmatpush1.msra.mxu0 0.0
    %2329 = vmatprep.subr.mxu0 0.0
    %2330 = vmatpush1.msra.mxu0 0.0
    %2331 = vmatprep.subr.mxu0 0.0
    %2332 = vmatpush1.msra.mxu0 0.0
    %2333 = vmatprep.subr.mxu0 0.0
    %2334 = vmatpush1.msra.mxu0 0.0
    %2335 = vmatprep.subr.mxu0 0.0
    %2336 = vmatpush1.msra.mxu0 0.0
    %2337 = vmatprep.subr.mxu0 0.0
    %2338 = vmatpush1.msra.mxu0 0.0
    %2339 = vmatprep.subr.mxu0 0.0
    %2340 = vmatpush1.msra.mxu0 0.0
    %2341 = vmatprep.subr.mxu0 0.0
    %2342 = vmatpush1.msra.mxu0 0.0
    %2343 = vmatprep.subr.mxu0 0.0
    %2344 = vmatpush1.msra.mxu0 0.0
    %2345 = vmatprep.mubr.f32.mxu0 0.0
    %2346 = vmatmul.mubr.f32.gmra.mrb[0].mxu0 0.0
    %v2347 = vpop.f32.mrb[0].mxu0
    %v2348 = vadd.f32 0.0, %v2347
    %v2349 = vpop.f32.mrb[0].mxu0
    %v2350 = vadd.f32 0.0, %v2349
    %2351 = vdwg.mxu0
    %2352 = vmatprep.subr.mxu0 %v1978
    %2353 = vmatpush1.msra.mxu0 %v1977
    %2354 = vmatprep.subr.mxu0 %v1982
    %2355 = vmatpush1.msra.mxu0 %v1981
    %2356 = vmatprep.subr.mxu0 %v1986
    %2357 = vmatpush1.msra.mxu0 %v1985
    %2358 = vmatprep.subr.mxu0 %v1990
    %2359 = vmatpush1.msra.mxu0 %v1989
    %2360 = vmatprep.subr.mxu0 %v1994
    %2361 = vmatpush1.msra.mxu0 %v1993
    %2362 = vmatprep.subr.mxu0 %v1998
    %2363 = vmatpush1.msra.mxu0 %v1997
    %2364 = vmatprep.subr.mxu0 %v2002
    %2365 = vmatpush1.msra.mxu0 %v2001
    %2366 = vmatprep.subr.mxu0 %v2006
    %2367 = vmatpush1.msra.mxu0 %v2005
    %2368 = vmatprep.subr.mxu0 %v2010
    %2369 = vmatpush1.msra.mxu0 %v2009
    %2370 = vmatprep.subr.mxu0 %v2014
    %2371 = vmatpush1.msra.mxu0 %v2013
    %2372 = vmatprep.subr.mxu0 %v2018
    %2373 = vmatpush1.msra.mxu0 %v2017
    %2374 = vmatprep.subr.mxu0 %v2022
    %2375 = vmatpush1.msra.mxu0 %v2021
    %2376 = vmatprep.subr.mxu0 %v2026
    %2377 = vmatpush1.msra.mxu0 %v2025
    %2378 = vmatprep.subr.mxu0 %v2030
    %2379 = vmatpush1.msra.mxu0 %v2029
    %2380 = vmatprep.subr.mxu0 %v2034
    %2381 = vmatpush1.msra.mxu0 %v2033
    %2382 = vmatprep.subr.mxu0 %v2038
    %2383 = vmatpush1.msra.mxu0 %v2037
    %2384 = vmatprep.subr.mxu0 0.0
    %2385 = vmatpush1.msra.mxu0 0.0
    %2386 = vmatprep.subr.mxu0 0.0
    %2387 = vmatpush1.msra.mxu0 0.0
    %2388 = vmatprep.subr.mxu0 0.0
    %2389 = vmatpush1.msra.mxu0 0.0
    %2390 = vmatprep.subr.mxu0 0.0
    %2391 = vmatpush1.msra.mxu0 0.0
    %2392 = vmatprep.subr.mxu0 0.0
    %2393 = vmatpush1.msra.mxu0 0.0
    %2394 = vmatprep.subr.mxu0 0.0
    %2395 = vmatpush1.msra.mxu0 0.0
    %2396 = vmatprep.subr.mxu0 0.0
    %2397 = vmatpush1.msra.mxu0 0.0
    %2398 = vmatprep.subr.mxu0 0.0
    %2399 = vmatpush1.msra.mxu0 0.0
    %2400 = vmatprep.subr.mxu0 0.0
    %2401 = vmatpush1.msra.mxu0 0.0
    %2402 = vmatprep.subr.mxu0 0.0
    %2403 = vmatpush1.msra.mxu0 0.0
    %2404 = vmatprep.subr.mxu0 0.0
    %2405 = vmatpush1.msra.mxu0 0.0
    %2406 = vmatprep.subr.mxu0 0.0
    %2407 = vmatpush1.msra.mxu0 0.0
    %2408 = vmatprep.subr.mxu0 0.0
    %2409 = vmatpush1.msra.mxu0 0.0
    %2410 = vmatprep.subr.mxu0 0.0
    %2411 = vmatpush1.msra.mxu0 0.0
    %2412 = vmatprep.subr.mxu0 0.0
    %2413 = vmatpush1.msra.mxu0 0.0
    %2414 = vmatprep.subr.mxu0 0.0
    %2415 = vmatpush1.msra.mxu0 0.0
    %2416 = vmatprep.mubr.f32.mxu0 0.0
    %2417 = vmatmul.mubr.f32.gmra.mrb[0].mxu0 0.0
    %v2418 = vpop.f32.mrb[0].mxu0
    %v2419 = vadd.f32 0.0, %v2418
    %v2420 = vpop.f32.mrb[0].mxu0
    %v2421 = vadd.f32 0.0, %v2420
    %2422 = vdwg.mxu0
    %v2423 = vadd.f32 %v2194, %v2348
    %v2424 = vadd.f32 %v2196, %v2350
    %v2425 = vadd.f32 %v2271, %v2419
    %v2426 = vadd.f32 %v2273, %v2421
    %v2427 = vxor.u32 %v2423, 2147483648
    %v2428 = vmul.f32 %v2427, 1.442695
    %v2429 = vpow.pop %v2428
    %v2430 = vadd.f32 %v2429, 1.0
    %v2431 = vrcp.pop %v2430
    %v2432 = vmul.f32 1.0, %v2431
    %v2433 = vxor.u32 %v2424, 2147483648
    %v2434 = vmul.f32 %v2433, 1.442695
    %v2435 = vpow.pop %v2434
    %v2436 = vadd.f32 %v2435, 1.0
    %v2437 = vrcp.pop %v2436
    %v2438 = vmul.f32 1.0, %v2437
    %v2439 = vtanh.pop %v2425
    %v2440 = vxor.u32 %v2426, 2147483648
    %v2441 = vmul.f32 %v2440, 1.442695
    %v2442 = vpow.pop %v2441
    %v2443 = vadd.f32 %v2442, 1.0
    %v2444 = vrcp.pop %v2443
    %v2445 = vmul.f32 1.0, %v2444
    %v2446 = vmul.f32 %v2438, 0.0
    %v2447 = vmul.f32 %v2432, %v2439
    %v2448 = vadd.f32 %v2446, %v2447
    %v2449 = vtanh.pop %v2448
    %v2450 = vmul.f32 %v2445, %v2449
    %2451 = vst [vmem:[#allocation2] sm:$0x3] %v2450
    %2452 = vmatprep.subr.mxu0 %v1976
    %2453 = vmatpush1.msra.mxu0 %v1975
    %2454 = vmatprep.subr.mxu0 %v1980
    %2455 = vmatpush1.msra.mxu0 %v1979
    %2456 = vmatprep.subr.mxu0 %v1984
    %2457 = vmatpush1.msra.mxu0 %v1983
    %2458 = vmatprep.subr.mxu0 %v1988
    %2459 = vmatpush1.msra.mxu0 %v1987
    %2460 = vmatprep.subr.mxu0 %v1992
    %2461 = vmatpush1.msra.mxu0 %v1991
    %2462 = vmatprep.subr.mxu0 %v1996
    %2463 = vmatpush1.msra.mxu0 %v1995
    %2464 = vmatprep.subr.mxu0 %v2000
    %2465 = vmatpush1.msra.mxu0 %v1999
    %2466 = vmatprep.subr.mxu0 %v2004
    %2467 = vmatpush1.msra.mxu0 %v2003
    %2468 = vmatprep.subr.mxu0 %v2008
    %2469 = vmatpush1.msra.mxu0 %v2007
    %2470 = vmatprep.subr.mxu0 %v2012
    %2471 = vmatpush1.msra.mxu0 %v2011
    %2472 = vmatprep.subr.mxu0 %v2016
    %2473 = vmatpush1.msra.mxu0 %v2015
    %2474 = vmatprep.subr.mxu0 %v2020
    %2475 = vmatpush1.msra.mxu0 %v2019
    %2476 = vmatprep.subr.mxu0 %v2024
    %2477 = vmatpush1.msra.mxu0 %v2023
    %2478 = vmatprep.subr.mxu0 %v2028
    %2479 = vmatpush1.msra.mxu0 %v2027
    %2480 = vmatprep.subr.mxu0 %v2032
    %2481 = vmatpush1.msra.mxu0 %v2031
    %2482 = vmatprep.subr.mxu0 %v2036
    %2483 = vmatpush1.msra.mxu0 %v2035
    %2484 = vmatprep.subr.mxu0 0.0
    %2485 = vmatpush1.msra.mxu0 0.0
    %2486 = vmatprep.subr.mxu0 0.0
    %2487 = vmatpush1.msra.mxu0 0.0
    %2488 = vmatprep.subr.mxu0 0.0
    %2489 = vmatpush1.msra.mxu0 0.0
    %2490 = vmatprep.subr.mxu0 0.0
    %2491 = vmatpush1.msra.mxu0 0.0
    %2492 = vmatprep.subr.mxu0 0.0
    %2493 = vmatpush1.msra.mxu0 0.0
    %2494 = vmatprep.subr.mxu0 0.0
    %2495 = vmatpush1.msra.mxu0 0.0
    %2496 = vmatprep.subr.mxu0 0.0
    %2497 = vmatpush1.msra.mxu0 0.0
    %2498 = vmatprep.subr.mxu0 0.0
    %2499 = vmatpush1.msra.mxu0 0.0
    %2500 = vmatprep.subr.mxu0 0.0
    %2501 = vmatpush1.msra.mxu0 0.0
    %2502 = vmatprep.subr.mxu0 0.0
    %2503 = vmatpush1.msra.mxu0 0.0
    %2504 = vmatprep.subr.mxu0 0.0
    %2505 = vmatpush1.msra.mxu0 0.0
    %2506 = vmatprep.subr.mxu0 0.0
    %2507 = vmatpush1.msra.mxu0 0.0
    %2508 = vmatprep.subr.mxu0 0.0
    %2509 = vmatpush1.msra.mxu0 0.0
    %2510 = vmatprep.subr.mxu0 0.0
    %2511 = vmatpush1.msra.mxu0 0.0
    %2512 = vmatprep.subr.mxu0 0.0
    %2513 = vmatpush1.msra.mxu0 0.0
    %2514 = vmatprep.subr.mxu0 0.0
    %2515 = vmatpush1.msra.mxu0 0.0
    %2516 = vmatprep.mubr.f32.mxu0 0.0
    %2517 = vmatmul.mubr.f32.gmra.mrb[0].mxu0 %v2450
    %v2518 = vpop.f32.mrb[0].mxu0
    %v2519 = vadd.f32 0.0, %v2518
    %v2520 = vpop.f32.mrb[0].mxu0
    %v2521 = vadd.f32 0.0, %v2520
    %2522 = vdwg.mxu0
    %2523 = vmatprep.subr.mxu0 %v1978
    %2524 = vmatpush1.msra.mxu0 %v1977
    %2525 = vmatprep.subr.mxu0 %v1982
    %2526 = vmatpush1.msra.mxu0 %v1981
    %2527 = vmatprep.subr.mxu0 %v1986
    %2528 = vmatpush1.msra.mxu0 %v1985
    %2529 = vmatprep.subr.mxu0 %v1990
    %2530 = vmatpush1.msra.mxu0 %v1989
    %2531 = vmatprep.subr.mxu0 %v1994
    %2532 = vmatpush1.msra.mxu0 %v1993
    %2533 = vmatprep.subr.mxu0 %v1998
    %2534 = vmatpush1.msra.mxu0 %v1997
    %2535 = vmatprep.subr.mxu0 %v2002
    %2536 = vmatpush1.msra.mxu0 %v2001
    %2537 = vmatprep.subr.mxu0 %v2006
    %2538 = vmatpush1.msra.mxu0 %v2005
    %2539 = vmatprep.subr.mxu0 %v2010
    %2540 = vmatpush1.msra.mxu0 %v2009
    %2541 = vmatprep.subr.mxu0 %v2014
    %2542 = vmatpush1.msra.mxu0 %v2013
    %2543 = vmatprep.subr.mxu0 %v2018
    %2544 = vmatpush1.msra.mxu0 %v2017
    %2545 = vmatprep.subr.mxu0 %v2022
    %2546 = vmatpush1.msra.mxu0 %v2021
    %2547 = vmatprep.subr.mxu0 %v2026
    %2548 = vmatpush1.msra.mxu0 %v2025
    %2549 = vmatprep.subr.mxu0 %v2030
    %2550 = vmatpush1.msra.mxu0 %v2029
    %2551 = vmatprep.subr.mxu0 %v2034
    %2552 = vmatpush1.msra.mxu0 %v2033
    %2553 = vmatprep.subr.mxu0 %v2038
    %2554 = vmatpush1.msra.mxu0 %v2037
    %2555 = vmatprep.subr.mxu0 0.0
    %2556 = vmatpush1.msra.mxu0 0.0
    %2557 = vmatprep.subr.mxu0 0.0
    %2558 = vmatpush1.msra.mxu0 0.0
    %2559 = vmatprep.subr.mxu0 0.0
    %2560 = vmatpush1.msra.mxu0 0.0
    %2561 = vmatprep.subr.mxu0 0.0
    %2562 = vmatpush1.msra.mxu0 0.0
    %2563 = vmatprep.subr.mxu0 0.0
    %2564 = vmatpush1.msra.mxu0 0.0
    %2565 = vmatprep.subr.mxu0 0.0
    %2566 = vmatpush1.msra.mxu0 0.0
    %2567 = vmatprep.subr.mxu0 0.0
    %2568 = vmatpush1.msra.mxu0 0.0
    %2569 = vmatprep.subr.mxu0 0.0
    %2570 = vmatpush1.msra.mxu0 0.0
    %2571 = vmatprep.subr.mxu0 0.0
    %2572 = vmatpush1.msra.mxu0 0.0
    %2573 = vmatprep.subr.mxu0 0.0
    %2574 = vmatpush1.msra.mxu0 0.0
    %2575 = vmatprep.subr.mxu0 0.0
    %2576 = vmatpush1.msra.mxu0 0.0
    %2577 = vmatprep.subr.mxu0 0.0
    %2578 = vmatpush1.msra.mxu0 0.0
    %2579 = vmatprep.subr.mxu0 0.0
    %2580 = vmatpush1.msra.mxu0 0.0
    %2581 = vmatprep.subr.mxu0 0.0
    %2582 = vmatpush1.msra.mxu0 0.0
    %2583 = vmatprep.subr.mxu0 0.0
    %2584 = vmatpush1.msra.mxu0 0.0
    %2585 = vmatprep.subr.mxu0 0.0
    %2586 = vmatpush1.msra.mxu0 0.0
    %2587 = vmatprep.mubr.f32.mxu0 0.0
    %2588 = vmatmul.mubr.f32.gmra.mrb[0].mxu0 %v2450
    %v2589 = vpop.f32.mrb[0].mxu0
    %v2590 = vadd.f32 0.0, %v2589
    %v2591 = vpop.f32.mrb[0].mxu0
    %v2592 = vadd.f32 0.0, %v2591
    %2593 = vdwg.mxu0
    %v2598 = vrot.slane %v2519, 6
    %v2599 = vrot.slane %v2521, 6
    %v2600 = vrot.slane %v2590, 6
    %v2601 = vrot.slane %v2592, 6
    %v2606 = vadd.f32 %v2194, %v2598
    %v2607 = vadd.f32 %v2196, %v2599
    %v2608 = vadd.f32 %v2271, %v2600
    %v2609 = vadd.f32 %v2273, %v2601
    %v2610 = vxor.u32 %v2606, 2147483648
    %v2611 = vmul.f32 %v2610, 1.442695
    %v2612 = vpow.pop %v2611
    %v2613 = vadd.f32 %v2612, 1.0
    %v2614 = vrcp.pop %v2613
    %v2615 = vmul.f32 1.0, %v2614
    %v2616 = vxor.u32 %v2607, 2147483648
    %v2617 = vmul.f32 %v2616, 1.442695
    %v2618 = vpow.pop %v2617
    %v2619 = vadd.f32 %v2618, 1.0
    %v2620 = vrcp.pop %v2619
    %v2621 = vmul.f32 1.0, %v2620
    %v2622 = vtanh.pop %v2608
    %v2623 = vxor.u32 %v2609, 2147483648
    %v2624 = vmul.f32 %v2623, 1.442695
    %v2625 = vpow.pop %v2624
    %v2626 = vadd.f32 %v2625, 1.0
    %v2627 = vrcp.pop %v2626
    %v2628 = vmul.f32 1.0, %v2627
    %v2630 = vrot.slane %v2448, 6
    %v2632 = vmul.f32 %v2621, %v2630
    %v2633 = vmul.f32 %v2615, %v2622
    %v2634 = vadd.f32 %v2632, %v2633
    %v2635 = vtanh.pop %v2634
    %v2636 = vmul.f32 %v2628, %v2635
    %2637 = vst [vmem:[#allocation2] sm:$0xc] %v2636
    %v2639 = vrot.slane %v2636, 2
    %2641 = vmatprep.subr.mxu0 %v1976
    %2642 = vmatpush1.msra.mxu0 %v1975
    %2643 = vmatprep.subr.mxu0 %v1980
    %2644 = vmatpush1.msra.mxu0 %v1979
    %2645 = vmatprep.subr.mxu0 %v1984
    %2646 = vmatpush1.msra.mxu0 %v1983
    %2647 = vmatprep.subr.mxu0 %v1988
    %2648 = vmatpush1.msra.mxu0 %v1987
    %2649 = vmatprep.subr.mxu0 %v1992
    %2650 = vmatpush1.msra.mxu0 %v1991
    %2651 = vmatprep.subr.mxu0 %v1996
    %2652 = vmatpush1.msra.mxu0 %v1995
    %2653 = vmatprep.subr.mxu0 %v2000
    %2654 = vmatpush1.msra.mxu0 %v1999
    %2655 = vmatprep.subr.mxu0 %v2004
    %2656 = vmatpush1.msra.mxu0 %v2003
    %2657 = vmatprep.subr.mxu0 %v2008
    %2658 = vmatpush1.msra.mxu0 %v2007
    %2659 = vmatprep.subr.mxu0 %v2012
    %2660 = vmatpush1.msra.mxu0 %v2011
    %2661 = vmatprep.subr.mxu0 %v2016
    %2662 = vmatpush1.msra.mxu0 %v2015
    %2663 = vmatprep.subr.mxu0 %v2020
    %2664 = vmatpush1.msra.mxu0 %v2019
    %2665 = vmatprep.subr.mxu0 %v2024
    %2666 = vmatpush1.msra.mxu0 %v2023
    %2667 = vmatprep.subr.mxu0 %v2028
    %2668 = vmatpush1.msra.mxu0 %v2027
    %2669 = vmatprep.subr.mxu0 %v2032
    %2670 = vmatpush1.msra.mxu0 %v2031
    %2671 = vmatprep.subr.mxu0 %v2036
    %2672 = vmatpush1.msra.mxu0 %v2035
    %2673 = vmatprep.subr.mxu0 0.0
    %2674 = vmatpush1.msra.mxu0 0.0
    %2675 = vmatprep.subr.mxu0 0.0
    %2676 = vmatpush1.msra.mxu0 0.0
    %2677 = vmatprep.subr.mxu0 0.0
    %2678 = vmatpush1.msra.mxu0 0.0
    %2679 = vmatprep.subr.mxu0 0.0
    %2680 = vmatpush1.msra.mxu0 0.0
    %2681 = vmatprep.subr.mxu0 0.0
    %2682 = vmatpush1.msra.mxu0 0.0
    %2683 = vmatprep.subr.mxu0 0.0
    %2684 = vmatpush1.msra.mxu0 0.0
    %2685 = vmatprep.subr.mxu0 0.0
    %2686 = vmatpush1.msra.mxu0 0.0
    %2687 = vmatprep.subr.mxu0 0.0
    %2688 = vmatpush1.msra.mxu0 0.0
    %2689 = vmatprep.subr.mxu0 0.0
    %2690 = vmatpush1.msra.mxu0 0.0
    %2691 = vmatprep.subr.mxu0 0.0
    %2692 = vmatpush1.msra.mxu0 0.0
    %2693 = vmatprep.subr.mxu0 0.0
    %2694 = vmatpush1.msra.mxu0 0.0
    %2695 = vmatprep.subr.mxu0 0.0
    %2696 = vmatpush1.msra.mxu0 0.0
    %2697 = vmatprep.subr.mxu0 0.0
    %2698 = vmatpush1.msra.mxu0 0.0
    %2699 = vmatprep.subr.mxu0 0.0
    %2700 = vmatpush1.msra.mxu0 0.0
    %2701 = vmatprep.subr.mxu0 0.0
    %2702 = vmatpush1.msra.mxu0 0.0
    %2703 = vmatprep.subr.mxu0 0.0
    %2704 = vmatpush1.msra.mxu0 0.0
    %2705 = vmatprep.mubr.f32.mxu0 0.0
    %2706 = vmatmul.mubr.f32.gmra.mrb[0].mxu0 %v2639
    %v2707 = vpop.f32.mrb[0].mxu0
    %v2708 = vadd.f32 0.0, %v2707
    %v2709 = vpop.f32.mrb[0].mxu0
    %v2710 = vadd.f32 0.0, %v2709
    %2711 = vdwg.mxu0
    %2712 = vmatprep.subr.mxu0 %v1978
    %2713 = vmatpush1.msra.mxu0 %v1977
    %2714 = vmatprep.subr.mxu0 %v1982
    %2715 = vmatpush1.msra.mxu0 %v1981
    %2716 = vmatprep.subr.mxu0 %v1986
    %2717 = vmatpush1.msra.mxu0 %v1985
    %2718 = vmatprep.subr.mxu0 %v1990
    %2719 = vmatpush1.msra.mxu0 %v1989
    %2720 = vmatprep.subr.mxu0 %v1994
    %2721 = vmatpush1.msra.mxu0 %v1993
    %2722 = vmatprep.subr.mxu0 %v1998
    %2723 = vmatpush1.msra.mxu0 %v1997
    %2724 = vmatprep.subr.mxu0 %v2002
    %2725 = vmatpush1.msra.mxu0 %v2001
    %2726 = vmatprep.subr.mxu0 %v2006
    %2727 = vmatpush1.msra.mxu0 %v2005
    %2728 = vmatprep.subr.mxu0 %v2010
    %2729 = vmatpush1.msra.mxu0 %v2009
    %2730 = vmatprep.subr.mxu0 %v2014
    %2731 = vmatpush1.msra.mxu0 %v2013
    %2732 = vmatprep.subr.mxu0 %v2018
    %2733 = vmatpush1.msra.mxu0 %v2017
    %2734 = vmatprep.subr.mxu0 %v2022
    %2735 = vmatpush1.msra.mxu0 %v2021
    %2736 = vmatprep.subr.mxu0 %v2026
    %2737 = vmatpush1.msra.mxu0 %v2025
    %2738 = vmatprep.subr.mxu0 %v2030
    %2739 = vmatpush1.msra.mxu0 %v2029
    %2740 = vmatprep.subr.mxu0 %v2034
    %2741 = vmatpush1.msra.mxu0 %v2033
    %2742 = vmatprep.subr.mxu0 %v2038
    %2743 = vmatpush1.msra.mxu0 %v2037
    %2744 = vmatprep.subr.mxu0 0.0
    %2745 = vmatpush1.msra.mxu0 0.0
    %2746 = vmatprep.subr.mxu0 0.0
    %2747 = vmatpush1.msra.mxu0 0.0
    %2748 = vmatprep.subr.mxu0 0.0
    %2749 = vmatpush1.msra.mxu0 0.0
    %2750 = vmatprep.subr.mxu0 0.0
    %2751 = vmatpush1.msra.mxu0 0.0
    %2752 = vmatprep.subr.mxu0 0.0
    %2753 = vmatpush1.msra.mxu0 0.0
    %2754 = vmatprep.subr.mxu0 0.0
    %2755 = vmatpush1.msra.mxu0 0.0
    %2756 = vmatprep.subr.mxu0 0.0
    %2757 = vmatpush1.msra.mxu0 0.0
    %2758 = vmatprep.subr.mxu0 0.0
    %2759 = vmatpush1.msra.mxu0 0.0
    %2760 = vmatprep.subr.mxu0 0.0
    %2761 = vmatpush1.msra.mxu0 0.0
    %2762 = vmatprep.subr.mxu0 0.0
    %2763 = vmatpush1.msra.mxu0 0.0
    %2764 = vmatprep.subr.mxu0 0.0
    %2765 = vmatpush1.msra.mxu0 0.0
    %2766 = vmatprep.subr.mxu0 0.0
    %2767 = vmatpush1.msra.mxu0 0.0
    %2768 = vmatprep.subr.mxu0 0.0
    %2769 = vmatpush1.msra.mxu0 0.0
    %2770 = vmatprep.subr.mxu0 0.0
    %2771 = vmatpush1.msra.mxu0 0.0
    %2772 = vmatprep.subr.mxu0 0.0
    %2773 = vmatpush1.msra.mxu0 0.0
    %2774 = vmatprep.subr.mxu0 0.0
    %2775 = vmatpush1.msra.mxu0 0.0
    %2776 = vmatprep.mubr.f32.mxu0 0.0
    %2777 = vmatmul.mubr.f32.gmra.mrb[0].mxu0 %v2639
    %v2778 = vpop.f32.mrb[0].mxu0
    %v2779 = vadd.f32 0.0, %v2778
    %v2780 = vpop.f32.mrb[0].mxu0
    %v2781 = vadd.f32 0.0, %v2780
    %2782 = vdwg.mxu0
    %v2787 = vrot.slane %v2708, 4
    %v2788 = vrot.slane %v2710, 4
    %v2789 = vrot.slane %v2779, 4
    %v2790 = vrot.slane %v2781, 4
    %v2795 = vadd.f32 %v2194, %v2787
    %v2796 = vadd.f32 %v2196, %v2788
    %v2797 = vadd.f32 %v2271, %v2789
    %v2798 = vadd.f32 %v2273, %v2790
    %v2799 = vxor.u32 %v2795, 2147483648
    %v2800 = vmul.f32 %v2799, 1.442695
    %v2801 = vpow.pop %v2800
    %v2802 = vadd.f32 %v2801, 1.0
    %v2803 = vrcp.pop %v2802
    %v2804 = vmul.f32 1.0, %v2803
    %v2805 = vxor.u32 %v2796, 2147483648
    %v2806 = vmul.f32 %v2805, 1.442695
    %v2807 = vpow.pop %v2806
    %v2808 = vadd.f32 %v2807, 1.0
    %v2809 = vrcp.pop %v2808
    %v2810 = vmul.f32 1.0, %v2809
    %v2811 = vtanh.pop %v2797
    %v2812 = vxor.u32 %v2798, 2147483648
    %v2813 = vmul.f32 %v2812, 1.442695
    %v2814 = vpow.pop %v2813
    %v2815 = vadd.f32 %v2814, 1.0
    %v2816 = vrcp.pop %v2815
    %v2817 = vmul.f32 1.0, %v2816
    %v2819 = vrot.slane %v2634, 6
    %v2821 = vmul.f32 %v2810, %v2819
    %v2822 = vmul.f32 %v2804, %v2811
    %v2823 = vadd.f32 %v2821, %v2822
    %v2824 = vtanh.pop %v2823
    %v2825 = vmul.f32 %v2817, %v2824
    %2826 = vst [vmem:[#allocation2] sm:$0x30] %v2825
    %v2828 = vrot.slane %v2825, 4
    %2830 = vmatprep.subr.mxu0 %v1976
    %2831 = vmatpush1.msra.mxu0 %v1975
    %2832 = vmatprep.subr.mxu0 %v1980
    %2833 = vmatpush1.msra.mxu0 %v1979
    %2834 = vmatprep.subr.mxu0 %v1984
    %2835 = vmatpush1.msra.mxu0 %v1983
    %2836 = vmatprep.subr.mxu0 %v1988
    %2837 = vmatpush1.msra.mxu0 %v1987
    %2838 = vmatprep.subr.mxu0 %v1992
    %2839 = vmatpush1.msra.mxu0 %v1991
    %2840 = vmatprep.subr.mxu0 %v1996
    %2841 = vmatpush1.msra.mxu0 %v1995
    %2842 = vmatprep.subr.mxu0 %v2000
    %2843 = vmatpush1.msra.mxu0 %v1999
    %2844 = vmatprep.subr.mxu0 %v2004
    %2845 = vmatpush1.msra.mxu0 %v2003
    %2846 = vmatprep.subr.mxu0 %v2008
    %2847 = vmatpush1.msra.mxu0 %v2007
    %2848 = vmatprep.subr.mxu0 %v2012
    %2849 = vmatpush1.msra.mxu0 %v2011
    %2850 = vmatprep.subr.mxu0 %v2016
    %2851 = vmatpush1.msra.mxu0 %v2015
    %2852 = vmatprep.subr.mxu0 %v2020
    %2853 = vmatpush1.msra.mxu0 %v2019
    %2854 = vmatprep.subr.mxu0 %v2024
    %2855 = vmatpush1.msra.mxu0 %v2023
    %2856 = vmatprep.subr.mxu0 %v2028
    %2857 = vmatpush1.msra.mxu0 %v2027
    %2858 = vmatprep.subr.mxu0 %v2032
    %2859 = vmatpush1.msra.mxu0 %v2031
    %2860 = vmatprep.subr.mxu0 %v2036
    %2861 = vmatpush1.msra.mxu0 %v2035
    %2862 = vmatprep.subr.mxu0 0.0
    %2863 = vmatpush1.msra.mxu0 0.0
    %2864 = vmatprep.subr.mxu0 0.0
    %2865 = vmatpush1.msra.mxu0 0.0
    %2866 = vmatprep.subr.mxu0 0.0
    %2867 = vmatpush1.msra.mxu0 0.0
    %2868 = vmatprep.subr.mxu0 0.0
    %2869 = vmatpush1.msra.mxu0 0.0
    %2870 = vmatprep.subr.mxu0 0.0
    %2871 = vmatpush1.msra.mxu0 0.0
    %2872 = vmatprep.subr.mxu0 0.0
    %2873 = vmatpush1.msra.mxu0 0.0
    %2874 = vmatprep.subr.mxu0 0.0
    %2875 = vmatpush1.msra.mxu0 0.0
    %2876 = vmatprep.subr.mxu0 0.0
    %2877 = vmatpush1.msra.mxu0 0.0
    %2878 = vmatprep.subr.mxu0 0.0
    %2879 = vmatpush1.msra.mxu0 0.0
    %2880 = vmatprep.subr.mxu0 0.0
    %2881 = vmatpush1.msra.mxu0 0.0
    %2882 = vmatprep.subr.mxu0 0.0
    %2883 = vmatpush1.msra.mxu0 0.0
    %2884 = vmatprep.subr.mxu0 0.0
    %2885 = vmatpush1.msra.mxu0 0.0
    %2886 = vmatprep.subr.mxu0 0.0
    %2887 = vmatpush1.msra.mxu0 0.0
    %2888 = vmatprep.subr.mxu0 0.0
    %2889 = vmatpush1.msra.mxu0 0.0
    %2890 = vmatprep.subr.mxu0 0.0
    %2891 = vmatpush1.msra.mxu0 0.0
    %2892 = vmatprep.subr.mxu0 0.0
    %2893 = vmatpush1.msra.mxu0 0.0
    %2894 = vmatprep.mubr.f32.mxu0 0.0
    %2895 = vmatmul.mubr.f32.gmra.mrb[0].mxu0 %v2828
    %v2896 = vpop.f32.mrb[0].mxu0
    %v2897 = vadd.f32 0.0, %v2896
    %v2898 = vpop.f32.mrb[0].mxu0
    %v2899 = vadd.f32 0.0, %v2898
    %2900 = vdwg.mxu0
    %2901 = vmatprep.subr.mxu0 %v1978
    %2902 = vmatpush1.msra.mxu0 %v1977
    %2903 = vmatprep.subr.mxu0 %v1982
    %2904 = vmatpush1.msra.mxu0 %v1981
    %2905 = vmatprep.subr.mxu0 %v1986
    %2906 = vmatpush1.msra.mxu0 %v1985
    %2907 = vmatprep.subr.mxu0 %v1990
    %2908 = vmatpush1.msra.mxu0 %v1989
    %2909 = vmatprep.subr.mxu0 %v1994
    %2910 = vmatpush1.msra.mxu0 %v1993
    %2911 = vmatprep.subr.mxu0 %v1998
    %2912 = vmatpush1.msra.mxu0 %v1997
    %2913 = vmatprep.subr.mxu0 %v2002
    %2914 = vmatpush1.msra.mxu0 %v2001
    %2915 = vmatprep.subr.mxu0 %v2006
    %2916 = vmatpush1.msra.mxu0 %v2005
    %2917 = vmatprep.subr.mxu0 %v2010
    %2918 = vmatpush1.msra.mxu0 %v2009
    %2919 = vmatprep.subr.mxu0 %v2014
    %2920 = vmatpush1.msra.mxu0 %v2013
    %2921 = vmatprep.subr.mxu0 %v2018
    %2922 = vmatpush1.msra.mxu0 %v2017
    %2923 = vmatprep.subr.mxu0 %v2022
    %2924 = vmatpush1.msra.mxu0 %v2021
    %2925 = vmatprep.subr.mxu0 %v2026
    %2926 = vmatpush1.msra.mxu0 %v2025
    %2927 = vmatprep.subr.mxu0 %v2030
    %2928 = vmatpush1.msra.mxu0 %v2029
    %2929 = vmatprep.subr.mxu0 %v2034
    %2930 = vmatpush1.msra.mxu0 %v2033
    %2931 = vmatprep.subr.mxu0 %v2038
    %2932 = vmatpush1.msra.mxu0 %v2037
    %2933 = vmatprep.subr.mxu0 0.0
    %2934 = vmatpush1.msra.mxu0 0.0
    %2935 = vmatprep.subr.mxu0 0.0
    %2936 = vmatpush1.msra.mxu0 0.0
    %2937 = vmatprep.subr.mxu0 0.0
    %2938 = vmatpush1.msra.mxu0 0.0
    %2939 = vmatprep.subr.mxu0 0.0
    %2940 = vmatpush1.msra.mxu0 0.0
    %2941 = vmatprep.subr.mxu0 0.0
    %2942 = vmatpush1.msra.mxu0 0.0
    %2943 = vmatprep.subr.mxu0 0.0
    %2944 = vmatpush1.msra.mxu0 0.0
    %2945 = vmatprep.subr.mxu0 0.0
    %2946 = vmatpush1.msra.mxu0 0.0
    %2947 = vmatprep.subr.mxu0 0.0
    %2948 = vmatpush1.msra.mxu0 0.0
    %2949 = vmatprep.subr.mxu0 0.0
    %2950 = vmatpush1.msra.mxu0 0.0
    %2951 = vmatprep.subr.mxu0 0.0
    %2952 = vmatpush1.msra.mxu0 0.0
    %2953 = vmatprep.subr.mxu0 0.0
    %2954 = vmatpush1.msra.mxu0 0.0
    %2955 = vmatprep.subr.mxu0 0.0
    %2956 = vmatpush1.msra.mxu0 0.0
    %2957 = vmatprep.subr.mxu0 0.0
    %2958 = vmatpush1.msra.mxu0 0.0
    %2959 = vmatprep.subr.mxu0 0.0
    %2960 = vmatpush1.msra.mxu0 0.0
    %2961 = vmatprep.subr.mxu0 0.0
    %2962 = vmatpush1.msra.mxu0 0.0
    %2963 = vmatprep.subr.mxu0 0.0
    %2964 = vmatpush1.msra.mxu0 0.0
    %2965 = vmatprep.mubr.f32.mxu0 0.0
    %2966 = vmatmul.mubr.f32.gmra.mrb[0].mxu0 %v2828
    %v2967 = vpop.f32.mrb[0].mxu0
    %v2968 = vadd.f32 0.0, %v2967
    %v2969 = vpop.f32.mrb[0].mxu0
    %v2970 = vadd.f32 0.0, %v2969
    %2971 = vdwg.mxu0
    %v2976 = vrot.slane %v2897, 2
    %v2977 = vrot.slane %v2899, 2
    %v2978 = vrot.slane %v2968, 2
    %v2979 = vrot.slane %v2970, 2
    %v2984 = vadd.f32 %v2194, %v2976
    %v2985 = vadd.f32 %v2196, %v2977
    %v2986 = vadd.f32 %v2271, %v2978
    %v2987 = vadd.f32 %v2273, %v2979
    %v2988 = vxor.u32 %v2984, 2147483648
    %v2989 = vmul.f32 %v2988, 1.442695
    %v2990 = vpow.pop %v2989
    %v2991 = vadd.f32 %v2990, 1.0
    %v2992 = vrcp.pop %v2991
    %v2993 = vmul.f32 1.0, %v2992
    %v2994 = vxor.u32 %v2985, 2147483648
    %v2995 = vmul.f32 %v2994, 1.442695
    %v2996 = vpow.pop %v2995
    %v2997 = vadd.f32 %v2996, 1.0
    %v2998 = vrcp.pop %v2997
    %v2999 = vmul.f32 1.0, %v2998
    %v3000 = vtanh.pop %v2986
    %v3001 = vxor.u32 %v2987, 2147483648
    %v3002 = vmul.f32 %v3001, 1.442695
    %v3003 = vpow.pop %v3002
    %v3004 = vadd.f32 %v3003, 1.0
    %v3005 = vrcp.pop %v3004
    %v3006 = vmul.f32 1.0, %v3005
    %v3008 = vrot.slane %v2823, 6
    %v3010 = vmul.f32 %v2999, %v3008
    %v3011 = vmul.f32 %v2993, %v3000
    %v3012 = vadd.f32 %v3010, %v3011
    %v3013 = vtanh.pop %v3012
    %v3014 = vmul.f32 %v3006, %v3013
    %3015 = vst [vmem:[#allocation2] sm:$0xc0] %v3014
    %v3017 = vrot.slane %v3014, 6
    %3019 = vmatprep.subr.mxu0 %v1976
    %3020 = vmatpush1.msra.mxu0 %v1975
    %3021 = vmatprep.subr.mxu0 %v1980
    %3022 = vmatpush1.msra.mxu0 %v1979
    %3023 = vmatprep.subr.mxu0 %v1984
    %3024 = vmatpush1.msra.mxu0 %v1983
    %3025 = vmatprep.subr.mxu0 %v1988
    %3026 = vmatpush1.msra.mxu0 %v1987
    %3027 = vmatprep.subr.mxu0 %v1992
    %3028 = vmatpush1.msra.mxu0 %v1991
    %3029 = vmatprep.subr.mxu0 %v1996
    %3030 = vmatpush1.msra.mxu0 %v1995
    %3031 = vmatprep.subr.mxu0 %v2000
    %3032 = vmatpush1.msra.mxu0 %v1999
    %3033 = vmatprep.subr.mxu0 %v2004
    %3034 = vmatpush1.msra.mxu0 %v2003
    %3035 = vmatprep.subr.mxu0 %v2008
    %3036 = vmatpush1.msra.mxu0 %v2007
    %3037 = vmatprep.subr.mxu0 %v2012
    %3038 = vmatpush1.msra.mxu0 %v2011
    %3039 = vmatprep.subr.mxu0 %v2016
    %3040 = vmatpush1.msra.mxu0 %v2015
    %3041 = vmatprep.subr.mxu0 %v2020
    %3042 = vmatpush1.msra.mxu0 %v2019
    %3043 = vmatprep.subr.mxu0 %v2024
    %3044 = vmatpush1.msra.mxu0 %v2023
    %3045 = vmatprep.subr.mxu0 %v2028
    %3046 = vmatpush1.msra.mxu0 %v2027
    %3047 = vmatprep.subr.mxu0 %v2032
    %3048 = vmatpush1.msra.mxu0 %v2031
    %3049 = vmatprep.subr.mxu0 %v2036
    %3050 = vmatpush1.msra.mxu0 %v2035
    %3051 = vmatprep.subr.mxu0 0.0
    %3052 = vmatpush1.msra.mxu0 0.0
    %3053 = vmatprep.subr.mxu0 0.0
    %3054 = vmatpush1.msra.mxu0 0.0
    %3055 = vmatprep.subr.mxu0 0.0
    %3056 = vmatpush1.msra.mxu0 0.0
    %3057 = vmatprep.subr.mxu0 0.0
    %3058 = vmatpush1.msra.mxu0 0.0
    %3059 = vmatprep.subr.mxu0 0.0
    %3060 = vmatpush1.msra.mxu0 0.0
    %3061 = vmatprep.subr.mxu0 0.0
    %3062 = vmatpush1.msra.mxu0 0.0
    %3063 = vmatprep.subr.mxu0 0.0
    %3064 = vmatpush1.msra.mxu0 0.0
    %3065 = vmatprep.subr.mxu0 0.0
    %3066 = vmatpush1.msra.mxu0 0.0
    %3067 = vmatprep.subr.mxu0 0.0
    %3068 = vmatpush1.msra.mxu0 0.0
    %3069 = vmatprep.subr.mxu0 0.0
    %3070 = vmatpush1.msra.mxu0 0.0
    %3071 = vmatprep.subr.mxu0 0.0
    %3072 = vmatpush1.msra.mxu0 0.0
    %3073 = vmatprep.subr.mxu0 0.0
    %3074 = vmatpush1.msra.mxu0 0.0
    %3075 = vmatprep.subr.mxu0 0.0
    %3076 = vmatpush1.msra.mxu0 0.0
    %3077 = vmatprep.subr.mxu0 0.0
    %3078 = vmatpush1.msra.mxu0 0.0
    %3079 = vmatprep.subr.mxu0 0.0
    %3080 = vmatpush1.msra.mxu0 0.0
    %3081 = vmatprep.subr.mxu0 0.0
    %3082 = vmatpush1.msra.mxu0 0.0
    %3083 = vmatprep.mubr.f32.mxu0 0.0
    %3084 = vmatmul.mubr.f32.gmra.mrb[0].mxu0 %v3017
    %v3085 = vpop.f32.mrb[0].mxu0
    %v3086 = vadd.f32 0.0, %v3085
    %v3087 = vpop.f32.mrb[0].mxu0
    %v3088 = vadd.f32 0.0, %v3087
    %3089 = vdwg.mxu0
    %3090 = vmatprep.subr.mxu0 %v1978
    %3091 = vmatpush1.msra.mxu0 %v1977
    %3092 = vmatprep.subr.mxu0 %v1982
    %3093 = vmatpush1.msra.mxu0 %v1981
    %3094 = vmatprep.subr.mxu0 %v1986
    %3095 = vmatpush1.msra.mxu0 %v1985
    %3096 = vmatprep.subr.mxu0 %v1990
    %3097 = vmatpush1.msra.mxu0 %v1989
    %3098 = vmatprep.subr.mxu0 %v1994
    %3099 = vmatpush1.msra.mxu0 %v1993
    %3100 = vmatprep.subr.mxu0 %v1998
    %3101 = vmatpush1.msra.mxu0 %v1997
    %3102 = vmatprep.subr.mxu0 %v2002
    %3103 = vmatpush1.msra.mxu0 %v2001
    %3104 = vmatprep.subr.mxu0 %v2006
    %3105 = vmatpush1.msra.mxu0 %v2005
    %3106 = vmatprep.subr.mxu0 %v2010
    %3107 = vmatpush1.msra.mxu0 %v2009
    %3108 = vmatprep.subr.mxu0 %v2014
    %3109 = vmatpush1.msra.mxu0 %v2013
    %3110 = vmatprep.subr.mxu0 %v2018
    %3111 = vmatpush1.msra.mxu0 %v2017
    %3112 = vmatprep.subr.mxu0 %v2022
    %3113 = vmatpush1.msra.mxu0 %v2021
    %3114 = vmatprep.subr.mxu0 %v2026
    %3115 = vmatpush1.msra.mxu0 %v2025
    %3116 = vmatprep.subr.mxu0 %v2030
    %3117 = vmatpush1.msra.mxu0 %v2029
    %3118 = vmatprep.subr.mxu0 %v2034
    %3119 = vmatpush1.msra.mxu0 %v2033
    %3120 = vmatprep.subr.mxu0 %v2038
    %3121 = vmatpush1.msra.mxu0 %v2037
    %3122 = vmatprep.subr.mxu0 0.0
    %3123 = vmatpush1.msra.mxu0 0.0
    %3124 = vmatprep.subr.mxu0 0.0
    %3125 = vmatpush1.msra.mxu0 0.0
    %3126 = vmatprep.subr.mxu0 0.0
    %3127 = vmatpush1.msra.mxu0 0.0
    %3128 = vmatprep.subr.mxu0 0.0
    %3129 = vmatpush1.msra.mxu0 0.0
    %3130 = vmatprep.subr.mxu0 0.0
    %3131 = vmatpush1.msra.mxu0 0.0
    %3132 = vmatprep.subr.mxu0 0.0
    %3133 = vmatpush1.msra.mxu0 0.0
    %3134 = vmatprep.subr.mxu0 0.0
    %3135 = vmatpush1.msra.mxu0 0.0
    %3136 = vmatprep.subr.mxu0 0.0
    %3137 = vmatpush1.msra.mxu0 0.0
    %3138 = vmatprep.subr.mxu0 0.0
    %3139 = vmatpush1.msra.mxu0 0.0
    %3140 = vmatprep.subr.mxu0 0.0
    %3141 = vmatpush1.msra.mxu0 0.0
    %3142 = vmatprep.subr.mxu0 0.0
    %3143 = vmatpush1.msra.mxu0 0.0
    %3144 = vmatprep.subr.mxu0 0.0
    %3145 = vmatpush1.msra.mxu0 0.0
    %3146 = vmatprep.subr.mxu0 0.0
    %3147 = vmatpush1.msra.mxu0 0.0
    %3148 = vmatprep.subr.mxu0 0.0
    %3149 = vmatpush1.msra.mxu0 0.0
    %3150 = vmatprep.subr.mxu0 0.0
    %3151 = vmatpush1.msra.mxu0 0.0
    %3152 = vmatprep.subr.mxu0 0.0
    %3153 = vmatpush1.msra.mxu0 0.0
    %3154 = vmatprep.mubr.f32.mxu0 0.0
    %3155 = vmatmul.mubr.f32.gmra.mrb[0].mxu0 %v3017
    %v3156 = vpop.f32.mrb[0].mxu0
    %v3157 = vadd.f32 0.0, %v3156
    %v3158 = vpop.f32.mrb[0].mxu0
    %v3159 = vadd.f32 0.0, %v3158
    %3160 = vdwg.mxu0
    %v3161 = vadd.f32 %v2200, %v3086
    %v3162 = vadd.f32 %v2202, %v3088
    %v3163 = vadd.f32 %v2277, %v3157
    %v3164 = vadd.f32 %v2279, %v3159
    %v3165 = vxor.u32 %v3161, 2147483648
    %v3166 = vmul.f32 %v3165, 1.442695
    %v3167 = vpow.pop %v3166
    %v3168 = vadd.f32 %v3167, 1.0
    %v3169 = vrcp.pop %v3168
    %v3170 = vmul.f32 1.0, %v3169
    %v3171 = vxor.u32 %v3162, 2147483648
    %v3172 = vmul.f32 %v3171, 1.442695
    %v3173 = vpow.pop %v3172
    %v3174 = vadd.f32 %v3173, 1.0
    %v3175 = vrcp.pop %v3174
    %v3176 = vmul.f32 1.0, %v3175
    %v3177 = vtanh.pop %v3163
    %v3178 = vxor.u32 %v3164, 2147483648
    %v3179 = vmul.f32 %v3178, 1.442695
    %v3180 = vpow.pop %v3179
    %v3181 = vadd.f32 %v3180, 1.0
    %v3182 = vrcp.pop %v3181
    %v3183 = vmul.f32 1.0, %v3182
    %v3185 = vrot.slane %v3012, 6
    %v3187 = vmul.f32 %v3176, %v3185
    %v3188 = vmul.f32 %v3170, %v3177
    %v3189 = vadd.f32 %v3187, %v3188
    %v3190 = vtanh.pop %v3189
    %v3191 = vmul.f32 %v3183, %v3190
    %3192 = vst [vmem:[#allocation2 + $0x8] sm:$0x3] %v3191
    %3193 = vmatprep.subr.mxu0 %v1976
    %3194 = vmatpush1.msra.mxu0 %v1975
    %3195 = vmatprep.subr.mxu0 %v1980
    %3196 = vmatpush1.msra.mxu0 %v1979
    %3197 = vmatprep.subr.mxu0 %v1984
    %3198 = vmatpush1.msra.mxu0 %v1983
    %3199 = vmatprep.subr.mxu0 %v1988
    %3200 = vmatpush1.msra.mxu0 %v1987
    %3201 = vmatprep.subr.mxu0 %v1992
    %3202 = vmatpush1.msra.mxu0 %v1991
    %3203 = vmatprep.subr.mxu0 %v1996
    %3204 = vmatpush1.msra.mxu0 %v1995
    %3205 = vmatprep.subr.mxu0 %v2000
    %3206 = vmatpush1.msra.mxu0 %v1999
    %3207 = vmatprep.subr.mxu0 %v2004
    %3208 = vmatpush1.msra.mxu0 %v2003
    %3209 = vmatprep.subr.mxu0 %v2008
    %3210 = vmatpush1.msra.mxu0 %v2007
    %3211 = vmatprep.subr.mxu0 %v2012
    %3212 = vmatpush1.msra.mxu0 %v2011
    %3213 = vmatprep.subr.mxu0 %v2016
    %3214 = vmatpush1.msra.mxu0 %v2015
    %3215 = vmatprep.subr.mxu0 %v2020
    %3216 = vmatpush1.msra.mxu0 %v2019
    %3217 = vmatprep.subr.mxu0 %v2024
    %3218 = vmatpush1.msra.mxu0 %v2023
    %3219 = vmatprep.subr.mxu0 %v2028
    %3220 = vmatpush1.msra.mxu0 %v2027
    %3221 = vmatprep.subr.mxu0 %v2032
    %3222 = vmatpush1.msra.mxu0 %v2031
    %3223 = vmatprep.subr.mxu0 %v2036
    %3224 = vmatpush1.msra.mxu0 %v2035
    %3225 = vmatprep.subr.mxu0 0.0
    %3226 = vmatpush1.msra.mxu0 0.0
    %3227 = vmatprep.subr.mxu0 0.0
    %3228 = vmatpush1.msra.mxu0 0.0
    %3229 = vmatprep.subr.mxu0 0.0
    %3230 = vmatpush1.msra.mxu0 0.0
    %3231 = vmatprep.subr.mxu0 0.0
    %3232 = vmatpush1.msra.mxu0 0.0
    %3233 = vmatprep.subr.mxu0 0.0
    %3234 = vmatpush1.msra.mxu0 0.0
    %3235 = vmatprep.subr.mxu0 0.0
    %3236 = vmatpush1.msra.mxu0 0.0
    %3237 = vmatprep.subr.mxu0 0.0
    %3238 = vmatpush1.msra.mxu0 0.0
    %3239 = vmatprep.subr.mxu0 0.0
    %3240 = vmatpush1.msra.mxu0 0.0
    %3241 = vmatprep.subr.mxu0 0.0
    %3242 = vmatpush1.msra.mxu0 0.0
    %3243 = vmatprep.subr.mxu0 0.0
    %3244 = vmatpush1.msra.mxu0 0.0
    %3245 = vmatprep.subr.mxu0 0.0
    %3246 = vmatpush1.msra.mxu0 0.0
    %3247 = vmatprep.subr.mxu0 0.0
    %3248 = vmatpush1.msra.mxu0 0.0
    %3249 = vmatprep.subr.mxu0 0.0
    %3250 = vmatpush1.msra.mxu0 0.0
    %3251 = vmatprep.subr.mxu0 0.0
    %3252 = vmatpush1.msra.mxu0 0.0
    %3253 = vmatprep.subr.mxu0 0.0
    %3254 = vmatpush1.msra.mxu0 0.0
    %3255 = vmatprep.subr.mxu0 0.0
    %3256 = vmatpush1.msra.mxu0 0.0
    %3257 = vmatprep.mubr.f32.mxu0 0.0
    %3258 = vmatmul.mubr.f32.gmra.mrb[0].mxu0 %v3191
    %v3259 = vpop.f32.mrb[0].mxu0
    %v3260 = vadd.f32 0.0, %v3259
    %v3261 = vpop.f32.mrb[0].mxu0
    %v3262 = vadd.f32 0.0, %v3261
    %3263 = vdwg.mxu0
    %3264 = vmatprep.subr.mxu0 %v1978
    %3265 = vmatpush1.msra.mxu0 %v1977
    %3266 = vmatprep.subr.mxu0 %v1982
    %3267 = vmatpush1.msra.mxu0 %v1981
    %3268 = vmatprep.subr.mxu0 %v1986
    %3269 = vmatpush1.msra.mxu0 %v1985
    %3270 = vmatprep.subr.mxu0 %v1990
    %3271 = vmatpush1.msra.mxu0 %v1989
    %3272 = vmatprep.subr.mxu0 %v1994
    %3273 = vmatpush1.msra.mxu0 %v1993
    %3274 = vmatprep.subr.mxu0 %v1998
    %3275 = vmatpush1.msra.mxu0 %v1997
    %3276 = vmatprep.subr.mxu0 %v2002
    %3277 = vmatpush1.msra.mxu0 %v2001
    %3278 = vmatprep.subr.mxu0 %v2006
    %3279 = vmatpush1.msra.mxu0 %v2005
    %3280 = vmatprep.subr.mxu0 %v2010
    %3281 = vmatpush1.msra.mxu0 %v2009
    %3282 = vmatprep.subr.mxu0 %v2014
    %3283 = vmatpush1.msra.mxu0 %v2013
    %3284 = vmatprep.subr.mxu0 %v2018
    %3285 = vmatpush1.msra.mxu0 %v2017
    %3286 = vmatprep.subr.mxu0 %v2022
    %3287 = vmatpush1.msra.mxu0 %v2021
    %3288 = vmatprep.subr.mxu0 %v2026
    %3289 = vmatpush1.msra.mxu0 %v2025
    %3290 = vmatprep.subr.mxu0 %v2030
    %3291 = vmatpush1.msra.mxu0 %v2029
    %3292 = vmatprep.subr.mxu0 %v2034
    %3293 = vmatpush1.msra.mxu0 %v2033
    %3294 = vmatprep.subr.mxu0 %v2038
    %3295 = vmatpush1.msra.mxu0 %v2037
    %3296 = vmatprep.subr.mxu0 0.0
    %3297 = vmatpush1.msra.mxu0 0.0
    %3298 = vmatprep.subr.mxu0 0.0
    %3299 = vmatpush1.msra.mxu0 0.0
    %3300 = vmatprep.subr.mxu0 0.0
    %3301 = vmatpush1.msra.mxu0 0.0
    %3302 = vmatprep.subr.mxu0 0.0
    %3303 = vmatpush1.msra.mxu0 0.0
    %3304 = vmatprep.subr.mxu0 0.0
    %3305 = vmatpush1.msra.mxu0 0.0
    %3306 = vmatprep.subr.mxu0 0.0
    %3307 = vmatpush1.msra.mxu0 0.0
    %3308 = vmatprep.subr.mxu0 0.0
    %3309 = vmatpush1.msra.mxu0 0.0
    %3310 = vmatprep.subr.mxu0 0.0
    %3311 = vmatpush1.msra.mxu0 0.0
    %3312 = vmatprep.subr.mxu0 0.0
    %3313 = vmatpush1.msra.mxu0 0.0
    %3314 = vmatprep.subr.mxu0 0.0
    %3315 = vmatpush1.msra.mxu0 0.0
    %3316 = vmatprep.subr.mxu0 0.0
    %3317 = vmatpush1.msra.mxu0 0.0
    %3318 = vmatprep.subr.mxu0 0.0
    %3319 = vmatpush1.msra.mxu0 0.0
    %3320 = vmatprep.subr.mxu0 0.0
    %3321 = vmatpush1.msra.mxu0 0.0
    %3322 = vmatprep.subr.mxu0 0.0
    %3323 = vmatpush1.msra.mxu0 0.0
    %3324 = vmatprep.subr.mxu0 0.0
    %3325 = vmatpush1.msra.mxu0 0.0
    %3326 = vmatprep.subr.mxu0 0.0
    %3327 = vmatpush1.msra.mxu0 0.0
    %3328 = vmatprep.mubr.f32.mxu0 0.0
    %3329 = vmatmul.mubr.f32.gmra.mrb[0].mxu0 %v3191
    %v3330 = vpop.f32.mrb[0].mxu0
    %v3331 = vadd.f32 0.0, %v3330
    %v3332 = vpop.f32.mrb[0].mxu0
    %v3333 = vadd.f32 0.0, %v3332
    %3334 = vdwg.mxu0
    %v3339 = vrot.slane %v3260, 6
    %v3340 = vrot.slane %v3262, 6
    %v3341 = vrot.slane %v3331, 6
    %v3342 = vrot.slane %v3333, 6
    %v3347 = vadd.f32 %v2200, %v3339
    %v3348 = vadd.f32 %v2202, %v3340
    %v3349 = vadd.f32 %v2277, %v3341
    %v3350 = vadd.f32 %v2279, %v3342
    %v3351 = vxor.u32 %v3347, 2147483648
    %v3352 = vmul.f32 %v3351, 1.442695
    %v3353 = vpow.pop %v3352
    %v3354 = vadd.f32 %v3353, 1.0
    %v3355 = vrcp.pop %v3354
    %v3356 = vmul.f32 1.0, %v3355
    %v3357 = vxor.u32 %v3348, 2147483648
    %v3358 = vmul.f32 %v3357, 1.442695
    %v3359 = vpow.pop %v3358
    %v3360 = vadd.f32 %v3359, 1.0
    %v3361 = vrcp.pop %v3360
    %v3362 = vmul.f32 1.0, %v3361
    %v3363 = vtanh.pop %v3349
    %v3364 = vxor.u32 %v3350, 2147483648
    %v3365 = vmul.f32 %v3364, 1.442695
    %v3366 = vpow.pop %v3365
    %v3367 = vadd.f32 %v3366, 1.0
    %v3368 = vrcp.pop %v3367
    %v3369 = vmul.f32 1.0, %v3368
    %v3371 = vrot.slane %v3189, 6
    %v3373 = vmul.f32 %v3362, %v3371
    %v3374 = vmul.f32 %v3356, %v3363
    %v3375 = vadd.f32 %v3373, %v3374
    %v3376 = vtanh.pop %v3375
    %v3377 = vmul.f32 %v3369, %v3376
    %3378 = vst [vmem:[#allocation2 + $0x8] sm:$0xc] %v3377
    %v3380 = vrot.slane %v3377, 2
    %3382 = vmatprep.subr.mxu0 %v1976
    %3383 = vmatpush1.msra.mxu0 %v1975
    %3384 = vmatprep.subr.mxu0 %v1980
    %3385 = vmatpush1.msra.mxu0 %v1979
    %3386 = vmatprep.subr.mxu0 %v1984
    %3387 = vmatpush1.msra.mxu0 %v1983
    %3388 = vmatprep.subr.mxu0 %v1988
    %3389 = vmatpush1.msra.mxu0 %v1987
    %3390 = vmatprep.subr.mxu0 %v1992
    %3391 = vmatpush1.msra.mxu0 %v1991
    %3392 = vmatprep.subr.mxu0 %v1996
    %3393 = vmatpush1.msra.mxu0 %v1995
    %3394 = vmatprep.subr.mxu0 %v2000
    %3395 = vmatpush1.msra.mxu0 %v1999
    %3396 = vmatprep.subr.mxu0 %v2004
    %3397 = vmatpush1.msra.mxu0 %v2003
    %3398 = vmatprep.subr.mxu0 %v2008
    %3399 = vmatpush1.msra.mxu0 %v2007
    %3400 = vmatprep.subr.mxu0 %v2012
    %3401 = vmatpush1.msra.mxu0 %v2011
    %3402 = vmatprep.subr.mxu0 %v2016
    %3403 = vmatpush1.msra.mxu0 %v2015
    %3404 = vmatprep.subr.mxu0 %v2020
    %3405 = vmatpush1.msra.mxu0 %v2019
    %3406 = vmatprep.subr.mxu0 %v2024
    %3407 = vmatpush1.msra.mxu0 %v2023
    %3408 = vmatprep.subr.mxu0 %v2028
    %3409 = vmatpush1.msra.mxu0 %v2027
    %3410 = vmatprep.subr.mxu0 %v2032
    %3411 = vmatpush1.msra.mxu0 %v2031
    %3412 = vmatprep.subr.mxu0 %v2036
    %3413 = vmatpush1.msra.mxu0 %v2035
    %3414 = vmatprep.subr.mxu0 0.0
    %3415 = vmatpush1.msra.mxu0 0.0
    %3416 = vmatprep.subr.mxu0 0.0
    %3417 = vmatpush1.msra.mxu0 0.0
    %3418 = vmatprep.subr.mxu0 0.0
    %3419 = vmatpush1.msra.mxu0 0.0
    %3420 = vmatprep.subr.mxu0 0.0
    %3421 = vmatpush1.msra.mxu0 0.0
    %3422 = vmatprep.subr.mxu0 0.0
    %3423 = vmatpush1.msra.mxu0 0.0
    %3424 = vmatprep.subr.mxu0 0.0
    %3425 = vmatpush1.msra.mxu0 0.0
    %3426 = vmatprep.subr.mxu0 0.0
    %3427 = vmatpush1.msra.mxu0 0.0
    %3428 = vmatprep.subr.mxu0 0.0
    %3429 = vmatpush1.msra.mxu0 0.0
    %3430 = vmatprep.subr.mxu0 0.0
    %3431 = vmatpush1.msra.mxu0 0.0
    %3432 = vmatprep.subr.mxu0 0.0
    %3433 = vmatpush1.msra.mxu0 0.0
    %3434 = vmatprep.subr.mxu0 0.0
    %3435 = vmatpush1.msra.mxu0 0.0
    %3436 = vmatprep.subr.mxu0 0.0
    %3437 = vmatpush1.msra.mxu0 0.0
    %3438 = vmatprep.subr.mxu0 0.0
    %3439 = vmatpush1.msra.mxu0 0.0
    %3440 = vmatprep.subr.mxu0 0.0
    %3441 = vmatpush1.msra.mxu0 0.0
    %3442 = vmatprep.subr.mxu0 0.0
    %3443 = vmatpush1.msra.mxu0 0.0
    %3444 = vmatprep.subr.mxu0 0.0
    %3445 = vmatpush1.msra.mxu0 0.0
    %3446 = vmatprep.mubr.f32.mxu0 0.0
    %3447 = vmatmul.mubr.f32.gmra.mrb[0].mxu0 %v3380
    %v3448 = vpop.f32.mrb[0].mxu0
    %v3449 = vadd.f32 0.0, %v3448
    %v3450 = vpop.f32.mrb[0].mxu0
    %v3451 = vadd.f32 0.0, %v3450
    %3452 = vdwg.mxu0
    %3453 = vmatprep.subr.mxu0 %v1978
    %3454 = vmatpush1.msra.mxu0 %v1977
    %3455 = vmatprep.subr.mxu0 %v1982
    %3456 = vmatpush1.msra.mxu0 %v1981
    %3457 = vmatprep.subr.mxu0 %v1986
    %3458 = vmatpush1.msra.mxu0 %v1985
    %3459 = vmatprep.subr.mxu0 %v1990
    %3460 = vmatpush1.msra.mxu0 %v1989
    %3461 = vmatprep.subr.mxu0 %v1994
    %3462 = vmatpush1.msra.mxu0 %v1993
    %3463 = vmatprep.subr.mxu0 %v1998
    %3464 = vmatpush1.msra.mxu0 %v1997
    %3465 = vmatprep.subr.mxu0 %v2002
    %3466 = vmatpush1.msra.mxu0 %v2001
    %3467 = vmatprep.subr.mxu0 %v2006
    %3468 = vmatpush1.msra.mxu0 %v2005
    %3469 = vmatprep.subr.mxu0 %v2010
    %3470 = vmatpush1.msra.mxu0 %v2009
    %3471 = vmatprep.subr.mxu0 %v2014
    %3472 = vmatpush1.msra.mxu0 %v2013
    %3473 = vmatprep.subr.mxu0 %v2018
    %3474 = vmatpush1.msra.mxu0 %v2017
    %3475 = vmatprep.subr.mxu0 %v2022
    %3476 = vmatpush1.msra.mxu0 %v2021
    %3477 = vmatprep.subr.mxu0 %v2026
    %3478 = vmatpush1.msra.mxu0 %v2025
    %3479 = vmatprep.subr.mxu0 %v2030
    %3480 = vmatpush1.msra.mxu0 %v2029
    %3481 = vmatprep.subr.mxu0 %v2034
    %3482 = vmatpush1.msra.mxu0 %v2033
    %3483 = vmatprep.subr.mxu0 %v2038
    %3484 = vmatpush1.msra.mxu0 %v2037
    %3485 = vmatprep.subr.mxu0 0.0
    %3486 = vmatpush1.msra.mxu0 0.0
    %3487 = vmatprep.subr.mxu0 0.0
    %3488 = vmatpush1.msra.mxu0 0.0
    %3489 = vmatprep.subr.mxu0 0.0
    %3490 = vmatpush1.msra.mxu0 0.0
    %3491 = vmatprep.subr.mxu0 0.0
    %3492 = vmatpush1.msra.mxu0 0.0
    %3493 = vmatprep.subr.mxu0 0.0
    %3494 = vmatpush1.msra.mxu0 0.0
    %3495 = vmatprep.subr.mxu0 0.0
    %3496 = vmatpush1.msra.mxu0 0.0
    %3497 = vmatprep.subr.mxu0 0.0
    %3498 = vmatpush1.msra.mxu0 0.0
    %3499 = vmatprep.subr.mxu0 0.0
    %3500 = vmatpush1.msra.mxu0 0.0
    %3501 = vmatprep.subr.mxu0 0.0
    %3502 = vmatpush1.msra.mxu0 0.0
    %3503 = vmatprep.subr.mxu0 0.0
    %3504 = vmatpush1.msra.mxu0 0.0
    %3505 = vmatprep.subr.mxu0 0.0
    %3506 = vmatpush1.msra.mxu0 0.0
    %3507 = vmatprep.subr.mxu0 0.0
    %3508 = vmatpush1.msra.mxu0 0.0
    %3509 = vmatprep.subr.mxu0 0.0
    %3510 = vmatpush1.msra.mxu0 0.0
    %3511 = vmatprep.subr.mxu0 0.0
    %3512 = vmatpush1.msra.mxu0 0.0
    %3513 = vmatprep.subr.mxu0 0.0
    %3514 = vmatpush1.msra.mxu0 0.0
    %3515 = vmatprep.subr.mxu0 0.0
    %3516 = vmatpush1.msra.mxu0 0.0
    %3517 = vmatprep.mubr.f32.mxu0 0.0
    %3518 = vmatmul.mubr.f32.gmra.mrb[0].mxu0 %v3380
    %v3519 = vpop.f32.mrb[0].mxu0
    %v3520 = vadd.f32 0.0, %v3519
    %v3521 = vpop.f32.mrb[0].mxu0
    %v3522 = vadd.f32 0.0, %v3521
    %3523 = vdwg.mxu0
    %v3528 = vrot.slane %v3449, 4
    %v3529 = vrot.slane %v3451, 4
    %v3530 = vrot.slane %v3520, 4
    %v3531 = vrot.slane %v3522, 4
    %v3536 = vadd.f32 %v2200, %v3528
    %v3537 = vadd.f32 %v2202, %v3529
    %v3538 = vadd.f32 %v2277, %v3530
    %v3539 = vadd.f32 %v2279, %v3531
    %v3540 = vxor.u32 %v3536, 2147483648
    %v3541 = vmul.f32 %v3540, 1.442695
    %v3542 = vpow.pop %v3541
    %v3543 = vadd.f32 %v3542, 1.0
    %v3544 = vrcp.pop %v3543
    %v3545 = vmul.f32 1.0, %v3544
    %v3546 = vxor.u32 %v3537, 2147483648
    %v3547 = vmul.f32 %v3546, 1.442695
    %v3548 = vpow.pop %v3547
    %v3549 = vadd.f32 %v3548, 1.0
    %v3550 = vrcp.pop %v3549
    %v3551 = vmul.f32 1.0, %v3550
    %v3552 = vtanh.pop %v3538
    %v3553 = vxor.u32 %v3539, 2147483648
    %v3554 = vmul.f32 %v3553, 1.442695
    %v3555 = vpow.pop %v3554
    %v3556 = vadd.f32 %v3555, 1.0
    %v3557 = vrcp.pop %v3556
    %v3558 = vmul.f32 1.0, %v3557
    %v3560 = vrot.slane %v3375, 6
    %v3562 = vmul.f32 %v3551, %v3560
    %v3563 = vmul.f32 %v3545, %v3552
    %v3564 = vadd.f32 %v3562, %v3563
    %v3565 = vtanh.pop %v3564
    %v3566 = vmul.f32 %v3558, %v3565
    %3567 = vst [vmem:[#allocation2 + $0x8] sm:$0x30] %v3566
    %v3569 = vrot.slane %v3566, 4
    %3571 = vmatprep.subr.mxu0 %v1976
    %3572 = vmatpush1.msra.mxu0 %v1975
    %3573 = vmatprep.subr.mxu0 %v1980
    %3574 = vmatpush1.msra.mxu0 %v1979
    %3575 = vmatprep.subr.mxu0 %v1984
    %3576 = vmatpush1.msra.mxu0 %v1983
    %3577 = vmatprep.subr.mxu0 %v1988
    %3578 = vmatpush1.msra.mxu0 %v1987
    %3579 = vmatprep.subr.mxu0 %v1992
    %3580 = vmatpush1.msra.mxu0 %v1991
    %3581 = vmatprep.subr.mxu0 %v1996
    %3582 = vmatpush1.msra.mxu0 %v1995
    %3583 = vmatprep.subr.mxu0 %v2000
    %3584 = vmatpush1.msra.mxu0 %v1999
    %3585 = vmatprep.subr.mxu0 %v2004
    %3586 = vmatpush1.msra.mxu0 %v2003
    %3587 = vmatprep.subr.mxu0 %v2008
    %3588 = vmatpush1.msra.mxu0 %v2007
    %3589 = vmatprep.subr.mxu0 %v2012
    %3590 = vmatpush1.msra.mxu0 %v2011
    %3591 = vmatprep.subr.mxu0 %v2016
    %3592 = vmatpush1.msra.mxu0 %v2015
    %3593 = vmatprep.subr.mxu0 %v2020
    %3594 = vmatpush1.msra.mxu0 %v2019
    %3595 = vmatprep.subr.mxu0 %v2024
    %3596 = vmatpush1.msra.mxu0 %v2023
    %3597 = vmatprep.subr.mxu0 %v2028
    %3598 = vmatpush1.msra.mxu0 %v2027
    %3599 = vmatprep.subr.mxu0 %v2032
    %3600 = vmatpush1.msra.mxu0 %v2031
    %3601 = vmatprep.subr.mxu0 %v2036
    %3602 = vmatpush1.msra.mxu0 %v2035
    %3603 = vmatprep.subr.mxu0 0.0
    %3604 = vmatpush1.msra.mxu0 0.0
    %3605 = vmatprep.subr.mxu0 0.0
    %3606 = vmatpush1.msra.mxu0 0.0
    %3607 = vmatprep.subr.mxu0 0.0
    %3608 = vmatpush1.msra.mxu0 0.0
    %3609 = vmatprep.subr.mxu0 0.0
    %3610 = vmatpush1.msra.mxu0 0.0
    %3611 = vmatprep.subr.mxu0 0.0
    %3612 = vmatpush1.msra.mxu0 0.0
    %3613 = vmatprep.subr.mxu0 0.0
    %3614 = vmatpush1.msra.mxu0 0.0
    %3615 = vmatprep.subr.mxu0 0.0
    %3616 = vmatpush1.msra.mxu0 0.0
    %3617 = vmatprep.subr.mxu0 0.0
    %3618 = vmatpush1.msra.mxu0 0.0
    %3619 = vmatprep.subr.mxu0 0.0
    %3620 = vmatpush1.msra.mxu0 0.0
    %3621 = vmatprep.subr.mxu0 0.0
    %3622 = vmatpush1.msra.mxu0 0.0
    %3623 = vmatprep.subr.mxu0 0.0
    %3624 = vmatpush1.msra.mxu0 0.0
    %3625 = vmatprep.subr.mxu0 0.0
    %3626 = vmatpush1.msra.mxu0 0.0
    %3627 = vmatprep.subr.mxu0 0.0
    %3628 = vmatpush1.msra.mxu0 0.0
    %3629 = vmatprep.subr.mxu0 0.0
    %3630 = vmatpush1.msra.mxu0 0.0
    %3631 = vmatprep.subr.mxu0 0.0
    %3632 = vmatpush1.msra.mxu0 0.0
    %3633 = vmatprep.subr.mxu0 0.0
    %3634 = vmatpush1.msra.mxu0 0.0
    %3635 = vmatprep.mubr.f32.mxu0 0.0
    %3636 = vmatmul.mubr.f32.gmra.mrb[0].mxu0 %v3569
    %v3637 = vpop.f32.mrb[0].mxu0
    %v3638 = vadd.f32 0.0, %v3637
    %v3639 = vpop.f32.mrb[0].mxu0
    %v3640 = vadd.f32 0.0, %v3639
    %3641 = vdwg.mxu0
    %3642 = vmatprep.subr.mxu0 %v1978
    %3643 = vmatpush1.msra.mxu0 %v1977
    %3644 = vmatprep.subr.mxu0 %v1982
    %3645 = vmatpush1.msra.mxu0 %v1981
    %3646 = vmatprep.subr.mxu0 %v1986
    %3647 = vmatpush1.msra.mxu0 %v1985
    %3648 = vmatprep.subr.mxu0 %v1990
    %3649 = vmatpush1.msra.mxu0 %v1989
    %3650 = vmatprep.subr.mxu0 %v1994
    %3651 = vmatpush1.msra.mxu0 %v1993
    %3652 = vmatprep.subr.mxu0 %v1998
    %3653 = vmatpush1.msra.mxu0 %v1997
    %3654 = vmatprep.subr.mxu0 %v2002
    %3655 = vmatpush1.msra.mxu0 %v2001
    %3656 = vmatprep.subr.mxu0 %v2006
    %3657 = vmatpush1.msra.mxu0 %v2005
    %3658 = vmatprep.subr.mxu0 %v2010
    %3659 = vmatpush1.msra.mxu0 %v2009
    %3660 = vmatprep.subr.mxu0 %v2014
    %3661 = vmatpush1.msra.mxu0 %v2013
    %3662 = vmatprep.subr.mxu0 %v2018
    %3663 = vmatpush1.msra.mxu0 %v2017
    %3664 = vmatprep.subr.mxu0 %v2022
    %3665 = vmatpush1.msra.mxu0 %v2021
    %3666 = vmatprep.subr.mxu0 %v2026
    %3667 = vmatpush1.msra.mxu0 %v2025
    %3668 = vmatprep.subr.mxu0 %v2030
    %3669 = vmatpush1.msra.mxu0 %v2029
    %3670 = vmatprep.subr.mxu0 %v2034
    %3671 = vmatpush1.msra.mxu0 %v2033
    %3672 = vmatprep.subr.mxu0 %v2038
    %3673 = vmatpush1.msra.mxu0 %v2037
    %3674 = vmatprep.subr.mxu0 0.0
    %3675 = vmatpush1.msra.mxu0 0.0
    %3676 = vmatprep.subr.mxu0 0.0
    %3677 = vmatpush1.msra.mxu0 0.0
    %3678 = vmatprep.subr.mxu0 0.0
    %3679 = vmatpush1.msra.mxu0 0.0
    %3680 = vmatprep.subr.mxu0 0.0
    %3681 = vmatpush1.msra.mxu0 0.0
    %3682 = vmatprep.subr.mxu0 0.0
    %3683 = vmatpush1.msra.mxu0 0.0
    %3684 = vmatprep.subr.mxu0 0.0
    %3685 = vmatpush1.msra.mxu0 0.0
    %3686 = vmatprep.subr.mxu0 0.0
    %3687 = vmatpush1.msra.mxu0 0.0
    %3688 = vmatprep.subr.mxu0 0.0
    %3689 = vmatpush1.msra.mxu0 0.0
    %3690 = vmatprep.subr.mxu0 0.0
    %3691 = vmatpush1.msra.mxu0 0.0
    %3692 = vmatprep.subr.mxu0 0.0
    %3693 = vmatpush1.msra.mxu0 0.0
    %3694 = vmatprep.subr.mxu0 0.0
    %3695 = vmatpush1.msra.mxu0 0.0
    %3696 = vmatprep.subr.mxu0 0.0
    %3697 = vmatpush1.msra.mxu0 0.0
    %3698 = vmatprep.subr.mxu0 0.0
    %3699 = vmatpush1.msra.mxu0 0.0
    %3700 = vmatprep.subr.mxu0 0.0
    %3701 = vmatpush1.msra.mxu0 0.0
    %3702 = vmatprep.subr.mxu0 0.0
    %3703 = vmatpush1.msra.mxu0 0.0
    %3704 = vmatprep.subr.mxu0 0.0
    %3705 = vmatpush1.msra.mxu0 0.0
    %3706 = vmatprep.mubr.f32.mxu0 0.0
    %3707 = vmatmul.mubr.f32.gmra.mrb[0].mxu0 %v3569
    %v3708 = vpop.f32.mrb[0].mxu0
    %v3709 = vadd.f32 0.0, %v3708
    %v3710 = vpop.f32.mrb[0].mxu0
    %v3711 = vadd.f32 0.0, %v3710
    %3712 = vdwg.mxu0
    %v3717 = vrot.slane %v3638, 2
    %v3718 = vrot.slane %v3640, 2
    %v3719 = vrot.slane %v3709, 2
    %v3720 = vrot.slane %v3711, 2
    %v3725 = vadd.f32 %v2200, %v3717
    %v3726 = vadd.f32 %v2202, %v3718
    %v3727 = vadd.f32 %v2277, %v3719
    %v3728 = vadd.f32 %v2279, %v3720
    %v3729 = vxor.u32 %v3725, 2147483648
    %v3730 = vmul.f32 %v3729, 1.442695
    %v3731 = vpow.pop %v3730
    %v3732 = vadd.f32 %v3731, 1.0
    %v3733 = vrcp.pop %v3732
    %v3734 = vmul.f32 1.0, %v3733
    %v3735 = vxor.u32 %v3726, 2147483648
    %v3736 = vmul.f32 %v3735, 1.442695
    %v3737 = vpow.pop %v3736
    %v3738 = vadd.f32 %v3737, 1.0
    %v3739 = vrcp.pop %v3738
    %v3740 = vmul.f32 1.0, %v3739
    %v3741 = vtanh.pop %v3727
    %v3742 = vxor.u32 %v3728, 2147483648
    %v3743 = vmul.f32 %v3742, 1.442695
    %v3744 = vpow.pop %v3743
    %v3745 = vadd.f32 %v3744, 1.0
    %v3746 = vrcp.pop %v3745
    %v3747 = vmul.f32 1.0, %v3746
    %v3749 = vrot.slane %v3564, 6
    %v3751 = vmul.f32 %v3740, %v3749
    %v3752 = vmul.f32 %v3734, %v3741
    %v3753 = vadd.f32 %v3751, %v3752
    %v3754 = vtanh.pop %v3753
    %v3755 = vmul.f32 %v3747, %v3754
    %3756 = vst [vmem:[#allocation2 + $0x8] sm:$0xc0] %v3755
    %v3757 = vld [vmem:[#allocation12] sm:$0xff]
    %v3758 = vld [vmem:[#allocation12 + $0x8] sm:$0xff]
    %v3759 = vld [vmem:[#allocation12 + $0x10] sm:$0xff]
    %v3760 = vld [vmem:[#allocation12 + $0x18] sm:$0xff]
    %v3761 = vld [vmem:[#allocation12 + $0x20] sm:$0xff]
    %v3762 = vld [vmem:[#allocation12 + $0x28] sm:$0xff]
    %v3763 = vld [vmem:[#allocation12 + $0x30] sm:$0xff]
    %v3764 = vld [vmem:[#allocation12 + $0x38] sm:$0xff]
    %v3765 = vld [vmem:[#allocation12 + $0x40] sm:$0xff]
    %v3766 = vld [vmem:[#allocation12 + $0x48] sm:$0xff]
    %v3767 = vld [vmem:[#allocation12 + $0x50] sm:$0xff]
    %v3768 = vld [vmem:[#allocation12 + $0x58] sm:$0xff]
    %v3769 = vld [vmem:[#allocation12 + $0x60] sm:$0xff]
    %v3770 = vld [vmem:[#allocation12 + $0x68] sm:$0xff]
    %v3771 = vld [vmem:[#allocation12 + $0x70] sm:$0xff]
    %v3772 = vld [vmem:[#allocation12 + $0x78] sm:$0xff]
    %v3773 = vld [vmem:[#allocation12 + $0x80] sm:$0xff]
    %v3774 = vld [vmem:[#allocation12 + $0x88] sm:$0xff]
    %v3775 = vld [vmem:[#allocation12 + $0x90] sm:$0xff]
    %v3776 = vld [vmem:[#allocation12 + $0x98] sm:$0xff]
    %v3777 = vld [vmem:[#allocation12 + $0xa0] sm:$0xff]
    %v3778 = vld [vmem:[#allocation12 + $0xa8] sm:$0xff]
    %v3779 = vld [vmem:[#allocation12 + $0xb0] sm:$0xff]
    %v3780 = vld [vmem:[#allocation12 + $0xb8] sm:$0xff]
    %v3781 = vld [vmem:[#allocation12 + $0xc0] sm:$0xff]
    %v3782 = vld [vmem:[#allocation12 + $0xc8] sm:$0xff]
    %v3783 = vld [vmem:[#allocation12 + $0xd0] sm:$0xff]
    %v3784 = vld [vmem:[#allocation12 + $0xd8] sm:$0xff]
    %v3785 = vld [vmem:[#allocation12 + $0xe0] sm:$0xff]
    %v3786 = vld [vmem:[#allocation12 + $0xe8] sm:$0xff]
    %v3787 = vld [vmem:[#allocation12 + $0xf0] sm:$0xff]
    %v3788 = vld [vmem:[#allocation12 + $0xf8] sm:$0xff]
    %v3789 = vld [vmem:[#allocation12 + $0x100] sm:$0xff]
    %v3790 = vld [vmem:[#allocation12 + $0x108] sm:$0xff]
    %v3791 = vld [vmem:[#allocation12 + $0x110] sm:$0xff]
    %v3792 = vld [vmem:[#allocation12 + $0x118] sm:$0xff]
    %v3793 = vld [vmem:[#allocation12 + $0x120] sm:$0xff]
    %v3794 = vld [vmem:[#allocation12 + $0x128] sm:$0xff]
    %v3795 = vld [vmem:[#allocation12 + $0x130] sm:$0xff]
    %v3796 = vld [vmem:[#allocation12 + $0x138] sm:$0xff]
    %v3797 = vld [vmem:[#allocation12 + $0x140] sm:$0xff]
    %v3798 = vld [vmem:[#allocation12 + $0x148] sm:$0xff]
    %v3799 = vld [vmem:[#allocation12 + $0x150] sm:$0xff]
    %v3800 = vld [vmem:[#allocation12 + $0x158] sm:$0xff]
    %v3801 = vld [vmem:[#allocation12 + $0x160] sm:$0xff]
    %v3802 = vld [vmem:[#allocation12 + $0x168] sm:$0xff]
    %v3803 = vld [vmem:[#allocation12 + $0x170] sm:$0xff]
    %v3804 = vld [vmem:[#allocation12 + $0x178] sm:$0xff]
    %v3805 = vld [vmem:[#allocation12 + $0x180] sm:$0xff]
    %v3806 = vld [vmem:[#allocation12 + $0x188] sm:$0xff]
    %v3807 = vld [vmem:[#allocation12 + $0x190] sm:$0xff]
    %v3808 = vld [vmem:[#allocation12 + $0x198] sm:$0xff]
    %v3809 = vld [vmem:[#allocation12 + $0x1a0] sm:$0xff]
    %v3810 = vld [vmem:[#allocation12 + $0x1a8] sm:$0xff]
    %v3811 = vld [vmem:[#allocation12 + $0x1b0] sm:$0xff]
    %v3812 = vld [vmem:[#allocation12 + $0x1b8] sm:$0xff]
    %v3813 = vld [vmem:[#allocation12 + $0x1c0] sm:$0xff]
    %v3814 = vld [vmem:[#allocation12 + $0x1c8] sm:$0xff]
    %v3815 = vld [vmem:[#allocation12 + $0x1d0] sm:$0xff]
    %v3816 = vld [vmem:[#allocation12 + $0x1d8] sm:$0xff]
    %v3817 = vld [vmem:[#allocation12 + $0x1e0] sm:$0xff]
    %v3818 = vld [vmem:[#allocation12 + $0x1e8] sm:$0xff]
    %v3819 = vld [vmem:[#allocation12 + $0x1f0] sm:$0xff]
    %v3820 = vld [vmem:[#allocation12 + $0x1f8] sm:$0xff]
    %v3821 = vld [vmem:[#allocation2] sm:$0xff]
    %v3822 = vld [vmem:[#allocation2 + $0x8] sm:$0xff]
    %v3823 = vld [vmem:[#allocation11] sm:$0xff]
    %v3824 = vld [vmem:[#allocation11 + $0x8] sm:$0xff]
    %v3825 = vld [vmem:[#allocation11 + $0x10] sm:$0xff]
    %v3826 = vld [vmem:[#allocation11 + $0x18] sm:$0xff]
    %v3827 = vld [vmem:[#allocation11 + $0x20] sm:$0xff]
    %v3828 = vld [vmem:[#allocation11 + $0x28] sm:$0xff]
    %v3829 = vld [vmem:[#allocation11 + $0x30] sm:$0xff]
    %v3830 = vld [vmem:[#allocation11 + $0x38] sm:$0xff]
    %v3831 = vld [vmem:[#allocation11 + $0x40] sm:$0xff]
    %v3832 = vld [vmem:[#allocation11 + $0x48] sm:$0xff]
    %v3833 = vld [vmem:[#allocation11 + $0x50] sm:$0xff]
    %v3834 = vld [vmem:[#allocation11 + $0x58] sm:$0xff]
    %v3835 = vld [vmem:[#allocation11 + $0x60] sm:$0xff]
    %v3836 = vld [vmem:[#allocation11 + $0x68] sm:$0xff]
    %v3837 = vld [vmem:[#allocation11 + $0x70] sm:$0xff]
    %v3838 = vld [vmem:[#allocation11 + $0x78] sm:$0xff]
    %v3839 = vld [vmem:[#allocation11 + $0x80] sm:$0xff]
    %v3840 = vld [vmem:[#allocation11 + $0x88] sm:$0xff]
    %v3841 = vld [vmem:[#allocation11 + $0x90] sm:$0xff]
    %v3842 = vld [vmem:[#allocation11 + $0x98] sm:$0xff]
    %v3843 = vld [vmem:[#allocation11 + $0xa0] sm:$0xff]
    %v3844 = vld [vmem:[#allocation11 + $0xa8] sm:$0xff]
    %v3845 = vld [vmem:[#allocation11 + $0xb0] sm:$0xff]
    %v3846 = vld [vmem:[#allocation11 + $0xb8] sm:$0xff]
    %v3847 = vld [vmem:[#allocation11 + $0xc0] sm:$0xff]
    %v3848 = vld [vmem:[#allocation11 + $0xc8] sm:$0xff]
    %v3849 = vld [vmem:[#allocation11 + $0xd0] sm:$0xff]
    %v3850 = vld [vmem:[#allocation11 + $0xd8] sm:$0xff]
    %v3851 = vld [vmem:[#allocation11 + $0xe0] sm:$0xff]
    %v3852 = vld [vmem:[#allocation11 + $0xe8] sm:$0xff]
    %v3853 = vld [vmem:[#allocation11 + $0xf0] sm:$0xff]
    %v3854 = vld [vmem:[#allocation11 + $0xf8] sm:$0xff]
    %v3855 = vld [vmem:[#allocation11 + $0x100] sm:$0xff]
    %v3856 = vld [vmem:[#allocation11 + $0x108] sm:$0xff]
    %v3857 = vld [vmem:[#allocation11 + $0x110] sm:$0xff]
    %v3858 = vld [vmem:[#allocation11 + $0x118] sm:$0xff]
    %v3859 = vld [vmem:[#allocation11 + $0x120] sm:$0xff]
    %v3860 = vld [vmem:[#allocation11 + $0x128] sm:$0xff]
    %v3861 = vld [vmem:[#allocation11 + $0x130] sm:$0xff]
    %v3862 = vld [vmem:[#allocation11 + $0x138] sm:$0xff]
    %v3863 = vld [vmem:[#allocation11 + $0x140] sm:$0xff]
    %v3864 = vld [vmem:[#allocation11 + $0x148] sm:$0xff]
    %v3865 = vld [vmem:[#allocation11 + $0x150] sm:$0xff]
    %v3866 = vld [vmem:[#allocation11 + $0x158] sm:$0xff]
    %v3867 = vld [vmem:[#allocation11 + $0x160] sm:$0xff]
    %v3868 = vld [vmem:[#allocation11 + $0x168] sm:$0xff]
    %v3869 = vld [vmem:[#allocation11 + $0x170] sm:$0xff]
    %v3870 = vld [vmem:[#allocation11 + $0x178] sm:$0xff]
    %v3871 = vld [vmem:[#allocation11 + $0x180] sm:$0xff]
    %v3872 = vld [vmem:[#allocation11 + $0x188] sm:$0xff]
    %v3873 = vld [vmem:[#allocation11 + $0x190] sm:$0xff]
    %v3874 = vld [vmem:[#allocation11 + $0x198] sm:$0xff]
    %v3875 = vld [vmem:[#allocation11 + $0x1a0] sm:$0xff]
    %v3876 = vld [vmem:[#allocation11 + $0x1a8] sm:$0xff]
    %v3877 = vld [vmem:[#allocation11 + $0x1b0] sm:$0xff]
    %v3878 = vld [vmem:[#allocation11 + $0x1b8] sm:$0xff]
    %v3879 = vld [vmem:[#allocation11 + $0x1c0] sm:$0xff]
    %v3880 = vld [vmem:[#allocation11 + $0x1c8] sm:$0xff]
    %v3881 = vld [vmem:[#allocation11 + $0x1d0] sm:$0xff]
    %v3882 = vld [vmem:[#allocation11 + $0x1d8] sm:$0xff]
    %v3883 = vld [vmem:[#allocation11 + $0x1e0] sm:$0xff]
    %v3884 = vld [vmem:[#allocation11 + $0x1e8] sm:$0xff]
    %v3885 = vld [vmem:[#allocation11 + $0x1f0] sm:$0xff]
    %v3886 = vld [vmem:[#allocation11 + $0x1f8] sm:$0xff]
    %v3887 = vld [vmem:[%s9] sm:$0xf]
    %v3889 = vlaneseq
    %v3890 = vshrl.u32 %v3889, 7
    %v3891 = vsub.s32 0, %v3890
    %v3892 = vrot.slane %v3887, %v3891
    %v3893 = vlaneseq
    %v3894 = vshrl.u32 %v3893, 7
    %v3895 = vsub.s32 1, %v3894
    %v3896 = vrot.slane %v3887, %v3895
    %v3897 = vlaneseq
    %v3898 = vshrl.u32 %v3897, 7
    %v3899 = vsub.s32 2, %v3898
    %v3900 = vrot.slane %v3887, %v3899
    %v3901 = vlaneseq
    %v3902 = vshrl.u32 %v3901, 7
    %v3903 = vsub.s32 3, %v3902
    %v3904 = vrot.slane %v3887, %v3903
    %3909 = vmatprep.subr.mxu0 %v3824
    %3910 = vmatpush1.msra.mxu0 %v3823
    %3911 = vmatprep.subr.mxu0 %v3828
    %3912 = vmatpush1.msra.mxu0 %v3827
    %3913 = vmatprep.subr.mxu0 %v3832
    %3914 = vmatpush1.msra.mxu0 %v3831
    %3915 = vmatprep.subr.mxu0 %v3836
    %3916 = vmatpush1.msra.mxu0 %v3835
    %3917 = vmatprep.subr.mxu0 %v3840
    %3918 = vmatpush1.msra.mxu0 %v3839
    %3919 = vmatprep.subr.mxu0 %v3844
    %3920 = vmatpush1.msra.mxu0 %v3843
    %3921 = vmatprep.subr.mxu0 %v3848
    %3922 = vmatpush1.msra.mxu0 %v3847
    %3923 = vmatprep.subr.mxu0 %v3852
    %3924 = vmatpush1.msra.mxu0 %v3851
    %3925 = vmatprep.subr.mxu0 %v3856
    %3926 = vmatpush1.msra.mxu0 %v3855
    %3927 = vmatprep.subr.mxu0 %v3860
    %3928 = vmatpush1.msra.mxu0 %v3859
    %3929 = vmatprep.subr.mxu0 %v3864
    %3930 = vmatpush1.msra.mxu0 %v3863
    %3931 = vmatprep.subr.mxu0 %v3868
    %3932 = vmatpush1.msra.mxu0 %v3867
    %3933 = vmatprep.subr.mxu0 %v3872
    %3934 = vmatpush1.msra.mxu0 %v3871
    %3935 = vmatprep.subr.mxu0 %v3876
    %3936 = vmatpush1.msra.mxu0 %v3875
    %3937 = vmatprep.subr.mxu0 %v3880
    %3938 = vmatpush1.msra.mxu0 %v3879
    %3939 = vmatprep.subr.mxu0 %v3884
    %3940 = vmatpush1.msra.mxu0 %v3883
    %3941 = vmatprep.subr.mxu0 0.0
    %3942 = vmatpush1.msra.mxu0 0.0
    %3943 = vmatprep.subr.mxu0 0.0
    %3944 = vmatpush1.msra.mxu0 0.0
    %3945 = vmatprep.subr.mxu0 0.0
    %3946 = vmatpush1.msra.mxu0 0.0
    %3947 = vmatprep.subr.mxu0 0.0
    %3948 = vmatpush1.msra.mxu0 0.0
    %3949 = vmatprep.subr.mxu0 0.0
    %3950 = vmatpush1.msra.mxu0 0.0
    %3951 = vmatprep.subr.mxu0 0.0
    %3952 = vmatpush1.msra.mxu0 0.0
    %3953 = vmatprep.subr.mxu0 0.0
    %3954 = vmatpush1.msra.mxu0 0.0
    %3955 = vmatprep.subr.mxu0 0.0
    %3956 = vmatpush1.msra.mxu0 0.0
    %3957 = vmatprep.subr.mxu0 0.0
    %3958 = vmatpush1.msra.mxu0 0.0
    %3959 = vmatprep.subr.mxu0 0.0
    %3960 = vmatpush1.msra.mxu0 0.0
    %3961 = vmatprep.subr.mxu0 0.0
    %3962 = vmatpush1.msra.mxu0 0.0
    %3963 = vmatprep.subr.mxu0 0.0
    %3964 = vmatpush1.msra.mxu0 0.0
    %3965 = vmatprep.subr.mxu0 0.0
    %3966 = vmatpush1.msra.mxu0 0.0
    %3967 = vmatprep.subr.mxu0 0.0
    %3968 = vmatpush1.msra.mxu0 0.0
    %3969 = vmatprep.subr.mxu0 0.0
    %3970 = vmatpush1.msra.mxu0 0.0
    %3971 = vmatprep.subr.mxu0 0.0
    %3972 = vmatpush1.msra.mxu0 0.0
    %3973 = vmatprep.mubr.f32.mxu0 0.0
    %3974 = vmatmul.mubr.f32.gmra.mrb[0].mxu0 %v3821
    %v3975 = vpop.f32.mrb[0].mxu0
    %v3976 = vadd.f32 %v3892, %v3975
    %v3977 = vpop.f32.mrb[0].mxu0
    %v3978 = vadd.f32 %v3896, %v3977
    %3979 = vmatprep.mubr.f32.mxu0 0.0
    %3980 = vmatmul.mubr.f32.gmra.mrb[0].mxu0 %v3822
    %v3981 = vpop.f32.mrb[0].mxu0
    %v3982 = vadd.f32 %v3892, %v3981
    %v3983 = vpop.f32.mrb[0].mxu0
    %v3984 = vadd.f32 %v3896, %v3983
    %3985 = vdwg.mxu0
    %3986 = vmatprep.subr.mxu0 %v3826
    %3987 = vmatpush1.msra.mxu0 %v3825
    %3988 = vmatprep.subr.mxu0 %v3830
    %3989 = vmatpush1.msra.mxu0 %v3829
    %3990 = vmatprep.subr.mxu0 %v3834
    %3991 = vmatpush1.msra.mxu0 %v3833
    %3992 = vmatprep.subr.mxu0 %v3838
    %3993 = vmatpush1.msra.mxu0 %v3837
    %3994 = vmatprep.subr.mxu0 %v3842
    %3995 = vmatpush1.msra.mxu0 %v3841
    %3996 = vmatprep.subr.mxu0 %v3846
    %3997 = vmatpush1.msra.mxu0 %v3845
    %3998 = vmatprep.subr.mxu0 %v3850
    %3999 = vmatpush1.msra.mxu0 %v3849
    %4000 = vmatprep.subr.mxu0 %v3854
    %4001 = vmatpush1.msra.mxu0 %v3853
    %4002 = vmatprep.subr.mxu0 %v3858
    %4003 = vmatpush1.msra.mxu0 %v3857
    %4004 = vmatprep.subr.mxu0 %v3862
    %4005 = vmatpush1.msra.mxu0 %v3861
    %4006 = vmatprep.subr.mxu0 %v3866
    %4007 = vmatpush1.msra.mxu0 %v3865
    %4008 = vmatprep.subr.mxu0 %v3870
    %4009 = vmatpush1.msra.mxu0 %v3869
    %4010 = vmatprep.subr.mxu0 %v3874
    %4011 = vmatpush1.msra.mxu0 %v3873
    %4012 = vmatprep.subr.mxu0 %v3878
    %4013 = vmatpush1.msra.mxu0 %v3877
    %4014 = vmatprep.subr.mxu0 %v3882
    %4015 = vmatpush1.msra.mxu0 %v3881
    %4016 = vmatprep.subr.mxu0 %v3886
    %4017 = vmatpush1.msra.mxu0 %v3885
    %4018 = vmatprep.subr.mxu0 0.0
    %4019 = vmatpush1.msra.mxu0 0.0
    %4020 = vmatprep.subr.mxu0 0.0
    %4021 = vmatpush1.msra.mxu0 0.0
    %4022 = vmatprep.subr.mxu0 0.0
    %4023 = vmatpush1.msra.mxu0 0.0
    %4024 = vmatprep.subr.mxu0 0.0
    %4025 = vmatpush1.msra.mxu0 0.0
    %4026 = vmatprep.subr.mxu0 0.0
    %4027 = vmatpush1.msra.mxu0 0.0
    %4028 = vmatprep.subr.mxu0 0.0
    %4029 = vmatpush1.msra.mxu0 0.0
    %4030 = vmatprep.subr.mxu0 0.0
    %4031 = vmatpush1.msra.mxu0 0.0
    %4032 = vmatprep.subr.mxu0 0.0
    %4033 = vmatpush1.msra.mxu0 0.0
    %4034 = vmatprep.subr.mxu0 0.0
    %4035 = vmatpush1.msra.mxu0 0.0
    %4036 = vmatprep.subr.mxu0 0.0
    %4037 = vmatpush1.msra.mxu0 0.0
    %4038 = vmatprep.subr.mxu0 0.0
    %4039 = vmatpush1.msra.mxu0 0.0
    %4040 = vmatprep.subr.mxu0 0.0
    %4041 = vmatpush1.msra.mxu0 0.0
    %4042 = vmatprep.subr.mxu0 0.0
    %4043 = vmatpush1.msra.mxu0 0.0
    %4044 = vmatprep.subr.mxu0 0.0
    %4045 = vmatpush1.msra.mxu0 0.0
    %4046 = vmatprep.subr.mxu0 0.0
    %4047 = vmatpush1.msra.mxu0 0.0
    %4048 = vmatprep.subr.mxu0 0.0
    %4049 = vmatpush1.msra.mxu0 0.0
    %4050 = vmatprep.mubr.f32.mxu0 0.0
    %4051 = vmatmul.mubr.f32.gmra.mrb[0].mxu0 %v3821
    %v4052 = vpop.f32.mrb[0].mxu0
    %v4053 = vadd.f32 %v3900, %v4052
    %v4054 = vpop.f32.mrb[0].mxu0
    %v4055 = vadd.f32 %v3904, %v4054
    %4056 = vmatprep.mubr.f32.mxu0 0.0
    %4057 = vmatmul.mubr.f32.gmra.mrb[0].mxu0 %v3822
    %v4058 = vpop.f32.mrb[0].mxu0
    %v4059 = vadd.f32 %v3900, %v4058
    %v4060 = vpop.f32.mrb[0].mxu0
    %v4061 = vadd.f32 %v3904, %v4060
    %4062 = vdwg.mxu0
    %4063 = vmatprep.subr.mxu0 %v3758
    %4064 = vmatpush1.msra.mxu0 %v3757
    %4065 = vmatprep.subr.mxu0 %v3762
    %4066 = vmatpush1.msra.mxu0 %v3761
    %4067 = vmatprep.subr.mxu0 %v3766
    %4068 = vmatpush1.msra.mxu0 %v3765
    %4069 = vmatprep.subr.mxu0 %v3770
    %4070 = vmatpush1.msra.mxu0 %v3769
    %4071 = vmatprep.subr.mxu0 %v3774
    %4072 = vmatpush1.msra.mxu0 %v3773
    %4073 = vmatprep.subr.mxu0 %v3778
    %4074 = vmatpush1.msra.mxu0 %v3777
    %4075 = vmatprep.subr.mxu0 %v3782
    %4076 = vmatpush1.msra.mxu0 %v3781
    %4077 = vmatprep.subr.mxu0 %v3786
    %4078 = vmatpush1.msra.mxu0 %v3785
    %4079 = vmatprep.subr.mxu0 %v3790
    %4080 = vmatpush1.msra.mxu0 %v3789
    %4081 = vmatprep.subr.mxu0 %v3794
    %4082 = vmatpush1.msra.mxu0 %v3793
    %4083 = vmatprep.subr.mxu0 %v3798
    %4084 = vmatpush1.msra.mxu0 %v3797
    %4085 = vmatprep.subr.mxu0 %v3802
    %4086 = vmatpush1.msra.mxu0 %v3801
    %4087 = vmatprep.subr.mxu0 %v3806
    %4088 = vmatpush1.msra.mxu0 %v3805
    %4089 = vmatprep.subr.mxu0 %v3810
    %4090 = vmatpush1.msra.mxu0 %v3809
    %4091 = vmatprep.subr.mxu0 %v3814
    %4092 = vmatpush1.msra.mxu0 %v3813
    %4093 = vmatprep.subr.mxu0 %v3818
    %4094 = vmatpush1.msra.mxu0 %v3817
    %4095 = vmatprep.subr.mxu0 0.0
    %4096 = vmatpush1.msra.mxu0 0.0
    %4097 = vmatprep.subr.mxu0 0.0
    %4098 = vmatpush1.msra.mxu0 0.0
    %4099 = vmatprep.subr.mxu0 0.0
    %4100 = vmatpush1.msra.mxu0 0.0
    %4101 = vmatprep.subr.mxu0 0.0
    %4102 = vmatpush1.msra.mxu0 0.0
    %4103 = vmatprep.subr.mxu0 0.0
    %4104 = vmatpush1.msra.mxu0 0.0
    %4105 = vmatprep.subr.mxu0 0.0
    %4106 = vmatpush1.msra.mxu0 0.0
    %4107 = vmatprep.subr.mxu0 0.0
    %4108 = vmatpush1.msra.mxu0 0.0
    %4109 = vmatprep.subr.mxu0 0.0
    %4110 = vmatpush1.msra.mxu0 0.0
    %4111 = vmatprep.subr.mxu0 0.0
    %4112 = vmatpush1.msra.mxu0 0.0
    %4113 = vmatprep.subr.mxu0 0.0
    %4114 = vmatpush1.msra.mxu0 0.0
    %4115 = vmatprep.subr.mxu0 0.0
    %4116 = vmatpush1.msra.mxu0 0.0
    %4117 = vmatprep.subr.mxu0 0.0
    %4118 = vmatpush1.msra.mxu0 0.0
    %4119 = vmatprep.subr.mxu0 0.0
    %4120 = vmatpush1.msra.mxu0 0.0
    %4121 = vmatprep.subr.mxu0 0.0
    %4122 = vmatpush1.msra.mxu0 0.0
    %4123 = vmatprep.subr.mxu0 0.0
    %4124 = vmatpush1.msra.mxu0 0.0
    %4125 = vmatprep.subr.mxu0 0.0
    %4126 = vmatpush1.msra.mxu0 0.0
    %4127 = vmatprep.mubr.f32.mxu0 0.0
    %4128 = vmatmul.mubr.f32.gmra.mrb[0].mxu0 0.0
    %v4129 = vpop.f32.mrb[0].mxu0
    %v4130 = vadd.f32 0.0, %v4129
    %v4131 = vpop.f32.mrb[0].mxu0
    %v4132 = vadd.f32 0.0, %v4131
    %4133 = vdwg.mxu0
    %4134 = vmatprep.subr.mxu0 %v3760
    %4135 = vmatpush1.msra.mxu0 %v3759
    %4136 = vmatprep.subr.mxu0 %v3764
    %4137 = vmatpush1.msra.mxu0 %v3763
    %4138 = vmatprep.subr.mxu0 %v3768
    %4139 = vmatpush1.msra.mxu0 %v3767
    %4140 = vmatprep.subr.mxu0 %v3772
    %4141 = vmatpush1.msra.mxu0 %v3771
    %4142 = vmatprep.subr.mxu0 %v3776
    %4143 = vmatpush1.msra.mxu0 %v3775
    %4144 = vmatprep.subr.mxu0 %v3780
    %4145 = vmatpush1.msra.mxu0 %v3779
    %4146 = vmatprep.subr.mxu0 %v3784
    %4147 = vmatpush1.msra.mxu0 %v3783
    %4148 = vmatprep.subr.mxu0 %v3788
    %4149 = vmatpush1.msra.mxu0 %v3787
    %4150 = vmatprep.subr.mxu0 %v3792
    %4151 = vmatpush1.msra.mxu0 %v3791
    %4152 = vmatprep.subr.mxu0 %v3796
    %4153 = vmatpush1.msra.mxu0 %v3795
    %4154 = vmatprep.subr.mxu0 %v3800
    %4155 = vmatpush1.msra.mxu0 %v3799
    %4156 = vmatprep.subr.mxu0 %v3804
    %4157 = vmatpush1.msra.mxu0 %v3803
    %4158 = vmatprep.subr.mxu0 %v3808
    %4159 = vmatpush1.msra.mxu0 %v3807
    %4160 = vmatprep.subr.mxu0 %v3812
    %4161 = vmatpush1.msra.mxu0 %v3811
    %4162 = vmatprep.subr.mxu0 %v3816
    %4163 = vmatpush1.msra.mxu0 %v3815
    %4164 = vmatprep.subr.mxu0 %v3820
    %4165 = vmatpush1.msra.mxu0 %v3819
    %4166 = vmatprep.subr.mxu0 0.0
    %4167 = vmatpush1.msra.mxu0 0.0
    %4168 = vmatprep.subr.mxu0 0.0
    %4169 = vmatpush1.msra.mxu0 0.0
    %4170 = vmatprep.subr.mxu0 0.0
    %4171 = vmatpush1.msra.mxu0 0.0
    %4172 = vmatprep.subr.mxu0 0.0
    %4173 = vmatpush1.msra.mxu0 0.0
    %4174 = vmatprep.subr.mxu0 0.0
    %4175 = vmatpush1.msra.mxu0 0.0
    %4176 = vmatprep.subr.mxu0 0.0
    %4177 = vmatpush1.msra.mxu0 0.0
    %4178 = vmatprep.subr.mxu0 0.0
    %4179 = vmatpush1.msra.mxu0 0.0
    %4180 = vmatprep.subr.mxu0 0.0
    %4181 = vmatpush1.msra.mxu0 0.0
    %4182 = vmatprep.subr.mxu0 0.0
    %4183 = vmatpush1.msra.mxu0 0.0
    %4184 = vmatprep.subr.mxu0 0.0
    %4185 = vmatpush1.msra.mxu0 0.0
    %4186 = vmatprep.subr.mxu0 0.0
    %4187 = vmatpush1.msra.mxu0 0.0
    %4188 = vmatprep.subr.mxu0 0.0
    %4189 = vmatpush1.msra.mxu0 0.0
    %4190 = vmatprep.subr.mxu0 0.0
    %4191 = vmatpush1.msra.mxu0 0.0
    %4192 = vmatprep.subr.mxu0 0.0
    %4193 = vmatpush1.msra.mxu0 0.0
    %4194 = vmatprep.subr.mxu0 0.0
    %4195 = vmatpush1.msra.mxu0 0.0
    %4196 = vmatprep.subr.mxu0 0.0
    %4197 = vmatpush1.msra.mxu0 0.0
    %4198 = vmatprep.mubr.f32.mxu0 0.0
    %4199 = vmatmul.mubr.f32.gmra.mrb[0].mxu0 0.0
    %v4200 = vpop.f32.mrb[0].mxu0
    %v4201 = vadd.f32 0.0, %v4200
    %v4202 = vpop.f32.mrb[0].mxu0
    %v4203 = vadd.f32 0.0, %v4202
    %4204 = vdwg.mxu0
    %v4205 = vadd.f32 %v3976, %v4130
    %v4206 = vadd.f32 %v3978, %v4132
    %v4207 = vadd.f32 %v4053, %v4201
    %v4208 = vadd.f32 %v4055, %v4203
    %v4209 = vxor.u32 %v4205, 2147483648
    %v4210 = vmul.f32 %v4209, 1.442695
    %v4211 = vpow.pop %v4210
    %v4212 = vadd.f32 %v4211, 1.0
    %v4213 = vrcp.pop %v4212
    %v4214 = vmul.f32 1.0, %v4213
    %v4215 = vxor.u32 %v4206, 2147483648
    %v4216 = vmul.f32 %v4215, 1.442695
    %v4217 = vpow.pop %v4216
    %v4218 = vadd.f32 %v4217, 1.0
    %v4219 = vrcp.pop %v4218
    %v4220 = vmul.f32 1.0, %v4219
    %v4221 = vtanh.pop %v4207
    %v4222 = vxor.u32 %v4208, 2147483648
    %v4223 = vmul.f32 %v4222, 1.442695
    %v4224 = vpow.pop %v4223
    %v4225 = vadd.f32 %v4224, 1.0
    %v4226 = vrcp.pop %v4225
    %v4227 = vmul.f32 1.0, %v4226
    %v4228 = vmul.f32 %v4220, 0.0
    %v4229 = vmul.f32 %v4214, %v4221
    %v4230 = vadd.f32 %v4228, %v4229
    %v4231 = vtanh.pop %v4230
    %v4232 = vmul.f32 %v4227, %v4231
    %4233 = vmatprep.subr.mxu0 %v3758
    %4234 = vmatpush1.msra.mxu0 %v3757
    %4235 = vmatprep.subr.mxu0 %v3762
    %4236 = vmatpush1.msra.mxu0 %v3761
    %4237 = vmatprep.subr.mxu0 %v3766
    %4238 = vmatpush1.msra.mxu0 %v3765
    %4239 = vmatprep.subr.mxu0 %v3770
    %4240 = vmatpush1.msra.mxu0 %v3769
    %4241 = vmatprep.subr.mxu0 %v3774
    %4242 = vmatpush1.msra.mxu0 %v3773
    %4243 = vmatprep.subr.mxu0 %v3778
    %4244 = vmatpush1.msra.mxu0 %v3777
    %4245 = vmatprep.subr.mxu0 %v3782
    %4246 = vmatpush1.msra.mxu0 %v3781
    %4247 = vmatprep.subr.mxu0 %v3786
    %4248 = vmatpush1.msra.mxu0 %v3785
    %4249 = vmatprep.subr.mxu0 %v3790
    %4250 = vmatpush1.msra.mxu0 %v3789
    %4251 = vmatprep.subr.mxu0 %v3794
    %4252 = vmatpush1.msra.mxu0 %v3793
    %4253 = vmatprep.subr.mxu0 %v3798
    %4254 = vmatpush1.msra.mxu0 %v3797
    %4255 = vmatprep.subr.mxu0 %v3802
    %4256 = vmatpush1.msra.mxu0 %v3801
    %4257 = vmatprep.subr.mxu0 %v3806
    %4258 = vmatpush1.msra.mxu0 %v3805
    %4259 = vmatprep.subr.mxu0 %v3810
    %4260 = vmatpush1.msra.mxu0 %v3809
    %4261 = vmatprep.subr.mxu0 %v3814
    %4262 = vmatpush1.msra.mxu0 %v3813
    %4263 = vmatprep.subr.mxu0 %v3818
    %4264 = vmatpush1.msra.mxu0 %v3817
    %4265 = vmatprep.subr.mxu0 0.0
    %4266 = vmatpush1.msra.mxu0 0.0
    %4267 = vmatprep.subr.mxu0 0.0
    %4268 = vmatpush1.msra.mxu0 0.0
    %4269 = vmatprep.subr.mxu0 0.0
    %4270 = vmatpush1.msra.mxu0 0.0
    %4271 = vmatprep.subr.mxu0 0.0
    %4272 = vmatpush1.msra.mxu0 0.0
    %4273 = vmatprep.subr.mxu0 0.0
    %4274 = vmatpush1.msra.mxu0 0.0
    %4275 = vmatprep.subr.mxu0 0.0
    %4276 = vmatpush1.msra.mxu0 0.0
    %4277 = vmatprep.subr.mxu0 0.0
    %4278 = vmatpush1.msra.mxu0 0.0
    %4279 = vmatprep.subr.mxu0 0.0
    %4280 = vmatpush1.msra.mxu0 0.0
    %4281 = vmatprep.subr.mxu0 0.0
    %4282 = vmatpush1.msra.mxu0 0.0
    %4283 = vmatprep.subr.mxu0 0.0
    %4284 = vmatpush1.msra.mxu0 0.0
    %4285 = vmatprep.subr.mxu0 0.0
    %4286 = vmatpush1.msra.mxu0 0.0
    %4287 = vmatprep.subr.mxu0 0.0
    %4288 = vmatpush1.msra.mxu0 0.0
    %4289 = vmatprep.subr.mxu0 0.0
    %4290 = vmatpush1.msra.mxu0 0.0
    %4291 = vmatprep.subr.mxu0 0.0
    %4292 = vmatpush1.msra.mxu0 0.0
    %4293 = vmatprep.subr.mxu0 0.0
    %4294 = vmatpush1.msra.mxu0 0.0
    %4295 = vmatprep.subr.mxu0 0.0
    %4296 = vmatpush1.msra.mxu0 0.0
    %4297 = vmatprep.mubr.f32.mxu0 0.0
    %4298 = vmatmul.mubr.f32.gmra.mrb[0].mxu0 %v4232
    %v4299 = vpop.f32.mrb[0].mxu0
    %v4300 = vadd.f32 0.0, %v4299
    %v4301 = vpop.f32.mrb[0].mxu0
    %v4302 = vadd.f32 0.0, %v4301
    %4303 = vdwg.mxu0
    %4304 = vmatprep.subr.mxu0 %v3760
    %4305 = vmatpush1.msra.mxu0 %v3759
    %4306 = vmatprep.subr.mxu0 %v3764
    %4307 = vmatpush1.msra.mxu0 %v3763
    %4308 = vmatprep.subr.mxu0 %v3768
    %4309 = vmatpush1.msra.mxu0 %v3767
    %4310 = vmatprep.subr.mxu0 %v3772
    %4311 = vmatpush1.msra.mxu0 %v3771
    %4312 = vmatprep.subr.mxu0 %v3776
    %4313 = vmatpush1.msra.mxu0 %v3775
    %4314 = vmatprep.subr.mxu0 %v3780
    %4315 = vmatpush1.msra.mxu0 %v3779
    %4316 = vmatprep.subr.mxu0 %v3784
    %4317 = vmatpush1.msra.mxu0 %v3783
    %4318 = vmatprep.subr.mxu0 %v3788
    %4319 = vmatpush1.msra.mxu0 %v3787
    %4320 = vmatprep.subr.mxu0 %v3792
    %4321 = vmatpush1.msra.mxu0 %v3791
    %4322 = vmatprep.subr.mxu0 %v3796
    %4323 = vmatpush1.msra.mxu0 %v3795
    %4324 = vmatprep.subr.mxu0 %v3800
    %4325 = vmatpush1.msra.mxu0 %v3799
    %4326 = vmatprep.subr.mxu0 %v3804
    %4327 = vmatpush1.msra.mxu0 %v3803
    %4328 = vmatprep.subr.mxu0 %v3808
    %4329 = vmatpush1.msra.mxu0 %v3807
    %4330 = vmatprep.subr.mxu0 %v3812
    %4331 = vmatpush1.msra.mxu0 %v3811
    %4332 = vmatprep.subr.mxu0 %v3816
    %4333 = vmatpush1.msra.mxu0 %v3815
    %4334 = vmatprep.subr.mxu0 %v3820
    %4335 = vmatpush1.msra.mxu0 %v3819
    %4336 = vmatprep.subr.mxu0 0.0
    %4337 = vmatpush1.msra.mxu0 0.0
    %4338 = vmatprep.subr.mxu0 0.0
    %4339 = vmatpush1.msra.mxu0 0.0
    %4340 = vmatprep.subr.mxu0 0.0
    %4341 = vmatpush1.msra.mxu0 0.0
    %4342 = vmatprep.subr.mxu0 0.0
    %4343 = vmatpush1.msra.mxu0 0.0
    %4344 = vmatprep.subr.mxu0 0.0
    %4345 = vmatpush1.msra.mxu0 0.0
    %4346 = vmatprep.subr.mxu0 0.0
    %4347 = vmatpush1.msra.mxu0 0.0
    %4348 = vmatprep.subr.mxu0 0.0
    %4349 = vmatpush1.msra.mxu0 0.0
    %4350 = vmatprep.subr.mxu0 0.0
    %4351 = vmatpush1.msra.mxu0 0.0
    %4352 = vmatprep.subr.mxu0 0.0
    %4353 = vmatpush1.msra.mxu0 0.0
    %4354 = vmatprep.subr.mxu0 0.0
    %4355 = vmatpush1.msra.mxu0 0.0
    %4356 = vmatprep.subr.mxu0 0.0
    %4357 = vmatpush1.msra.mxu0 0.0
    %4358 = vmatprep.subr.mxu0 0.0
    %4359 = vmatpush1.msra.mxu0 0.0
    %4360 = vmatprep.subr.mxu0 0.0
    %4361 = vmatpush1.msra.mxu0 0.0
    %4362 = vmatprep.subr.mxu0 0.0
    %4363 = vmatpush1.msra.mxu0 0.0
    %4364 = vmatprep.subr.mxu0 0.0
    %4365 = vmatpush1.msra.mxu0 0.0
    %4366 = vmatprep.subr.mxu0 0.0
    %4367 = vmatpush1.msra.mxu0 0.0
    %4368 = vmatprep.mubr.f32.mxu0 0.0
    %4369 = vmatmul.mubr.f32.gmra.mrb[0].mxu0 %v4232
    %v4370 = vpop.f32.mrb[0].mxu0
    %v4371 = vadd.f32 0.0, %v4370
    %v4372 = vpop.f32.mrb[0].mxu0
    %v4373 = vadd.f32 0.0, %v4372
    %4374 = vdwg.mxu0
    %v4379 = vrot.slane %v4300, 6
    %v4380 = vrot.slane %v4302, 6
    %v4381 = vrot.slane %v4371, 6
    %v4382 = vrot.slane %v4373, 6
    %v4387 = vadd.f32 %v3976, %v4379
    %v4388 = vadd.f32 %v3978, %v4380
    %v4389 = vadd.f32 %v4053, %v4381
    %v4390 = vadd.f32 %v4055, %v4382
    %v4391 = vxor.u32 %v4387, 2147483648
    %v4392 = vmul.f32 %v4391, 1.442695
    %v4393 = vpow.pop %v4392
    %v4394 = vadd.f32 %v4393, 1.0
    %v4395 = vrcp.pop %v4394
    %v4396 = vmul.f32 1.0, %v4395
    %v4397 = vxor.u32 %v4388, 2147483648
    %v4398 = vmul.f32 %v4397, 1.442695
    %v4399 = vpow.pop %v4398
    %v4400 = vadd.f32 %v4399, 1.0
    %v4401 = vrcp.pop %v4400
    %v4402 = vmul.f32 1.0, %v4401
    %v4403 = vtanh.pop %v4389
    %v4404 = vxor.u32 %v4390, 2147483648
    %v4405 = vmul.f32 %v4404, 1.442695
    %v4406 = vpow.pop %v4405
    %v4407 = vadd.f32 %v4406, 1.0
    %v4408 = vrcp.pop %v4407
    %v4409 = vmul.f32 1.0, %v4408
    %v4411 = vrot.slane %v4230, 6
    %v4413 = vmul.f32 %v4402, %v4411
    %v4414 = vmul.f32 %v4396, %v4403
    %v4415 = vadd.f32 %v4413, %v4414
    %v4416 = vtanh.pop %v4415
    %v4417 = vmul.f32 %v4409, %v4416
    %v4419 = vrot.slane %v4417, 2
    %4421 = vmatprep.subr.mxu0 %v3758
    %4422 = vmatpush1.msra.mxu0 %v3757
    %4423 = vmatprep.subr.mxu0 %v3762
    %4424 = vmatpush1.msra.mxu0 %v3761
    %4425 = vmatprep.subr.mxu0 %v3766
    %4426 = vmatpush1.msra.mxu0 %v3765
    %4427 = vmatprep.subr.mxu0 %v3770
    %4428 = vmatpush1.msra.mxu0 %v3769
    %4429 = vmatprep.subr.mxu0 %v3774
    %4430 = vmatpush1.msra.mxu0 %v3773
    %4431 = vmatprep.subr.mxu0 %v3778
    %4432 = vmatpush1.msra.mxu0 %v3777
    %4433 = vmatprep.subr.mxu0 %v3782
    %4434 = vmatpush1.msra.mxu0 %v3781
    %4435 = vmatprep.subr.mxu0 %v3786
    %4436 = vmatpush1.msra.mxu0 %v3785
    %4437 = vmatprep.subr.mxu0 %v3790
    %4438 = vmatpush1.msra.mxu0 %v3789
    %4439 = vmatprep.subr.mxu0 %v3794
    %4440 = vmatpush1.msra.mxu0 %v3793
    %4441 = vmatprep.subr.mxu0 %v3798
    %4442 = vmatpush1.msra.mxu0 %v3797
    %4443 = vmatprep.subr.mxu0 %v3802
    %4444 = vmatpush1.msra.mxu0 %v3801
    %4445 = vmatprep.subr.mxu0 %v3806
    %4446 = vmatpush1.msra.mxu0 %v3805
    %4447 = vmatprep.subr.mxu0 %v3810
    %4448 = vmatpush1.msra.mxu0 %v3809
    %4449 = vmatprep.subr.mxu0 %v3814
    %4450 = vmatpush1.msra.mxu0 %v3813
    %4451 = vmatprep.subr.mxu0 %v3818
    %4452 = vmatpush1.msra.mxu0 %v3817
    %4453 = vmatprep.subr.mxu0 0.0
    %4454 = vmatpush1.msra.mxu0 0.0
    %4455 = vmatprep.subr.mxu0 0.0
    %4456 = vmatpush1.msra.mxu0 0.0
    %4457 = vmatprep.subr.mxu0 0.0
    %4458 = vmatpush1.msra.mxu0 0.0
    %4459 = vmatprep.subr.mxu0 0.0
    %4460 = vmatpush1.msra.mxu0 0.0
    %4461 = vmatprep.subr.mxu0 0.0
    %4462 = vmatpush1.msra.mxu0 0.0
    %4463 = vmatprep.subr.mxu0 0.0
    %4464 = vmatpush1.msra.mxu0 0.0
    %4465 = vmatprep.subr.mxu0 0.0
    %4466 = vmatpush1.msra.mxu0 0.0
    %4467 = vmatprep.subr.mxu0 0.0
    %4468 = vmatpush1.msra.mxu0 0.0
    %4469 = vmatprep.subr.mxu0 0.0
    %4470 = vmatpush1.msra.mxu0 0.0
    %4471 = vmatprep.subr.mxu0 0.0
    %4472 = vmatpush1.msra.mxu0 0.0
    %4473 = vmatprep.subr.mxu0 0.0
    %4474 = vmatpush1.msra.mxu0 0.0
    %4475 = vmatprep.subr.mxu0 0.0
    %4476 = vmatpush1.msra.mxu0 0.0
    %4477 = vmatprep.subr.mxu0 0.0
    %4478 = vmatpush1.msra.mxu0 0.0
    %4479 = vmatprep.subr.mxu0 0.0
    %4480 = vmatpush1.msra.mxu0 0.0
    %4481 = vmatprep.subr.mxu0 0.0
    %4482 = vmatpush1.msra.mxu0 0.0
    %4483 = vmatprep.subr.mxu0 0.0
    %4484 = vmatpush1.msra.mxu0 0.0
    %4485 = vmatprep.mubr.f32.mxu0 0.0
    %4486 = vmatmul.mubr.f32.gmra.mrb[0].mxu0 %v4419
    %v4487 = vpop.f32.mrb[0].mxu0
    %v4488 = vadd.f32 0.0, %v4487
    %v4489 = vpop.f32.mrb[0].mxu0
    %v4490 = vadd.f32 0.0, %v4489
    %4491 = vdwg.mxu0
    %4492 = vmatprep.subr.mxu0 %v3760
    %4493 = vmatpush1.msra.mxu0 %v3759
    %4494 = vmatprep.subr.mxu0 %v3764
    %4495 = vmatpush1.msra.mxu0 %v3763
    %4496 = vmatprep.subr.mxu0 %v3768
    %4497 = vmatpush1.msra.mxu0 %v3767
    %4498 = vmatprep.subr.mxu0 %v3772
    %4499 = vmatpush1.msra.mxu0 %v3771
    %4500 = vmatprep.subr.mxu0 %v3776
    %4501 = vmatpush1.msra.mxu0 %v3775
    %4502 = vmatprep.subr.mxu0 %v3780
    %4503 = vmatpush1.msra.mxu0 %v3779
    %4504 = vmatprep.subr.mxu0 %v3784
    %4505 = vmatpush1.msra.mxu0 %v3783
    %4506 = vmatprep.subr.mxu0 %v3788
    %4507 = vmatpush1.msra.mxu0 %v3787
    %4508 = vmatprep.subr.mxu0 %v3792
    %4509 = vmatpush1.msra.mxu0 %v3791
    %4510 = vmatprep.subr.mxu0 %v3796
    %4511 = vmatpush1.msra.mxu0 %v3795
    %4512 = vmatprep.subr.mxu0 %v3800
    %4513 = vmatpush1.msra.mxu0 %v3799
    %4514 = vmatprep.subr.mxu0 %v3804
    %4515 = vmatpush1.msra.mxu0 %v3803
    %4516 = vmatprep.subr.mxu0 %v3808
    %4517 = vmatpush1.msra.mxu0 %v3807
    %4518 = vmatprep.subr.mxu0 %v3812
    %4519 = vmatpush1.msra.mxu0 %v3811
    %4520 = vmatprep.subr.mxu0 %v3816
    %4521 = vmatpush1.msra.mxu0 %v3815
    %4522 = vmatprep.subr.mxu0 %v3820
    %4523 = vmatpush1.msra.mxu0 %v3819
    %4524 = vmatprep.subr.mxu0 0.0
    %4525 = vmatpush1.msra.mxu0 0.0
    %4526 = vmatprep.subr.mxu0 0.0
    %4527 = vmatpush1.msra.mxu0 0.0
    %4528 = vmatprep.subr.mxu0 0.0
    %4529 = vmatpush1.msra.mxu0 0.0
    %4530 = vmatprep.subr.mxu0 0.0
    %4531 = vmatpush1.msra.mxu0 0.0
    %4532 = vmatprep.subr.mxu0 0.0
    %4533 = vmatpush1.msra.mxu0 0.0
    %4534 = vmatprep.subr.mxu0 0.0
    %4535 = vmatpush1.msra.mxu0 0.0
    %4536 = vmatprep.subr.mxu0 0.0
    %4537 = vmatpush1.msra.mxu0 0.0
    %4538 = vmatprep.subr.mxu0 0.0
    %4539 = vmatpush1.msra.mxu0 0.0
    %4540 = vmatprep.subr.mxu0 0.0
    %4541 = vmatpush1.msra.mxu0 0.0
    %4542 = vmatprep.subr.mxu0 0.0
    %4543 = vmatpush1.msra.mxu0 0.0
    %4544 = vmatprep.subr.mxu0 0.0
    %4545 = vmatpush1.msra.mxu0 0.0
    %4546 = vmatprep.subr.mxu0 0.0
    %4547 = vmatpush1.msra.mxu0 0.0
    %4548 = vmatprep.subr.mxu0 0.0
    %4549 = vmatpush1.msra.mxu0 0.0
    %4550 = vmatprep.subr.mxu0 0.0
    %4551 = vmatpush1.msra.mxu0 0.0
    %4552 = vmatprep.subr.mxu0 0.0
    %4553 = vmatpush1.msra.mxu0 0.0
    %4554 = vmatprep.subr.mxu0 0.0
    %4555 = vmatpush1.msra.mxu0 0.0
    %4556 = vmatprep.mubr.f32.mxu0 0.0
    %4557 = vmatmul.mubr.f32.gmra.mrb[0].mxu0 %v4419
    %v4558 = vpop.f32.mrb[0].mxu0
    %v4559 = vadd.f32 0.0, %v4558
    %v4560 = vpop.f32.mrb[0].mxu0
    %v4561 = vadd.f32 0.0, %v4560
    %4562 = vdwg.mxu0
    %v4567 = vrot.slane %v4488, 4
    %v4568 = vrot.slane %v4490, 4
    %v4569 = vrot.slane %v4559, 4
    %v4570 = vrot.slane %v4561, 4
    %v4575 = vadd.f32 %v3976, %v4567
    %v4576 = vadd.f32 %v3978, %v4568
    %v4577 = vadd.f32 %v4053, %v4569
    %v4578 = vadd.f32 %v4055, %v4570
    %v4579 = vxor.u32 %v4575, 2147483648
    %v4580 = vmul.f32 %v4579, 1.442695
    %v4581 = vpow.pop %v4580
    %v4582 = vadd.f32 %v4581, 1.0
    %v4583 = vrcp.pop %v4582
    %v4584 = vmul.f32 1.0, %v4583
    %v4585 = vxor.u32 %v4576, 2147483648
    %v4586 = vmul.f32 %v4585, 1.442695
    %v4587 = vpow.pop %v4586
    %v4588 = vadd.f32 %v4587, 1.0
    %v4589 = vrcp.pop %v4588
    %v4590 = vmul.f32 1.0, %v4589
    %v4591 = vtanh.pop %v4577
    %v4592 = vxor.u32 %v4578, 2147483648
    %v4593 = vmul.f32 %v4592, 1.442695
    %v4594 = vpow.pop %v4593
    %v4595 = vadd.f32 %v4594, 1.0
    %v4596 = vrcp.pop %v4595
    %v4597 = vmul.f32 1.0, %v4596
    %v4599 = vrot.slane %v4415, 6
    %v4601 = vmul.f32 %v4590, %v4599
    %v4602 = vmul.f32 %v4584, %v4591
    %v4603 = vadd.f32 %v4601, %v4602
    %v4604 = vtanh.pop %v4603
    %v4605 = vmul.f32 %v4597, %v4604
    %v4607 = vrot.slane %v4605, 4
    %4609 = vmatprep.subr.mxu0 %v3758
    %4610 = vmatpush1.msra.mxu0 %v3757
    %4611 = vmatprep.subr.mxu0 %v3762
    %4612 = vmatpush1.msra.mxu0 %v3761
    %4613 = vmatprep.subr.mxu0 %v3766
    %4614 = vmatpush1.msra.mxu0 %v3765
    %4615 = vmatprep.subr.mxu0 %v3770
    %4616 = vmatpush1.msra.mxu0 %v3769
    %4617 = vmatprep.subr.mxu0 %v3774
    %4618 = vmatpush1.msra.mxu0 %v3773
    %4619 = vmatprep.subr.mxu0 %v3778
    %4620 = vmatpush1.msra.mxu0 %v3777
    %4621 = vmatprep.subr.mxu0 %v3782
    %4622 = vmatpush1.msra.mxu0 %v3781
    %4623 = vmatprep.subr.mxu0 %v3786
    %4624 = vmatpush1.msra.mxu0 %v3785
    %4625 = vmatprep.subr.mxu0 %v3790
    %4626 = vmatpush1.msra.mxu0 %v3789
    %4627 = vmatprep.subr.mxu0 %v3794
    %4628 = vmatpush1.msra.mxu0 %v3793
    %4629 = vmatprep.subr.mxu0 %v3798
    %4630 = vmatpush1.msra.mxu0 %v3797
    %4631 = vmatprep.subr.mxu0 %v3802
    %4632 = vmatpush1.msra.mxu0 %v3801
    %4633 = vmatprep.subr.mxu0 %v3806
    %4634 = vmatpush1.msra.mxu0 %v3805
    %4635 = vmatprep.subr.mxu0 %v3810
    %4636 = vmatpush1.msra.mxu0 %v3809
    %4637 = vmatprep.subr.mxu0 %v3814
    %4638 = vmatpush1.msra.mxu0 %v3813
    %4639 = vmatprep.subr.mxu0 %v3818
    %4640 = vmatpush1.msra.mxu0 %v3817
    %4641 = vmatprep.subr.mxu0 0.0
    %4642 = vmatpush1.msra.mxu0 0.0
    %4643 = vmatprep.subr.mxu0 0.0
    %4644 = vmatpush1.msra.mxu0 0.0
    %4645 = vmatprep.subr.mxu0 0.0
    %4646 = vmatpush1.msra.mxu0 0.0
    %4647 = vmatprep.subr.mxu0 0.0
    %4648 = vmatpush1.msra.mxu0 0.0
    %4649 = vmatprep.subr.mxu0 0.0
    %4650 = vmatpush1.msra.mxu0 0.0
    %4651 = vmatprep.subr.mxu0 0.0
    %4652 = vmatpush1.msra.mxu0 0.0
    %4653 = vmatprep.subr.mxu0 0.0
    %4654 = vmatpush1.msra.mxu0 0.0
    %4655 = vmatprep.subr.mxu0 0.0
    %4656 = vmatpush1.msra.mxu0 0.0
    %4657 = vmatprep.subr.mxu0 0.0
    %4658 = vmatpush1.msra.mxu0 0.0
    %4659 = vmatprep.subr.mxu0 0.0
    %4660 = vmatpush1.msra.mxu0 0.0
    %4661 = vmatprep.subr.mxu0 0.0
    %4662 = vmatpush1.msra.mxu0 0.0
    %4663 = vmatprep.subr.mxu0 0.0
    %4664 = vmatpush1.msra.mxu0 0.0
    %4665 = vmatprep.subr.mxu0 0.0
    %4666 = vmatpush1.msra.mxu0 0.0
    %4667 = vmatprep.subr.mxu0 0.0
    %4668 = vmatpush1.msra.mxu0 0.0
    %4669 = vmatprep.subr.mxu0 0.0
    %4670 = vmatpush1.msra.mxu0 0.0
    %4671 = vmatprep.subr.mxu0 0.0
    %4672 = vmatpush1.msra.mxu0 0.0
    %4673 = vmatprep.mubr.f32.mxu0 0.0
    %4674 = vmatmul.mubr.f32.gmra.mrb[0].mxu0 %v4607
    %v4675 = vpop.f32.mrb[0].mxu0
    %v4676 = vadd.f32 0.0, %v4675
    %v4677 = vpop.f32.mrb[0].mxu0
    %v4678 = vadd.f32 0.0, %v4677
    %4679 = vdwg.mxu0
    %4680 = vmatprep.subr.mxu0 %v3760
    %4681 = vmatpush1.msra.mxu0 %v3759
    %4682 = vmatprep.subr.mxu0 %v3764
    %4683 = vmatpush1.msra.mxu0 %v3763
    %4684 = vmatprep.subr.mxu0 %v3768
    %4685 = vmatpush1.msra.mxu0 %v3767
    %4686 = vmatprep.subr.mxu0 %v3772
    %4687 = vmatpush1.msra.mxu0 %v3771
    %4688 = vmatprep.subr.mxu0 %v3776
    %4689 = vmatpush1.msra.mxu0 %v3775
    %4690 = vmatprep.subr.mxu0 %v3780
    %4691 = vmatpush1.msra.mxu0 %v3779
    %4692 = vmatprep.subr.mxu0 %v3784
    %4693 = vmatpush1.msra.mxu0 %v3783
    %4694 = vmatprep.subr.mxu0 %v3788
    %4695 = vmatpush1.msra.mxu0 %v3787
    %4696 = vmatprep.subr.mxu0 %v3792
    %4697 = vmatpush1.msra.mxu0 %v3791
    %4698 = vmatprep.subr.mxu0 %v3796
    %4699 = vmatpush1.msra.mxu0 %v3795
    %4700 = vmatprep.subr.mxu0 %v3800
    %4701 = vmatpush1.msra.mxu0 %v3799
    %4702 = vmatprep.subr.mxu0 %v3804
    %4703 = vmatpush1.msra.mxu0 %v3803
    %4704 = vmatprep.subr.mxu0 %v3808
    %4705 = vmatpush1.msra.mxu0 %v3807
    %4706 = vmatprep.subr.mxu0 %v3812
    %4707 = vmatpush1.msra.mxu0 %v3811
    %4708 = vmatprep.subr.mxu0 %v3816
    %4709 = vmatpush1.msra.mxu0 %v3815
    %4710 = vmatprep.subr.mxu0 %v3820
    %4711 = vmatpush1.msra.mxu0 %v3819
    %4712 = vmatprep.subr.mxu0 0.0
    %4713 = vmatpush1.msra.mxu0 0.0
    %4714 = vmatprep.subr.mxu0 0.0
    %4715 = vmatpush1.msra.mxu0 0.0
    %4716 = vmatprep.subr.mxu0 0.0
    %4717 = vmatpush1.msra.mxu0 0.0
    %4718 = vmatprep.subr.mxu0 0.0
    %4719 = vmatpush1.msra.mxu0 0.0
    %4720 = vmatprep.subr.mxu0 0.0
    %4721 = vmatpush1.msra.mxu0 0.0
    %4722 = vmatprep.subr.mxu0 0.0
    %4723 = vmatpush1.msra.mxu0 0.0
    %4724 = vmatprep.subr.mxu0 0.0
    %4725 = vmatpush1.msra.mxu0 0.0
    %4726 = vmatprep.subr.mxu0 0.0
    %4727 = vmatpush1.msra.mxu0 0.0
    %4728 = vmatprep.subr.mxu0 0.0
    %4729 = vmatpush1.msra.mxu0 0.0
    %4730 = vmatprep.subr.mxu0 0.0
    %4731 = vmatpush1.msra.mxu0 0.0
    %4732 = vmatprep.subr.mxu0 0.0
    %4733 = vmatpush1.msra.mxu0 0.0
    %4734 = vmatprep.subr.mxu0 0.0
    %4735 = vmatpush1.msra.mxu0 0.0
    %4736 = vmatprep.subr.mxu0 0.0
    %4737 = vmatpush1.msra.mxu0 0.0
    %4738 = vmatprep.subr.mxu0 0.0
    %4739 = vmatpush1.msra.mxu0 0.0
    %4740 = vmatprep.subr.mxu0 0.0
    %4741 = vmatpush1.msra.mxu0 0.0
    %4742 = vmatprep.subr.mxu0 0.0
    %4743 = vmatpush1.msra.mxu0 0.0
    %4744 = vmatprep.mubr.f32.mxu0 0.0
    %4745 = vmatmul.mubr.f32.gmra.mrb[0].mxu0 %v4607
    %v4746 = vpop.f32.mrb[0].mxu0
    %v4747 = vadd.f32 0.0, %v4746
    %v4748 = vpop.f32.mrb[0].mxu0
    %v4749 = vadd.f32 0.0, %v4748
    %4750 = vdwg.mxu0
    %v4755 = vrot.slane %v4676, 2
    %v4756 = vrot.slane %v4678, 2
    %v4757 = vrot.slane %v4747, 2
    %v4758 = vrot.slane %v4749, 2
    %v4763 = vadd.f32 %v3976, %v4755
    %v4764 = vadd.f32 %v3978, %v4756
    %v4765 = vadd.f32 %v4053, %v4757
    %v4766 = vadd.f32 %v4055, %v4758
    %v4767 = vxor.u32 %v4763, 2147483648
    %v4768 = vmul.f32 %v4767, 1.442695
    %v4769 = vpow.pop %v4768
    %v4770 = vadd.f32 %v4769, 1.0
    %v4771 = vrcp.pop %v4770
    %v4772 = vmul.f32 1.0, %v4771
    %v4773 = vxor.u32 %v4764, 2147483648
    %v4774 = vmul.f32 %v4773, 1.442695
    %v4775 = vpow.pop %v4774
    %v4776 = vadd.f32 %v4775, 1.0
    %v4777 = vrcp.pop %v4776
    %v4778 = vmul.f32 1.0, %v4777
    %v4779 = vtanh.pop %v4765
    %v4780 = vxor.u32 %v4766, 2147483648
    %v4781 = vmul.f32 %v4780, 1.442695
    %v4782 = vpow.pop %v4781
    %v4783 = vadd.f32 %v4782, 1.0
    %v4784 = vrcp.pop %v4783
    %v4785 = vmul.f32 1.0, %v4784
    %v4787 = vrot.slane %v4603, 6
    %v4789 = vmul.f32 %v4778, %v4787
    %v4790 = vmul.f32 %v4772, %v4779
    %v4791 = vadd.f32 %v4789, %v4790
    %v4792 = vtanh.pop %v4791
    %v4793 = vmul.f32 %v4785, %v4792
    %v4795 = vrot.slane %v4793, 6
    %4797 = vmatprep.subr.mxu0 %v3758
    %4798 = vmatpush1.msra.mxu0 %v3757
    %4799 = vmatprep.subr.mxu0 %v3762
    %4800 = vmatpush1.msra.mxu0 %v3761
    %4801 = vmatprep.subr.mxu0 %v3766
    %4802 = vmatpush1.msra.mxu0 %v3765
    %4803 = vmatprep.subr.mxu0 %v3770
    %4804 = vmatpush1.msra.mxu0 %v3769
    %4805 = vmatprep.subr.mxu0 %v3774
    %4806 = vmatpush1.msra.mxu0 %v3773
    %4807 = vmatprep.subr.mxu0 %v3778
    %4808 = vmatpush1.msra.mxu0 %v3777
    %4809 = vmatprep.subr.mxu0 %v3782
    %4810 = vmatpush1.msra.mxu0 %v3781
    %4811 = vmatprep.subr.mxu0 %v3786
    %4812 = vmatpush1.msra.mxu0 %v3785
    %4813 = vmatprep.subr.mxu0 %v3790
    %4814 = vmatpush1.msra.mxu0 %v3789
    %4815 = vmatprep.subr.mxu0 %v3794
    %4816 = vmatpush1.msra.mxu0 %v3793
    %4817 = vmatprep.subr.mxu0 %v3798
    %4818 = vmatpush1.msra.mxu0 %v3797
    %4819 = vmatprep.subr.mxu0 %v3802
    %4820 = vmatpush1.msra.mxu0 %v3801
    %4821 = vmatprep.subr.mxu0 %v3806
    %4822 = vmatpush1.msra.mxu0 %v3805
    %4823 = vmatprep.subr.mxu0 %v3810
    %4824 = vmatpush1.msra.mxu0 %v3809
    %4825 = vmatprep.subr.mxu0 %v3814
    %4826 = vmatpush1.msra.mxu0 %v3813
    %4827 = vmatprep.subr.mxu0 %v3818
    %4828 = vmatpush1.msra.mxu0 %v3817
    %4829 = vmatprep.subr.mxu0 0.0
    %4830 = vmatpush1.msra.mxu0 0.0
    %4831 = vmatprep.subr.mxu0 0.0
    %4832 = vmatpush1.msra.mxu0 0.0
    %4833 = vmatprep.subr.mxu0 0.0
    %4834 = vmatpush1.msra.mxu0 0.0
    %4835 = vmatprep.subr.mxu0 0.0
    %4836 = vmatpush1.msra.mxu0 0.0
    %4837 = vmatprep.subr.mxu0 0.0
    %4838 = vmatpush1.msra.mxu0 0.0
    %4839 = vmatprep.subr.mxu0 0.0
    %4840 = vmatpush1.msra.mxu0 0.0
    %4841 = vmatprep.subr.mxu0 0.0
    %4842 = vmatpush1.msra.mxu0 0.0
    %4843 = vmatprep.subr.mxu0 0.0
    %4844 = vmatpush1.msra.mxu0 0.0
    %4845 = vmatprep.subr.mxu0 0.0
    %4846 = vmatpush1.msra.mxu0 0.0
    %4847 = vmatprep.subr.mxu0 0.0
    %4848 = vmatpush1.msra.mxu0 0.0
    %4849 = vmatprep.subr.mxu0 0.0
    %4850 = vmatpush1.msra.mxu0 0.0
    %4851 = vmatprep.subr.mxu0 0.0
    %4852 = vmatpush1.msra.mxu0 0.0
    %4853 = vmatprep.subr.mxu0 0.0
    %4854 = vmatpush1.msra.mxu0 0.0
    %4855 = vmatprep.subr.mxu0 0.0
    %4856 = vmatpush1.msra.mxu0 0.0
    %4857 = vmatprep.subr.mxu0 0.0
    %4858 = vmatpush1.msra.mxu0 0.0
    %4859 = vmatprep.subr.mxu0 0.0
    %4860 = vmatpush1.msra.mxu0 0.0
    %4861 = vmatprep.mubr.f32.mxu0 0.0
    %4862 = vmatmul.mubr.f32.gmra.mrb[0].mxu0 %v4795
    %v4863 = vpop.f32.mrb[0].mxu0
    %v4864 = vadd.f32 0.0, %v4863
    %v4865 = vpop.f32.mrb[0].mxu0
    %v4866 = vadd.f32 0.0, %v4865
    %4867 = vdwg.mxu0
    %4868 = vmatprep.subr.mxu0 %v3760
    %4869 = vmatpush1.msra.mxu0 %v3759
    %4870 = vmatprep.subr.mxu0 %v3764
    %4871 = vmatpush1.msra.mxu0 %v3763
    %4872 = vmatprep.subr.mxu0 %v3768
    %4873 = vmatpush1.msra.mxu0 %v3767
    %4874 = vmatprep.subr.mxu0 %v3772
    %4875 = vmatpush1.msra.mxu0 %v3771
    %4876 = vmatprep.subr.mxu0 %v3776
    %4877 = vmatpush1.msra.mxu0 %v3775
    %4878 = vmatprep.subr.mxu0 %v3780
    %4879 = vmatpush1.msra.mxu0 %v3779
    %4880 = vmatprep.subr.mxu0 %v3784
    %4881 = vmatpush1.msra.mxu0 %v3783
    %4882 = vmatprep.subr.mxu0 %v3788
    %4883 = vmatpush1.msra.mxu0 %v3787
    %4884 = vmatprep.subr.mxu0 %v3792
    %4885 = vmatpush1.msra.mxu0 %v3791
    %4886 = vmatprep.subr.mxu0 %v3796
    %4887 = vmatpush1.msra.mxu0 %v3795
    %4888 = vmatprep.subr.mxu0 %v3800
    %4889 = vmatpush1.msra.mxu0 %v3799
    %4890 = vmatprep.subr.mxu0 %v3804
    %4891 = vmatpush1.msra.mxu0 %v3803
    %4892 = vmatprep.subr.mxu0 %v3808
    %4893 = vmatpush1.msra.mxu0 %v3807
    %4894 = vmatprep.subr.mxu0 %v3812
    %4895 = vmatpush1.msra.mxu0 %v3811
    %4896 = vmatprep.subr.mxu0 %v3816
    %4897 = vmatpush1.msra.mxu0 %v3815
    %4898 = vmatprep.subr.mxu0 %v3820
    %4899 = vmatpush1.msra.mxu0 %v3819
    %4900 = vmatprep.subr.mxu0 0.0
    %4901 = vmatpush1.msra.mxu0 0.0
    %4902 = vmatprep.subr.mxu0 0.0
    %4903 = vmatpush1.msra.mxu0 0.0
    %4904 = vmatprep.subr.mxu0 0.0
    %4905 = vmatpush1.msra.mxu0 0.0
    %4906 = vmatprep.subr.mxu0 0.0
    %4907 = vmatpush1.msra.mxu0 0.0
    %4908 = vmatprep.subr.mxu0 0.0
    %4909 = vmatpush1.msra.mxu0 0.0
    %4910 = vmatprep.subr.mxu0 0.0
    %4911 = vmatpush1.msra.mxu0 0.0
    %4912 = vmatprep.subr.mxu0 0.0
    %4913 = vmatpush1.msra.mxu0 0.0
    %4914 = vmatprep.subr.mxu0 0.0
    %4915 = vmatpush1.msra.mxu0 0.0
    %4916 = vmatprep.subr.mxu0 0.0
    %4917 = vmatpush1.msra.mxu0 0.0
    %4918 = vmatprep.subr.mxu0 0.0
    %4919 = vmatpush1.msra.mxu0 0.0
    %4920 = vmatprep.subr.mxu0 0.0
    %4921 = vmatpush1.msra.mxu0 0.0
    %4922 = vmatprep.subr.mxu0 0.0
    %4923 = vmatpush1.msra.mxu0 0.0
    %4924 = vmatprep.subr.mxu0 0.0
    %4925 = vmatpush1.msra.mxu0 0.0
    %4926 = vmatprep.subr.mxu0 0.0
    %4927 = vmatpush1.msra.mxu0 0.0
    %4928 = vmatprep.subr.mxu0 0.0
    %4929 = vmatpush1.msra.mxu0 0.0
    %4930 = vmatprep.subr.mxu0 0.0
    %4931 = vmatpush1.msra.mxu0 0.0
    %4932 = vmatprep.mubr.f32.mxu0 0.0
    %4933 = vmatmul.mubr.f32.gmra.mrb[0].mxu0 %v4795
    %v4934 = vpop.f32.mrb[0].mxu0
    %v4935 = vadd.f32 0.0, %v4934
    %v4936 = vpop.f32.mrb[0].mxu0
    %v4937 = vadd.f32 0.0, %v4936
    %4938 = vdwg.mxu0
    %v4939 = vadd.f32 %v3982, %v4864
    %v4940 = vadd.f32 %v3984, %v4866
    %v4941 = vadd.f32 %v4059, %v4935
    %v4942 = vadd.f32 %v4061, %v4937
    %v4943 = vxor.u32 %v4939, 2147483648
    %v4944 = vmul.f32 %v4943, 1.442695
    %v4945 = vpow.pop %v4944
    %v4946 = vadd.f32 %v4945, 1.0
    %v4947 = vrcp.pop %v4946
    %v4948 = vmul.f32 1.0, %v4947
    %v4949 = vxor.u32 %v4940, 2147483648
    %v4950 = vmul.f32 %v4949, 1.442695
    %v4951 = vpow.pop %v4950
    %v4952 = vadd.f32 %v4951, 1.0
    %v4953 = vrcp.pop %v4952
    %v4954 = vmul.f32 1.0, %v4953
    %v4955 = vtanh.pop %v4941
    %v4956 = vxor.u32 %v4942, 2147483648
    %v4957 = vmul.f32 %v4956, 1.442695
    %v4958 = vpow.pop %v4957
    %v4959 = vadd.f32 %v4958, 1.0
    %v4960 = vrcp.pop %v4959
    %v4961 = vmul.f32 1.0, %v4960
    %v4963 = vrot.slane %v4791, 6
    %v4965 = vmul.f32 %v4954, %v4963
    %v4966 = vmul.f32 %v4948, %v4955
    %v4967 = vadd.f32 %v4965, %v4966
    %v4968 = vtanh.pop %v4967
    %v4969 = vmul.f32 %v4961, %v4968
    %4970 = vmatprep.subr.mxu0 %v3758
    %4971 = vmatpush1.msra.mxu0 %v3757
    %4972 = vmatprep.subr.mxu0 %v3762
    %4973 = vmatpush1.msra.mxu0 %v3761
    %4974 = vmatprep.subr.mxu0 %v3766
    %4975 = vmatpush1.msra.mxu0 %v3765
    %4976 = vmatprep.subr.mxu0 %v3770
    %4977 = vmatpush1.msra.mxu0 %v3769
    %4978 = vmatprep.subr.mxu0 %v3774
    %4979 = vmatpush1.msra.mxu0 %v3773
    %4980 = vmatprep.subr.mxu0 %v3778
    %4981 = vmatpush1.msra.mxu0 %v3777
    %4982 = vmatprep.subr.mxu0 %v3782
    %4983 = vmatpush1.msra.mxu0 %v3781
    %4984 = vmatprep.subr.mxu0 %v3786
    %4985 = vmatpush1.msra.mxu0 %v3785
    %4986 = vmatprep.subr.mxu0 %v3790
    %4987 = vmatpush1.msra.mxu0 %v3789
    %4988 = vmatprep.subr.mxu0 %v3794
    %4989 = vmatpush1.msra.mxu0 %v3793
    %4990 = vmatprep.subr.mxu0 %v3798
    %4991 = vmatpush1.msra.mxu0 %v3797
    %4992 = vmatprep.subr.mxu0 %v3802
    %4993 = vmatpush1.msra.mxu0 %v3801
    %4994 = vmatprep.subr.mxu0 %v3806
    %4995 = vmatpush1.msra.mxu0 %v3805
    %4996 = vmatprep.subr.mxu0 %v3810
    %4997 = vmatpush1.msra.mxu0 %v3809
    %4998 = vmatprep.subr.mxu0 %v3814
    %4999 = vmatpush1.msra.mxu0 %v3813
    %5000 = vmatprep.subr.mxu0 %v3818
    %5001 = vmatpush1.msra.mxu0 %v3817
    %5002 = vmatprep.subr.mxu0 0.0
    %5003 = vmatpush1.msra.mxu0 0.0
    %5004 = vmatprep.subr.mxu0 0.0
    %5005 = vmatpush1.msra.mxu0 0.0
    %5006 = vmatprep.subr.mxu0 0.0
    %5007 = vmatpush1.msra.mxu0 0.0
    %5008 = vmatprep.subr.mxu0 0.0
    %5009 = vmatpush1.msra.mxu0 0.0
    %5010 = vmatprep.subr.mxu0 0.0
    %5011 = vmatpush1.msra.mxu0 0.0
    %5012 = vmatprep.subr.mxu0 0.0
    %5013 = vmatpush1.msra.mxu0 0.0
    %5014 = vmatprep.subr.mxu0 0.0
    %5015 = vmatpush1.msra.mxu0 0.0
    %5016 = vmatprep.subr.mxu0 0.0
    %5017 = vmatpush1.msra.mxu0 0.0
    %5018 = vmatprep.subr.mxu0 0.0
    %5019 = vmatpush1.msra.mxu0 0.0
    %5020 = vmatprep.subr.mxu0 0.0
    %5021 = vmatpush1.msra.mxu0 0.0
    %5022 = vmatprep.subr.mxu0 0.0
    %5023 = vmatpush1.msra.mxu0 0.0
    %5024 = vmatprep.subr.mxu0 0.0
    %5025 = vmatpush1.msra.mxu0 0.0
    %5026 = vmatprep.subr.mxu0 0.0
    %5027 = vmatpush1.msra.mxu0 0.0
    %5028 = vmatprep.subr.mxu0 0.0
    %5029 = vmatpush1.msra.mxu0 0.0
    %5030 = vmatprep.subr.mxu0 0.0
    %5031 = vmatpush1.msra.mxu0 0.0
    %5032 = vmatprep.subr.mxu0 0.0
    %5033 = vmatpush1.msra.mxu0 0.0
    %5034 = vmatprep.mubr.f32.mxu0 0.0
    %5035 = vmatmul.mubr.f32.gmra.mrb[0].mxu0 %v4969
    %v5036 = vpop.f32.mrb[0].mxu0
    %v5037 = vadd.f32 0.0, %v5036
    %v5038 = vpop.f32.mrb[0].mxu0
    %v5039 = vadd.f32 0.0, %v5038
    %5040 = vdwg.mxu0
    %5041 = vmatprep.subr.mxu0 %v3760
    %5042 = vmatpush1.msra.mxu0 %v3759
    %5043 = vmatprep.subr.mxu0 %v3764
    %5044 = vmatpush1.msra.mxu0 %v3763
    %5045 = vmatprep.subr.mxu0 %v3768
    %5046 = vmatpush1.msra.mxu0 %v3767
    %5047 = vmatprep.subr.mxu0 %v3772
    %5048 = vmatpush1.msra.mxu0 %v3771
    %5049 = vmatprep.subr.mxu0 %v3776
    %5050 = vmatpush1.msra.mxu0 %v3775
    %5051 = vmatprep.subr.mxu0 %v3780
    %5052 = vmatpush1.msra.mxu0 %v3779
    %5053 = vmatprep.subr.mxu0 %v3784
    %5054 = vmatpush1.msra.mxu0 %v3783
    %5055 = vmatprep.subr.mxu0 %v3788
    %5056 = vmatpush1.msra.mxu0 %v3787
    %5057 = vmatprep.subr.mxu0 %v3792
    %5058 = vmatpush1.msra.mxu0 %v3791
    %5059 = vmatprep.subr.mxu0 %v3796
    %5060 = vmatpush1.msra.mxu0 %v3795
    %5061 = vmatprep.subr.mxu0 %v3800
    %5062 = vmatpush1.msra.mxu0 %v3799
    %5063 = vmatprep.subr.mxu0 %v3804
    %5064 = vmatpush1.msra.mxu0 %v3803
    %5065 = vmatprep.subr.mxu0 %v3808
    %5066 = vmatpush1.msra.mxu0 %v3807
    %5067 = vmatprep.subr.mxu0 %v3812
    %5068 = vmatpush1.msra.mxu0 %v3811
    %5069 = vmatprep.subr.mxu0 %v3816
    %5070 = vmatpush1.msra.mxu0 %v3815
    %5071 = vmatprep.subr.mxu0 %v3820
    %5072 = vmatpush1.msra.mxu0 %v3819
    %5073 = vmatprep.subr.mxu0 0.0
    %5074 = vmatpush1.msra.mxu0 0.0
    %5075 = vmatprep.subr.mxu0 0.0
    %5076 = vmatpush1.msra.mxu0 0.0
    %5077 = vmatprep.subr.mxu0 0.0
    %5078 = vmatpush1.msra.mxu0 0.0
    %5079 = vmatprep.subr.mxu0 0.0
    %5080 = vmatpush1.msra.mxu0 0.0
    %5081 = vmatprep.subr.mxu0 0.0
    %5082 = vmatpush1.msra.mxu0 0.0
    %5083 = vmatprep.subr.mxu0 0.0
    %5084 = vmatpush1.msra.mxu0 0.0
    %5085 = vmatprep.subr.mxu0 0.0
    %5086 = vmatpush1.msra.mxu0 0.0
    %5087 = vmatprep.subr.mxu0 0.0
    %5088 = vmatpush1.msra.mxu0 0.0
    %5089 = vmatprep.subr.mxu0 0.0
    %5090 = vmatpush1.msra.mxu0 0.0
    %5091 = vmatprep.subr.mxu0 0.0
    %5092 = vmatpush1.msra.mxu0 0.0
    %5093 = vmatprep.subr.mxu0 0.0
    %5094 = vmatpush1.msra.mxu0 0.0
    %5095 = vmatprep.subr.mxu0 0.0
    %5096 = vmatpush1.msra.mxu0 0.0
    %5097 = vmatprep.subr.mxu0 0.0
    %5098 = vmatpush1.msra.mxu0 0.0
    %5099 = vmatprep.subr.mxu0 0.0
    %5100 = vmatpush1.msra.mxu0 0.0
    %5101 = vmatprep.subr.mxu0 0.0
    %5102 = vmatpush1.msra.mxu0 0.0
    %5103 = vmatprep.subr.mxu0 0.0
    %5104 = vmatpush1.msra.mxu0 0.0
    %5105 = vmatprep.mubr.f32.mxu0 0.0
    %5106 = vmatmul.mubr.f32.gmra.mrb[0].mxu0 %v4969
    %v5107 = vpop.f32.mrb[0].mxu0
    %v5108 = vadd.f32 0.0, %v5107
    %v5109 = vpop.f32.mrb[0].mxu0
    %v5110 = vadd.f32 0.0, %v5109
    %5111 = vdwg.mxu0
    %v5116 = vrot.slane %v5037, 6
    %v5117 = vrot.slane %v5039, 6
    %v5118 = vrot.slane %v5108, 6
    %v5119 = vrot.slane %v5110, 6
    %v5124 = vadd.f32 %v3982, %v5116
    %v5125 = vadd.f32 %v3984, %v5117
    %v5126 = vadd.f32 %v4059, %v5118
    %v5127 = vadd.f32 %v4061, %v5119
    %v5128 = vxor.u32 %v5124, 2147483648
    %v5129 = vmul.f32 %v5128, 1.442695
    %v5130 = vpow.pop %v5129
    %v5131 = vadd.f32 %v5130, 1.0
    %v5132 = vrcp.pop %v5131
    %v5133 = vmul.f32 1.0, %v5132
    %v5134 = vxor.u32 %v5125, 2147483648
    %v5135 = vmul.f32 %v5134, 1.442695
    %v5136 = vpow.pop %v5135
    %v5137 = vadd.f32 %v5136, 1.0
    %v5138 = vrcp.pop %v5137
    %v5139 = vmul.f32 1.0, %v5138
    %v5140 = vtanh.pop %v5126
    %v5141 = vxor.u32 %v5127, 2147483648
    %v5142 = vmul.f32 %v5141, 1.442695
    %v5143 = vpow.pop %v5142
    %v5144 = vadd.f32 %v5143, 1.0
    %v5145 = vrcp.pop %v5144
    %v5146 = vmul.f32 1.0, %v5145
    %v5148 = vrot.slane %v4967, 6
    %v5150 = vmul.f32 %v5139, %v5148
    %v5151 = vmul.f32 %v5133, %v5140
    %v5152 = vadd.f32 %v5150, %v5151
    %v5153 = vtanh.pop %v5152
    %v5154 = vmul.f32 %v5146, %v5153
    %v5156 = vrot.slane %v5154, 2
    %5158 = vmatprep.subr.mxu0 %v3758
    %5159 = vmatpush1.msra.mxu0 %v3757
    %5160 = vmatprep.subr.mxu0 %v3762
    %5161 = vmatpush1.msra.mxu0 %v3761
    %5162 = vmatprep.subr.mxu0 %v3766
    %5163 = vmatpush1.msra.mxu0 %v3765
    %5164 = vmatprep.subr.mxu0 %v3770
    %5165 = vmatpush1.msra.mxu0 %v3769
    %5166 = vmatprep.subr.mxu0 %v3774
    %5167 = vmatpush1.msra.mxu0 %v3773
    %5168 = vmatprep.subr.mxu0 %v3778
    %5169 = vmatpush1.msra.mxu0 %v3777
    %5170 = vmatprep.subr.mxu0 %v3782
    %5171 = vmatpush1.msra.mxu0 %v3781
    %5172 = vmatprep.subr.mxu0 %v3786
    %5173 = vmatpush1.msra.mxu0 %v3785
    %5174 = vmatprep.subr.mxu0 %v3790
    %5175 = vmatpush1.msra.mxu0 %v3789
    %5176 = vmatprep.subr.mxu0 %v3794
    %5177 = vmatpush1.msra.mxu0 %v3793
    %5178 = vmatprep.subr.mxu0 %v3798
    %5179 = vmatpush1.msra.mxu0 %v3797
    %5180 = vmatprep.subr.mxu0 %v3802
    %5181 = vmatpush1.msra.mxu0 %v3801
    %5182 = vmatprep.subr.mxu0 %v3806
    %5183 = vmatpush1.msra.mxu0 %v3805
    %5184 = vmatprep.subr.mxu0 %v3810
    %5185 = vmatpush1.msra.mxu0 %v3809
    %5186 = vmatprep.subr.mxu0 %v3814
    %5187 = vmatpush1.msra.mxu0 %v3813
    %5188 = vmatprep.subr.mxu0 %v3818
    %5189 = vmatpush1.msra.mxu0 %v3817
    %5190 = vmatprep.subr.mxu0 0.0
    %5191 = vmatpush1.msra.mxu0 0.0
    %5192 = vmatprep.subr.mxu0 0.0
    %5193 = vmatpush1.msra.mxu0 0.0
    %5194 = vmatprep.subr.mxu0 0.0
    %5195 = vmatpush1.msra.mxu0 0.0
    %5196 = vmatprep.subr.mxu0 0.0
    %5197 = vmatpush1.msra.mxu0 0.0
    %5198 = vmatprep.subr.mxu0 0.0
    %5199 = vmatpush1.msra.mxu0 0.0
    %5200 = vmatprep.subr.mxu0 0.0
    %5201 = vmatpush1.msra.mxu0 0.0
    %5202 = vmatprep.subr.mxu0 0.0
    %5203 = vmatpush1.msra.mxu0 0.0
    %5204 = vmatprep.subr.mxu0 0.0
    %5205 = vmatpush1.msra.mxu0 0.0
    %5206 = vmatprep.subr.mxu0 0.0
    %5207 = vmatpush1.msra.mxu0 0.0
    %5208 = vmatprep.subr.mxu0 0.0
    %5209 = vmatpush1.msra.mxu0 0.0
    %5210 = vmatprep.subr.mxu0 0.0
    %5211 = vmatpush1.msra.mxu0 0.0
    %5212 = vmatprep.subr.mxu0 0.0
    %5213 = vmatpush1.msra.mxu0 0.0
    %5214 = vmatprep.subr.mxu0 0.0
    %5215 = vmatpush1.msra.mxu0 0.0
    %5216 = vmatprep.subr.mxu0 0.0
    %5217 = vmatpush1.msra.mxu0 0.0
    %5218 = vmatprep.subr.mxu0 0.0
    %5219 = vmatpush1.msra.mxu0 0.0
    %5220 = vmatprep.subr.mxu0 0.0
    %5221 = vmatpush1.msra.mxu0 0.0
    %5222 = vmatprep.mubr.f32.mxu0 0.0
    %5223 = vmatmul.mubr.f32.gmra.mrb[0].mxu0 %v5156
    %v5224 = vpop.f32.mrb[0].mxu0
    %v5225 = vadd.f32 0.0, %v5224
    %v5226 = vpop.f32.mrb[0].mxu0
    %v5227 = vadd.f32 0.0, %v5226
    %5228 = vdwg.mxu0
    %5229 = vmatprep.subr.mxu0 %v3760
    %5230 = vmatpush1.msra.mxu0 %v3759
    %5231 = vmatprep.subr.mxu0 %v3764
    %5232 = vmatpush1.msra.mxu0 %v3763
    %5233 = vmatprep.subr.mxu0 %v3768
    %5234 = vmatpush1.msra.mxu0 %v3767
    %5235 = vmatprep.subr.mxu0 %v3772
    %5236 = vmatpush1.msra.mxu0 %v3771
    %5237 = vmatprep.subr.mxu0 %v3776
    %5238 = vmatpush1.msra.mxu0 %v3775
    %5239 = vmatprep.subr.mxu0 %v3780
    %5240 = vmatpush1.msra.mxu0 %v3779
    %5241 = vmatprep.subr.mxu0 %v3784
    %5242 = vmatpush1.msra.mxu0 %v3783
    %5243 = vmatprep.subr.mxu0 %v3788
    %5244 = vmatpush1.msra.mxu0 %v3787
    %5245 = vmatprep.subr.mxu0 %v3792
    %5246 = vmatpush1.msra.mxu0 %v3791
    %5247 = vmatprep.subr.mxu0 %v3796
    %5248 = vmatpush1.msra.mxu0 %v3795
    %5249 = vmatprep.subr.mxu0 %v3800
    %5250 = vmatpush1.msra.mxu0 %v3799
    %5251 = vmatprep.subr.mxu0 %v3804
    %5252 = vmatpush1.msra.mxu0 %v3803
    %5253 = vmatprep.subr.mxu0 %v3808
    %5254 = vmatpush1.msra.mxu0 %v3807
    %5255 = vmatprep.subr.mxu0 %v3812
    %5256 = vmatpush1.msra.mxu0 %v3811
    %5257 = vmatprep.subr.mxu0 %v3816
    %5258 = vmatpush1.msra.mxu0 %v3815
    %5259 = vmatprep.subr.mxu0 %v3820
    %5260 = vmatpush1.msra.mxu0 %v3819
    %5261 = vmatprep.subr.mxu0 0.0
    %5262 = vmatpush1.msra.mxu0 0.0
    %5263 = vmatprep.subr.mxu0 0.0
    %5264 = vmatpush1.msra.mxu0 0.0
    %5265 = vmatprep.subr.mxu0 0.0
    %5266 = vmatpush1.msra.mxu0 0.0
    %5267 = vmatprep.subr.mxu0 0.0
    %5268 = vmatpush1.msra.mxu0 0.0
    %5269 = vmatprep.subr.mxu0 0.0
    %5270 = vmatpush1.msra.mxu0 0.0
    %5271 = vmatprep.subr.mxu0 0.0
    %5272 = vmatpush1.msra.mxu0 0.0
    %5273 = vmatprep.subr.mxu0 0.0
    %5274 = vmatpush1.msra.mxu0 0.0
    %5275 = vmatprep.subr.mxu0 0.0
    %5276 = vmatpush1.msra.mxu0 0.0
    %5277 = vmatprep.subr.mxu0 0.0
    %5278 = vmatpush1.msra.mxu0 0.0
    %5279 = vmatprep.subr.mxu0 0.0
    %5280 = vmatpush1.msra.mxu0 0.0
    %5281 = vmatprep.subr.mxu0 0.0
    %5282 = vmatpush1.msra.mxu0 0.0
    %5283 = vmatprep.subr.mxu0 0.0
    %5284 = vmatpush1.msra.mxu0 0.0
    %5285 = vmatprep.subr.mxu0 0.0
    %5286 = vmatpush1.msra.mxu0 0.0
    %5287 = vmatprep.subr.mxu0 0.0
    %5288 = vmatpush1.msra.mxu0 0.0
    %5289 = vmatprep.subr.mxu0 0.0
    %5290 = vmatpush1.msra.mxu0 0.0
    %5291 = vmatprep.subr.mxu0 0.0
    %5292 = vmatpush1.msra.mxu0 0.0
    %5293 = vmatprep.mubr.f32.mxu0 0.0
    %5294 = vmatmul.mubr.f32.gmra.mrb[0].mxu0 %v5156
    %v5295 = vpop.f32.mrb[0].mxu0
    %v5296 = vadd.f32 0.0, %v5295
    %v5297 = vpop.f32.mrb[0].mxu0
    %v5298 = vadd.f32 0.0, %v5297
    %5299 = vdwg.mxu0
    %v5304 = vrot.slane %v5225, 4
    %v5305 = vrot.slane %v5227, 4
    %v5306 = vrot.slane %v5296, 4
    %v5307 = vrot.slane %v5298, 4
    %v5312 = vadd.f32 %v3982, %v5304
    %v5313 = vadd.f32 %v3984, %v5305
    %v5314 = vadd.f32 %v4059, %v5306
    %v5315 = vadd.f32 %v4061, %v5307
    %v5316 = vxor.u32 %v5312, 2147483648
    %v5317 = vmul.f32 %v5316, 1.442695
    %v5318 = vpow.pop %v5317
    %v5319 = vadd.f32 %v5318, 1.0
    %v5320 = vrcp.pop %v5319
    %v5321 = vmul.f32 1.0, %v5320
    %v5322 = vxor.u32 %v5313, 2147483648
    %v5323 = vmul.f32 %v5322, 1.442695
    %v5324 = vpow.pop %v5323
    %v5325 = vadd.f32 %v5324, 1.0
    %v5326 = vrcp.pop %v5325
    %v5327 = vmul.f32 1.0, %v5326
    %v5328 = vtanh.pop %v5314
    %v5329 = vxor.u32 %v5315, 2147483648
    %v5330 = vmul.f32 %v5329, 1.442695
    %v5331 = vpow.pop %v5330
    %v5332 = vadd.f32 %v5331, 1.0
    %v5333 = vrcp.pop %v5332
    %v5334 = vmul.f32 1.0, %v5333
    %v5336 = vrot.slane %v5152, 6
    %v5338 = vmul.f32 %v5327, %v5336
    %v5339 = vmul.f32 %v5321, %v5328
    %v5340 = vadd.f32 %v5338, %v5339
    %v5341 = vtanh.pop %v5340
    %v5342 = vmul.f32 %v5334, %v5341
    %v5344 = vrot.slane %v5342, 4
    %5346 = vmatprep.subr.mxu0 %v3758
    %5347 = vmatpush1.msra.mxu0 %v3757
    %5348 = vmatprep.subr.mxu0 %v3762
    %5349 = vmatpush1.msra.mxu0 %v3761
    %5350 = vmatprep.subr.mxu0 %v3766
    %5351 = vmatpush1.msra.mxu0 %v3765
    %5352 = vmatprep.subr.mxu0 %v3770
    %5353 = vmatpush1.msra.mxu0 %v3769
    %5354 = vmatprep.subr.mxu0 %v3774
    %5355 = vmatpush1.msra.mxu0 %v3773
    %5356 = vmatprep.subr.mxu0 %v3778
    %5357 = vmatpush1.msra.mxu0 %v3777
    %5358 = vmatprep.subr.mxu0 %v3782
    %5359 = vmatpush1.msra.mxu0 %v3781
    %5360 = vmatprep.subr.mxu0 %v3786
    %5361 = vmatpush1.msra.mxu0 %v3785
    %5362 = vmatprep.subr.mxu0 %v3790
    %5363 = vmatpush1.msra.mxu0 %v3789
    %5364 = vmatprep.subr.mxu0 %v3794
    %5365 = vmatpush1.msra.mxu0 %v3793
    %5366 = vmatprep.subr.mxu0 %v3798
    %5367 = vmatpush1.msra.mxu0 %v3797
    %5368 = vmatprep.subr.mxu0 %v3802
    %5369 = vmatpush1.msra.mxu0 %v3801
    %5370 = vmatprep.subr.mxu0 %v3806
    %5371 = vmatpush1.msra.mxu0 %v3805
    %5372 = vmatprep.subr.mxu0 %v3810
    %5373 = vmatpush1.msra.mxu0 %v3809
    %5374 = vmatprep.subr.mxu0 %v3814
    %5375 = vmatpush1.msra.mxu0 %v3813
    %5376 = vmatprep.subr.mxu0 %v3818
    %5377 = vmatpush1.msra.mxu0 %v3817
    %5378 = vmatprep.subr.mxu0 0.0
    %5379 = vmatpush1.msra.mxu0 0.0
    %5380 = vmatprep.subr.mxu0 0.0
    %5381 = vmatpush1.msra.mxu0 0.0
    %5382 = vmatprep.subr.mxu0 0.0
    %5383 = vmatpush1.msra.mxu0 0.0
    %5384 = vmatprep.subr.mxu0 0.0
    %5385 = vmatpush1.msra.mxu0 0.0
    %5386 = vmatprep.subr.mxu0 0.0
    %5387 = vmatpush1.msra.mxu0 0.0
    %5388 = vmatprep.subr.mxu0 0.0
    %5389 = vmatpush1.msra.mxu0 0.0
    %5390 = vmatprep.subr.mxu0 0.0
    %5391 = vmatpush1.msra.mxu0 0.0
    %5392 = vmatprep.subr.mxu0 0.0
    %5393 = vmatpush1.msra.mxu0 0.0
    %5394 = vmatprep.subr.mxu0 0.0
    %5395 = vmatpush1.msra.mxu0 0.0
    %5396 = vmatprep.subr.mxu0 0.0
    %5397 = vmatpush1.msra.mxu0 0.0
    %5398 = vmatprep.subr.mxu0 0.0
    %5399 = vmatpush1.msra.mxu0 0.0
    %5400 = vmatprep.subr.mxu0 0.0
    %5401 = vmatpush1.msra.mxu0 0.0
    %5402 = vmatprep.subr.mxu0 0.0
    %5403 = vmatpush1.msra.mxu0 0.0
    %5404 = vmatprep.subr.mxu0 0.0
    %5405 = vmatpush1.msra.mxu0 0.0
    %5406 = vmatprep.subr.mxu0 0.0
    %5407 = vmatpush1.msra.mxu0 0.0
    %5408 = vmatprep.subr.mxu0 0.0
    %5409 = vmatpush1.msra.mxu0 0.0
    %5410 = vmatprep.mubr.f32.mxu0 0.0
    %5411 = vmatmul.mubr.f32.gmra.mrb[0].mxu0 %v5344
    %v5412 = vpop.f32.mrb[0].mxu0
    %v5413 = vadd.f32 0.0, %v5412
    %v5414 = vpop.f32.mrb[0].mxu0
    %v5415 = vadd.f32 0.0, %v5414
    %5416 = vdwg.mxu0
    %5417 = vmatprep.subr.mxu0 %v3760
    %5418 = vmatpush1.msra.mxu0 %v3759
    %5419 = vmatprep.subr.mxu0 %v3764
    %5420 = vmatpush1.msra.mxu0 %v3763
    %5421 = vmatprep.subr.mxu0 %v3768
    %5422 = vmatpush1.msra.mxu0 %v3767
    %5423 = vmatprep.subr.mxu0 %v3772
    %5424 = vmatpush1.msra.mxu0 %v3771
    %5425 = vmatprep.subr.mxu0 %v3776
    %5426 = vmatpush1.msra.mxu0 %v3775
    %5427 = vmatprep.subr.mxu0 %v3780
    %5428 = vmatpush1.msra.mxu0 %v3779
    %5429 = vmatprep.subr.mxu0 %v3784
    %5430 = vmatpush1.msra.mxu0 %v3783
    %5431 = vmatprep.subr.mxu0 %v3788
    %5432 = vmatpush1.msra.mxu0 %v3787
    %5433 = vmatprep.subr.mxu0 %v3792
    %5434 = vmatpush1.msra.mxu0 %v3791
    %5435 = vmatprep.subr.mxu0 %v3796
    %5436 = vmatpush1.msra.mxu0 %v3795
    %5437 = vmatprep.subr.mxu0 %v3800
    %5438 = vmatpush1.msra.mxu0 %v3799
    %5439 = vmatprep.subr.mxu0 %v3804
    %5440 = vmatpush1.msra.mxu0 %v3803
    %5441 = vmatprep.subr.mxu0 %v3808
    %5442 = vmatpush1.msra.mxu0 %v3807
    %5443 = vmatprep.subr.mxu0 %v3812
    %5444 = vmatpush1.msra.mxu0 %v3811
    %5445 = vmatprep.subr.mxu0 %v3816
    %5446 = vmatpush1.msra.mxu0 %v3815
    %5447 = vmatprep.subr.mxu0 %v3820
    %5448 = vmatpush1.msra.mxu0 %v3819
    %5449 = vmatprep.subr.mxu0 0.0
    %5450 = vmatpush1.msra.mxu0 0.0
    %5451 = vmatprep.subr.mxu0 0.0
    %5452 = vmatpush1.msra.mxu0 0.0
    %5453 = vmatprep.subr.mxu0 0.0
    %5454 = vmatpush1.msra.mxu0 0.0
    %5455 = vmatprep.subr.mxu0 0.0
    %5456 = vmatpush1.msra.mxu0 0.0
    %5457 = vmatprep.subr.mxu0 0.0
    %5458 = vmatpush1.msra.mxu0 0.0
    %5459 = vmatprep.subr.mxu0 0.0
    %5460 = vmatpush1.msra.mxu0 0.0
    %5461 = vmatprep.subr.mxu0 0.0
    %5462 = vmatpush1.msra.mxu0 0.0
    %5463 = vmatprep.subr.mxu0 0.0
    %5464 = vmatpush1.msra.mxu0 0.0
    %5465 = vmatprep.subr.mxu0 0.0
    %5466 = vmatpush1.msra.mxu0 0.0
    %5467 = vmatprep.subr.mxu0 0.0
    %5468 = vmatpush1.msra.mxu0 0.0
    %5469 = vmatprep.subr.mxu0 0.0
    %5470 = vmatpush1.msra.mxu0 0.0
    %5471 = vmatprep.subr.mxu0 0.0
    %5472 = vmatpush1.msra.mxu0 0.0
    %5473 = vmatprep.subr.mxu0 0.0
    %5474 = vmatpush1.msra.mxu0 0.0
    %5475 = vmatprep.subr.mxu0 0.0
    %5476 = vmatpush1.msra.mxu0 0.0
    %5477 = vmatprep.subr.mxu0 0.0
    %5478 = vmatpush1.msra.mxu0 0.0
    %5479 = vmatprep.subr.mxu0 0.0
    %5480 = vmatpush1.msra.mxu0 0.0
    %5481 = vmatprep.mubr.f32.mxu0 0.0
    %5482 = vmatmul.mubr.f32.gmra.mrb[0].mxu0 %v5344
    %v5483 = vpop.f32.mrb[0].mxu0
    %v5484 = vadd.f32 0.0, %v5483
    %v5485 = vpop.f32.mrb[0].mxu0
    %v5486 = vadd.f32 0.0, %v5485
    %5487 = vdwg.mxu0
    %v5492 = vrot.slane %v5413, 2
    %v5493 = vrot.slane %v5415, 2
    %v5494 = vrot.slane %v5484, 2
    %v5495 = vrot.slane %v5486, 2
    %v5500 = vadd.f32 %v3982, %v5492
    %v5501 = vadd.f32 %v3984, %v5493
    %v5502 = vadd.f32 %v4059, %v5494
    %v5503 = vadd.f32 %v4061, %v5495
    %v5504 = vxor.u32 %v5500, 2147483648
    %v5505 = vmul.f32 %v5504, 1.442695
    %v5506 = vpow.pop %v5505
    %v5507 = vadd.f32 %v5506, 1.0
    %v5508 = vrcp.pop %v5507
    %v5509 = vmul.f32 1.0, %v5508
    %v5510 = vxor.u32 %v5501, 2147483648
    %v5511 = vmul.f32 %v5510, 1.442695
    %v5512 = vpow.pop %v5511
    %v5513 = vadd.f32 %v5512, 1.0
    %v5514 = vrcp.pop %v5513
    %v5515 = vmul.f32 1.0, %v5514
    %v5516 = vtanh.pop %v5502
    %v5517 = vxor.u32 %v5503, 2147483648
    %v5518 = vmul.f32 %v5517, 1.442695
    %v5519 = vpow.pop %v5518
    %v5520 = vadd.f32 %v5519, 1.0
    %v5521 = vrcp.pop %v5520
    %v5522 = vmul.f32 1.0, %v5521
    %v5524 = vrot.slane %v5340, 6
    %v5526 = vmul.f32 %v5515, %v5524
    %v5527 = vmul.f32 %v5509, %v5516
    %v5528 = vadd.f32 %v5526, %v5527
    %v5529 = vtanh.pop %v5528
    %v5530 = vmul.f32 %v5522, %v5529
    %v5531 = vld [vmem:[%s10] sm:$0x1]
    %v5533 = vlaneseq
    %v5534 = vshrl.u32 %v5533, 7
    %v5535 = vsub.s32 0, %v5534
    %v5536 = vrot.slane %v5531, %v5535
    %v5538 = vmul.f32 %v5530, %v5536
    %vm5539 = vcmask 1047558
    %v5540 = vsel %vm5539, %v5538, 0.0
    %5541 = vadd.xlane.f32.xlu0 %v5540
    %v5542 = vpop.xlane.xlu0 %5541
    %v5543 = vld [vmem:[#allocation3] sm:$0x1]
    %v5545 = vlaneseq
    %v5546 = vshrl.u32 %v5545, 7
    %v5547 = vsub.s32 0, %v5546
    %v5548 = vrot.slane %v5543, %v5547
    %v5550 = vadd.f32 %v5542, %v5548
    %vm5551 = vcmask 7174
    %5552 = vst.msk [vmem:[%s12 - $0x6] sm:$0xc0] %vm5551, %v5550
    // Predicated region
    $region74: #{lstm_model_forward.1} parent=1 // pred_check
      _
    $region75: #{lstm_model_forward.1} parent=1 // pred_check_branch
      %5554 = sbr.rel (0) target = $region77
    $region76: #{lstm_model_forward.1} parent=1 // pred_region
      _
    $region77: #{lstm_model_forward.1} parent=1 // pred_fallthru
      _
    // Predicated region
    $region78: #{lstm_model_forward.1} parent=1 // pred_check
      _
    $region79: #{lstm_model_forward.1} parent=1 // pred_check_branch
      %5556 = sbr.rel (0) target = $region81
    $region80: #{lstm_model_forward.1} parent=1 // pred_region
      _
    $region81: #{lstm_model_forward.1} parent=1 // pred_fallthru
      _
    %5557 = vsyncpa [#allocation5], 1
    %5558 = vsyncpa [#allocation7], 1
    %5559 = vsyncpa [#allocation10], 1
    %5560 = vsyncpa [#allocation13], 1

</llo_original>
